<compile_context>
chip_gen: v6e
topology: v6e:2x2x1
jax: 0.10.0
libtpu: 0.0.40
codegen_flags: <defaults>
</compile_context>

<pallas_src>
import functools

import jax
import jax.numpy as jnp
from jax.experimental import pallas as pl
from jax.experimental.pallas import tpu as pltpu


# ----------------------------------------------------------------------------
# Config (small synthetic shapes, vit_tiny-style)
# ----------------------------------------------------------------------------
class Cfg:
    C = 3
    PATCH = 8
    IMG_GLOBAL = 16
    IMG_LOCAL = 8
    EMBED = 48           # dino_config.out_dim (ViT embed_dim)
    HEADS = 3            # vit_tiny
    DEPTH = 2
    MLP = 4 * EMBED
    HEAD_HIDDEN = 64
    HEAD_BOTTLENECK = 32
    HEAD_OUT = 96
    LN_EPS = 1e-6
    NEG_INF = -1e30


# ----------------------------------------------------------------------------
# Fused Pallas kernel: backbone (+ optional DINO head)
# ----------------------------------------------------------------------------
def _ln_f32(x, g, b, eps):
    mu = jnp.mean(x, axis=-1, keepdims=True)
    xc = x - mu
    var = jnp.mean(xc * xc, axis=-1, keepdims=True)
    return xc * jax.lax.rsqrt(var + eps) * g + b


def _dino_fused_kernel(
        patches_ref, pos_ref, mask_ref,
        patch_w, patch_b, cls_tok,
        ln1_g, ln1_b, qkv_w, qkv_b, proj_w, proj_b,
        ln2_g, ln2_b, fc1_w, fc1_b, fc2_w, fc2_b,
        norm_g, norm_b,
        *rest, heads, depth, eps, with_head, head_eps):
    """patches -> patch embed -> cls/pos -> blocks -> cls LN [-> DINO head]."""
    o_ref = rest[-1]
    Bg, Np, PD = patches_ref.shape
    _, N, D = pos_ref.shape
    hd = D // heads
    bf16 = jnp.bfloat16

    # ---- patch embed + cls concat + pos add (all group rows batched in M) --
    p = patches_ref[...].reshape(Bg * Np, PD).astype(bf16)
    tok = (jnp.dot(p, patch_w[...], preferred_element_type=jnp.float32)
           + patch_b[...]).reshape(Bg, Np, D)
    cls = jnp.broadcast_to(cls_tok[...].reshape(1, 1, D), (Bg, 1, D))
    x = jnp.concatenate([cls, tok], axis=1) + pos_ref[...]      # (Bg, N, D) f32
    amask = mask_ref[...]                                       # (Bg, 1, N)

    # ---- transformer blocks (static unroll; weights indexed per layer) -----
    for l in range(depth):
        # attention
        h = _ln_f32(x, ln1_g[l], ln1_b[l], eps)
        qkv = (jnp.dot(h.reshape(Bg * N, D).astype(bf16), qkv_w[l],
                       preferred_element_type=jnp.float32)
               + qkv_b[l]).reshape(Bg, N, 3 * D)
        outs = []
        for hh in range(heads):                 # static unroll over heads
            lo = hh * hd
            q = qkv[:, :, lo:lo + hd].astype(bf16)   # 1/sqrt(hd) folded into W_q
            k = qkv[:, :, D + lo:D + lo + hd].astype(bf16)
            v = qkv[:, :, 2 * D + lo:2 * D + lo + hd].astype(bf16)
            s = jnp.einsum('bnd,bmd->bnm', q, k,
                           preferred_element_type=jnp.float32) + amask
            s = s - jnp.max(s, axis=-1, keepdims=True)
            pr = jnp.exp(s)
            pr = pr * pl.reciprocal(jnp.sum(pr, axis=-1, keepdims=True),
                                    approx=True)
            outs.append(jnp.einsum('bnm,bmd->bnd', pr.astype(bf16), v,
                                   preferred_element_type=jnp.float32))
        attn = jnp.concatenate(outs, axis=-1)                   # (Bg, N, D)
        x = x + (jnp.dot(attn.reshape(Bg * N, D).astype(bf16), proj_w[l],
                         preferred_element_type=jnp.float32)
                 + proj_b[l]).reshape(Bg, N, D)

        # MLP
        h = _ln_f32(x, ln2_g[l], ln2_b[l], eps)
        h = (jnp.dot(h.reshape(Bg * N, D).astype(bf16), fc1_w[l],
                     preferred_element_type=jnp.float32) + fc1_b[l])
        # TODO(synk): PyTorch nn.GELU defaults to the exact erf form; tanh
        # approximation used here for a clean EUP lowering.
        h = jax.nn.gelu(h, approximate=True)
        h = (jnp.dot(h.astype(bf16), fc2_w[l],
                     preferred_element_type=jnp.float32) + fc2_b[l])
        x = x + h.reshape(Bg, N, D)

    # ---- final LayerNorm on the pooled cls token only ----------------------
    cls_out = _ln_f32(x[:, 0, :], norm_g[...], norm_b[...], eps)  # (Bg, D)

    if not with_head:
        o_ref[0] = cls_out.astype(o_ref.dtype)
        return

    # ---- DINO head: MLP(3)+GELU -> bottleneck -> L2 norm -> weight-norm ----
    w1, b1, w2, b2, w3, b3, vT, g = rest[:-1]
    h = jnp.dot(cls_out.astype(bf16), w1[...],
                preferred_element_type=jnp.float32) + b1[...]
    h = jax.nn.gelu(h, approximate=True)
    h = jnp.dot(h.astype(bf16), w2[...],
                preferred_element_type=jnp.float32) + b2[...]
    h = jax.nn.gelu(h, approximate=True)
    h = jnp.dot(h.astype(bf16), w3[...],
                preferred_element_type=jnp.float32) + b3[...]
    ssq = jnp.sum(h * h, axis=-1, keepdims=True)
    hn = h * jax.lax.rsqrt(jnp.maximum(ssq, head_eps * head_eps))
    v = vT[...].astype(jnp.float32)
    col_ssq = jnp.sum(v * v, axis=0, keepdims=True)
    w_eff = (v * jax.lax.rsqrt(col_ssq) * g[...]).astype(bf16)
    o_ref[0] = jnp.dot(hn.astype(bf16), w_eff,
                       preferred_element_type=jnp.float32).astype(o_ref.dtype)


def _const_spec(shape):
    """Whole-array block, same block index every grid step (fetched once)."""
    zeros = (0,) * len(shape)
    return pl.BlockSpec(shape, lambda g, _z=zeros: _z)


def fused_forward(backbone, head, patches, pos, mask, *, with_head):
    """Whole backbone (+ optional DINO head) in ONE pallas_call."""
    cfg = Cfg
    B, Np, PD = patches.shape
    N, D = pos.shape[1], cfg.EMBED
    # One "parallel" grid axis of (at most) 2 groups: feeds v7x's 2nd
    # TensorCore; on single-TC v5e/v6e the 2 steps cost ~600 cycles total.
    G = 2 if (B % 2 == 0 and B >= 4) else 1
    Bg = B // G
    out_dim = head["last_vT"].shape[1] if with_head else D

    blk = backbone["blocks"]
    args = [patches, pos, mask,
            backbone["patch_w"], backbone["patch_b"], backbone["cls_token"],
            blk["ln1_g"], blk["ln1_b"], blk["qkv_w"], blk["qkv_b"],
            blk["proj_w"], blk["proj_b"], blk["ln2_g"], blk["ln2_b"],
            blk["fc1_w"], blk["fc1_b"], blk["fc2_w"], blk["fc2_b"],
            backbone["norm_g"], backbone["norm_b"]]
    if with_head:
        args += [head["w1"], head["b1"], head["w2"], head["b2"],
                 head["w3"], head["b3"], head["last_vT"], head["last_g"]]

    def batched_spec(shape):
        tail = shape[1:]
        zeros = (0,) * len(tail)
        return pl.BlockSpec((Bg,) + tail, lambda g, _z=zeros: (g,) + _z)

    in_specs = ([batched_spec(patches.shape), batched_spec(pos.shape),
                 batched_spec(mask.shape)]
                + [_const_spec(a.shape) for a in args[3:]])

    kern = functools.partial(
        _dino_fused_kernel, heads=cfg.HEADS, depth=cfg.DEPTH,
        eps=cfg.LN_EPS, with_head=with_head, head_eps=1e-12)

    out = pl.pallas_call(
        kern,
        out_shape=jax.ShapeDtypeStruct((G, Bg, out_dim), jnp.float32),
        grid=(G,),
        in_specs=in_specs,
        out_specs=pl.BlockSpec((1, Bg, out_dim), lambda g: (g, 0, 0)),
        compiler_params=pltpu.CompilerParams(
            dimension_semantics=("parallel",)),
    )(*args)
    return out.reshape(B, out_dim)


# ----------------------------------------------------------------------------
# Model glue (patch extraction / pos interpolation / padding in plain JAX)
# ----------------------------------------------------------------------------
def extract_patches(imgs_nchw, patch):
    """(B, C, H, W) -> (B, Np, C*P*P), flatten order (C, ph, pw)."""
    B, C, H, W = imgs_nchw.shape
    Hp, Wp = H // patch, W // patch
    x = imgs_nchw.reshape(B, C, Hp, patch, Wp, patch)
    x = jnp.transpose(x, (0, 2, 4, 1, 3, 5))          # (B, Hp, Wp, C, P, P)
    return x.reshape(B, Hp * Wp, C * patch * patch)


def pos_for_grid(pos_embed, src_grid, dst_grid, embed):
    """DINO-style interpolation of the patch part of the position embedding."""
    if dst_grid == src_grid:
        return pos_embed
    cls_pos = pos_embed[:, :1]
    patch_pos = pos_embed[:, 1:].reshape(1, src_grid, src_grid, embed)
    # TODO(synk): jax.image.resize bicubic may differ slightly from PyTorch
    # F.interpolate(mode='bicubic') corner/scale semantics used by DINO.
    patch_pos = jax.image.resize(patch_pos, (1, dst_grid, dst_grid, embed),
                                 method="bicubic")
    return jnp.concatenate(
        [cls_pos, patch_pos.reshape(1, dst_grid * dst_grid, embed)], axis=1)


def _prep_group(backbone, imgs, np_pad):
    """Build padded patches, per-image pos embed and additive key mask."""
    cfg = Cfg
    B, _, H, _ = imgs.shape
    grid = H // cfg.PATCH
    np_real = grid * grid
    patches = extract_patches(imgs, cfg.PATCH)                 # (B, np_real, PD)
    src_grid = cfg.IMG_GLOBAL // cfg.PATCH
    pos = pos_for_grid(backbone["pos_embed"], src_grid, grid, cfg.EMBED)
    n_real, n_pad = np_real + 1, np_pad + 1
    if np_pad > np_real:
        patches = jnp.pad(patches, ((0, 0), (0, np_pad - np_real), (0, 0)))
        pos = jnp.pad(pos, ((0, 0), (0, np_pad - np_real), (0, 0)))
    pos = jnp.broadcast_to(pos, (B, n_pad, cfg.EMBED))
    keymask = jnp.where(jnp.arange(n_pad) < n_real, 0.0, cfg.NEG_INF)
    mask = jnp.broadcast_to(keymask.astype(jnp.float32).reshape(1, 1, n_pad),
                            (B, 1, n_pad))
    return patches, pos, mask


class DINO:
    """JAX/Pallas reimplementation of the PyTorch DINO module forward."""

    def __init__(self, key):
        cfg = Cfg
        D, P, C, L = cfg.EMBED, cfg.PATCH, cfg.C, cfg.DEPTH
        grid = cfg.IMG_GLOBAL // cfg.PATCH
        hd = D // cfg.HEADS
        bf16 = jnp.bfloat16
        ks = iter(jax.random.split(key, 16))

        def nrm(k, shape, s=0.02):
            return s * jax.random.normal(k, shape, jnp.float32)

        # 1/sqrt(head_dim) attention scale pre-folded into the Q columns.
        qkv_w = nrm(next(ks), (L, D, 3 * D))
        qkv_w = qkv_w.at[:, :, :D].multiply(hd ** -0.5)

        backbone = {
            "patch_w": nrm(next(ks), (C * P * P, D)).astype(bf16),
            "patch_b": jnp.zeros((1, D), jnp.float32),
            "cls_token": nrm(next(ks), (1, D)),
            "pos_embed": nrm(next(ks), (1, grid * grid + 1, D)),
            "norm_g": jnp.ones((1, D), jnp.float32),
            "norm_b": jnp.zeros((1, D), jnp.float32),
            "blocks": {   # all block params stacked over layers
                "ln1_g": jnp.ones((L, 1, D), jnp.float32),
                "ln1_b": jnp.zeros((L, 1, D), jnp.float32),
                "qkv_w": qkv_w.astype(bf16),
                "qkv_b": jnp.zeros((L, 1, 3 * D), jnp.float32),
                "proj_w": nrm(next(ks), (L, D, D)).astype(bf16),
                "proj_b": jnp.zeros((L, 1, D), jnp.float32),
                "ln2_g": jnp.ones((L, 1, D), jnp.float32),
                "ln2_b": jnp.zeros((L, 1, D), jnp.float32),
                "fc1_w": nrm(next(ks), (L, D, cfg.MLP)).astype(bf16),
                "fc1_b": jnp.zeros((L, 1, cfg.MLP), jnp.float32),
                "fc2_w": nrm(next(ks), (L, cfg.MLP, D)).astype(bf16),
                "fc2_b": jnp.zeros((L, 1, D), jnp.float32),
            },
        }

        head = {
            "w1": nrm(next(ks), (D, cfg.HEAD_HIDDEN)).astype(bf16),
            "b1": jnp.zeros((1, cfg.HEAD_HIDDEN), jnp.float32),
            "w2": nrm(next(ks), (cfg.HEAD_HIDDEN, cfg.HEAD_HIDDEN)).astype(bf16),
            "b2": jnp.zeros((1, cfg.HEAD_HIDDEN), jnp.float32),
            "w3": nrm(next(ks), (cfg.HEAD_HIDDEN, cfg.HEAD_BOTTLENECK)).astype(bf16),
            "b3": jnp.zeros((1, cfg.HEAD_BOTTLENECK), jnp.float32),
            # weight-normed last layer stored transposed: (bottleneck, out)
            "last_vT": nrm(next(ks), (cfg.HEAD_BOTTLENECK, cfg.HEAD_OUT)),
            "last_g": jnp.ones((1, cfg.HEAD_OUT), jnp.float32),
        }

        # teacher.load_state_dict(student.state_dict()) -> identical params
        self.student_backbone = backbone
        self.teacher_backbone = jax.tree_util.tree_map(lambda a: a, backbone)
        self.student_head = head
        self.teacher_head = jax.tree_util.tree_map(lambda a: a, head)

    # ---- forwards mirroring the PyTorch module ----
    def _student_forward(self, crops):
        sizes = [int(c.shape[-1]) for c in crops]
        nb_global = 1                       # first consecutive group = globals
        while nb_global < len(sizes) and sizes[nb_global] == sizes[0]:
            nb_global += 1
        global_crops = jnp.concatenate(crops[:nb_global], axis=0)
        np_g = (global_crops.shape[-1] // Cfg.PATCH) ** 2
        if nb_global == len(crops):
            p, pos, m = _prep_group(self.student_backbone, global_crops, np_g)
        else:
            local_crops = jnp.concatenate(crops[nb_global:], axis=0)
            np_l = (local_crops.shape[-1] // Cfg.PATCH) ** 2
            np_max = max(np_g, np_l)
            pg, posg, mg = _prep_group(self.student_backbone, global_crops, np_max)
            pll, posl, ml = _prep_group(self.student_backbone, local_crops, np_max)
            p = jnp.concatenate([pg, pll], axis=0)
            pos = jnp.concatenate([posg, posl], axis=0)
            m = jnp.concatenate([mg, ml], axis=0)
        # globals + padded/masked locals -> ONE fused backbone+head launch
        return fused_forward(self.student_backbone, self.student_head,
                             p, pos, m, with_head=True)

    def _teacher_forward(self, global_crops):
        np_g = (global_crops.shape[-1] // Cfg.PATCH) ** 2
        p, pos, m = _prep_group(self.teacher_backbone, global_crops, np_g)
        return fused_forward(self.teacher_backbone, self.teacher_head,
                             p, pos, m, with_head=True)

    def forward(self, x, training=False):
        if not training:
            np_g = (x.shape[-1] // Cfg.PATCH) ** 2
            p, pos, m = _prep_group(self.student_backbone, x, np_g)
            return fused_forward(self.student_backbone, None, p, pos, m,
                                 with_head=False)
        global_crops = jnp.concatenate(x[:2], axis=0)
        student_out = self._student_forward(x)        # 1 pallas_call
        teacher_out = self._teacher_forward(global_crops)  # 1 pallas_call
        student_out = jnp.split(student_out, len(x), axis=0)
        teacher_out = jnp.split(teacher_out, 2, axis=0)
        return tuple(student_out), tuple(teacher_out)


# ----------------------------------------------------------------------------
if __name__ == "__main__":
    key = jax.random.PRNGKey(0)
    pk, dk = jax.random.split(key)
    model = DINO(pk)

    B = 2
    dks = jax.random.split(dk, 4)
    crops = [
        jax.random.normal(dks[0], (B, Cfg.C, Cfg.IMG_GLOBAL, Cfg.IMG_GLOBAL),
                          jnp.float32),
        jax.random.normal(dks[1], (B, Cfg.C, Cfg.IMG_GLOBAL, Cfg.IMG_GLOBAL),
                          jnp.float32),
        jax.random.normal(dks[2], (B, Cfg.C, Cfg.IMG_LOCAL, Cfg.IMG_LOCAL),
                          jnp.float32),
        jax.random.normal(dks[3], (B, Cfg.C, Cfg.IMG_LOCAL, Cfg.IMG_LOCAL),
                          jnp.float32),
    ]

    # training path: (student_out chunked per crop, teacher_out chunked in 2)
    student_out, teacher_out = model.forward(crops, training=True)
    jax.block_until_ready(student_out)
    jax.block_until_ready(teacher_out)
    assert len(student_out) == 4 and student_out[0].shape == (B, Cfg.HEAD_OUT)
    assert len(teacher_out) == 2 and teacher_out[0].shape == (B, Cfg.HEAD_OUT)

    # inference path: student backbone only
    feats = model.forward(crops[0], training=False)
    jax.block_until_ready(feats)
    assert feats.shape == (B, Cfg.EMBED)

    print("KERNEL_OK")
</pallas_src>

<mosaic_0001>
module attributes {stable_mosaic.version = 11 : i64} {
  func.func @_dino_fused_kernel(%arg0: i32, %arg1: memref<4x4x192xf32, #tpu.memory_space<vmem>>, %arg2: memref<4x5x48xf32, #tpu.memory_space<vmem>>, %arg3: memref<4x1x5xf32, #tpu.memory_space<vmem>>, %arg4: memref<192x48xbf16, #tpu.memory_space<vmem>>, %arg5: memref<1x48xf32, #tpu.memory_space<vmem>>, %arg6: memref<1x48xf32, #tpu.memory_space<vmem>>, %arg7: memref<2x1x48xf32, #tpu.memory_space<vmem>>, %arg8: memref<2x1x48xf32, #tpu.memory_space<vmem>>, %arg9: memref<2x48x144xbf16, #tpu.memory_space<vmem>>, %arg10: memref<2x1x144xf32, #tpu.memory_space<vmem>>, %arg11: memref<2x48x48xbf16, #tpu.memory_space<vmem>>, %arg12: memref<2x1x48xf32, #tpu.memory_space<vmem>>, %arg13: memref<2x1x48xf32, #tpu.memory_space<vmem>>, %arg14: memref<2x1x48xf32, #tpu.memory_space<vmem>>, %arg15: memref<2x48x192xbf16, #tpu.memory_space<vmem>>, %arg16: memref<2x1x192xf32, #tpu.memory_space<vmem>>, %arg17: memref<2x192x48xbf16, #tpu.memory_space<vmem>>, %arg18: memref<2x1x48xf32, #tpu.memory_space<vmem>>, %arg19: memref<1x48xf32, #tpu.memory_space<vmem>>, %arg20: memref<1x48xf32, #tpu.memory_space<vmem>>, %arg21: memref<48x64xbf16, #tpu.memory_space<vmem>>, %arg22: memref<1x64xf32, #tpu.memory_space<vmem>>, %arg23: memref<64x64xbf16, #tpu.memory_space<vmem>>, %arg24: memref<1x64xf32, #tpu.memory_space<vmem>>, %arg25: memref<64x32xbf16, #tpu.memory_space<vmem>>, %arg26: memref<1x32xf32, #tpu.memory_space<vmem>>, %arg27: memref<32x96xf32, #tpu.memory_space<vmem>>, %arg28: memref<1x96xf32, #tpu.memory_space<vmem>>, %arg29: memref<1x4x96xf32, #tpu.memory_space<vmem>>) attributes {dimension_semantics = [#tpu.dimension_semantics<parallel>], iteration_bounds = array<i64: 2>, scalar_prefetch = 0 : i64, scratch_operands = 0 : i64, tpu.core_type = #tpu.core_type<tc>, window_params = [{transform_indices = @transform_0, window_bounds = array<i64: 4, 4, 192>}, {transform_indices = @transform_1, window_bounds = array<i64: 4, 5, 48>}, {transform_indices = @transform_2, window_bounds = array<i64: 4, 1, 5>}, {pipeline_mode = #tpu.pipeline_mode<synchronous>, transform_indices = @transform_3, window_bounds = array<i64: 192, 48>}, {pipeline_mode = #tpu.pipeline_mode<synchronous>, transform_indices = @transform_4, window_bounds = array<i64: 1, 48>}, {pipeline_mode = #tpu.pipeline_mode<synchronous>, transform_indices = @transform_5, window_bounds = array<i64: 1, 48>}, {pipeline_mode = #tpu.pipeline_mode<synchronous>, transform_indices = @transform_6, window_bounds = array<i64: 2, 1, 48>}, {pipeline_mode = #tpu.pipeline_mode<synchronous>, transform_indices = @transform_7, window_bounds = array<i64: 2, 1, 48>}, {pipeline_mode = #tpu.pipeline_mode<synchronous>, transform_indices = @transform_8, window_bounds = array<i64: 2, 48, 144>}, {pipeline_mode = #tpu.pipeline_mode<synchronous>, transform_indices = @transform_9, window_bounds = array<i64: 2, 1, 144>}, {pipeline_mode = #tpu.pipeline_mode<synchronous>, transform_indices = @transform_10, window_bounds = array<i64: 2, 48, 48>}, {pipeline_mode = #tpu.pipeline_mode<synchronous>, transform_indices = @transform_11, window_bounds = array<i64: 2, 1, 48>}, {pipeline_mode = #tpu.pipeline_mode<synchronous>, transform_indices = @transform_12, window_bounds = array<i64: 2, 1, 48>}, {pipeline_mode = #tpu.pipeline_mode<synchronous>, transform_indices = @transform_13, window_bounds = array<i64: 2, 1, 48>}, {pipeline_mode = #tpu.pipeline_mode<synchronous>, transform_indices = @transform_14, window_bounds = array<i64: 2, 48, 192>}, {pipeline_mode = #tpu.pipeline_mode<synchronous>, transform_indices = @transform_15, window_bounds = array<i64: 2, 1, 192>}, {pipeline_mode = #tpu.pipeline_mode<synchronous>, transform_indices = @transform_16, window_bounds = array<i64: 2, 192, 48>}, {pipeline_mode = #tpu.pipeline_mode<synchronous>, transform_indices = @transform_17, window_bounds = array<i64: 2, 1, 48>}, {pipeline_mode = #tpu.pipeline_mode<synchronous>, transform_indices = @transform_18, window_bounds = array<i64: 1, 48>}, {pipeline_mode = #tpu.pipeline_mode<synchronous>, transform_indices = @transform_19, window_bounds = array<i64: 1, 48>}, {pipeline_mode = #tpu.pipeline_mode<synchronous>, transform_indices = @transform_20, window_bounds = array<i64: 48, 64>}, {pipeline_mode = #tpu.pipeline_mode<synchronous>, transform_indices = @transform_21, window_bounds = array<i64: 1, 64>}, {pipeline_mode = #tpu.pipeline_mode<synchronous>, transform_indices = @transform_22, window_bounds = array<i64: 64, 64>}, {pipeline_mode = #tpu.pipeline_mode<synchronous>, transform_indices = @transform_23, window_bounds = array<i64: 1, 64>}, {pipeline_mode = #tpu.pipeline_mode<synchronous>, transform_indices = @transform_24, window_bounds = array<i64: 64, 32>}, {pipeline_mode = #tpu.pipeline_mode<synchronous>, transform_indices = @transform_25, window_bounds = array<i64: 1, 32>}, {pipeline_mode = #tpu.pipeline_mode<synchronous>, transform_indices = @transform_26, window_bounds = array<i64: 32, 96>}, {pipeline_mode = #tpu.pipeline_mode<synchronous>, transform_indices = @transform_27, window_bounds = array<i64: 1, 96>}, {transform_indices = @transform_28, window_bounds = array<i64: 1, 4, 96>}]} {
    %c0 = arith.constant 0 : index
    %c0_0 = arith.constant 0 : index
    %c0_1 = arith.constant 0 : index
    %0 = vector.load %arg1[%c0, %c0_0, %c0_1] : memref<4x4x192xf32, #tpu.memory_space<vmem>>, vector<4x4x192xf32>
    %1 = vector.shape_cast %0 : vector<4x4x192xf32> to vector<16x192xf32>
    %2 = arith.truncf %1 : vector<16x192xf32> to vector<16x192xbf16>
    %c0_2 = arith.constant 0 : index
    %c0_3 = arith.constant 0 : index
    %3 = vector.load %arg4[%c0_2, %c0_3] : memref<192x48xbf16, #tpu.memory_space<vmem>>, vector<192x48xbf16>
    %cst = arith.constant dense<0.000000e+00> : vector<16x48xf32>
    %4 = tpu.matmul %2, %3, %cst {dimension_numbers = #tpu.dot_dimension_numbers<[1], [0], [0], [1], [0, 0, 1, 1], [], []>} : vector<16x192xbf16>, vector<192x48xbf16>, vector<16x48xf32> -> vector<16x48xf32>
    %c0_4 = arith.constant 0 : index
    %c0_5 = arith.constant 0 : index
    %5 = vector.load %arg5[%c0_4, %c0_5] : memref<1x48xf32, #tpu.memory_space<vmem>>, vector<1x48xf32>
    %6 = vector.broadcast %5 : vector<1x48xf32> to vector<16x48xf32>
    %7 = arith.addf %4, %6 : vector<16x48xf32>
    %8 = vector.shape_cast %7 : vector<16x48xf32> to vector<4x4x48xf32>
    %c0_6 = arith.constant 0 : index
    %c0_7 = arith.constant 0 : index
    %9 = vector.load %arg6[%c0_6, %c0_7] : memref<1x48xf32, #tpu.memory_space<vmem>>, vector<1x48xf32>
    %10 = vector.shape_cast %9 : vector<1x48xf32> to vector<1x1x48xf32>
    %11 = vector.shape_cast %10 : vector<1x1x48xf32> to vector<1x1x48xf32>
    %12 = vector.broadcast %11 : vector<1x1x48xf32> to vector<4x1x48xf32>
    %13 = tpu.concatenate %12, %8 in 1 : vector<4x1x48xf32>, vector<4x4x48xf32> -> vector<4x5x48xf32>
    %c0_8 = arith.constant 0 : index
    %c0_9 = arith.constant 0 : index
    %c0_10 = arith.constant 0 : index
    %14 = vector.load %arg2[%c0_8, %c0_9, %c0_10] : memref<4x5x48xf32, #tpu.memory_space<vmem>>, vector<4x5x48xf32>
    %15 = arith.addf %13, %14 : vector<4x5x48xf32>
    %c0_11 = arith.constant 0 : index
    %c0_12 = arith.constant 0 : index
    %c0_13 = arith.constant 0 : index
    %16 = vector.load %arg3[%c0_11, %c0_12, %c0_13] : memref<4x1x5xf32, #tpu.memory_space<vmem>>, vector<4x1x5xf32>
    %c0_14 = arith.constant 0 : index
    %c0_15 = arith.constant 0 : index
    %c0_16 = arith.constant 0 : index
    %17 = vector.load %arg7[%c0_14, %c0_15, %c0_16] : memref<2x1x48xf32, #tpu.memory_space<vmem>>, vector<1x1x48xf32>
    %18 = vector.shape_cast %17 : vector<1x1x48xf32> to vector<1x48xf32>
    %c0_17 = arith.constant 0 : index
    %c0_18 = arith.constant 0 : index
    %c0_19 = arith.constant 0 : index
    %19 = vector.load %arg8[%c0_17, %c0_18, %c0_19] : memref<2x1x48xf32, #tpu.memory_space<vmem>>, vector<1x1x48xf32>
    %20 = vector.shape_cast %19 : vector<1x1x48xf32> to vector<1x48xf32>
    %cst_20 = arith.constant dense<0.000000e+00> : vector<4x5xf32>
    %21 = vector.multi_reduction <add>, %15, %cst_20 [2] : vector<4x5x48xf32> to vector<4x5xf32>
    %22 = vector.shape_cast %21 : vector<4x5xf32> to vector<4x5x1xf32>
    %cst_21 = arith.constant 4.800000e+01 : f32
    %23 = vector.broadcast %cst_21 : f32 to vector<4x5x1xf32>
    %24 = arith.divf %22, %23 : vector<4x5x1xf32>
    %25 = vector.broadcast %24 : vector<4x5x1xf32> to vector<4x5x48xf32>
    %26 = arith.subf %15, %25 : vector<4x5x48xf32>
    %27 = arith.mulf %26, %26 : vector<4x5x48xf32>
    %cst_22 = arith.constant dense<0.000000e+00> : vector<4x5xf32>
    %28 = vector.multi_reduction <add>, %27, %cst_22 [2] : vector<4x5x48xf32> to vector<4x5xf32>
    %29 = vector.shape_cast %28 : vector<4x5xf32> to vector<4x5x1xf32>
    %cst_23 = arith.constant 4.800000e+01 : f32
    %30 = vector.broadcast %cst_23 : f32 to vector<4x5x1xf32>
    %31 = arith.divf %29, %30 : vector<4x5x1xf32>
    %cst_24 = arith.constant 9.99999997E-7 : f32
    %32 = vector.broadcast %cst_24 : f32 to vector<4x5x1xf32>
    %33 = arith.addf %31, %32 : vector<4x5x1xf32>
    %34 = math.rsqrt %33 : vector<4x5x1xf32>
    %35 = vector.broadcast %34 : vector<4x5x1xf32> to vector<4x5x48xf32>
    %36 = arith.mulf %26, %35 : vector<4x5x48xf32>
    %37 = vector.shape_cast %18 : vector<1x48xf32> to vector<1x1x48xf32>
    %38 = vector.broadcast %37 : vector<1x1x48xf32> to vector<4x5x48xf32>
    %39 = arith.mulf %36, %38 : vector<4x5x48xf32>
    %40 = vector.shape_cast %20 : vector<1x48xf32> to vector<1x1x48xf32>
    %41 = vector.broadcast %40 : vector<1x1x48xf32> to vector<4x5x48xf32>
    %42 = arith.addf %39, %41 : vector<4x5x48xf32>
    %43 = vector.shape_cast %42 : vector<4x5x48xf32> to vector<20x48xf32>
    %44 = arith.truncf %43 : vector<20x48xf32> to vector<20x48xbf16>
    %c0_25 = arith.constant 0 : index
    %c0_26 = arith.constant 0 : index
    %c0_27 = arith.constant 0 : index
    %45 = vector.load %arg9[%c0_25, %c0_26, %c0_27] : memref<2x48x144xbf16, #tpu.memory_space<vmem>>, vector<1x48x144xbf16>
    %46 = vector.shape_cast %45 : vector<1x48x144xbf16> to vector<48x144xbf16>
    %cst_28 = arith.constant dense<0.000000e+00> : vector<20x144xf32>
    %47 = tpu.matmul %44, %46, %cst_28 {dimension_numbers = #tpu.dot_dimension_numbers<[1], [0], [0], [1], [0, 0, 1, 1], [], []>} : vector<20x48xbf16>, vector<48x144xbf16>, vector<20x144xf32> -> vector<20x144xf32>
    %c0_29 = arith.constant 0 : index
    %c0_30 = arith.constant 0 : index
    %c0_31 = arith.constant 0 : index
    %48 = vector.load %arg10[%c0_29, %c0_30, %c0_31] : memref<2x1x144xf32, #tpu.memory_space<vmem>>, vector<1x1x144xf32>
    %49 = vector.shape_cast %48 : vector<1x1x144xf32> to vector<1x144xf32>
    %50 = vector.broadcast %49 : vector<1x144xf32> to vector<20x144xf32>
    %51 = arith.addf %47, %50 : vector<20x144xf32>
    %52 = vector.shape_cast %51 : vector<20x144xf32> to vector<4x5x144xf32>
    %53 = vector.extract_strided_slice %52 {offsets = [0, 0, 0], sizes = [4, 5, 16], strides = [1, 1, 1]} : vector<4x5x144xf32> to vector<4x5x16xf32>
    %54 = arith.truncf %53 : vector<4x5x16xf32> to vector<4x5x16xbf16>
    %55 = vector.extract_strided_slice %52 {offsets = [0, 0, 48], sizes = [4, 5, 16], strides = [1, 1, 1]} : vector<4x5x144xf32> to vector<4x5x16xf32>
    %56 = arith.truncf %55 : vector<4x5x16xf32> to vector<4x5x16xbf16>
    %57 = vector.extract_strided_slice %52 {offsets = [0, 0, 96], sizes = [4, 5, 16], strides = [1, 1, 1]} : vector<4x5x144xf32> to vector<4x5x16xf32>
    %58 = arith.truncf %57 : vector<4x5x16xf32> to vector<4x5x16xbf16>
    "tpu.trace_start"() <{level = 10 : i32, message = "bnd,bmd->bnm"}> : () -> ()
    %cst_32 = arith.constant dense<0.000000e+00> : vector<4x5x5xf32>
    %59 = tpu.matmul %54, %56, %cst_32 {dimension_numbers = #tpu.dot_dimension_numbers<[2], [2], [1], [1], [0, 0, 0, 1, 1, 1], [0], [0]>} : vector<4x5x16xbf16>, vector<4x5x16xbf16>, vector<4x5x5xf32> -> vector<4x5x5xf32>
    "tpu.trace_stop"() : () -> ()
    %60 = vector.broadcast %16 : vector<4x1x5xf32> to vector<4x5x5xf32>
    %61 = arith.addf %59, %60 : vector<4x5x5xf32>
    %cst_33 = arith.constant dense<0xFF800000> : vector<4x5xf32>
    %62 = vector.multi_reduction <maximumf>, %61, %cst_33 [2] : vector<4x5x5xf32> to vector<4x5xf32>
    %63 = vector.shape_cast %62 : vector<4x5xf32> to vector<4x5x1xf32>
    %64 = vector.broadcast %63 : vector<4x5x1xf32> to vector<4x5x5xf32>
    %65 = arith.subf %61, %64 : vector<4x5x5xf32>
    %66 = math.exp %65 : vector<4x5x5xf32>
    %cst_34 = arith.constant dense<0.000000e+00> : vector<4x5xf32>
    %67 = vector.multi_reduction <add>, %66, %cst_34 [2] : vector<4x5x5xf32> to vector<4x5xf32>
    %68 = vector.shape_cast %67 : vector<4x5xf32> to vector<4x5x1xf32>
    %69 = tpu.reciprocal %68 {approx = true} : vector<4x5x1xf32> -> vector<4x5x1xf32>
    %70 = vector.broadcast %69 : vector<4x5x1xf32> to vector<4x5x5xf32>
    %71 = arith.mulf %66, %70 : vector<4x5x5xf32>
    %72 = arith.truncf %71 : vector<4x5x5xf32> to vector<4x5x5xbf16>
    "tpu.trace_start"() <{level = 10 : i32, message = "bnm,bmd->bnd"}> : () -> ()
    %cst_35 = arith.constant dense<0.000000e+00> : vector<4x5x16xf32>
    %73 = tpu.matmul %72, %58, %cst_35 {dimension_numbers = #tpu.dot_dimension_numbers<[2], [1], [1], [2], [0, 0, 0, 1, 1, 2], [0], [0]>} : vector<4x5x5xbf16>, vector<4x5x16xbf16>, vector<4x5x16xf32> -> vector<4x5x16xf32>
    "tpu.trace_stop"() : () -> ()
    %74 = vector.extract_strided_slice %52 {offsets = [0, 0, 16], sizes = [4, 5, 16], strides = [1, 1, 1]} : vector<4x5x144xf32> to vector<4x5x16xf32>
    %75 = arith.truncf %74 : vector<4x5x16xf32> to vector<4x5x16xbf16>
    %76 = vector.extract_strided_slice %52 {offsets = [0, 0, 64], sizes = [4, 5, 16], strides = [1, 1, 1]} : vector<4x5x144xf32> to vector<4x5x16xf32>
    %77 = arith.truncf %76 : vector<4x5x16xf32> to vector<4x5x16xbf16>
    %78 = vector.extract_strided_slice %52 {offsets = [0, 0, 112], sizes = [4, 5, 16], strides = [1, 1, 1]} : vector<4x5x144xf32> to vector<4x5x16xf32>
    %79 = arith.truncf %78 : vector<4x5x16xf32> to vector<4x5x16xbf16>
    "tpu.trace_start"() <{level = 10 : i32, message = "bnd,bmd->bnm"}> : () -> ()
    %cst_36 = arith.constant dense<0.000000e+00> : vector<4x5x5xf32>
    %80 = tpu.matmul %75, %77, %cst_36 {dimension_numbers = #tpu.dot_dimension_numbers<[2], [2], [1], [1], [0, 0, 0, 1, 1, 1], [0], [0]>} : vector<4x5x16xbf16>, vector<4x5x16xbf16>, vector<4x5x5xf32> -> vector<4x5x5xf32>
    "tpu.trace_stop"() : () -> ()
    %81 = vector.broadcast %16 : vector<4x1x5xf32> to vector<4x5x5xf32>
    %82 = arith.addf %80, %81 : vector<4x5x5xf32>
    %cst_37 = arith.constant dense<0xFF800000> : vector<4x5xf32>
    %83 = vector.multi_reduction <maximumf>, %82, %cst_37 [2] : vector<4x5x5xf32> to vector<4x5xf32>
    %84 = vector.shape_cast %83 : vector<4x5xf32> to vector<4x5x1xf32>
    %85 = vector.broadcast %84 : vector<4x5x1xf32> to vector<4x5x5xf32>
    %86 = arith.subf %82, %85 : vector<4x5x5xf32>
    %87 = math.exp %86 : vector<4x5x5xf32>
    %cst_38 = arith.constant dense<0.000000e+00> : vector<4x5xf32>
    %88 = vector.multi_reduction <add>, %87, %cst_38 [2] : vector<4x5x5xf32> to vector<4x5xf32>
    %89 = vector.shape_cast %88 : vector<4x5xf32> to vector<4x5x1xf32>
    %90 = tpu.reciprocal %89 {approx = true} : vector<4x5x1xf32> -> vector<4x5x1xf32>
    %91 = vector.broadcast %90 : vector<4x5x1xf32> to vector<4x5x5xf32>
    %92 = arith.mulf %87, %91 : vector<4x5x5xf32>
    %93 = arith.truncf %92 : vector<4x5x5xf32> to vector<4x5x5xbf16>
    "tpu.trace_start"() <{level = 10 : i32, message = "bnm,bmd->bnd"}> : () -> ()
    %cst_39 = arith.constant dense<0.000000e+00> : vector<4x5x16xf32>
    %94 = tpu.matmul %93, %79, %cst_39 {dimension_numbers = #tpu.dot_dimension_numbers<[2], [1], [1], [2], [0, 0, 0, 1, 1, 2], [0], [0]>} : vector<4x5x5xbf16>, vector<4x5x16xbf16>, vector<4x5x16xf32> -> vector<4x5x16xf32>
    "tpu.trace_stop"() : () -> ()
    %95 = vector.extract_strided_slice %52 {offsets = [0, 0, 32], sizes = [4, 5, 16], strides = [1, 1, 1]} : vector<4x5x144xf32> to vector<4x5x16xf32>
    %96 = arith.truncf %95 : vector<4x5x16xf32> to vector<4x5x16xbf16>
    %97 = vector.extract_strided_slice %52 {offsets = [0, 0, 80], sizes = [4, 5, 16], strides = [1, 1, 1]} : vector<4x5x144xf32> to vector<4x5x16xf32>
    %98 = arith.truncf %97 : vector<4x5x16xf32> to vector<4x5x16xbf16>
    %99 = vector.extract_strided_slice %52 {offsets = [0, 0, 128], sizes = [4, 5, 16], strides = [1, 1, 1]} : vector<4x5x144xf32> to vector<4x5x16xf32>
    %100 = arith.truncf %99 : vector<4x5x16xf32> to vector<4x5x16xbf16>
    "tpu.trace_start"() <{level = 10 : i32, message = "bnd,bmd->bnm"}> : () -> ()
    %cst_40 = arith.constant dense<0.000000e+00> : vector<4x5x5xf32>
    %101 = tpu.matmul %96, %98, %cst_40 {dimension_numbers = #tpu.dot_dimension_numbers<[2], [2], [1], [1], [0, 0, 0, 1, 1, 1], [0], [0]>} : vector<4x5x16xbf16>, vector<4x5x16xbf16>, vector<4x5x5xf32> -> vector<4x5x5xf32>
    "tpu.trace_stop"() : () -> ()
    %102 = vector.broadcast %16 : vector<4x1x5xf32> to vector<4x5x5xf32>
    %103 = arith.addf %101, %102 : vector<4x5x5xf32>
    %cst_41 = arith.constant dense<0xFF800000> : vector<4x5xf32>
    %104 = vector.multi_reduction <maximumf>, %103, %cst_41 [2] : vector<4x5x5xf32> to vector<4x5xf32>
    %105 = vector.shape_cast %104 : vector<4x5xf32> to vector<4x5x1xf32>
    %106 = vector.broadcast %105 : vector<4x5x1xf32> to vector<4x5x5xf32>
    %107 = arith.subf %103, %106 : vector<4x5x5xf32>
    %108 = math.exp %107 : vector<4x5x5xf32>
    %cst_42 = arith.constant dense<0.000000e+00> : vector<4x5xf32>
    %109 = vector.multi_reduction <add>, %108, %cst_42 [2] : vector<4x5x5xf32> to vector<4x5xf32>
    %110 = vector.shape_cast %109 : vector<4x5xf32> to vector<4x5x1xf32>
    %111 = tpu.reciprocal %110 {approx = true} : vector<4x5x1xf32> -> vector<4x5x1xf32>
    %112 = vector.broadcast %111 : vector<4x5x1xf32> to vector<4x5x5xf32>
    %113 = arith.mulf %108, %112 : vector<4x5x5xf32>
    %114 = arith.truncf %113 : vector<4x5x5xf32> to vector<4x5x5xbf16>
    "tpu.trace_start"() <{level = 10 : i32, message = "bnm,bmd->bnd"}> : () -> ()
    %cst_43 = arith.constant dense<0.000000e+00> : vector<4x5x16xf32>
    %115 = tpu.matmul %114, %100, %cst_43 {dimension_numbers = #tpu.dot_dimension_numbers<[2], [1], [1], [2], [0, 0, 0, 1, 1, 2], [0], [0]>} : vector<4x5x5xbf16>, vector<4x5x16xbf16>, vector<4x5x16xf32> -> vector<4x5x16xf32>
    "tpu.trace_stop"() : () -> ()
    %116 = tpu.concatenate %73, %94, %115 in 2 : vector<4x5x16xf32>, vector<4x5x16xf32>, vector<4x5x16xf32> -> vector<4x5x48xf32>
    %117 = vector.shape_cast %116 : vector<4x5x48xf32> to vector<20x48xf32>
    %118 = arith.truncf %117 : vector<20x48xf32> to vector<20x48xbf16>
    %c0_44 = arith.constant 0 : index
    %c0_45 = arith.constant 0 : index
    %c0_46 = arith.constant 0 : index
    %119 = vector.load %arg11[%c0_44, %c0_45, %c0_46] : memref<2x48x48xbf16, #tpu.memory_space<vmem>>, vector<1x48x48xbf16>
    %120 = vector.shape_cast %119 : vector<1x48x48xbf16> to vector<48x48xbf16>
    %cst_47 = arith.constant dense<0.000000e+00> : vector<20x48xf32>
    %121 = tpu.matmul %118, %120, %cst_47 {dimension_numbers = #tpu.dot_dimension_numbers<[1], [0], [0], [1], [0, 0, 1, 1], [], []>} : vector<20x48xbf16>, vector<48x48xbf16>, vector<20x48xf32> -> vector<20x48xf32>
    %c0_48 = arith.constant 0 : index
    %c0_49 = arith.constant 0 : index
    %c0_50 = arith.constant 0 : index
    %122 = vector.load %arg12[%c0_48, %c0_49, %c0_50] : memref<2x1x48xf32, #tpu.memory_space<vmem>>, vector<1x1x48xf32>
    %123 = vector.shape_cast %122 : vector<1x1x48xf32> to vector<1x48xf32>
    %124 = vector.broadcast %123 : vector<1x48xf32> to vector<20x48xf32>
    %125 = arith.addf %121, %124 : vector<20x48xf32>
    %126 = vector.shape_cast %125 : vector<20x48xf32> to vector<4x5x48xf32>
    %127 = arith.addf %15, %126 : vector<4x5x48xf32>
    %c0_51 = arith.constant 0 : index
    %c0_52 = arith.constant 0 : index
    %c0_53 = arith.constant 0 : index
    %128 = vector.load %arg13[%c0_51, %c0_52, %c0_53] : memref<2x1x48xf32, #tpu.memory_space<vmem>>, vector<1x1x48xf32>
    %129 = vector.shape_cast %128 : vector<1x1x48xf32> to vector<1x48xf32>
    %c0_54 = arith.constant 0 : index
    %c0_55 = arith.constant 0 : index
    %c0_56 = arith.constant 0 : index
    %130 = vector.load %arg14[%c0_54, %c0_55, %c0_56] : memref<2x1x48xf32, #tpu.memory_space<vmem>>, vector<1x1x48xf32>
    %131 = vector.shape_cast %130 : vector<1x1x48xf32> to vector<1x48xf32>
    %cst_57 = arith.constant dense<0.000000e+00> : vector<4x5xf32>
    %132 = vector.multi_reduction <add>, %127, %cst_57 [2] : vector<4x5x48xf32> to vector<4x5xf32>
    %133 = vector.shape_cast %132 : vector<4x5xf32> to vector<4x5x1xf32>
    %cst_58 = arith.constant 4.800000e+01 : f32
    %134 = vector.broadcast %cst_58 : f32 to vector<4x5x1xf32>
    %135 = arith.divf %133, %134 : vector<4x5x1xf32>
    %136 = vector.broadcast %135 : vector<4x5x1xf32> to vector<4x5x48xf32>
    %137 = arith.subf %127, %136 : vector<4x5x48xf32>
    %138 = arith.mulf %137, %137 : vector<4x5x48xf32>
    %cst_59 = arith.constant dense<0.000000e+00> : vector<4x5xf32>
    %139 = vector.multi_reduction <add>, %138, %cst_59 [2] : vector<4x5x48xf32> to vector<4x5xf32>
    %140 = vector.shape_cast %139 : vector<4x5xf32> to vector<4x5x1xf32>
    %cst_60 = arith.constant 4.800000e+01 : f32
    %141 = vector.broadcast %cst_60 : f32 to vector<4x5x1xf32>
    %142 = arith.divf %140, %141 : vector<4x5x1xf32>
    %cst_61 = arith.constant 9.99999997E-7 : f32
    %143 = vector.broadcast %cst_61 : f32 to vector<4x5x1xf32>
    %144 = arith.addf %142, %143 : vector<4x5x1xf32>
    %145 = math.rsqrt %144 : vector<4x5x1xf32>
    %146 = vector.broadcast %145 : vector<4x5x1xf32> to vector<4x5x48xf32>
    %147 = arith.mulf %137, %146 : vector<4x5x48xf32>
    %148 = vector.shape_cast %129 : vector<1x48xf32> to vector<1x1x48xf32>
    %149 = vector.broadcast %148 : vector<1x1x48xf32> to vector<4x5x48xf32>
    %150 = arith.mulf %147, %149 : vector<4x5x48xf32>
    %151 = vector.shape_cast %131 : vector<1x48xf32> to vector<1x1x48xf32>
    %152 = vector.broadcast %151 : vector<1x1x48xf32> to vector<4x5x48xf32>
    %153 = arith.addf %150, %152 : vector<4x5x48xf32>
    %154 = vector.shape_cast %153 : vector<4x5x48xf32> to vector<20x48xf32>
    %155 = arith.truncf %154 : vector<20x48xf32> to vector<20x48xbf16>
    %c0_62 = arith.constant 0 : index
    %c0_63 = arith.constant 0 : index
    %c0_64 = arith.constant 0 : index
    %156 = vector.load %arg15[%c0_62, %c0_63, %c0_64] : memref<2x48x192xbf16, #tpu.memory_space<vmem>>, vector<1x48x192xbf16>
    %157 = vector.shape_cast %156 : vector<1x48x192xbf16> to vector<48x192xbf16>
    %cst_65 = arith.constant dense<0.000000e+00> : vector<20x192xf32>
    %158 = tpu.matmul %155, %157, %cst_65 {dimension_numbers = #tpu.dot_dimension_numbers<[1], [0], [0], [1], [0, 0, 1, 1], [], []>} : vector<20x48xbf16>, vector<48x192xbf16>, vector<20x192xf32> -> vector<20x192xf32>
    %c0_66 = arith.constant 0 : index
    %c0_67 = arith.constant 0 : index
    %c0_68 = arith.constant 0 : index
    %159 = vector.load %arg16[%c0_66, %c0_67, %c0_68] : memref<2x1x192xf32, #tpu.memory_space<vmem>>, vector<1x1x192xf32>
    %160 = vector.shape_cast %159 : vector<1x1x192xf32> to vector<1x192xf32>
    %161 = vector.broadcast %160 : vector<1x192xf32> to vector<20x192xf32>
    %162 = arith.addf %158, %161 : vector<20x192xf32>
    %163 = arith.mulf %162, %162 : vector<20x192xf32>
    %164 = arith.mulf %162, %163 : vector<20x192xf32>
    %cst_69 = arith.constant 4.471500e-02 : f32
    %165 = vector.broadcast %cst_69 : f32 to vector<20x192xf32>
    %166 = arith.mulf %165, %164 : vector<20x192xf32>
    %167 = arith.addf %162, %166 : vector<20x192xf32>
    %cst_70 = arith.constant 0.797884583 : f32
    %168 = vector.broadcast %cst_70 : f32 to vector<20x192xf32>
    %169 = arith.mulf %168, %167 : vector<20x192xf32>
    %170 = math.tanh %169 : vector<20x192xf32>
    %cst_71 = arith.constant 1.000000e+00 : f32
    %171 = vector.broadcast %cst_71 : f32 to vector<20x192xf32>
    %172 = arith.addf %171, %170 : vector<20x192xf32>
    %cst_72 = arith.constant 5.000000e-01 : f32
    %173 = vector.broadcast %cst_72 : f32 to vector<20x192xf32>
    %174 = arith.mulf %173, %172 : vector<20x192xf32>
    %175 = arith.mulf %162, %174 : vector<20x192xf32>
    %176 = arith.truncf %175 : vector<20x192xf32> to vector<20x192xbf16>
    %c0_73 = arith.constant 0 : index
    %c0_74 = arith.constant 0 : index
    %c0_75 = arith.constant 0 : index
    %177 = vector.load %arg17[%c0_73, %c0_74, %c0_75] : memref<2x192x48xbf16, #tpu.memory_space<vmem>>, vector<1x192x48xbf16>
    %178 = vector.shape_cast %177 : vector<1x192x48xbf16> to vector<192x48xbf16>
    %cst_76 = arith.constant dense<0.000000e+00> : vector<20x48xf32>
    %179 = tpu.matmul %176, %178, %cst_76 {dimension_numbers = #tpu.dot_dimension_numbers<[1], [0], [0], [1], [0, 0, 1, 1], [], []>} : vector<20x192xbf16>, vector<192x48xbf16>, vector<20x48xf32> -> vector<20x48xf32>
    %c0_77 = arith.constant 0 : index
    %c0_78 = arith.constant 0 : index
    %c0_79 = arith.constant 0 : index
    %180 = vector.load %arg18[%c0_77, %c0_78, %c0_79] : memref<2x1x48xf32, #tpu.memory_space<vmem>>, vector<1x1x48xf32>
    %181 = vector.shape_cast %180 : vector<1x1x48xf32> to vector<1x48xf32>
    %182 = vector.broadcast %181 : vector<1x48xf32> to vector<20x48xf32>
    %183 = arith.addf %179, %182 : vector<20x48xf32>
    %184 = vector.shape_cast %183 : vector<20x48xf32> to vector<4x5x48xf32>
    %185 = arith.addf %127, %184 : vector<4x5x48xf32>
    %c1 = arith.constant 1 : index
    %c0_80 = arith.constant 0 : index
    %c0_81 = arith.constant 0 : index
    %186 = vector.load %arg7[%c1, %c0_80, %c0_81] : memref<2x1x48xf32, #tpu.memory_space<vmem>>, vector<1x1x48xf32>
    %187 = vector.shape_cast %186 : vector<1x1x48xf32> to vector<1x48xf32>
    %c1_82 = arith.constant 1 : index
    %c0_83 = arith.constant 0 : index
    %c0_84 = arith.constant 0 : index
    %188 = vector.load %arg8[%c1_82, %c0_83, %c0_84] : memref<2x1x48xf32, #tpu.memory_space<vmem>>, vector<1x1x48xf32>
    %189 = vector.shape_cast %188 : vector<1x1x48xf32> to vector<1x48xf32>
    %cst_85 = arith.constant dense<0.000000e+00> : vector<4x5xf32>
    %190 = vector.multi_reduction <add>, %185, %cst_85 [2] : vector<4x5x48xf32> to vector<4x5xf32>
    %191 = vector.shape_cast %190 : vector<4x5xf32> to vector<4x5x1xf32>
    %cst_86 = arith.constant 4.800000e+01 : f32
    %192 = vector.broadcast %cst_86 : f32 to vector<4x5x1xf32>
    %193 = arith.divf %191, %192 : vector<4x5x1xf32>
    %194 = vector.broadcast %193 : vector<4x5x1xf32> to vector<4x5x48xf32>
    %195 = arith.subf %185, %194 : vector<4x5x48xf32>
    %196 = arith.mulf %195, %195 : vector<4x5x48xf32>
    %cst_87 = arith.constant dense<0.000000e+00> : vector<4x5xf32>
    %197 = vector.multi_reduction <add>, %196, %cst_87 [2] : vector<4x5x48xf32> to vector<4x5xf32>
    %198 = vector.shape_cast %197 : vector<4x5xf32> to vector<4x5x1xf32>
    %cst_88 = arith.constant 4.800000e+01 : f32
    %199 = vector.broadcast %cst_88 : f32 to vector<4x5x1xf32>
    %200 = arith.divf %198, %199 : vector<4x5x1xf32>
    %cst_89 = arith.constant 9.99999997E-7 : f32
    %201 = vector.broadcast %cst_89 : f32 to vector<4x5x1xf32>
    %202 = arith.addf %200, %201 : vector<4x5x1xf32>
    %203 = math.rsqrt %202 : vector<4x5x1xf32>
    %204 = vector.broadcast %203 : vector<4x5x1xf32> to vector<4x5x48xf32>
    %205 = arith.mulf %195, %204 : vector<4x5x48xf32>
    %206 = vector.shape_cast %187 : vector<1x48xf32> to vector<1x1x48xf32>
    %207 = vector.broadcast %206 : vector<1x1x48xf32> to vector<4x5x48xf32>
    %208 = arith.mulf %205, %207 : vector<4x5x48xf32>
    %209 = vector.shape_cast %189 : vector<1x48xf32> to vector<1x1x48xf32>
    %210 = vector.broadcast %209 : vector<1x1x48xf32> to vector<4x5x48xf32>
    %211 = arith.addf %208, %210 : vector<4x5x48xf32>
    %212 = vector.shape_cast %211 : vector<4x5x48xf32> to vector<20x48xf32>
    %213 = arith.truncf %212 : vector<20x48xf32> to vector<20x48xbf16>
    %c1_90 = arith.constant 1 : index
    %c0_91 = arith.constant 0 : index
    %c0_92 = arith.constant 0 : index
    %214 = vector.load %arg9[%c1_90, %c0_91, %c0_92] : memref<2x48x144xbf16, #tpu.memory_space<vmem>>, vector<1x48x144xbf16>
    %215 = vector.shape_cast %214 : vector<1x48x144xbf16> to vector<48x144xbf16>
    %cst_93 = arith.constant dense<0.000000e+00> : vector<20x144xf32>
    %216 = tpu.matmul %213, %215, %cst_93 {dimension_numbers = #tpu.dot_dimension_numbers<[1], [0], [0], [1], [0, 0, 1, 1], [], []>} : vector<20x48xbf16>, vector<48x144xbf16>, vector<20x144xf32> -> vector<20x144xf32>
    %c1_94 = arith.constant 1 : index
    %c0_95 = arith.constant 0 : index
    %c0_96 = arith.constant 0 : index
    %217 = vector.load %arg10[%c1_94, %c0_95, %c0_96] : memref<2x1x144xf32, #tpu.memory_space<vmem>>, vector<1x1x144xf32>
    %218 = vector.shape_cast %217 : vector<1x1x144xf32> to vector<1x144xf32>
    %219 = vector.broadcast %218 : vector<1x144xf32> to vector<20x144xf32>
    %220 = arith.addf %216, %219 : vector<20x144xf32>
    %221 = vector.shape_cast %220 : vector<20x144xf32> to vector<4x5x144xf32>
    %222 = vector.extract_strided_slice %221 {offsets = [0, 0, 0], sizes = [4, 5, 16], strides = [1, 1, 1]} : vector<4x5x144xf32> to vector<4x5x16xf32>
    %223 = arith.truncf %222 : vector<4x5x16xf32> to vector<4x5x16xbf16>
    %224 = vector.extract_strided_slice %221 {offsets = [0, 0, 48], sizes = [4, 5, 16], strides = [1, 1, 1]} : vector<4x5x144xf32> to vector<4x5x16xf32>
    %225 = arith.truncf %224 : vector<4x5x16xf32> to vector<4x5x16xbf16>
    %226 = vector.extract_strided_slice %221 {offsets = [0, 0, 96], sizes = [4, 5, 16], strides = [1, 1, 1]} : vector<4x5x144xf32> to vector<4x5x16xf32>
    %227 = arith.truncf %226 : vector<4x5x16xf32> to vector<4x5x16xbf16>
    "tpu.trace_start"() <{level = 10 : i32, message = "bnd,bmd->bnm"}> : () -> ()
    %cst_97 = arith.constant dense<0.000000e+00> : vector<4x5x5xf32>
    %228 = tpu.matmul %223, %225, %cst_97 {dimension_numbers = #tpu.dot_dimension_numbers<[2], [2], [1], [1], [0, 0, 0, 1, 1, 1], [0], [0]>} : vector<4x5x16xbf16>, vector<4x5x16xbf16>, vector<4x5x5xf32> -> vector<4x5x5xf32>
    "tpu.trace_stop"() : () -> ()
    %229 = vector.broadcast %16 : vector<4x1x5xf32> to vector<4x5x5xf32>
    %230 = arith.addf %228, %229 : vector<4x5x5xf32>
    %cst_98 = arith.constant dense<0xFF800000> : vector<4x5xf32>
    %231 = vector.multi_reduction <maximumf>, %230, %cst_98 [2] : vector<4x5x5xf32> to vector<4x5xf32>
    %232 = vector.shape_cast %231 : vector<4x5xf32> to vector<4x5x1xf32>
    %233 = vector.broadcast %232 : vector<4x5x1xf32> to vector<4x5x5xf32>
    %234 = arith.subf %230, %233 : vector<4x5x5xf32>
    %235 = math.exp %234 : vector<4x5x5xf32>
    %cst_99 = arith.constant dense<0.000000e+00> : vector<4x5xf32>
    %236 = vector.multi_reduction <add>, %235, %cst_99 [2] : vector<4x5x5xf32> to vector<4x5xf32>
    %237 = vector.shape_cast %236 : vector<4x5xf32> to vector<4x5x1xf32>
    %238 = tpu.reciprocal %237 {approx = true} : vector<4x5x1xf32> -> vector<4x5x1xf32>
    %239 = vector.broadcast %238 : vector<4x5x1xf32> to vector<4x5x5xf32>
    %240 = arith.mulf %235, %239 : vector<4x5x5xf32>
    %241 = arith.truncf %240 : vector<4x5x5xf32> to vector<4x5x5xbf16>
    "tpu.trace_start"() <{level = 10 : i32, message = "bnm,bmd->bnd"}> : () -> ()
    %cst_100 = arith.constant dense<0.000000e+00> : vector<4x5x16xf32>
    %242 = tpu.matmul %241, %227, %cst_100 {dimension_numbers = #tpu.dot_dimension_numbers<[2], [1], [1], [2], [0, 0, 0, 1, 1, 2], [0], [0]>} : vector<4x5x5xbf16>, vector<4x5x16xbf16>, vector<4x5x16xf32> -> vector<4x5x16xf32>
    "tpu.trace_stop"() : () -> ()
    %243 = vector.extract_strided_slice %221 {offsets = [0, 0, 16], sizes = [4, 5, 16], strides = [1, 1, 1]} : vector<4x5x144xf32> to vector<4x5x16xf32>
    %244 = arith.truncf %243 : vector<4x5x16xf32> to vector<4x5x16xbf16>
    %245 = vector.extract_strided_slice %221 {offsets = [0, 0, 64], sizes = [4, 5, 16], strides = [1, 1, 1]} : vector<4x5x144xf32> to vector<4x5x16xf32>
    %246 = arith.truncf %245 : vector<4x5x16xf32> to vector<4x5x16xbf16>
    %247 = vector.extract_strided_slice %221 {offsets = [0, 0, 112], sizes = [4, 5, 16], strides = [1, 1, 1]} : vector<4x5x144xf32> to vector<4x5x16xf32>
    %248 = arith.truncf %247 : vector<4x5x16xf32> to vector<4x5x16xbf16>
    "tpu.trace_start"() <{level = 10 : i32, message = "bnd,bmd->bnm"}> : () -> ()
    %cst_101 = arith.constant dense<0.000000e+00> : vector<4x5x5xf32>
    %249 = tpu.matmul %244, %246, %cst_101 {dimension_numbers = #tpu.dot_dimension_numbers<[2], [2], [1], [1], [0, 0, 0, 1, 1, 1], [0], [0]>} : vector<4x5x16xbf16>, vector<4x5x16xbf16>, vector<4x5x5xf32> -> vector<4x5x5xf32>
    "tpu.trace_stop"() : () -> ()
    %250 = vector.broadcast %16 : vector<4x1x5xf32> to vector<4x5x5xf32>
    %251 = arith.addf %249, %250 : vector<4x5x5xf32>
    %cst_102 = arith.constant dense<0xFF800000> : vector<4x5xf32>
    %252 = vector.multi_reduction <maximumf>, %251, %cst_102 [2] : vector<4x5x5xf32> to vector<4x5xf32>
    %253 = vector.shape_cast %252 : vector<4x5xf32> to vector<4x5x1xf32>
    %254 = vector.broadcast %253 : vector<4x5x1xf32> to vector<4x5x5xf32>
    %255 = arith.subf %251, %254 : vector<4x5x5xf32>
    %256 = math.exp %255 : vector<4x5x5xf32>
    %cst_103 = arith.constant dense<0.000000e+00> : vector<4x5xf32>
    %257 = vector.multi_reduction <add>, %256, %cst_103 [2] : vector<4x5x5xf32> to vector<4x5xf32>
    %258 = vector.shape_cast %257 : vector<4x5xf32> to vector<4x5x1xf32>
    %259 = tpu.reciprocal %258 {approx = true} : vector<4x5x1xf32> -> vector<4x5x1xf32>
    %260 = vector.broadcast %259 : vector<4x5x1xf32> to vector<4x5x5xf32>
    %261 = arith.mulf %256, %260 : vector<4x5x5xf32>
    %262 = arith.truncf %261 : vector<4x5x5xf32> to vector<4x5x5xbf16>
    "tpu.trace_start"() <{level = 10 : i32, message = "bnm,bmd->bnd"}> : () -> ()
    %cst_104 = arith.constant dense<0.000000e+00> : vector<4x5x16xf32>
    %263 = tpu.matmul %262, %248, %cst_104 {dimension_numbers = #tpu.dot_dimension_numbers<[2], [1], [1], [2], [0, 0, 0, 1, 1, 2], [0], [0]>} : vector<4x5x5xbf16>, vector<4x5x16xbf16>, vector<4x5x16xf32> -> vector<4x5x16xf32>
    "tpu.trace_stop"() : () -> ()
    %264 = vector.extract_strided_slice %221 {offsets = [0, 0, 32], sizes = [4, 5, 16], strides = [1, 1, 1]} : vector<4x5x144xf32> to vector<4x5x16xf32>
    %265 = arith.truncf %264 : vector<4x5x16xf32> to vector<4x5x16xbf16>
    %266 = vector.extract_strided_slice %221 {offsets = [0, 0, 80], sizes = [4, 5, 16], strides = [1, 1, 1]} : vector<4x5x144xf32> to vector<4x5x16xf32>
    %267 = arith.truncf %266 : vector<4x5x16xf32> to vector<4x5x16xbf16>
    %268 = vector.extract_strided_slice %221 {offsets = [0, 0, 128], sizes = [4, 5, 16], strides = [1, 1, 1]} : vector<4x5x144xf32> to vector<4x5x16xf32>
    %269 = arith.truncf %268 : vector<4x5x16xf32> to vector<4x5x16xbf16>
    "tpu.trace_start"() <{level = 10 : i32, message = "bnd,bmd->bnm"}> : () -> ()
    %cst_105 = arith.constant dense<0.000000e+00> : vector<4x5x5xf32>
    %270 = tpu.matmul %265, %267, %cst_105 {dimension_numbers = #tpu.dot_dimension_numbers<[2], [2], [1], [1], [0, 0, 0, 1, 1, 1], [0], [0]>} : vector<4x5x16xbf16>, vector<4x5x16xbf16>, vector<4x5x5xf32> -> vector<4x5x5xf32>
    "tpu.trace_stop"() : () -> ()
    %271 = vector.broadcast %16 : vector<4x1x5xf32> to vector<4x5x5xf32>
    %272 = arith.addf %270, %271 : vector<4x5x5xf32>
    %cst_106 = arith.constant dense<0xFF800000> : vector<4x5xf32>
    %273 = vector.multi_reduction <maximumf>, %272, %cst_106 [2] : vector<4x5x5xf32> to vector<4x5xf32>
    %274 = vector.shape_cast %273 : vector<4x5xf32> to vector<4x5x1xf32>
    %275 = vector.broadcast %274 : vector<4x5x1xf32> to vector<4x5x5xf32>
    %276 = arith.subf %272, %275 : vector<4x5x5xf32>
    %277 = math.exp %276 : vector<4x5x5xf32>
    %cst_107 = arith.constant dense<0.000000e+00> : vector<4x5xf32>
    %278 = vector.multi_reduction <add>, %277, %cst_107 [2] : vector<4x5x5xf32> to vector<4x5xf32>
    %279 = vector.shape_cast %278 : vector<4x5xf32> to vector<4x5x1xf32>
    %280 = tpu.reciprocal %279 {approx = true} : vector<4x5x1xf32> -> vector<4x5x1xf32>
    %281 = vector.broadcast %280 : vector<4x5x1xf32> to vector<4x5x5xf32>
    %282 = arith.mulf %277, %281 : vector<4x5x5xf32>
    %283 = arith.truncf %282 : vector<4x5x5xf32> to vector<4x5x5xbf16>
    "tpu.trace_start"() <{level = 10 : i32, message = "bnm,bmd->bnd"}> : () -> ()
    %cst_108 = arith.constant dense<0.000000e+00> : vector<4x5x16xf32>
    %284 = tpu.matmul %283, %269, %cst_108 {dimension_numbers = #tpu.dot_dimension_numbers<[2], [1], [1], [2], [0, 0, 0, 1, 1, 2], [0], [0]>} : vector<4x5x5xbf16>, vector<4x5x16xbf16>, vector<4x5x16xf32> -> vector<4x5x16xf32>
    "tpu.trace_stop"() : () -> ()
    %285 = tpu.concatenate %242, %263, %284 in 2 : vector<4x5x16xf32>, vector<4x5x16xf32>, vector<4x5x16xf32> -> vector<4x5x48xf32>
    %286 = vector.shape_cast %285 : vector<4x5x48xf32> to vector<20x48xf32>
    %287 = arith.truncf %286 : vector<20x48xf32> to vector<20x48xbf16>
    %c1_109 = arith.constant 1 : index
    %c0_110 = arith.constant 0 : index
    %c0_111 = arith.constant 0 : index
    %288 = vector.load %arg11[%c1_109, %c0_110, %c0_111] : memref<2x48x48xbf16, #tpu.memory_space<vmem>>, vector<1x48x48xbf16>
    %289 = vector.shape_cast %288 : vector<1x48x48xbf16> to vector<48x48xbf16>
    %cst_112 = arith.constant dense<0.000000e+00> : vector<20x48xf32>
    %290 = tpu.matmul %287, %289, %cst_112 {dimension_numbers = #tpu.dot_dimension_numbers<[1], [0], [0], [1], [0, 0, 1, 1], [], []>} : vector<20x48xbf16>, vector<48x48xbf16>, vector<20x48xf32> -> vector<20x48xf32>
    %c1_113 = arith.constant 1 : index
    %c0_114 = arith.constant 0 : index
    %c0_115 = arith.constant 0 : index
    %291 = vector.load %arg12[%c1_113, %c0_114, %c0_115] : memref<2x1x48xf32, #tpu.memory_space<vmem>>, vector<1x1x48xf32>
    %292 = vector.shape_cast %291 : vector<1x1x48xf32> to vector<1x48xf32>
    %293 = vector.broadcast %292 : vector<1x48xf32> to vector<20x48xf32>
    %294 = arith.addf %290, %293 : vector<20x48xf32>
    %295 = vector.shape_cast %294 : vector<20x48xf32> to vector<4x5x48xf32>
    %296 = arith.addf %185, %295 : vector<4x5x48xf32>
    %c1_116 = arith.constant 1 : index
    %c0_117 = arith.constant 0 : index
    %c0_118 = arith.constant 0 : index
    %297 = vector.load %arg13[%c1_116, %c0_117, %c0_118] : memref<2x1x48xf32, #tpu.memory_space<vmem>>, vector<1x1x48xf32>
    %298 = vector.shape_cast %297 : vector<1x1x48xf32> to vector<1x48xf32>
    %c1_119 = arith.constant 1 : index
    %c0_120 = arith.constant 0 : index
    %c0_121 = arith.constant 0 : index
    %299 = vector.load %arg14[%c1_119, %c0_120, %c0_121] : memref<2x1x48xf32, #tpu.memory_space<vmem>>, vector<1x1x48xf32>
    %300 = vector.shape_cast %299 : vector<1x1x48xf32> to vector<1x48xf32>
    %cst_122 = arith.constant dense<0.000000e+00> : vector<4x5xf32>
    %301 = vector.multi_reduction <add>, %296, %cst_122 [2] : vector<4x5x48xf32> to vector<4x5xf32>
    %302 = vector.shape_cast %301 : vector<4x5xf32> to vector<4x5x1xf32>
    %cst_123 = arith.constant 4.800000e+01 : f32
    %303 = vector.broadcast %cst_123 : f32 to vector<4x5x1xf32>
    %304 = arith.divf %302, %303 : vector<4x5x1xf32>
    %305 = vector.broadcast %304 : vector<4x5x1xf32> to vector<4x5x48xf32>
    %306 = arith.subf %296, %305 : vector<4x5x48xf32>
    %307 = arith.mulf %306, %306 : vector<4x5x48xf32>
    %cst_124 = arith.constant dense<0.000000e+00> : vector<4x5xf32>
    %308 = vector.multi_reduction <add>, %307, %cst_124 [2] : vector<4x5x48xf32> to vector<4x5xf32>
    %309 = vector.shape_cast %308 : vector<4x5xf32> to vector<4x5x1xf32>
    %cst_125 = arith.constant 4.800000e+01 : f32
    %310 = vector.broadcast %cst_125 : f32 to vector<4x5x1xf32>
    %311 = arith.divf %309, %310 : vector<4x5x1xf32>
    %cst_126 = arith.constant 9.99999997E-7 : f32
    %312 = vector.broadcast %cst_126 : f32 to vector<4x5x1xf32>
    %313 = arith.addf %311, %312 : vector<4x5x1xf32>
    %314 = math.rsqrt %313 : vector<4x5x1xf32>
    %315 = vector.broadcast %314 : vector<4x5x1xf32> to vector<4x5x48xf32>
    %316 = arith.mulf %306, %315 : vector<4x5x48xf32>
    %317 = vector.shape_cast %298 : vector<1x48xf32> to vector<1x1x48xf32>
    %318 = vector.broadcast %317 : vector<1x1x48xf32> to vector<4x5x48xf32>
    %319 = arith.mulf %316, %318 : vector<4x5x48xf32>
    %320 = vector.shape_cast %300 : vector<1x48xf32> to vector<1x1x48xf32>
    %321 = vector.broadcast %320 : vector<1x1x48xf32> to vector<4x5x48xf32>
    %322 = arith.addf %319, %321 : vector<4x5x48xf32>
    %323 = vector.shape_cast %322 : vector<4x5x48xf32> to vector<20x48xf32>
    %324 = arith.truncf %323 : vector<20x48xf32> to vector<20x48xbf16>
    %c1_127 = arith.constant 1 : index
    %c0_128 = arith.constant 0 : index
    %c0_129 = arith.constant 0 : index
    %325 = vector.load %arg15[%c1_127, %c0_128, %c0_129] : memref<2x48x192xbf16, #tpu.memory_space<vmem>>, vector<1x48x192xbf16>
    %326 = vector.shape_cast %325 : vector<1x48x192xbf16> to vector<48x192xbf16>
    %cst_130 = arith.constant dense<0.000000e+00> : vector<20x192xf32>
    %327 = tpu.matmul %324, %326, %cst_130 {dimension_numbers = #tpu.dot_dimension_numbers<[1], [0], [0], [1], [0, 0, 1, 1], [], []>} : vector<20x48xbf16>, vector<48x192xbf16>, vector<20x192xf32> -> vector<20x192xf32>
    %c1_131 = arith.constant 1 : index
    %c0_132 = arith.constant 0 : index
    %c0_133 = arith.constant 0 : index
    %328 = vector.load %arg16[%c1_131, %c0_132, %c0_133] : memref<2x1x192xf32, #tpu.memory_space<vmem>>, vector<1x1x192xf32>
    %329 = vector.shape_cast %328 : vector<1x1x192xf32> to vector<1x192xf32>
    %330 = vector.broadcast %329 : vector<1x192xf32> to vector<20x192xf32>
    %331 = arith.addf %327, %330 : vector<20x192xf32>
    %332 = arith.mulf %331, %331 : vector<20x192xf32>
    %333 = arith.mulf %331, %332 : vector<20x192xf32>
    %cst_134 = arith.constant 4.471500e-02 : f32
    %334 = vector.broadcast %cst_134 : f32 to vector<20x192xf32>
    %335 = arith.mulf %334, %333 : vector<20x192xf32>
    %336 = arith.addf %331, %335 : vector<20x192xf32>
    %cst_135 = arith.constant 0.797884583 : f32
    %337 = vector.broadcast %cst_135 : f32 to vector<20x192xf32>
    %338 = arith.mulf %337, %336 : vector<20x192xf32>
    %339 = math.tanh %338 : vector<20x192xf32>
    %cst_136 = arith.constant 1.000000e+00 : f32
    %340 = vector.broadcast %cst_136 : f32 to vector<20x192xf32>
    %341 = arith.addf %340, %339 : vector<20x192xf32>
    %cst_137 = arith.constant 5.000000e-01 : f32
    %342 = vector.broadcast %cst_137 : f32 to vector<20x192xf32>
    %343 = arith.mulf %342, %341 : vector<20x192xf32>
    %344 = arith.mulf %331, %343 : vector<20x192xf32>
    %345 = arith.truncf %344 : vector<20x192xf32> to vector<20x192xbf16>
    %c1_138 = arith.constant 1 : index
    %c0_139 = arith.constant 0 : index
    %c0_140 = arith.constant 0 : index
    %346 = vector.load %arg17[%c1_138, %c0_139, %c0_140] : memref<2x192x48xbf16, #tpu.memory_space<vmem>>, vector<1x192x48xbf16>
    %347 = vector.shape_cast %346 : vector<1x192x48xbf16> to vector<192x48xbf16>
    %cst_141 = arith.constant dense<0.000000e+00> : vector<20x48xf32>
    %348 = tpu.matmul %345, %347, %cst_141 {dimension_numbers = #tpu.dot_dimension_numbers<[1], [0], [0], [1], [0, 0, 1, 1], [], []>} : vector<20x192xbf16>, vector<192x48xbf16>, vector<20x48xf32> -> vector<20x48xf32>
    %c1_142 = arith.constant 1 : index
    %c0_143 = arith.constant 0 : index
    %c0_144 = arith.constant 0 : index
    %349 = vector.load %arg18[%c1_142, %c0_143, %c0_144] : memref<2x1x48xf32, #tpu.memory_space<vmem>>, vector<1x1x48xf32>
    %350 = vector.shape_cast %349 : vector<1x1x48xf32> to vector<1x48xf32>
    %351 = vector.broadcast %350 : vector<1x48xf32> to vector<20x48xf32>
    %352 = arith.addf %348, %351 : vector<20x48xf32>
    %353 = vector.shape_cast %352 : vector<20x48xf32> to vector<4x5x48xf32>
    %354 = arith.addf %296, %353 : vector<4x5x48xf32>
    %355 = vector.extract_strided_slice %354 {offsets = [0, 0, 0], sizes = [4, 1, 48], strides = [1, 1, 1]} : vector<4x5x48xf32> to vector<4x1x48xf32>
    %356 = vector.shape_cast %355 : vector<4x1x48xf32> to vector<4x48xf32>
    %c0_145 = arith.constant 0 : index
    %c0_146 = arith.constant 0 : index
    %357 = vector.load %arg19[%c0_145, %c0_146] : memref<1x48xf32, #tpu.memory_space<vmem>>, vector<1x48xf32>
    %c0_147 = arith.constant 0 : index
    %c0_148 = arith.constant 0 : index
    %358 = vector.load %arg20[%c0_147, %c0_148] : memref<1x48xf32, #tpu.memory_space<vmem>>, vector<1x48xf32>
    %cst_149 = arith.constant dense<0.000000e+00> : vector<4xf32>
    %359 = vector.multi_reduction <add>, %356, %cst_149 [1] : vector<4x48xf32> to vector<4xf32>
    %360 = vector.shape_cast %359 : vector<4xf32> to vector<4x1xf32>
    %cst_150 = arith.constant 4.800000e+01 : f32
    %361 = vector.broadcast %cst_150 : f32 to vector<4x1xf32>
    %362 = arith.divf %360, %361 : vector<4x1xf32>
    %363 = vector.broadcast %362 : vector<4x1xf32> to vector<4x48xf32>
    %364 = arith.subf %356, %363 : vector<4x48xf32>
    %365 = arith.mulf %364, %364 : vector<4x48xf32>
    %cst_151 = arith.constant dense<0.000000e+00> : vector<4xf32>
    %366 = vector.multi_reduction <add>, %365, %cst_151 [1] : vector<4x48xf32> to vector<4xf32>
    %367 = vector.shape_cast %366 : vector<4xf32> to vector<4x1xf32>
    %cst_152 = arith.constant 4.800000e+01 : f32
    %368 = vector.broadcast %cst_152 : f32 to vector<4x1xf32>
    %369 = arith.divf %367, %368 : vector<4x1xf32>
    %cst_153 = arith.constant 9.99999997E-7 : f32
    %370 = vector.broadcast %cst_153 : f32 to vector<4x1xf32>
    %371 = arith.addf %369, %370 : vector<4x1xf32>
    %372 = math.rsqrt %371 : vector<4x1xf32>
    %373 = vector.broadcast %372 : vector<4x1xf32> to vector<4x48xf32>
    %374 = arith.mulf %364, %373 : vector<4x48xf32>
    %375 = vector.broadcast %357 : vector<1x48xf32> to vector<4x48xf32>
    %376 = arith.mulf %374, %375 : vector<4x48xf32>
    %377 = vector.broadcast %358 : vector<1x48xf32> to vector<4x48xf32>
    %378 = arith.addf %376, %377 : vector<4x48xf32>
    %379 = arith.truncf %378 : vector<4x48xf32> to vector<4x48xbf16>
    %c0_154 = arith.constant 0 : index
    %c0_155 = arith.constant 0 : index
    %380 = vector.load %arg21[%c0_154, %c0_155] : memref<48x64xbf16, #tpu.memory_space<vmem>>, vector<48x64xbf16>
    %cst_156 = arith.constant dense<0.000000e+00> : vector<4x64xf32>
    %381 = tpu.matmul %379, %380, %cst_156 {dimension_numbers = #tpu.dot_dimension_numbers<[1], [0], [0], [1], [0, 0, 1, 1], [], []>} : vector<4x48xbf16>, vector<48x64xbf16>, vector<4x64xf32> -> vector<4x64xf32>
    %c0_157 = arith.constant 0 : index
    %c0_158 = arith.constant 0 : index
    %382 = vector.load %arg22[%c0_157, %c0_158] : memref<1x64xf32, #tpu.memory_space<vmem>>, vector<1x64xf32>
    %383 = vector.broadcast %382 : vector<1x64xf32> to vector<4x64xf32>
    %384 = arith.addf %381, %383 : vector<4x64xf32>
    %385 = arith.mulf %384, %384 : vector<4x64xf32>
    %386 = arith.mulf %384, %385 : vector<4x64xf32>
    %cst_159 = arith.constant 4.471500e-02 : f32
    %387 = vector.broadcast %cst_159 : f32 to vector<4x64xf32>
    %388 = arith.mulf %387, %386 : vector<4x64xf32>
    %389 = arith.addf %384, %388 : vector<4x64xf32>
    %cst_160 = arith.constant 0.797884583 : f32
    %390 = vector.broadcast %cst_160 : f32 to vector<4x64xf32>
    %391 = arith.mulf %390, %389 : vector<4x64xf32>
    %392 = math.tanh %391 : vector<4x64xf32>
    %cst_161 = arith.constant 1.000000e+00 : f32
    %393 = vector.broadcast %cst_161 : f32 to vector<4x64xf32>
    %394 = arith.addf %393, %392 : vector<4x64xf32>
    %cst_162 = arith.constant 5.000000e-01 : f32
    %395 = vector.broadcast %cst_162 : f32 to vector<4x64xf32>
    %396 = arith.mulf %395, %394 : vector<4x64xf32>
    %397 = arith.mulf %384, %396 : vector<4x64xf32>
    %398 = arith.truncf %397 : vector<4x64xf32> to vector<4x64xbf16>
    %c0_163 = arith.constant 0 : index
    %c0_164 = arith.constant 0 : index
    %399 = vector.load %arg23[%c0_163, %c0_164] : memref<64x64xbf16, #tpu.memory_space<vmem>>, vector<64x64xbf16>
    %cst_165 = arith.constant dense<0.000000e+00> : vector<4x64xf32>
    %400 = tpu.matmul %398, %399, %cst_165 {dimension_numbers = #tpu.dot_dimension_numbers<[1], [0], [0], [1], [0, 0, 1, 1], [], []>} : vector<4x64xbf16>, vector<64x64xbf16>, vector<4x64xf32> -> vector<4x64xf32>
    %c0_166 = arith.constant 0 : index
    %c0_167 = arith.constant 0 : index
    %401 = vector.load %arg24[%c0_166, %c0_167] : memref<1x64xf32, #tpu.memory_space<vmem>>, vector<1x64xf32>
    %402 = vector.broadcast %401 : vector<1x64xf32> to vector<4x64xf32>
    %403 = arith.addf %400, %402 : vector<4x64xf32>
    %404 = arith.mulf %403, %403 : vector<4x64xf32>
    %405 = arith.mulf %403, %404 : vector<4x64xf32>
    %cst_168 = arith.constant 4.471500e-02 : f32
    %406 = vector.broadcast %cst_168 : f32 to vector<4x64xf32>
    %407 = arith.mulf %406, %405 : vector<4x64xf32>
    %408 = arith.addf %403, %407 : vector<4x64xf32>
    %cst_169 = arith.constant 0.797884583 : f32
    %409 = vector.broadcast %cst_169 : f32 to vector<4x64xf32>
    %410 = arith.mulf %409, %408 : vector<4x64xf32>
    %411 = math.tanh %410 : vector<4x64xf32>
    %cst_170 = arith.constant 1.000000e+00 : f32
    %412 = vector.broadcast %cst_170 : f32 to vector<4x64xf32>
    %413 = arith.addf %412, %411 : vector<4x64xf32>
    %cst_171 = arith.constant 5.000000e-01 : f32
    %414 = vector.broadcast %cst_171 : f32 to vector<4x64xf32>
    %415 = arith.mulf %414, %413 : vector<4x64xf32>
    %416 = arith.mulf %403, %415 : vector<4x64xf32>
    %417 = arith.truncf %416 : vector<4x64xf32> to vector<4x64xbf16>
    %c0_172 = arith.constant 0 : index
    %c0_173 = arith.constant 0 : index
    %418 = vector.load %arg25[%c0_172, %c0_173] : memref<64x32xbf16, #tpu.memory_space<vmem>>, vector<64x32xbf16>
    %cst_174 = arith.constant dense<0.000000e+00> : vector<4x32xf32>
    %419 = tpu.matmul %417, %418, %cst_174 {dimension_numbers = #tpu.dot_dimension_numbers<[1], [0], [0], [1], [0, 0, 1, 1], [], []>} : vector<4x64xbf16>, vector<64x32xbf16>, vector<4x32xf32> -> vector<4x32xf32>
    %c0_175 = arith.constant 0 : index
    %c0_176 = arith.constant 0 : index
    %420 = vector.load %arg26[%c0_175, %c0_176] : memref<1x32xf32, #tpu.memory_space<vmem>>, vector<1x32xf32>
    %421 = vector.broadcast %420 : vector<1x32xf32> to vector<4x32xf32>
    %422 = arith.addf %419, %421 : vector<4x32xf32>
    %423 = arith.mulf %422, %422 : vector<4x32xf32>
    %cst_177 = arith.constant dense<0.000000e+00> : vector<4xf32>
    %424 = vector.multi_reduction <add>, %423, %cst_177 [1] : vector<4x32xf32> to vector<4xf32>
    %425 = vector.shape_cast %424 : vector<4xf32> to vector<4x1xf32>
    %cst_178 = arith.constant 1.000000e-24 : f32
    %426 = vector.broadcast %cst_178 : f32 to vector<4x1xf32>
    %427 = arith.maximumf %425, %426 : vector<4x1xf32>
    %428 = math.rsqrt %427 : vector<4x1xf32>
    %429 = vector.broadcast %428 : vector<4x1xf32> to vector<4x32xf32>
    %430 = arith.mulf %422, %429 : vector<4x32xf32>
    %c0_179 = arith.constant 0 : index
    %c0_180 = arith.constant 0 : index
    %431 = vector.load %arg27[%c0_179, %c0_180] : memref<32x96xf32, #tpu.memory_space<vmem>>, vector<32x96xf32>
    %432 = arith.mulf %431, %431 : vector<32x96xf32>
    %cst_181 = arith.constant dense<0.000000e+00> : vector<96xf32>
    %433 = vector.multi_reduction <add>, %432, %cst_181 [0] : vector<32x96xf32> to vector<96xf32>
    %434 = vector.shape_cast %433 : vector<96xf32> to vector<1x96xf32>
    %435 = math.rsqrt %434 : vector<1x96xf32>
    %436 = vector.broadcast %435 : vector<1x96xf32> to vector<32x96xf32>
    %437 = arith.mulf %431, %436 : vector<32x96xf32>
    %c0_182 = arith.constant 0 : index
    %c0_183 = arith.constant 0 : index
    %438 = vector.load %arg28[%c0_182, %c0_183] : memref<1x96xf32, #tpu.memory_space<vmem>>, vector<1x96xf32>
    %439 = vector.broadcast %438 : vector<1x96xf32> to vector<32x96xf32>
    %440 = arith.mulf %437, %439 : vector<32x96xf32>
    %441 = arith.truncf %440 : vector<32x96xf32> to vector<32x96xbf16>
    %442 = arith.truncf %430 : vector<4x32xf32> to vector<4x32xbf16>
    %cst_184 = arith.constant dense<0.000000e+00> : vector<4x96xf32>
    %443 = tpu.matmul %442, %441, %cst_184 {dimension_numbers = #tpu.dot_dimension_numbers<[1], [0], [0], [1], [0, 0, 1, 1], [], []>} : vector<4x32xbf16>, vector<32x96xbf16>, vector<4x96xf32> -> vector<4x96xf32>
    %c0_185 = arith.constant 0 : index
    %c0_186 = arith.constant 0 : index
    %c0_187 = arith.constant 0 : index
    %444 = vector.load %arg29[%c0_185, %c0_186, %c0_187] : memref<1x4x96xf32, #tpu.memory_space<vmem>>, vector<1x4x96xf32>
    %445 = vector.shape_cast %444 : vector<1x4x96xf32> to vector<4x96xf32>
    %446 = vector.shape_cast %443 : vector<4x96xf32> to vector<1x4x96xf32>
    tpu.vector_store %arg29[%c0_185, %c0_186, %c0_187], %446 {strides = array<i32>} : memref<1x4x96xf32, #tpu.memory_space<vmem>>, vector<1x4x96xf32>,
    return
  }
  func.func @transform_0(%arg0: i32) -> (i32, i32, i32) {
    %c0_i32 = arith.constant 0 : i32
    %c0_i32_0 = arith.constant 0 : i32
    %c0_i32_1 = arith.constant 0 : i32
    return %arg0, %c0_i32, %c0_i32_0 : i32, i32, i32
  }
  func.func @transform_1(%arg0: i32) -> (i32, i32, i32) {
    %c0_i32 = arith.constant 0 : i32
    %c0_i32_0 = arith.constant 0 : i32
    %c0_i32_1 = arith.constant 0 : i32
    return %arg0, %c0_i32, %c0_i32_0 : i32, i32, i32
  }
  func.func @transform_2(%arg0: i32) -> (i32, i32, i32) {
    %c0_i32 = arith.constant 0 : i32
    %c0_i32_0 = arith.constant 0 : i32
    %c0_i32_1 = arith.constant 0 : i32
    return %arg0, %c0_i32, %c0_i32_0 : i32, i32, i32
  }
  func.func @transform_3(%arg0: i32) -> (i32, i32) {
    %c0_i32 = arith.constant 0 : i32
    %c0_i32_0 = arith.constant 0 : i32
    %c0_i32_1 = arith.constant 0 : i32
    return %c0_i32, %c0_i32_0 : i32, i32
  }
  func.func @transform_4(%arg0: i32) -> (i32, i32) {
    %c0_i32 = arith.constant 0 : i32
    %c0_i32_0 = arith.constant 0 : i32
    %c0_i32_1 = arith.constant 0 : i32
    return %c0_i32, %c0_i32_0 : i32, i32
  }
  func.func @transform_5(%arg0: i32) -> (i32, i32) {
    %c0_i32 = arith.constant 0 : i32
    %c0_i32_0 = arith.constant 0 : i32
    %c0_i32_1 = arith.constant 0 : i32
    return %c0_i32, %c0_i32_0 : i32, i32
  }
  func.func @transform_6(%arg0: i32) -> (i32, i32, i32) {
    %c0_i32 = arith.constant 0 : i32
    %c0_i32_0 = arith.constant 0 : i32
    %c0_i32_1 = arith.constant 0 : i32
    %c0_i32_2 = arith.constant 0 : i32
    return %c0_i32, %c0_i32_0, %c0_i32_1 : i32, i32, i32
  }
  func.func @transform_7(%arg0: i32) -> (i32, i32, i32) {
    %c0_i32 = arith.constant 0 : i32
    %c0_i32_0 = arith.constant 0 : i32
    %c0_i32_1 = arith.constant 0 : i32
    %c0_i32_2 = arith.constant 0 : i32
    return %c0_i32, %c0_i32_0, %c0_i32_1 : i32, i32, i32
  }
  func.func @transform_8(%arg0: i32) -> (i32, i32, i32) {
    %c0_i32 = arith.constant 0 : i32
    %c0_i32_0 = arith.constant 0 : i32
    %c0_i32_1 = arith.constant 0 : i32
    %c0_i32_2 = arith.constant 0 : i32
    return %c0_i32, %c0_i32_0, %c0_i32_1 : i32, i32, i32
  }
  func.func @transform_9(%arg0: i32) -> (i32, i32, i32) {
    %c0_i32 = arith.constant 0 : i32
    %c0_i32_0 = arith.constant 0 : i32
    %c0_i32_1 = arith.constant 0 : i32
    %c0_i32_2 = arith.constant 0 : i32
    return %c0_i32, %c0_i32_0, %c0_i32_1 : i32, i32, i32
  }
  func.func @transform_10(%arg0: i32) -> (i32, i32, i32) {
    %c0_i32 = arith.constant 0 : i32
    %c0_i32_0 = arith.constant 0 : i32
    %c0_i32_1 = arith.constant 0 : i32
    %c0_i32_2 = arith.constant 0 : i32
    return %c0_i32, %c0_i32_0, %c0_i32_1 : i32, i32, i32
  }
  func.func @transform_11(%arg0: i32) -> (i32, i32, i32) {
    %c0_i32 = arith.constant 0 : i32
    %c0_i32_0 = arith.constant 0 : i32
    %c0_i32_1 = arith.constant 0 : i32
    %c0_i32_2 = arith.constant 0 : i32
    return %c0_i32, %c0_i32_0, %c0_i32_1 : i32, i32, i32
  }
  func.func @transform_12(%arg0: i32) -> (i32, i32, i32) {
    %c0_i32 = arith.constant 0 : i32
    %c0_i32_0 = arith.constant 0 : i32
    %c0_i32_1 = arith.constant 0 : i32
    %c0_i32_2 = arith.constant 0 : i32
    return %c0_i32, %c0_i32_0, %c0_i32_1 : i32, i32, i32
  }
  func.func @transform_13(%arg0: i32) -> (i32, i32, i32) {
    %c0_i32 = arith.constant 0 : i32
    %c0_i32_0 = arith.constant 0 : i32
    %c0_i32_1 = arith.constant 0 : i32
    %c0_i32_2 = arith.constant 0 : i32
    return %c0_i32, %c0_i32_0, %c0_i32_1 : i32, i32, i32
  }
  func.func @transform_14(%arg0: i32) -> (i32, i32, i32) {
    %c0_i32 = arith.constant 0 : i32
    %c0_i32_0 = arith.constant 0 : i32
    %c0_i32_1 = arith.constant 0 : i32
    %c0_i32_2 = arith.constant 0 : i32
    return %c0_i32, %c0_i32_0, %c0_i32_1 : i32, i32, i32
  }
  func.func @transform_15(%arg0: i32) -> (i32, i32, i32) {
    %c0_i32 = arith.constant 0 : i32
    %c0_i32_0 = arith.constant 0 : i32
    %c0_i32_1 = arith.constant 0 : i32
    %c0_i32_2 = arith.constant 0 : i32
    return %c0_i32, %c0_i32_0, %c0_i32_1 : i32, i32, i32
  }
  func.func @transform_16(%arg0: i32) -> (i32, i32, i32) {
    %c0_i32 = arith.constant 0 : i32
    %c0_i32_0 = arith.constant 0 : i32
    %c0_i32_1 = arith.constant 0 : i32
    %c0_i32_2 = arith.constant 0 : i32
    return %c0_i32, %c0_i32_0, %c0_i32_1 : i32, i32, i32
  }
  func.func @transform_17(%arg0: i32) -> (i32, i32, i32) {
    %c0_i32 = arith.constant 0 : i32
    %c0_i32_0 = arith.constant 0 : i32
    %c0_i32_1 = arith.constant 0 : i32
    %c0_i32_2 = arith.constant 0 : i32
    return %c0_i32, %c0_i32_0, %c0_i32_1 : i32, i32, i32
  }
  func.func @transform_18(%arg0: i32) -> (i32, i32) {
    %c0_i32 = arith.constant 0 : i32
    %c0_i32_0 = arith.constant 0 : i32
    %c0_i32_1 = arith.constant 0 : i32
    return %c0_i32, %c0_i32_0 : i32, i32
  }
  func.func @transform_19(%arg0: i32) -> (i32, i32) {
    %c0_i32 = arith.constant 0 : i32
    %c0_i32_0 = arith.constant 0 : i32
    %c0_i32_1 = arith.constant 0 : i32
    return %c0_i32, %c0_i32_0 : i32, i32
  }
  func.func @transform_20(%arg0: i32) -> (i32, i32) {
    %c0_i32 = arith.constant 0 : i32
    %c0_i32_0 = arith.constant 0 : i32
    %c0_i32_1 = arith.constant 0 : i32
    return %c0_i32, %c0_i32_0 : i32, i32
  }
  func.func @transform_21(%arg0: i32) -> (i32, i32) {
    %c0_i32 = arith.constant 0 : i32
    %c0_i32_0 = arith.constant 0 : i32
    %c0_i32_1 = arith.constant 0 : i32
    return %c0_i32, %c0_i32_0 : i32, i32
  }
  func.func @transform_22(%arg0: i32) -> (i32, i32) {
    %c0_i32 = arith.constant 0 : i32
    %c0_i32_0 = arith.constant 0 : i32
    %c0_i32_1 = arith.constant 0 : i32
    return %c0_i32, %c0_i32_0 : i32, i32
  }
  func.func @transform_23(%arg0: i32) -> (i32, i32) {
    %c0_i32 = arith.constant 0 : i32
    %c0_i32_0 = arith.constant 0 : i32
    %c0_i32_1 = arith.constant 0 : i32
    return %c0_i32, %c0_i32_0 : i32, i32
  }
  func.func @transform_24(%arg0: i32) -> (i32, i32) {
    %c0_i32 = arith.constant 0 : i32
    %c0_i32_0 = arith.constant 0 : i32
    %c0_i32_1 = arith.constant 0 : i32
    return %c0_i32, %c0_i32_0 : i32, i32
  }
  func.func @transform_25(%arg0: i32) -> (i32, i32) {
    %c0_i32 = arith.constant 0 : i32
    %c0_i32_0 = arith.constant 0 : i32
    %c0_i32_1 = arith.constant 0 : i32
    return %c0_i32, %c0_i32_0 : i32, i32
  }
  func.func @transform_26(%arg0: i32) -> (i32, i32) {
    %c0_i32 = arith.constant 0 : i32
    %c0_i32_0 = arith.constant 0 : i32
    %c0_i32_1 = arith.constant 0 : i32
    return %c0_i32, %c0_i32_0 : i32, i32
  }
  func.func @transform_27(%arg0: i32) -> (i32, i32) {
    %c0_i32 = arith.constant 0 : i32
    %c0_i32_0 = arith.constant 0 : i32
    %c0_i32_1 = arith.constant 0 : i32
    return %c0_i32, %c0_i32_0 : i32, i32
  }
  func.func @transform_28(%arg0: i32) -> (i32, i32, i32) {
    %c0_i32 = arith.constant 0 : i32
    %c0_i32_0 = arith.constant 0 : i32
    %c0_i32_1 = arith.constant 0 : i32
    return %arg0, %c0_i32, %c0_i32_0 : i32, i32, i32
  }
}

</mosaic_0001>

<llo_original>
// kernel: tpu_custom_call.1
$region0: #{tpu_custom_call.1}
  #allocation0 [shape = 'u32[]', space=smem, size = 0x4, offset = 0x4, fixed_abs, tag = 'smem constant byte address 0x4 - core index']
  #allocation1 [shape = 'u32[144,128]{1,0:T(1,128)}', space=vmem, size = 0x12000, scoped, tag = 'internal scratch']
  %s0 = inlined_call_operand.vmem [shape: f32[8,4,192], index: 0, kind: input, shape index: {}]
  %s1 = inlined_call_operand.vmem [shape: f32[8,5,48], index: 1, kind: input, shape index: {}]
  %s2 = inlined_call_operand.vmem [shape: f32[8,1,5], index: 2, kind: input, shape index: {}]
  %s3 = inlined_call_operand.vmem [shape: bf16[192,48], index: 3, kind: input, shape index: {}]
  %s4 = inlined_call_operand.vmem [shape: f32[1,48], index: 4, kind: input, shape index: {}]
  %s5 = inlined_call_operand.vmem [shape: f32[1,48], index: 5, kind: input, shape index: {}]
  %s6 = inlined_call_operand.vmem [shape: f32[2,1,48], index: 6, kind: input, shape index: {}]
  %s7 = inlined_call_operand.vmem [shape: f32[2,1,48], index: 7, kind: input, shape index: {}]
  %s8 = inlined_call_operand.vmem [shape: bf16[2,48,144], index: 8, kind: input, shape index: {}]
  %s9 = inlined_call_operand.vmem [shape: f32[2,1,144], index: 9, kind: input, shape index: {}]
  %s10 = inlined_call_operand.vmem [shape: bf16[2,48,48], index: 10, kind: input, shape index: {}]
  %s11 = inlined_call_operand.vmem [shape: f32[2,1,48], index: 11, kind: input, shape index: {}]
  %s12 = inlined_call_operand.vmem [shape: f32[2,1,48], index: 12, kind: input, shape index: {}]
  %s13 = inlined_call_operand.vmem [shape: f32[2,1,48], index: 13, kind: input, shape index: {}]
  %s14 = inlined_call_operand.vmem [shape: bf16[2,48,192], index: 14, kind: input, shape index: {}]
  %s15 = inlined_call_operand.vmem [shape: f32[2,1,192], index: 15, kind: input, shape index: {}]
  %s16 = inlined_call_operand.vmem [shape: bf16[2,192,48], index: 16, kind: input, shape index: {}]
  %s17 = inlined_call_operand.vmem [shape: f32[2,1,48], index: 17, kind: input, shape index: {}]
  %s18 = inlined_call_operand.vmem [shape: f32[1,48], index: 18, kind: input, shape index: {}]
  %s19 = inlined_call_operand.vmem [shape: f32[1,48], index: 19, kind: input, shape index: {}]
  %s20 = inlined_call_operand.vmem [shape: bf16[48,64], index: 20, kind: input, shape index: {}]
  %s21 = inlined_call_operand.vmem [shape: f32[1,64], index: 21, kind: input, shape index: {}]
  %s22 = inlined_call_operand.vmem [shape: bf16[64,64], index: 22, kind: input, shape index: {}]
  %s23 = inlined_call_operand.vmem [shape: f32[1,64], index: 23, kind: input, shape index: {}]
  %s24 = inlined_call_operand.vmem [shape: bf16[64,32], index: 24, kind: input, shape index: {}]
  %s25 = inlined_call_operand.vmem [shape: f32[1,32], index: 25, kind: input, shape index: {}]
  %s26 = inlined_call_operand.vmem [shape: f32[32,96], index: 26, kind: input, shape index: {}]
  %s27 = inlined_call_operand.vmem [shape: f32[1,96], index: 27, kind: input, shape index: {}]
  %s28 = inlined_call_operand.hbm [shape: f32[2,4,96], index: 28, kind: output, shape index: {}]
  %s29 = sld [smem:[#allocation0]]
  $region145: #{tpu_custom_call.1} parent=0
    _
  %s31 = ssub.s32 1, %s29
  %s32 = scalar_select 0, %s31, %s29
  $region1: #{tpu_custom_call.1} parent=0
    #allocation2 [shape = 'u8[4096]{0}', space=vmem, size = 0x1000, scoped, tag = 'output window, operand 0']
    #allocation3 [shape = 's32[2]{0}', space=sflag, size = 0x8, scoped, tag = 'scoped memory for tpu_custom_call.1']
    %33 = vsyncpa [#allocation3], 0
    %s34 = scalar_lea.sflag [#allocation3], 1
    %35 = vsyncpa %s34, 0
    loop: start=0, step=1, limit=4
    $region2: #{tpu_custom_call.1} parent=1 // loop_pre_header
      _
    $region3: #{tpu_custom_call.1} parent=1 // loop_header
      %s37 = sphi 0, %s41
      %p38 = scmp.ge.s32.totalorder %s37, 4
      %s47 = sphi 0, %s49
      %s50 = sphi 0, %s47
      %s51 = sphi 0, %s50
      %s67 = sphi 0, %s51
      %s73 = sphi 0, %s75
      %s76 = sphi 0, %s73
      %s77 = sphi 0, %s76
      %s93 = sphi 0, %s77
      %s99 = sphi 0, %s101
      %s102 = sphi 0, %s99
      %s103 = sphi 0, %s102
      %s119 = sphi 0, %s103
      %s123 = sphi 0, %s123
      %s125 = sphi 0, %s123
      %s126 = sphi 0, %s125
      %s140 = sphi 0, %s126
      %s144 = sphi 0, %s144
      %s146 = sphi 0, %s144
      %s147 = sphi 0, %s146
      %s161 = sphi 0, %s147
      %s165 = sphi 0, %s165
      %s167 = sphi 0, %s165
      %s168 = sphi 0, %s167
      %s182 = sphi 0, %s168
      %s186 = sphi 0, %s186
      %s188 = sphi 0, %s186
      %s189 = sphi 0, %s188
      %s203 = sphi 0, %s189
      %s207 = sphi 0, %s207
      %s209 = sphi 0, %s207
      %s210 = sphi 0, %s209
      %s224 = sphi 0, %s210
      %s228 = sphi 0, %s228
      %s230 = sphi 0, %s228
      %s231 = sphi 0, %s230
      %s245 = sphi 0, %s231
      %s249 = sphi 0, %s249
      %s251 = sphi 0, %s249
      %s252 = sphi 0, %s251
      %s266 = sphi 0, %s252
      %s270 = sphi 0, %s270
      %s272 = sphi 0, %s270
      %s273 = sphi 0, %s272
      %s287 = sphi 0, %s273
      %s291 = sphi 0, %s291
      %s293 = sphi 0, %s291
      %s294 = sphi 0, %s293
      %s308 = sphi 0, %s294
      %s312 = sphi 0, %s312
      %s314 = sphi 0, %s312
      %s315 = sphi 0, %s314
      %s329 = sphi 0, %s315
      %s333 = sphi 0, %s333
      %s335 = sphi 0, %s333
      %s336 = sphi 0, %s335
      %s350 = sphi 0, %s336
      %s354 = sphi 0, %s354
      %s356 = sphi 0, %s354
      %s357 = sphi 0, %s356
      %s371 = sphi 0, %s357
      %s375 = sphi 0, %s375
      %s377 = sphi 0, %s375
      %s378 = sphi 0, %s377
      %s392 = sphi 0, %s378
      %s396 = sphi 0, %s396
      %s398 = sphi 0, %s396
      %s399 = sphi 0, %s398
      %s413 = sphi 0, %s399
      %s417 = sphi 0, %s417
      %s419 = sphi 0, %s417
      %s420 = sphi 0, %s419
      %s434 = sphi 0, %s420
      %s438 = sphi 0, %s438
      %s440 = sphi 0, %s438
      %s441 = sphi 0, %s440
      %s455 = sphi 0, %s441
      %s459 = sphi 0, %s459
      %s461 = sphi 0, %s459
      %s462 = sphi 0, %s461
      %s476 = sphi 0, %s462
      %s480 = sphi 0, %s480
      %s482 = sphi 0, %s480
      %s483 = sphi 0, %s482
      %s497 = sphi 0, %s483
      %s501 = sphi 0, %s501
      %s503 = sphi 0, %s501
      %s504 = sphi 0, %s503
      %s518 = sphi 0, %s504
      %s522 = sphi 0, %s522
      %s524 = sphi 0, %s522
      %s525 = sphi 0, %s524
      %s539 = sphi 0, %s525
      %s543 = sphi 0, %s543
      %s545 = sphi 0, %s543
      %s546 = sphi 0, %s545
      %s560 = sphi 0, %s546
      %s564 = sphi 0, %s564
      %s566 = sphi 0, %s564
      %s567 = sphi 0, %s566
      %s581 = sphi 0, %s567
      %s585 = sphi 0, %s585
      %s587 = sphi 0, %s585
      %s588 = sphi 0, %s587
      %s602 = sphi 0, %s588
      %s606 = sphi 0, %s606
      %s608 = sphi 0, %s606
      %s609 = sphi 0, %s608
      %s623 = sphi 0, %s609
      %s627 = sphi 0, %s627
      %s629 = sphi 0, %s627
      %s630 = sphi 0, %s629
      %s644 = sphi 0, %s630
      %s650 = sphi 0, %s652
      %s653 = sphi 0, %s650
      %s654 = sphi 0, %s653
      %s670 = sphi 0, %s654
    $region4: #{tpu_custom_call.1} parent=1 // loop_header_branch
      %40 = sbr.rel (%p38) target = $region8
    $region5: #{tpu_custom_call.1} parent=1 // loop_body
      %s42 = ssub.s32 %s37, 1
      %s43 = ssub.s32 %s37, 2
      %s44 = sadd.s32 %s37, 1
      %s45 = ssub.s32 %s37, %s44
      %p46 = scmp.eq.s32.totalorder %s45, 0
      %s48 = sadd.s32 %s47, 1
      %s49 = scalar_select %p46, %s47, %s48
      %p52 = pneg %p46
      %p53 = scmp.eq.s32.totalorder %s37, 1
      %p54 = por %p52, %p53
      %p55 = scmp.ne.s32.totalorder %s47, %s50
      %p56 = scmp.eq.s32.totalorder %s37, 0
      %p57 = por %p55, %p56
      %p58 = scmp.ne.s32.totalorder %s47, %s50
      %p59 = scmp.eq.s32.totalorder %s42, 1
      %p60 = por %p58, %p59
      %p61 = scmp.ne.s32.totalorder %s50, %s51
      %p62 = scmp.eq.s32.totalorder %s42, 0
      %p63 = por %p61, %p62
      %p64 = scmp.ne.s32.totalorder %s50, %s51
      %p65 = scmp.eq.s32.totalorder %s43, 1
      %p66 = por %p64, %p65
      %p68 = scmp.ne.s32.totalorder %s51, %s67
      %p69 = scmp.eq.s32.totalorder %s43, 0
      %p70 = por %p68, %p69
      %s71 = ssub.s32 %s37, %s44
      %p72 = scmp.eq.s32.totalorder %s71, 0
      %s74 = sadd.s32 %s73, 1
      %s75 = scalar_select %p72, %s73, %s74
      %p78 = pneg %p72
      %p79 = scmp.eq.s32.totalorder %s37, 1
      %p80 = por %p78, %p79
      %p81 = scmp.ne.s32.totalorder %s73, %s76
      %p82 = scmp.eq.s32.totalorder %s37, 0
      %p83 = por %p81, %p82
      %p84 = scmp.ne.s32.totalorder %s73, %s76
      %p85 = scmp.eq.s32.totalorder %s42, 1
      %p86 = por %p84, %p85
      %p87 = scmp.ne.s32.totalorder %s76, %s77
      %p88 = scmp.eq.s32.totalorder %s42, 0
      %p89 = por %p87, %p88
      %p90 = scmp.ne.s32.totalorder %s76, %s77
      %p91 = scmp.eq.s32.totalorder %s43, 1
      %p92 = por %p90, %p91
      %p94 = scmp.ne.s32.totalorder %s77, %s93
      %p95 = scmp.eq.s32.totalorder %s43, 0
      %p96 = por %p94, %p95
      %s97 = ssub.s32 %s37, %s44
      %p98 = scmp.eq.s32.totalorder %s97, 0
      %s100 = sadd.s32 %s99, 1
      %s101 = scalar_select %p98, %s99, %s100
      %p104 = pneg %p98
      %p105 = scmp.eq.s32.totalorder %s37, 1
      %p106 = por %p104, %p105
      %p107 = scmp.ne.s32.totalorder %s99, %s102
      %p108 = scmp.eq.s32.totalorder %s37, 0
      %p109 = por %p107, %p108
      %p110 = scmp.ne.s32.totalorder %s99, %s102
      %p111 = scmp.eq.s32.totalorder %s42, 1
      %p112 = por %p110, %p111
      %p113 = scmp.ne.s32.totalorder %s102, %s103
      %p114 = scmp.eq.s32.totalorder %s42, 0
      %p115 = por %p113, %p114
      %p116 = scmp.ne.s32.totalorder %s102, %s103
      %p117 = scmp.eq.s32.totalorder %s43, 1
      %p118 = por %p116, %p117
      %p120 = scmp.ne.s32.totalorder %s103, %s119
      %p121 = scmp.eq.s32.totalorder %s43, 0
      %p122 = por %p120, %p121
      %s124 = sadd.s32 %s123, 1
      %p127 = scmp.eq.s32.totalorder %s37, 1
      %p128 = scmp.ne.s32.totalorder %s123, %s125
      %p129 = scmp.eq.s32.totalorder %s37, 0
      %p130 = por %p128, %p129
      %p131 = scmp.ne.s32.totalorder %s123, %s125
      %p132 = scmp.eq.s32.totalorder %s42, 1
      %p133 = por %p131, %p132
      %p134 = scmp.ne.s32.totalorder %s125, %s126
      %p135 = scmp.eq.s32.totalorder %s42, 0
      %p136 = por %p134, %p135
      %p137 = scmp.ne.s32.totalorder %s125, %s126
      %p138 = scmp.eq.s32.totalorder %s43, 1
      %p139 = por %p137, %p138
      %p141 = scmp.ne.s32.totalorder %s126, %s140
      %p142 = scmp.eq.s32.totalorder %s43, 0
      %p143 = por %p141, %p142
      %s145 = sadd.s32 %s144, 1
      %p148 = scmp.eq.s32.totalorder %s37, 1
      %p149 = scmp.ne.s32.totalorder %s144, %s146
      %p150 = scmp.eq.s32.totalorder %s37, 0
      %p151 = por %p149, %p150
      %p152 = scmp.ne.s32.totalorder %s144, %s146
      %p153 = scmp.eq.s32.totalorder %s42, 1
      %p154 = por %p152, %p153
      %p155 = scmp.ne.s32.totalorder %s146, %s147
      %p156 = scmp.eq.s32.totalorder %s42, 0
      %p157 = por %p155, %p156
      %p158 = scmp.ne.s32.totalorder %s146, %s147
      %p159 = scmp.eq.s32.totalorder %s43, 1
      %p160 = por %p158, %p159
      %p162 = scmp.ne.s32.totalorder %s147, %s161
      %p163 = scmp.eq.s32.totalorder %s43, 0
      %p164 = por %p162, %p163
      %s166 = sadd.s32 %s165, 1
      %p169 = scmp.eq.s32.totalorder %s37, 1
      %p170 = scmp.ne.s32.totalorder %s165, %s167
      %p171 = scmp.eq.s32.totalorder %s37, 0
      %p172 = por %p170, %p171
      %p173 = scmp.ne.s32.totalorder %s165, %s167
      %p174 = scmp.eq.s32.totalorder %s42, 1
      %p175 = por %p173, %p174
      %p176 = scmp.ne.s32.totalorder %s167, %s168
      %p177 = scmp.eq.s32.totalorder %s42, 0
      %p178 = por %p176, %p177
      %p179 = scmp.ne.s32.totalorder %s167, %s168
      %p180 = scmp.eq.s32.totalorder %s43, 1
      %p181 = por %p179, %p180
      %p183 = scmp.ne.s32.totalorder %s168, %s182
      %p184 = scmp.eq.s32.totalorder %s43, 0
      %p185 = por %p183, %p184
      %s187 = sadd.s32 %s186, 1
      %p190 = scmp.eq.s32.totalorder %s37, 1
      %p191 = scmp.ne.s32.totalorder %s186, %s188
      %p192 = scmp.eq.s32.totalorder %s37, 0
      %p193 = por %p191, %p192
      %p194 = scmp.ne.s32.totalorder %s186, %s188
      %p195 = scmp.eq.s32.totalorder %s42, 1
      %p196 = por %p194, %p195
      %p197 = scmp.ne.s32.totalorder %s188, %s189
      %p198 = scmp.eq.s32.totalorder %s42, 0
      %p199 = por %p197, %p198
      %p200 = scmp.ne.s32.totalorder %s188, %s189
      %p201 = scmp.eq.s32.totalorder %s43, 1
      %p202 = por %p200, %p201
      %p204 = scmp.ne.s32.totalorder %s189, %s203
      %p205 = scmp.eq.s32.totalorder %s43, 0
      %p206 = por %p204, %p205
      %s208 = sadd.s32 %s207, 1
      %p211 = scmp.eq.s32.totalorder %s37, 1
      %p212 = scmp.ne.s32.totalorder %s207, %s209
      %p213 = scmp.eq.s32.totalorder %s37, 0
      %p214 = por %p212, %p213
      %p215 = scmp.ne.s32.totalorder %s207, %s209
      %p216 = scmp.eq.s32.totalorder %s42, 1
      %p217 = por %p215, %p216
      %p218 = scmp.ne.s32.totalorder %s209, %s210
      %p219 = scmp.eq.s32.totalorder %s42, 0
      %p220 = por %p218, %p219
      %p221 = scmp.ne.s32.totalorder %s209, %s210
      %p222 = scmp.eq.s32.totalorder %s43, 1
      %p223 = por %p221, %p222
      %p225 = scmp.ne.s32.totalorder %s210, %s224
      %p226 = scmp.eq.s32.totalorder %s43, 0
      %p227 = por %p225, %p226
      %s229 = sadd.s32 %s228, 1
      %p232 = scmp.eq.s32.totalorder %s37, 1
      %p233 = scmp.ne.s32.totalorder %s228, %s230
      %p234 = scmp.eq.s32.totalorder %s37, 0
      %p235 = por %p233, %p234
      %p236 = scmp.ne.s32.totalorder %s228, %s230
      %p237 = scmp.eq.s32.totalorder %s42, 1
      %p238 = por %p236, %p237
      %p239 = scmp.ne.s32.totalorder %s230, %s231
      %p240 = scmp.eq.s32.totalorder %s42, 0
      %p241 = por %p239, %p240
      %p242 = scmp.ne.s32.totalorder %s230, %s231
      %p243 = scmp.eq.s32.totalorder %s43, 1
      %p244 = por %p242, %p243
      %p246 = scmp.ne.s32.totalorder %s231, %s245
      %p247 = scmp.eq.s32.totalorder %s43, 0
      %p248 = por %p246, %p247
      %s250 = sadd.s32 %s249, 1
      %p253 = scmp.eq.s32.totalorder %s37, 1
      %p254 = scmp.ne.s32.totalorder %s249, %s251
      %p255 = scmp.eq.s32.totalorder %s37, 0
      %p256 = por %p254, %p255
      %p257 = scmp.ne.s32.totalorder %s249, %s251
      %p258 = scmp.eq.s32.totalorder %s42, 1
      %p259 = por %p257, %p258
      %p260 = scmp.ne.s32.totalorder %s251, %s252
      %p261 = scmp.eq.s32.totalorder %s42, 0
      %p262 = por %p260, %p261
      %p263 = scmp.ne.s32.totalorder %s251, %s252
      %p264 = scmp.eq.s32.totalorder %s43, 1
      %p265 = por %p263, %p264
      %p267 = scmp.ne.s32.totalorder %s252, %s266
      %p268 = scmp.eq.s32.totalorder %s43, 0
      %p269 = por %p267, %p268
      %s271 = sadd.s32 %s270, 1
      %p274 = scmp.eq.s32.totalorder %s37, 1
      %p275 = scmp.ne.s32.totalorder %s270, %s272
      %p276 = scmp.eq.s32.totalorder %s37, 0
      %p277 = por %p275, %p276
      %p278 = scmp.ne.s32.totalorder %s270, %s272
      %p279 = scmp.eq.s32.totalorder %s42, 1
      %p280 = por %p278, %p279
      %p281 = scmp.ne.s32.totalorder %s272, %s273
      %p282 = scmp.eq.s32.totalorder %s42, 0
      %p283 = por %p281, %p282
      %p284 = scmp.ne.s32.totalorder %s272, %s273
      %p285 = scmp.eq.s32.totalorder %s43, 1
      %p286 = por %p284, %p285
      %p288 = scmp.ne.s32.totalorder %s273, %s287
      %p289 = scmp.eq.s32.totalorder %s43, 0
      %p290 = por %p288, %p289
      %s292 = sadd.s32 %s291, 1
      %p295 = scmp.eq.s32.totalorder %s37, 1
      %p296 = scmp.ne.s32.totalorder %s291, %s293
      %p297 = scmp.eq.s32.totalorder %s37, 0
      %p298 = por %p296, %p297
      %p299 = scmp.ne.s32.totalorder %s291, %s293
      %p300 = scmp.eq.s32.totalorder %s42, 1
      %p301 = por %p299, %p300
      %p302 = scmp.ne.s32.totalorder %s293, %s294
      %p303 = scmp.eq.s32.totalorder %s42, 0
      %p304 = por %p302, %p303
      %p305 = scmp.ne.s32.totalorder %s293, %s294
      %p306 = scmp.eq.s32.totalorder %s43, 1
      %p307 = por %p305, %p306
      %p309 = scmp.ne.s32.totalorder %s294, %s308
      %p310 = scmp.eq.s32.totalorder %s43, 0
      %p311 = por %p309, %p310
      %s313 = sadd.s32 %s312, 1
      %p316 = scmp.eq.s32.totalorder %s37, 1
      %p317 = scmp.ne.s32.totalorder %s312, %s314
      %p318 = scmp.eq.s32.totalorder %s37, 0
      %p319 = por %p317, %p318
      %p320 = scmp.ne.s32.totalorder %s312, %s314
      %p321 = scmp.eq.s32.totalorder %s42, 1
      %p322 = por %p320, %p321
      %p323 = scmp.ne.s32.totalorder %s314, %s315
      %p324 = scmp.eq.s32.totalorder %s42, 0
      %p325 = por %p323, %p324
      %p326 = scmp.ne.s32.totalorder %s314, %s315
      %p327 = scmp.eq.s32.totalorder %s43, 1
      %p328 = por %p326, %p327
      %p330 = scmp.ne.s32.totalorder %s315, %s329
      %p331 = scmp.eq.s32.totalorder %s43, 0
      %p332 = por %p330, %p331
      %s334 = sadd.s32 %s333, 1
      %p337 = scmp.eq.s32.totalorder %s37, 1
      %p338 = scmp.ne.s32.totalorder %s333, %s335
      %p339 = scmp.eq.s32.totalorder %s37, 0
      %p340 = por %p338, %p339
      %p341 = scmp.ne.s32.totalorder %s333, %s335
      %p342 = scmp.eq.s32.totalorder %s42, 1
      %p343 = por %p341, %p342
      %p344 = scmp.ne.s32.totalorder %s335, %s336
      %p345 = scmp.eq.s32.totalorder %s42, 0
      %p346 = por %p344, %p345
      %p347 = scmp.ne.s32.totalorder %s335, %s336
      %p348 = scmp.eq.s32.totalorder %s43, 1
      %p349 = por %p347, %p348
      %p351 = scmp.ne.s32.totalorder %s336, %s350
      %p352 = scmp.eq.s32.totalorder %s43, 0
      %p353 = por %p351, %p352
      %s355 = sadd.s32 %s354, 1
      %p358 = scmp.eq.s32.totalorder %s37, 1
      %p359 = scmp.ne.s32.totalorder %s354, %s356
      %p360 = scmp.eq.s32.totalorder %s37, 0
      %p361 = por %p359, %p360
      %p362 = scmp.ne.s32.totalorder %s354, %s356
      %p363 = scmp.eq.s32.totalorder %s42, 1
      %p364 = por %p362, %p363
      %p365 = scmp.ne.s32.totalorder %s356, %s357
      %p366 = scmp.eq.s32.totalorder %s42, 0
      %p367 = por %p365, %p366
      %p368 = scmp.ne.s32.totalorder %s356, %s357
      %p369 = scmp.eq.s32.totalorder %s43, 1
      %p370 = por %p368, %p369
      %p372 = scmp.ne.s32.totalorder %s357, %s371
      %p373 = scmp.eq.s32.totalorder %s43, 0
      %p374 = por %p372, %p373
      %s376 = sadd.s32 %s375, 1
      %p379 = scmp.eq.s32.totalorder %s37, 1
      %p380 = scmp.ne.s32.totalorder %s375, %s377
      %p381 = scmp.eq.s32.totalorder %s37, 0
      %p382 = por %p380, %p381
      %p383 = scmp.ne.s32.totalorder %s375, %s377
      %p384 = scmp.eq.s32.totalorder %s42, 1
      %p385 = por %p383, %p384
      %p386 = scmp.ne.s32.totalorder %s377, %s378
      %p387 = scmp.eq.s32.totalorder %s42, 0
      %p388 = por %p386, %p387
      %p389 = scmp.ne.s32.totalorder %s377, %s378
      %p390 = scmp.eq.s32.totalorder %s43, 1
      %p391 = por %p389, %p390
      %p393 = scmp.ne.s32.totalorder %s378, %s392
      %p394 = scmp.eq.s32.totalorder %s43, 0
      %p395 = por %p393, %p394
      %s397 = sadd.s32 %s396, 1
      %p400 = scmp.eq.s32.totalorder %s37, 1
      %p401 = scmp.ne.s32.totalorder %s396, %s398
      %p402 = scmp.eq.s32.totalorder %s37, 0
      %p403 = por %p401, %p402
      %p404 = scmp.ne.s32.totalorder %s396, %s398
      %p405 = scmp.eq.s32.totalorder %s42, 1
      %p406 = por %p404, %p405
      %p407 = scmp.ne.s32.totalorder %s398, %s399
      %p408 = scmp.eq.s32.totalorder %s42, 0
      %p409 = por %p407, %p408
      %p410 = scmp.ne.s32.totalorder %s398, %s399
      %p411 = scmp.eq.s32.totalorder %s43, 1
      %p412 = por %p410, %p411
      %p414 = scmp.ne.s32.totalorder %s399, %s413
      %p415 = scmp.eq.s32.totalorder %s43, 0
      %p416 = por %p414, %p415
      %s418 = sadd.s32 %s417, 1
      %p421 = scmp.eq.s32.totalorder %s37, 1
      %p422 = scmp.ne.s32.totalorder %s417, %s419
      %p423 = scmp.eq.s32.totalorder %s37, 0
      %p424 = por %p422, %p423
      %p425 = scmp.ne.s32.totalorder %s417, %s419
      %p426 = scmp.eq.s32.totalorder %s42, 1
      %p427 = por %p425, %p426
      %p428 = scmp.ne.s32.totalorder %s419, %s420
      %p429 = scmp.eq.s32.totalorder %s42, 0
      %p430 = por %p428, %p429
      %p431 = scmp.ne.s32.totalorder %s419, %s420
      %p432 = scmp.eq.s32.totalorder %s43, 1
      %p433 = por %p431, %p432
      %p435 = scmp.ne.s32.totalorder %s420, %s434
      %p436 = scmp.eq.s32.totalorder %s43, 0
      %p437 = por %p435, %p436
      %s439 = sadd.s32 %s438, 1
      %p442 = scmp.eq.s32.totalorder %s37, 1
      %p443 = scmp.ne.s32.totalorder %s438, %s440
      %p444 = scmp.eq.s32.totalorder %s37, 0
      %p445 = por %p443, %p444
      %p446 = scmp.ne.s32.totalorder %s438, %s440
      %p447 = scmp.eq.s32.totalorder %s42, 1
      %p448 = por %p446, %p447
      %p449 = scmp.ne.s32.totalorder %s440, %s441
      %p450 = scmp.eq.s32.totalorder %s42, 0
      %p451 = por %p449, %p450
      %p452 = scmp.ne.s32.totalorder %s440, %s441
      %p453 = scmp.eq.s32.totalorder %s43, 1
      %p454 = por %p452, %p453
      %p456 = scmp.ne.s32.totalorder %s441, %s455
      %p457 = scmp.eq.s32.totalorder %s43, 0
      %p458 = por %p456, %p457
      %s460 = sadd.s32 %s459, 1
      %p463 = scmp.eq.s32.totalorder %s37, 1
      %p464 = scmp.ne.s32.totalorder %s459, %s461
      %p465 = scmp.eq.s32.totalorder %s37, 0
      %p466 = por %p464, %p465
      %p467 = scmp.ne.s32.totalorder %s459, %s461
      %p468 = scmp.eq.s32.totalorder %s42, 1
      %p469 = por %p467, %p468
      %p470 = scmp.ne.s32.totalorder %s461, %s462
      %p471 = scmp.eq.s32.totalorder %s42, 0
      %p472 = por %p470, %p471
      %p473 = scmp.ne.s32.totalorder %s461, %s462
      %p474 = scmp.eq.s32.totalorder %s43, 1
      %p475 = por %p473, %p474
      %p477 = scmp.ne.s32.totalorder %s462, %s476
      %p478 = scmp.eq.s32.totalorder %s43, 0
      %p479 = por %p477, %p478
      %s481 = sadd.s32 %s480, 1
      %p484 = scmp.eq.s32.totalorder %s37, 1
      %p485 = scmp.ne.s32.totalorder %s480, %s482
      %p486 = scmp.eq.s32.totalorder %s37, 0
      %p487 = por %p485, %p486
      %p488 = scmp.ne.s32.totalorder %s480, %s482
      %p489 = scmp.eq.s32.totalorder %s42, 1
      %p490 = por %p488, %p489
      %p491 = scmp.ne.s32.totalorder %s482, %s483
      %p492 = scmp.eq.s32.totalorder %s42, 0
      %p493 = por %p491, %p492
      %p494 = scmp.ne.s32.totalorder %s482, %s483
      %p495 = scmp.eq.s32.totalorder %s43, 1
      %p496 = por %p494, %p495
      %p498 = scmp.ne.s32.totalorder %s483, %s497
      %p499 = scmp.eq.s32.totalorder %s43, 0
      %p500 = por %p498, %p499
      %s502 = sadd.s32 %s501, 1
      %p505 = scmp.eq.s32.totalorder %s37, 1
      %p506 = scmp.ne.s32.totalorder %s501, %s503
      %p507 = scmp.eq.s32.totalorder %s37, 0
      %p508 = por %p506, %p507
      %p509 = scmp.ne.s32.totalorder %s501, %s503
      %p510 = scmp.eq.s32.totalorder %s42, 1
      %p511 = por %p509, %p510
      %p512 = scmp.ne.s32.totalorder %s503, %s504
      %p513 = scmp.eq.s32.totalorder %s42, 0
      %p514 = por %p512, %p513
      %p515 = scmp.ne.s32.totalorder %s503, %s504
      %p516 = scmp.eq.s32.totalorder %s43, 1
      %p517 = por %p515, %p516
      %p519 = scmp.ne.s32.totalorder %s504, %s518
      %p520 = scmp.eq.s32.totalorder %s43, 0
      %p521 = por %p519, %p520
      %s523 = sadd.s32 %s522, 1
      %p526 = scmp.eq.s32.totalorder %s37, 1
      %p527 = scmp.ne.s32.totalorder %s522, %s524
      %p528 = scmp.eq.s32.totalorder %s37, 0
      %p529 = por %p527, %p528
      %p530 = scmp.ne.s32.totalorder %s522, %s524
      %p531 = scmp.eq.s32.totalorder %s42, 1
      %p532 = por %p530, %p531
      %p533 = scmp.ne.s32.totalorder %s524, %s525
      %p534 = scmp.eq.s32.totalorder %s42, 0
      %p535 = por %p533, %p534
      %p536 = scmp.ne.s32.totalorder %s524, %s525
      %p537 = scmp.eq.s32.totalorder %s43, 1
      %p538 = por %p536, %p537
      %p540 = scmp.ne.s32.totalorder %s525, %s539
      %p541 = scmp.eq.s32.totalorder %s43, 0
      %p542 = por %p540, %p541
      %s544 = sadd.s32 %s543, 1
      %p547 = scmp.eq.s32.totalorder %s37, 1
      %p548 = scmp.ne.s32.totalorder %s543, %s545
      %p549 = scmp.eq.s32.totalorder %s37, 0
      %p550 = por %p548, %p549
      %p551 = scmp.ne.s32.totalorder %s543, %s545
      %p552 = scmp.eq.s32.totalorder %s42, 1
      %p553 = por %p551, %p552
      %p554 = scmp.ne.s32.totalorder %s545, %s546
      %p555 = scmp.eq.s32.totalorder %s42, 0
      %p556 = por %p554, %p555
      %p557 = scmp.ne.s32.totalorder %s545, %s546
      %p558 = scmp.eq.s32.totalorder %s43, 1
      %p559 = por %p557, %p558
      %p561 = scmp.ne.s32.totalorder %s546, %s560
      %p562 = scmp.eq.s32.totalorder %s43, 0
      %p563 = por %p561, %p562
      %s565 = sadd.s32 %s564, 1
      %p568 = scmp.eq.s32.totalorder %s37, 1
      %p569 = scmp.ne.s32.totalorder %s564, %s566
      %p570 = scmp.eq.s32.totalorder %s37, 0
      %p571 = por %p569, %p570
      %p572 = scmp.ne.s32.totalorder %s564, %s566
      %p573 = scmp.eq.s32.totalorder %s42, 1
      %p574 = por %p572, %p573
      %p575 = scmp.ne.s32.totalorder %s566, %s567
      %p576 = scmp.eq.s32.totalorder %s42, 0
      %p577 = por %p575, %p576
      %p578 = scmp.ne.s32.totalorder %s566, %s567
      %p579 = scmp.eq.s32.totalorder %s43, 1
      %p580 = por %p578, %p579
      %p582 = scmp.ne.s32.totalorder %s567, %s581
      %p583 = scmp.eq.s32.totalorder %s43, 0
      %p584 = por %p582, %p583
      %s586 = sadd.s32 %s585, 1
      %p589 = scmp.eq.s32.totalorder %s37, 1
      %p590 = scmp.ne.s32.totalorder %s585, %s587
      %p591 = scmp.eq.s32.totalorder %s37, 0
      %p592 = por %p590, %p591
      %p593 = scmp.ne.s32.totalorder %s585, %s587
      %p594 = scmp.eq.s32.totalorder %s42, 1
      %p595 = por %p593, %p594
      %p596 = scmp.ne.s32.totalorder %s587, %s588
      %p597 = scmp.eq.s32.totalorder %s42, 0
      %p598 = por %p596, %p597
      %p599 = scmp.ne.s32.totalorder %s587, %s588
      %p600 = scmp.eq.s32.totalorder %s43, 1
      %p601 = por %p599, %p600
      %p603 = scmp.ne.s32.totalorder %s588, %s602
      %p604 = scmp.eq.s32.totalorder %s43, 0
      %p605 = por %p603, %p604
      %s607 = sadd.s32 %s606, 1
      %p610 = scmp.eq.s32.totalorder %s37, 1
      %p611 = scmp.ne.s32.totalorder %s606, %s608
      %p612 = scmp.eq.s32.totalorder %s37, 0
      %p613 = por %p611, %p612
      %p614 = scmp.ne.s32.totalorder %s606, %s608
      %p615 = scmp.eq.s32.totalorder %s42, 1
      %p616 = por %p614, %p615
      %p617 = scmp.ne.s32.totalorder %s608, %s609
      %p618 = scmp.eq.s32.totalorder %s42, 0
      %p619 = por %p617, %p618
      %p620 = scmp.ne.s32.totalorder %s608, %s609
      %p621 = scmp.eq.s32.totalorder %s43, 1
      %p622 = por %p620, %p621
      %p624 = scmp.ne.s32.totalorder %s609, %s623
      %p625 = scmp.eq.s32.totalorder %s43, 0
      %p626 = por %p624, %p625
      %s628 = sadd.s32 %s627, 1
      %p631 = scmp.eq.s32.totalorder %s37, 1
      %p632 = scmp.ne.s32.totalorder %s627, %s629
      %p633 = scmp.eq.s32.totalorder %s37, 0
      %p634 = por %p632, %p633
      %p635 = scmp.ne.s32.totalorder %s627, %s629
      %p636 = scmp.eq.s32.totalorder %s42, 1
      %p637 = por %p635, %p636
      %p638 = scmp.ne.s32.totalorder %s629, %s630
      %p639 = scmp.eq.s32.totalorder %s42, 0
      %p640 = por %p638, %p639
      %p641 = scmp.ne.s32.totalorder %s629, %s630
      %p642 = scmp.eq.s32.totalorder %s43, 1
      %p643 = por %p641, %p642
      %p645 = scmp.ne.s32.totalorder %s630, %s644
      %p646 = scmp.eq.s32.totalorder %s43, 0
      %p647 = por %p645, %p646
      %s648 = ssub.s32 %s37, %s44
      %p649 = scmp.eq.s32.totalorder %s648, 0
      %s651 = sadd.s32 %s650, 1
      %s652 = scalar_select %p649, %s650, %s651
      %p655 = pneg %p649
      %p656 = scmp.eq.s32.totalorder %s37, 1
      %p657 = por %p655, %p656
      %p658 = scmp.ne.s32.totalorder %s650, %s653
      %p659 = scmp.eq.s32.totalorder %s37, 0
      %p660 = por %p658, %p659
      %p661 = scmp.ne.s32.totalorder %s650, %s653
      %p662 = scmp.eq.s32.totalorder %s42, 1
      %p663 = por %p661, %p662
      %p664 = scmp.ne.s32.totalorder %s653, %s654
      %p665 = scmp.eq.s32.totalorder %s42, 0
      %p666 = por %p664, %p665
      %p667 = scmp.ne.s32.totalorder %s653, %s654
      %p668 = scmp.eq.s32.totalorder %s43, 1
      %p669 = por %p667, %p668
      %p671 = scmp.ne.s32.totalorder %s654, %s670
      %p672 = scmp.eq.s32.totalorder %s43, 0
      %p673 = por %p671, %p672
      %p674 = scmp.le.s32.totalorder 1, %s37
      %p675 = scmp.lt.s32.totalorder %s37, 3
      %p676 = pnand %p674, %p675
      %p677 = pneg %p676
      // Predicated region
      $region9: #{tpu_custom_call.1} parent=5 // pred_check
        _
      $region10: #{tpu_custom_call.1} parent=5 // pred_check_branch
        %679 = sbr.rel (%p676) target = $region12
      $region11: #{tpu_custom_call.1} parent=5 // pred_region
        %s680 = ssub.s32 %s37, 1
        // Predicated region
        $region13: #{tpu_custom_call.1} parent=11 // pred_check
          %p681 = pneg %p136
        $region14: #{tpu_custom_call.1} parent=11 // pred_check_branch
          %683 = sbr.rel (%p681) target = $region16
        $region15: #{tpu_custom_call.1} parent=11 // pred_region
          _
        $region16: #{tpu_custom_call.1} parent=11 // pred_fallthru
          _
        // Predicated region
        $region17: #{tpu_custom_call.1} parent=11 // pred_check
          %p684 = pneg %p157
        $region18: #{tpu_custom_call.1} parent=11 // pred_check_branch
          %686 = sbr.rel (%p684) target = $region20
        $region19: #{tpu_custom_call.1} parent=11 // pred_region
          _
        $region20: #{tpu_custom_call.1} parent=11 // pred_fallthru
          _
        // Predicated region
        $region21: #{tpu_custom_call.1} parent=11 // pred_check
          %p687 = pneg %p178
        $region22: #{tpu_custom_call.1} parent=11 // pred_check_branch
          %689 = sbr.rel (%p687) target = $region24
        $region23: #{tpu_custom_call.1} parent=11 // pred_region
          _
        $region24: #{tpu_custom_call.1} parent=11 // pred_fallthru
          _
        // Predicated region
        $region25: #{tpu_custom_call.1} parent=11 // pred_check
          %p690 = pneg %p199
        $region26: #{tpu_custom_call.1} parent=11 // pred_check_branch
          %692 = sbr.rel (%p690) target = $region28
        $region27: #{tpu_custom_call.1} parent=11 // pred_region
          _
        $region28: #{tpu_custom_call.1} parent=11 // pred_fallthru
          _
        // Predicated region
        $region29: #{tpu_custom_call.1} parent=11 // pred_check
          %p693 = pneg %p220
        $region30: #{tpu_custom_call.1} parent=11 // pred_check_branch
          %695 = sbr.rel (%p693) target = $region32
        $region31: #{tpu_custom_call.1} parent=11 // pred_region
          _
        $region32: #{tpu_custom_call.1} parent=11 // pred_fallthru
          _
        // Predicated region
        $region33: #{tpu_custom_call.1} parent=11 // pred_check
          %p696 = pneg %p241
        $region34: #{tpu_custom_call.1} parent=11 // pred_check_branch
          %698 = sbr.rel (%p696) target = $region36
        $region35: #{tpu_custom_call.1} parent=11 // pred_region
          _
        $region36: #{tpu_custom_call.1} parent=11 // pred_fallthru
          _
        // Predicated region
        $region37: #{tpu_custom_call.1} parent=11 // pred_check
          %p699 = pneg %p262
        $region38: #{tpu_custom_call.1} parent=11 // pred_check_branch
          %701 = sbr.rel (%p699) target = $region40
        $region39: #{tpu_custom_call.1} parent=11 // pred_region
          _
        $region40: #{tpu_custom_call.1} parent=11 // pred_fallthru
          _
        // Predicated region
        $region41: #{tpu_custom_call.1} parent=11 // pred_check
          %p702 = pneg %p283
        $region42: #{tpu_custom_call.1} parent=11 // pred_check_branch
          %704 = sbr.rel (%p702) target = $region44
        $region43: #{tpu_custom_call.1} parent=11 // pred_region
          _
        $region44: #{tpu_custom_call.1} parent=11 // pred_fallthru
          _
        // Predicated region
        $region45: #{tpu_custom_call.1} parent=11 // pred_check
          %p705 = pneg %p304
        $region46: #{tpu_custom_call.1} parent=11 // pred_check_branch
          %707 = sbr.rel (%p705) target = $region48
        $region47: #{tpu_custom_call.1} parent=11 // pred_region
          _
        $region48: #{tpu_custom_call.1} parent=11 // pred_fallthru
          _
        // Predicated region
        $region49: #{tpu_custom_call.1} parent=11 // pred_check
          %p708 = pneg %p325
        $region50: #{tpu_custom_call.1} parent=11 // pred_check_branch
          %710 = sbr.rel (%p708) target = $region52
        $region51: #{tpu_custom_call.1} parent=11 // pred_region
          _
        $region52: #{tpu_custom_call.1} parent=11 // pred_fallthru
          _
        // Predicated region
        $region53: #{tpu_custom_call.1} parent=11 // pred_check
          %p711 = pneg %p346
        $region54: #{tpu_custom_call.1} parent=11 // pred_check_branch
          %713 = sbr.rel (%p711) target = $region56
        $region55: #{tpu_custom_call.1} parent=11 // pred_region
          _
        $region56: #{tpu_custom_call.1} parent=11 // pred_fallthru
          _
        // Predicated region
        $region57: #{tpu_custom_call.1} parent=11 // pred_check
          %p714 = pneg %p367
        $region58: #{tpu_custom_call.1} parent=11 // pred_check_branch
          %716 = sbr.rel (%p714) target = $region60
        $region59: #{tpu_custom_call.1} parent=11 // pred_region
          _
        $region60: #{tpu_custom_call.1} parent=11 // pred_fallthru
          _
        // Predicated region
        $region61: #{tpu_custom_call.1} parent=11 // pred_check
          %p717 = pneg %p388
        $region62: #{tpu_custom_call.1} parent=11 // pred_check_branch
          %719 = sbr.rel (%p717) target = $region64
        $region63: #{tpu_custom_call.1} parent=11 // pred_region
          _
        $region64: #{tpu_custom_call.1} parent=11 // pred_fallthru
          _
        // Predicated region
        $region65: #{tpu_custom_call.1} parent=11 // pred_check
          %p720 = pneg %p409
        $region66: #{tpu_custom_call.1} parent=11 // pred_check_branch
          %722 = sbr.rel (%p720) target = $region68
        $region67: #{tpu_custom_call.1} parent=11 // pred_region
          _
        $region68: #{tpu_custom_call.1} parent=11 // pred_fallthru
          _
        // Predicated region
        $region69: #{tpu_custom_call.1} parent=11 // pred_check
          %p723 = pneg %p430
        $region70: #{tpu_custom_call.1} parent=11 // pred_check_branch
          %725 = sbr.rel (%p723) target = $region72
        $region71: #{tpu_custom_call.1} parent=11 // pred_region
          _
        $region72: #{tpu_custom_call.1} parent=11 // pred_fallthru
          _
        // Predicated region
        $region73: #{tpu_custom_call.1} parent=11 // pred_check
          %p726 = pneg %p451
        $region74: #{tpu_custom_call.1} parent=11 // pred_check_branch
          %728 = sbr.rel (%p726) target = $region76
        $region75: #{tpu_custom_call.1} parent=11 // pred_region
          _
        $region76: #{tpu_custom_call.1} parent=11 // pred_fallthru
          _
        // Predicated region
        $region77: #{tpu_custom_call.1} parent=11 // pred_check
          %p729 = pneg %p472
        $region78: #{tpu_custom_call.1} parent=11 // pred_check_branch
          %731 = sbr.rel (%p729) target = $region80
        $region79: #{tpu_custom_call.1} parent=11 // pred_region
          _
        $region80: #{tpu_custom_call.1} parent=11 // pred_fallthru
          _
        // Predicated region
        $region81: #{tpu_custom_call.1} parent=11 // pred_check
          %p732 = pneg %p493
        $region82: #{tpu_custom_call.1} parent=11 // pred_check_branch
          %734 = sbr.rel (%p732) target = $region84
        $region83: #{tpu_custom_call.1} parent=11 // pred_region
          _
        $region84: #{tpu_custom_call.1} parent=11 // pred_fallthru
          _
        // Predicated region
        $region85: #{tpu_custom_call.1} parent=11 // pred_check
          %p735 = pneg %p514
        $region86: #{tpu_custom_call.1} parent=11 // pred_check_branch
          %737 = sbr.rel (%p735) target = $region88
        $region87: #{tpu_custom_call.1} parent=11 // pred_region
          _
        $region88: #{tpu_custom_call.1} parent=11 // pred_fallthru
          _
        // Predicated region
        $region89: #{tpu_custom_call.1} parent=11 // pred_check
          %p738 = pneg %p535
        $region90: #{tpu_custom_call.1} parent=11 // pred_check_branch
          %740 = sbr.rel (%p738) target = $region92
        $region91: #{tpu_custom_call.1} parent=11 // pred_region
          _
        $region92: #{tpu_custom_call.1} parent=11 // pred_fallthru
          _
        // Predicated region
        $region93: #{tpu_custom_call.1} parent=11 // pred_check
          %p741 = pneg %p556
        $region94: #{tpu_custom_call.1} parent=11 // pred_check_branch
          %743 = sbr.rel (%p741) target = $region96
        $region95: #{tpu_custom_call.1} parent=11 // pred_region
          _
        $region96: #{tpu_custom_call.1} parent=11 // pred_fallthru
          _
        // Predicated region
        $region97: #{tpu_custom_call.1} parent=11 // pred_check
          %p744 = pneg %p577
        $region98: #{tpu_custom_call.1} parent=11 // pred_check_branch
          %746 = sbr.rel (%p744) target = $region100
        $region99: #{tpu_custom_call.1} parent=11 // pred_region
          _
        $region100: #{tpu_custom_call.1} parent=11 // pred_fallthru
          _
        // Predicated region
        $region101: #{tpu_custom_call.1} parent=11 // pred_check
          %p747 = pneg %p598
        $region102: #{tpu_custom_call.1} parent=11 // pred_check_branch
          %749 = sbr.rel (%p747) target = $region104
        $region103: #{tpu_custom_call.1} parent=11 // pred_region
          _
        $region104: #{tpu_custom_call.1} parent=11 // pred_fallthru
          _
        // Predicated region
        $region105: #{tpu_custom_call.1} parent=11 // pred_check
          %p750 = pneg %p619
        $region106: #{tpu_custom_call.1} parent=11 // pred_check_branch
          %752 = sbr.rel (%p750) target = $region108
        $region107: #{tpu_custom_call.1} parent=11 // pred_region
          _
        $region108: #{tpu_custom_call.1} parent=11 // pred_fallthru
          _
        // Predicated region
        $region109: #{tpu_custom_call.1} parent=11 // pred_check
          %p753 = pneg %p640
        $region110: #{tpu_custom_call.1} parent=11 // pred_check_branch
          %755 = sbr.rel (%p753) target = $region112
        $region111: #{tpu_custom_call.1} parent=11 // pred_region
          _
        $region112: #{tpu_custom_call.1} parent=11 // pred_fallthru
          _
      $region12: #{tpu_custom_call.1} parent=5 // pred_fallthru
        _
      %p756 = scmp.lt.s32.totalorder %s37, 2
      // Predicated region
      $region113: #{tpu_custom_call.1} parent=5 // pred_check
        %p757 = pneg %p756
      $region114: #{tpu_custom_call.1} parent=5 // pred_check_branch
        %759 = sbr.rel (%p757) target = $region116
      $region115: #{tpu_custom_call.1} parent=5 // pred_region
        // Predicated region
        $region117: #{tpu_custom_call.1} parent=115 // pred_check
          %p760 = pneg %p57
        $region118: #{tpu_custom_call.1} parent=115 // pred_check_branch
          %762 = sbr.rel (%p760) target = $region120
        $region119: #{tpu_custom_call.1} parent=115 // pred_region
          %s763 = smul.u32 4, %s37
          %p764 = scmp.lt.s32.totalorder %s763, 7
          %s765 = scalar_select %p764, %s763, 7
          %s766 = smul.addr %s765, 2
          %s767 = smul.addr %s766, 4
          %s768 = scalar_lea.vmem %s0, %s767
          %s769 = smul.u32 4, %s37
        $region120: #{tpu_custom_call.1} parent=115 // pred_fallthru
          _
        // Predicated region
        $region121: #{tpu_custom_call.1} parent=115 // pred_check
          %p770 = pneg %p83
        $region122: #{tpu_custom_call.1} parent=115 // pred_check_branch
          %772 = sbr.rel (%p770) target = $region124
        $region123: #{tpu_custom_call.1} parent=115 // pred_region
          %s773 = smul.u32 4, %s37
          %p774 = scmp.lt.s32.totalorder %s773, 7
          %s775 = scalar_select %p774, %s773, 7
          %s776 = smul.addr %s775, 8
          %s777 = scalar_lea.vmem %s1, %s776
          %s778 = smul.u32 4, %s37
        $region124: #{tpu_custom_call.1} parent=115 // pred_fallthru
          _
        // Predicated region
        $region125: #{tpu_custom_call.1} parent=115 // pred_check
          %p779 = pneg %p109
        $region126: #{tpu_custom_call.1} parent=115 // pred_check_branch
          %781 = sbr.rel (%p779) target = $region128
        $region127: #{tpu_custom_call.1} parent=115 // pred_region
          %s782 = smul.u32 4, %s37
          %p783 = scmp.lt.s32.totalorder %s782, 7
          %s784 = scalar_select %p783, %s782, 7
          %s785 = scalar_lea.vmem %s2, %s784
          %s786 = smul.u32 4, %s37
        $region128: #{tpu_custom_call.1} parent=115 // pred_fallthru
          _
      $region116: #{tpu_custom_call.1} parent=5 // pred_fallthru
        _
      %p787 = scmp.le.s32.totalorder 1, %s37
      %p788 = scmp.lt.s32.totalorder %s37, 3
      %p789 = pnand %p787, %p788
      %p790 = pneg %p789
      // Predicated region
      $region129: #{tpu_custom_call.1} parent=5 // pred_check
        _
      $region130: #{tpu_custom_call.1} parent=5 // pred_check_branch
        %792 = sbr.rel (%p789) target = $region132
      $region131: #{tpu_custom_call.1} parent=5 // pred_region
        %s793 = ssub.s32 %s37, 1
        %s794 = smul.u32 4, %s42
        %p795 = scmp.lt.s32.totalorder %s794, 7
        %s796 = scalar_select %p795, %s794, 7
        %s797 = smul.addr %s796, 2
        %s798 = smul.addr %s797, 4
        %s799 = scalar_lea.vmem %s0, %s798
        %p800 = pneg %p63
        %p801 = pneg %p60
        %s802 = smul.u32 4, %s42
        %p803 = scmp.lt.s32.totalorder %s802, 7
        %s804 = scalar_select %p803, %s802, 7
        %s805 = smul.addr %s804, 8
        %s806 = scalar_lea.vmem %s1, %s805
        %p807 = pneg %p89
        %p808 = pneg %p86
        %s809 = smul.u32 4, %s42
        %p810 = scmp.lt.s32.totalorder %s809, 7
        %s811 = scalar_select %p810, %s809, 7
        %s812 = scalar_lea.vmem %s2, %s811
        %p813 = pneg %p115
        %p814 = pneg %p112
        %p815 = pneg %p136
        %p816 = pneg %p133
        %p817 = pneg %p157
        %p818 = pneg %p154
        %p819 = pneg %p178
        %p820 = pneg %p175
        %p821 = pneg %p199
        %p822 = pneg %p196
        %p823 = pneg %p220
        %p824 = pneg %p217
        %p825 = pneg %p241
        %p826 = pneg %p238
        %p827 = pneg %p262
        %p828 = pneg %p259
        %p829 = pneg %p283
        %p830 = pneg %p280
        %p831 = pneg %p304
        %p832 = pneg %p301
        %p833 = pneg %p325
        %p834 = pneg %p322
        %p835 = pneg %p346
        %p836 = pneg %p343
        %p837 = pneg %p367
        %p838 = pneg %p364
        %p839 = pneg %p388
        %p840 = pneg %p385
        %p841 = pneg %p409
        %p842 = pneg %p406
        %p843 = pneg %p430
        %p844 = pneg %p427
        %p845 = pneg %p451
        %p846 = pneg %p448
        %p847 = pneg %p472
        %p848 = pneg %p469
        %p849 = pneg %p493
        %p850 = pneg %p490
        %p851 = pneg %p514
        %p852 = pneg %p511
        %p853 = pneg %p535
        %p854 = pneg %p532
        %p855 = pneg %p556
        %p856 = pneg %p553
        %p857 = pneg %p577
        %p858 = pneg %p574
        %p859 = pneg %p598
        %p860 = pneg %p595
        %p861 = pneg %p619
        %p862 = pneg %p616
        %p863 = pneg %p640
        %p864 = pneg %p637
        %p865 = pneg %p666
        %p866 = pneg %p663
        %s867 = sand.u32 %s653, 1
        %s868 = scalar_lea.sflag [#allocation3], %s867
        %s869 = sand.u32 %s653, 1
        %s870 = smul.addr %s869, 4
        %s871 = scalar_lea.vmem [#allocation2], %s870
        %s872 = smul.u32 4, %s42
        %p873 = scmp.lt.s32.totalorder %s872, 7
        %s874 = scalar_select %p873, %s872, 7
        %s875 = smul.addr %s874, 2
        %s876 = smul.addr %s875, 4
        %s877 = scalar_lea.vmem %s0, %s876
        %s878 = smul.u32 4, %s42
        %s879 = smul.u32 4, %s42
        %p880 = scmp.lt.s32.totalorder %s879, 7
        %s881 = scalar_select %p880, %s879, 7
        %s882 = smul.addr %s881, 8
        %s883 = scalar_lea.vmem %s1, %s882
        %s884 = smul.u32 4, %s42
        %s885 = smul.u32 4, %s42
        %p886 = scmp.lt.s32.totalorder %s885, 7
        %s887 = scalar_select %p886, %s885, 7
        %s888 = scalar_lea.vmem %s2, %s887
        %s889 = smul.u32 4, %s42
        %v891 = vld [vmem:[%s877] sm:$0xff]
        %v892 = vld [vmem:[%s877 + $0x8] sm:$0xff]
        %v893 = vld [vmem:[%s877 + $0x10] sm:$0xff]
        %v894 = vld [vmem:[%s877 + $0x18] sm:$0xff]
        %v899 = vcombine.low %v891, %v892
        %v900 = vcombine.high %v891, %v892
        %v901 = vcombine.low %v893, %v894
        %v902 = vcombine.high %v893, %v894
        %v907 = vpack.c.bf16 %v901, %v899
        %v908 = vpack.c.bf16 %v902, %v900
        %v909 = vld [vmem:[%s3] sm:$0xf]
        %v910 = vld [vmem:[%s3 + $0x4] sm:$0xf]
        %v911 = vld [vmem:[%s3 + $0x8] sm:$0xf]
        %v912 = vld [vmem:[%s3 + $0xc] sm:$0xf]
        %v913 = vld [vmem:[%s3 + $0x10] sm:$0xf]
        %v914 = vld [vmem:[%s3 + $0x14] sm:$0xf]
        %v915 = vld [vmem:[%s3 + $0x18] sm:$0xf]
        %v916 = vld [vmem:[%s3 + $0x1c] sm:$0xf]
        %v917 = vld [vmem:[%s3 + $0x20] sm:$0xf]
        %v918 = vld [vmem:[%s3 + $0x24] sm:$0xf]
        %v919 = vld [vmem:[%s3 + $0x28] sm:$0xf]
        %v920 = vld [vmem:[%s3 + $0x2c] sm:$0xf]
        %v921 = vld [vmem:[%s3 + $0x30] sm:$0xf]
        %v922 = vld [vmem:[%s3 + $0x34] sm:$0xf]
        %v923 = vld [vmem:[%s3 + $0x38] sm:$0xf]
        %v924 = vld [vmem:[%s3 + $0x3c] sm:$0xf]
        %v925 = vld [vmem:[%s3 + $0x40] sm:$0xf]
        %v926 = vld [vmem:[%s3 + $0x44] sm:$0xf]
        %v927 = vld [vmem:[%s3 + $0x48] sm:$0xf]
        %v928 = vld [vmem:[%s3 + $0x4c] sm:$0xf]
        %v929 = vld [vmem:[%s3 + $0x50] sm:$0xf]
        %v930 = vld [vmem:[%s3 + $0x54] sm:$0xf]
        %v931 = vld [vmem:[%s3 + $0x58] sm:$0xf]
        %v932 = vld [vmem:[%s3 + $0x5c] sm:$0xf]
        %v933 = vld [vmem:[%s4] sm:$0x1]
        %v935 = vlaneseq
        %v936 = vshrl.u32 %v935, 7
        %v937 = vsub.s32 0, %v936
        %v938 = vrot.slane %v933, %v937
        %v964 = vunpack.c.l.b16 %v909
        %v965 = vunpack.c.l.b16 %v910
        %v966 = vunpack.c.l.b16 %v911
        %v967 = vunpack.c.l.b16 %v912
        %v968 = vunpack.c.l.b16 %v913
        %v969 = vunpack.c.l.b16 %v914
        %v970 = vunpack.c.l.b16 %v915
        %v971 = vunpack.c.l.b16 %v916
        %v972 = vunpack.c.l.b16 %v917
        %v973 = vunpack.c.l.b16 %v918
        %v974 = vunpack.c.l.b16 %v919
        %v975 = vunpack.c.l.b16 %v920
        %v976 = vunpack.c.l.b16 %v921
        %v977 = vunpack.c.l.b16 %v922
        %v978 = vunpack.c.l.b16 %v923
        %v979 = vunpack.c.l.b16 %v924
        %v980 = vunpack.c.l.b16 %v925
        %v981 = vunpack.c.l.b16 %v926
        %v982 = vunpack.c.l.b16 %v927
        %v983 = vunpack.c.l.b16 %v928
        %v984 = vunpack.c.l.b16 %v929
        %v985 = vunpack.c.l.b16 %v930
        %v986 = vunpack.c.l.b16 %v931
        %v987 = vunpack.c.l.b16 %v932
        %v988 = vpack.c.b16 %v965, %v964
        %v989 = vpack.c.b16 %v967, %v966
        %v990 = vpack.c.b16 %v969, %v968
        %v991 = vpack.c.b16 %v971, %v970
        %v992 = vpack.c.b16 %v973, %v972
        %v993 = vpack.c.b16 %v975, %v974
        %v994 = vpack.c.b16 %v977, %v976
        %v995 = vpack.c.b16 %v979, %v978
        %v996 = vpack.c.b16 %v981, %v980
        %v997 = vpack.c.b16 %v983, %v982
        %v998 = vpack.c.b16 %v985, %v984
        %v999 = vpack.c.b16 %v987, %v986
        %vm1012 = vcmask 523264
        %v1014 = vsel %vm1012, %v908, 0
        %1016 = vmatprep.subr.bf16.mxu0 0
        %1017 = vmatpush1.bf16.msra.mxu0 %v995
        %1018 = vmatprep.subr.bf16.mxu0 0
        %1019 = vmatpush1.bf16.msra.mxu0 %v994
        %1020 = vmatprep.subr.bf16.mxu0 0
        %1021 = vmatpush1.bf16.msra.mxu0 %v993
        %1022 = vmatprep.subr.bf16.mxu0 0
        %1023 = vmatpush1.bf16.msra.mxu0 %v992
        %1024 = vmatprep.subr.bf16.mxu0 0
        %1025 = vmatpush1.bf16.msra.mxu0 %v991
        %1026 = vmatprep.subr.bf16.mxu0 0
        %1027 = vmatpush1.bf16.msra.mxu0 %v990
        %1028 = vmatprep.subr.bf16.mxu0 0
        %1029 = vmatpush1.bf16.msra.mxu0 %v989
        %1030 = vmatprep.subr.bf16.mxu0 0
        %1031 = vmatpush1.bf16.msra.mxu0 %v988
        %1032 = vmatprep.subr.bf16.mxu0 0
        %1033 = vmatpush2.bf16.msra.mxu0 0
        %1034 = vmatprep.subr.bf16.mxu0 0
        %1035 = vmatpush2.bf16.msra.mxu0 0
        %1036 = vmatprep.subr.bf16.mxu0 0
        %1037 = vmatpush2.bf16.msra.mxu0 0
        %1038 = vmatprep.subr.bf16.mxu0 0
        %1039 = vmatpush2.bf16.msra.mxu0 0
        %1040 = vmatprep.subr.bf16.mxu0 0
        %1041 = vmatpush2.bf16.msra.mxu0 %v999
        %1042 = vmatprep.subr.bf16.mxu0 0
        %1043 = vmatpush2.bf16.msra.mxu0 %v998
        %1044 = vmatprep.subr.bf16.mxu0 0
        %1045 = vmatpush2.bf16.msra.mxu0 %v997
        %1046 = vmatprep.subr.bf16.mxu0 0
        %1047 = vmatpush2.bf16.msra.mxu0 %v996
        %1048 = vmatprep.mubr.bf16.mxu0 %v1014
        %1049 = vmatmul.mubr.bf16.gmra.mxu0 %v907
        %v1050 = vpop.f32.mrf.mxu0
        %v1051 = vadd.f32 %v938, %v1050
        %v1052 = vpop.f32.mrf.mxu0
        %v1053 = vpop.f32.mrf.mxu0
        %v1054 = vadd.f32 %v938, %v1053
        %v1055 = vpop.f32.mrf.mxu0
        %1056 = vdwg.mxu0
        %v1059 = vcombine.high %v1051, %v1051
        %v1060 = vcombine.high %v1054, %v1054
        %v1061 = vld [vmem:[%s5] sm:$0x1]
        %v1062 = vrot.slane %v1051, 7
        %v1063 = vrot.slane %v1059, 7
        %v1064 = vrot.slane %v1054, 7
        %v1065 = vrot.slane %v1060, 7
        %vm1070 = vcmask 1040384
        %v1071 = vsel %vm1070, %v1061, %v1062
        %v1072 = vsel %vm1070, %v1061, %v1063
        %v1073 = vsel %vm1070, %v1061, %v1064
        %v1074 = vsel %vm1070, %v1061, %v1065
        %v1075 = vld [vmem:[%s883] sm:$0x1f]
        %v1076 = vld [vmem:[%s883 + $0x8] sm:$0x1f]
        %v1077 = vld [vmem:[%s883 + $0x10] sm:$0x1f]
        %v1078 = vld [vmem:[%s883 + $0x18] sm:$0x1f]
        %v1079 = vadd.f32 %v1071, %v1075
        %v1080 = vadd.f32 %v1072, %v1076
        %v1081 = vadd.f32 %v1073, %v1077
        %v1082 = vadd.f32 %v1074, %v1078
        %v1083 = vld [vmem:[%s888] sm:$0x1]
        %v1084 = vld [vmem:[%s888 + $0x1] sm:$0x1]
        %v1085 = vld [vmem:[%s888 + $0x2] sm:$0x1]
        %v1086 = vld [vmem:[%s888 + $0x3] sm:$0x1]
        %v1087 = vld [vmem:[%s6] sm:$0x1]
        %v1088 = vld [vmem:[%s7] sm:$0x1]
        %vm1089 = vcmask 389120
        %v1090 = vsel %vm1089, %v1079, 0.0
        %1091 = vadd.xlane.f32.xlu0 %v1090
        %v1092 = vpop.xlane.xlu0 %1091
        %v1093 = vsel %vm1089, %v1080, 0.0
        %1094 = vadd.xlane.f32.xlu0 %v1093
        %v1095 = vpop.xlane.xlu0 %1094
        %v1096 = vsel %vm1089, %v1081, 0.0
        %1097 = vadd.xlane.f32.xlu0 %v1096
        %v1098 = vpop.xlane.xlu0 %1097
        %v1099 = vsel %vm1089, %v1082, 0.0
        %1100 = vadd.xlane.f32.xlu0 %v1099
        %v1101 = vpop.xlane.xlu0 %1100
        %v1102 = vrcp.pop 48.0
        %v1103 = vmul.f32 %v1092, %v1102
        %v1104 = vmul.f32 %v1095, %v1102
        %v1105 = vmul.f32 %v1098, %v1102
        %v1106 = vmul.f32 %v1101, %v1102
        %v1107 = vsub.f32 %v1079, %v1103
        %v1108 = vsub.f32 %v1080, %v1104
        %v1109 = vsub.f32 %v1081, %v1105
        %v1110 = vsub.f32 %v1082, %v1106
        %v1111 = vmul.f32 %v1107, %v1107
        %v1112 = vmul.f32 %v1108, %v1108
        %v1113 = vmul.f32 %v1109, %v1109
        %v1114 = vmul.f32 %v1110, %v1110
        %v1115 = vsel %vm1089, %v1111, 0.0
        %1116 = vadd.xlane.f32.xlu0 %v1115
        %v1117 = vpop.xlane.xlu0 %1116
        %v1118 = vsel %vm1089, %v1112, 0.0
        %1119 = vadd.xlane.f32.xlu0 %v1118
        %v1120 = vpop.xlane.xlu0 %1119
        %v1121 = vsel %vm1089, %v1113, 0.0
        %1122 = vadd.xlane.f32.xlu0 %v1121
        %v1123 = vpop.xlane.xlu0 %1122
        %v1124 = vsel %vm1089, %v1114, 0.0
        %1125 = vadd.xlane.f32.xlu0 %v1124
        %v1126 = vpop.xlane.xlu0 %1125
        %v1127 = vmul.f32 %v1117, %v1102
        %v1128 = vmul.f32 %v1120, %v1102
        %v1129 = vmul.f32 %v1123, %v1102
        %v1130 = vmul.f32 %v1126, %v1102
        %v1131 = vadd.f32 %v1127, 1e-06
        %v1132 = vadd.f32 %v1128, 1e-06
        %v1133 = vadd.f32 %v1129, 1e-06
        %v1134 = vadd.f32 %v1130, 1e-06
        %v1135 = vrsqrt.pop %v1131
        %v1136 = vrsqrt.pop %v1132
        %v1137 = vrsqrt.pop %v1133
        %v1138 = vrsqrt.pop %v1134
        %v1139 = vmul.f32 %v1107, %v1135
        %v1140 = vmul.f32 %v1108, %v1136
        %v1141 = vmul.f32 %v1109, %v1137
        %v1142 = vmul.f32 %v1110, %v1138
        %v1144 = vlaneseq
        %v1145 = vshrl.u32 %v1144, 7
        %v1146 = vsub.s32 0, %v1145
        %v1147 = vrot.slane %v1087, %v1146
        %v1149 = vmul.f32 %v1139, %v1147
        %v1150 = vmul.f32 %v1140, %v1147
        %v1151 = vmul.f32 %v1141, %v1147
        %v1152 = vmul.f32 %v1142, %v1147
        %v1154 = vlaneseq
        %v1155 = vshrl.u32 %v1154, 7
        %v1156 = vsub.s32 0, %v1155
        %v1157 = vrot.slane %v1088, %v1156
        %v1159 = vadd.f32 %v1149, %v1157
        %v1160 = vadd.f32 %v1150, %v1157
        %v1161 = vadd.f32 %v1151, %v1157
        %v1162 = vadd.f32 %v1152, %v1157
        %v1167 = vcombine.high %v1159, %v1159
        %v1169 = vunpack.c.l.s4 1966171168
        %v1170 = vunpack.c.0.s8 %v1169
        %v1171 = vlaneseq
        %v1172 = vshrl.u32 %v1171, 7
        %v1173 = vsub.s32 %v1170, %v1172
        %v1174 = vrot.slane %v1159, %v1173
        %v1176 = vunpack.c.l.s4 1966171168
        %v1177 = vunpack.c.0.s8 %v1176
        %v1178 = vlaneseq
        %v1179 = vshrl.u32 %v1178, 7
        %v1180 = vsub.s32 %v1177, %v1179
        %v1181 = vrot.slane %v1167, %v1180
        %v1182 = vcombine.high %v1174, %v1174
        %v1184 = vunpack.c.l.s4 1966171168
        %v1185 = vunpack.c.0.s8 %v1184
        %v1186 = vlaneseq
        %v1187 = vshrl.u32 %v1186, 7
        %v1188 = vsub.s32 %v1185, %v1187
        %v1189 = vrot.slane %v1174, %v1188
        %v1191 = vunpack.c.l.s4 1966171168
        %v1192 = vunpack.c.0.s8 %v1191
        %v1193 = vlaneseq
        %v1194 = vshrl.u32 %v1193, 7
        %v1195 = vsub.s32 %v1192, %v1194
        %v1196 = vrot.slane %v1181, %v1195
        %v1198 = vunpack.c.l.s4 1966171168
        %v1199 = vunpack.c.0.s8 %v1198
        %v1200 = vlaneseq
        %v1201 = vshrl.u32 %v1200, 7
        %v1202 = vsub.s32 %v1199, %v1201
        %v1203 = vrot.slane %v1182, %v1202
        %v1204 = vcombine.high %v1189, %v1189
        %v1205 = vcombine.high %v1203, %v1203
        %v1206 = vcombine.high %v1160, %v1160
        %v1208 = vunpack.c.l.s4 1966171168
        %v1209 = vunpack.c.0.s8 %v1208
        %v1210 = vlaneseq
        %v1211 = vshrl.u32 %v1210, 7
        %v1212 = vsub.s32 %v1209, %v1211
        %v1213 = vrot.slane %v1160, %v1212
        %v1215 = vunpack.c.l.s4 1966171168
        %v1216 = vunpack.c.0.s8 %v1215
        %v1217 = vlaneseq
        %v1218 = vshrl.u32 %v1217, 7
        %v1219 = vsub.s32 %v1216, %v1218
        %v1220 = vrot.slane %v1206, %v1219
        %v1221 = vcombine.high %v1213, %v1213
        %v1223 = vunpack.c.l.s4 1966171168
        %v1224 = vunpack.c.0.s8 %v1223
        %v1225 = vlaneseq
        %v1226 = vshrl.u32 %v1225, 7
        %v1227 = vsub.s32 %v1224, %v1226
        %v1228 = vrot.slane %v1213, %v1227
        %v1230 = vunpack.c.l.s4 1966171168
        %v1231 = vunpack.c.0.s8 %v1230
        %v1232 = vlaneseq
        %v1233 = vshrl.u32 %v1232, 7
        %v1234 = vsub.s32 %v1231, %v1233
        %v1235 = vrot.slane %v1220, %v1234
        %v1237 = vunpack.c.l.s4 1966171168
        %v1238 = vunpack.c.0.s8 %v1237
        %v1239 = vlaneseq
        %v1240 = vshrl.u32 %v1239, 7
        %v1241 = vsub.s32 %v1238, %v1240
        %v1242 = vrot.slane %v1221, %v1241
        %v1243 = vcombine.high %v1228, %v1228
        %v1244 = vcombine.high %v1242, %v1242
        %v1245 = vcombine.high %v1161, %v1161
        %v1247 = vunpack.c.l.s4 1966171168
        %v1248 = vunpack.c.0.s8 %v1247
        %v1249 = vlaneseq
        %v1250 = vshrl.u32 %v1249, 7
        %v1251 = vsub.s32 %v1248, %v1250
        %v1252 = vrot.slane %v1161, %v1251
        %v1254 = vunpack.c.l.s4 1966171168
        %v1255 = vunpack.c.0.s8 %v1254
        %v1256 = vlaneseq
        %v1257 = vshrl.u32 %v1256, 7
        %v1258 = vsub.s32 %v1255, %v1257
        %v1259 = vrot.slane %v1245, %v1258
        %v1260 = vcombine.high %v1252, %v1252
        %v1262 = vunpack.c.l.s4 1966171168
        %v1263 = vunpack.c.0.s8 %v1262
        %v1264 = vlaneseq
        %v1265 = vshrl.u32 %v1264, 7
        %v1266 = vsub.s32 %v1263, %v1265
        %v1267 = vrot.slane %v1252, %v1266
        %v1269 = vunpack.c.l.s4 1966171168
        %v1270 = vunpack.c.0.s8 %v1269
        %v1271 = vlaneseq
        %v1272 = vshrl.u32 %v1271, 7
        %v1273 = vsub.s32 %v1270, %v1272
        %v1274 = vrot.slane %v1259, %v1273
        %v1276 = vunpack.c.l.s4 1966171168
        %v1277 = vunpack.c.0.s8 %v1276
        %v1278 = vlaneseq
        %v1279 = vshrl.u32 %v1278, 7
        %v1280 = vsub.s32 %v1277, %v1279
        %v1281 = vrot.slane %v1260, %v1280
        %v1282 = vcombine.high %v1267, %v1267
        %v1283 = vcombine.high %v1281, %v1281
        %v1284 = vcombine.high %v1162, %v1162
        %v1286 = vunpack.c.l.s4 1966171168
        %v1287 = vunpack.c.0.s8 %v1286
        %v1288 = vlaneseq
        %v1289 = vshrl.u32 %v1288, 7
        %v1290 = vsub.s32 %v1287, %v1289
        %v1291 = vrot.slane %v1162, %v1290
        %v1293 = vunpack.c.l.s4 1966171168
        %v1294 = vunpack.c.0.s8 %v1293
        %v1295 = vlaneseq
        %v1296 = vshrl.u32 %v1295, 7
        %v1297 = vsub.s32 %v1294, %v1296
        %v1298 = vrot.slane %v1284, %v1297
        %v1299 = vcombine.high %v1291, %v1291
        %v1301 = vunpack.c.l.s4 1966171168
        %v1302 = vunpack.c.0.s8 %v1301
        %v1303 = vlaneseq
        %v1304 = vshrl.u32 %v1303, 7
        %v1305 = vsub.s32 %v1302, %v1304
        %v1306 = vrot.slane %v1291, %v1305
        %v1308 = vunpack.c.l.s4 1966171168
        %v1309 = vunpack.c.0.s8 %v1308
        %v1310 = vlaneseq
        %v1311 = vshrl.u32 %v1310, 7
        %v1312 = vsub.s32 %v1309, %v1311
        %v1313 = vrot.slane %v1298, %v1312
        %v1315 = vunpack.c.l.s4 1966171168
        %v1316 = vunpack.c.0.s8 %v1315
        %v1317 = vlaneseq
        %v1318 = vshrl.u32 %v1317, 7
        %v1319 = vsub.s32 %v1316, %v1318
        %v1320 = vrot.slane %v1299, %v1319
        %v1321 = vcombine.high %v1306, %v1306
        %v1322 = vcombine.high %v1320, %v1320
        %v1323 = vcombine.low %v1189, %v1203
        %v1324 = vcombine.low %v1204, %v1205
        %v1325 = vcombine.low %v1196, %v1228
        %v1326 = vcombine.low %v1242, %v1243
        %v1328 = vunpack.c.l.s4 1966171168
        %v1329 = vunpack.c.0.s8 %v1328
        %v1330 = vlaneseq
        %v1331 = vshrl.u32 %v1330, 7
        %v1332 = vsub.s32 %v1329, %v1331
        %v1333 = vrot.slane %v1323, %v1332
        %v1335 = vunpack.c.l.s4 1966171168
        %v1336 = vunpack.c.0.s8 %v1335
        %v1337 = vlaneseq
        %v1338 = vshrl.u32 %v1337, 7
        %v1339 = vsub.s32 %v1336, %v1338
        %v1340 = vrot.slane %v1324, %v1339
        %v1342 = vunpack.c.l.s4 1966171168
        %v1343 = vunpack.c.0.s8 %v1342
        %v1344 = vlaneseq
        %v1345 = vshrl.u32 %v1344, 7
        %v1346 = vsub.s32 %v1343, %v1345
        %v1347 = vrot.slane %v1325, %v1346
        %v1349 = vunpack.c.l.s4 1966171168
        %v1350 = vunpack.c.0.s8 %v1349
        %v1351 = vlaneseq
        %v1352 = vshrl.u32 %v1351, 7
        %v1353 = vsub.s32 %v1350, %v1352
        %v1354 = vrot.slane %v1326, %v1353
        %v1355 = vcombine.low %v1333, %v1340
        %v1356 = vcombine.low %v1347, %v1354
        %v1358 = vunpack.c.l.s4 1966171168
        %v1359 = vunpack.c.0.s8 %v1358
        %v1360 = vlaneseq
        %v1361 = vshrl.u32 %v1360, 7
        %v1362 = vsub.s32 %v1359, %v1361
        %v1363 = vrot.slane %v1355, %v1362
        %v1365 = vunpack.c.l.s4 1966171168
        %v1366 = vunpack.c.0.s8 %v1365
        %v1367 = vlaneseq
        %v1368 = vshrl.u32 %v1367, 7
        %v1369 = vsub.s32 %v1366, %v1368
        %v1370 = vrot.slane %v1356, %v1369
        %v1371 = vcombine.low %v1363, %v1370
        %v1372 = vcombine.low %v1244, %v1235
        %v1373 = vcombine.low %v1267, %v1281
        %v1374 = vcombine.low %v1282, %v1283
        %v1375 = vcombine.low %v1274, %v1306
        %v1377 = vunpack.c.l.s4 1966171168
        %v1378 = vunpack.c.0.s8 %v1377
        %v1379 = vlaneseq
        %v1380 = vshrl.u32 %v1379, 7
        %v1381 = vsub.s32 %v1378, %v1380
        %v1382 = vrot.slane %v1372, %v1381
        %v1384 = vunpack.c.l.s4 1966171168
        %v1385 = vunpack.c.0.s8 %v1384
        %v1386 = vlaneseq
        %v1387 = vshrl.u32 %v1386, 7
        %v1388 = vsub.s32 %v1385, %v1387
        %v1389 = vrot.slane %v1373, %v1388
        %v1391 = vunpack.c.l.s4 1966171168
        %v1392 = vunpack.c.0.s8 %v1391
        %v1393 = vlaneseq
        %v1394 = vshrl.u32 %v1393, 7
        %v1395 = vsub.s32 %v1392, %v1394
        %v1396 = vrot.slane %v1374, %v1395
        %v1398 = vunpack.c.l.s4 1966171168
        %v1399 = vunpack.c.0.s8 %v1398
        %v1400 = vlaneseq
        %v1401 = vshrl.u32 %v1400, 7
        %v1402 = vsub.s32 %v1399, %v1401
        %v1403 = vrot.slane %v1375, %v1402
        %v1404 = vcombine.low %v1382, %v1389
        %v1405 = vcombine.low %v1396, %v1403
        %v1407 = vunpack.c.l.s4 1966171168
        %v1408 = vunpack.c.0.s8 %v1407
        %v1409 = vlaneseq
        %v1410 = vshrl.u32 %v1409, 7
        %v1411 = vsub.s32 %v1408, %v1410
        %v1412 = vrot.slane %v1404, %v1411
        %v1414 = vunpack.c.l.s4 1966171168
        %v1415 = vunpack.c.0.s8 %v1414
        %v1416 = vlaneseq
        %v1417 = vshrl.u32 %v1416, 7
        %v1418 = vsub.s32 %v1415, %v1417
        %v1419 = vrot.slane %v1405, %v1418
        %v1420 = vcombine.low %v1412, %v1419
        %v1421 = vcombine.low %v1320, %v1321
        %v1422 = vcombine.low %v1322, %v1313
        %v1424 = vunpack.c.l.s4 1966171168
        %v1425 = vunpack.c.0.s8 %v1424
        %v1426 = vlaneseq
        %v1427 = vshrl.u32 %v1426, 7
        %v1428 = vsub.s32 %v1425, %v1427
        %v1429 = vrot.slane %v1421, %v1428
        %v1431 = vunpack.c.l.s4 1966171168
        %v1432 = vunpack.c.0.s8 %v1431
        %v1433 = vlaneseq
        %v1434 = vshrl.u32 %v1433, 7
        %v1435 = vsub.s32 %v1432, %v1434
        %v1436 = vrot.slane %v1422, %v1435
        %v1437 = vcombine.low %v1429, %v1436
        %v1439 = vunpack.c.l.s4 1966171168
        %v1440 = vunpack.c.0.s8 %v1439
        %v1441 = vlaneseq
        %v1442 = vshrl.u32 %v1441, 7
        %v1443 = vsub.s32 %v1440, %v1442
        %v1444 = vrot.slane %v1437, %v1443
        %v1448 = vpack.c.bf16 %v1420, %v1371
        %v1449 = vpack.c.bf16 %v1444, %v1444
        %v1450 = vld [vmem:[%s8] sm:$0xff]
        %v1451 = vld [vmem:[%s8 + $0x8] sm:$0xff]
        %v1452 = vld [vmem:[%s8 + $0x10] sm:$0xff]
        %v1453 = vld [vmem:[%s8 + $0x18] sm:$0xff]
        %v1454 = vld [vmem:[%s8 + $0x20] sm:$0xff]
        %v1455 = vld [vmem:[%s8 + $0x28] sm:$0xff]
        %v1456 = vld [vmem:[%s9] sm:$0x3]
        %v1458 = vlaneseq
        %v1459 = vshrl.u32 %v1458, 7
        %v1460 = vsub.s32 0, %v1459
        %v1461 = vrot.slane %v1456, %v1460
        %v1462 = vlaneseq
        %v1463 = vshrl.u32 %v1462, 7
        %v1464 = vsub.s32 1, %v1463
        %v1465 = vrot.slane %v1456, %v1464
        %v1474 = vunpack.c.l.b16 %v1450
        %v1475 = vunpack.c.h.b16 %v1450
        %v1476 = vunpack.c.l.b16 %v1451
        %v1477 = vunpack.c.h.b16 %v1451
        %v1478 = vunpack.c.l.b16 %v1452
        %v1479 = vunpack.c.h.b16 %v1452
        %v1480 = vunpack.c.l.b16 %v1453
        %v1481 = vunpack.c.h.b16 %v1453
        %v1482 = vunpack.c.l.b16 %v1454
        %v1483 = vunpack.c.h.b16 %v1454
        %v1484 = vunpack.c.l.b16 %v1455
        %v1485 = vunpack.c.h.b16 %v1455
        %v1486 = vpack.c.b16 %v1476, %v1474
        %v1487 = vpack.c.b16 %v1477, %v1475
        %v1488 = vpack.c.b16 %v1480, %v1478
        %v1489 = vpack.c.b16 %v1481, %v1479
        %v1490 = vpack.c.b16 %v1484, %v1482
        %v1491 = vpack.c.b16 %v1485, %v1483
        %vm1498 = vcmask 392192
        %v1500 = vsel %vm1498, %v1448, 0
        %v1503 = vsel %vm1498, %v1449, 0
        %1505 = vmatprep.subr.bf16.mxu0 0
        %1506 = vmatpush1.bf16.msra.mxu0 0
        %1507 = vmatprep.subr.bf16.mxu0 0
        %1508 = vmatpush1.bf16.msra.mxu0 0
        %1509 = vmatprep.subr.bf16.mxu0 0
        %1510 = vmatpush1.bf16.msra.mxu0 0
        %1511 = vmatprep.subr.bf16.mxu0 0
        %1512 = vmatpush1.bf16.msra.mxu0 0
        %1513 = vmatprep.subr.bf16.mxu0 0
        %1514 = vmatpush1.bf16.msra.mxu0 0
        %1515 = vmatprep.subr.bf16.mxu0 %v1491
        %1516 = vmatpush1.bf16.msra.mxu0 %v1490
        %1517 = vmatprep.subr.bf16.mxu0 %v1489
        %1518 = vmatpush1.bf16.msra.mxu0 %v1488
        %1519 = vmatprep.subr.bf16.mxu0 %v1487
        %1520 = vmatpush1.bf16.msra.mxu0 %v1486
        %1521 = vmatprep.subr.bf16.mxu0 0
        %1522 = vmatpush2.bf16.msra.mxu0 0
        %1523 = vmatprep.subr.bf16.mxu0 0
        %1524 = vmatpush2.bf16.msra.mxu0 0
        %1525 = vmatprep.subr.bf16.mxu0 0
        %1526 = vmatpush2.bf16.msra.mxu0 0
        %1527 = vmatprep.subr.bf16.mxu0 0
        %1528 = vmatpush2.bf16.msra.mxu0 0
        %1529 = vmatprep.subr.bf16.mxu0 0
        %1530 = vmatpush2.bf16.msra.mxu0 0
        %1531 = vmatprep.subr.bf16.mxu0 0
        %1532 = vmatpush2.bf16.msra.mxu0 0
        %1533 = vmatprep.subr.bf16.mxu0 0
        %1534 = vmatpush2.bf16.msra.mxu0 0
        %1535 = vmatprep.subr.bf16.mxu0 0
        %1536 = vmatpush2.bf16.msra.mxu0 0
        %1537 = vmatprep.mubr.bf16.mxu0 0
        %1538 = vmatmul.mubr.bf16.gmra.mxu0 %v1500
        %v1539 = vpop.f32.mrf.mxu0
        %v1540 = vadd.f32 %v1461, %v1539
        %v1541 = vpop.f32.mrf.mxu0
        %v1542 = vadd.f32 %v1465, %v1541
        %v1543 = vpop.f32.mrf.mxu0
        %v1544 = vadd.f32 %v1461, %v1543
        %v1545 = vpop.f32.mrf.mxu0
        %v1546 = vadd.f32 %v1465, %v1545
        %1547 = vmatprep.mubr.bf16.mxu0 0
        %1548 = vmatmul.mubr.bf16.gmra.mxu0 %v1503
        %v1549 = vpop.f32.mrf.mxu0
        %v1550 = vadd.f32 %v1461, %v1549
        %v1551 = vpop.f32.mrf.mxu0
        %v1552 = vadd.f32 %v1465, %v1551
        %v1553 = vpop.f32.mrf.mxu0
        %v1554 = vpop.f32.mrf.mxu0
        %1555 = vdwg.mxu0
        %v1562 = vcombine.low %v1540, %v1542
        %v1563 = vcombine.high %v1540, %v1542
        %v1565 = vunpack.c.l.s4 1966171168
        %v1566 = vunpack.c.0.s8 %v1565
        %v1567 = vlaneseq
        %v1568 = vshrl.u32 %v1567, 7
        %v1569 = vsub.s32 %v1566, %v1568
        %v1570 = vrot.slane %v1562, %v1569
        %v1572 = vunpack.c.l.s4 1966171168
        %v1573 = vunpack.c.0.s8 %v1572
        %v1574 = vlaneseq
        %v1575 = vshrl.u32 %v1574, 7
        %v1576 = vsub.s32 %v1573, %v1575
        %v1577 = vrot.slane %v1563, %v1576
        %v1578 = vcombine.high %v1570, %v1570
        %v1579 = vcombine.high %v1577, %v1577
        %v1581 = vunpack.c.l.s4 1966171168
        %v1582 = vunpack.c.0.s8 %v1581
        %v1583 = vlaneseq
        %v1584 = vshrl.u32 %v1583, 7
        %v1585 = vsub.s32 %v1582, %v1584
        %v1586 = vrot.slane %v1570, %v1585
        %v1588 = vunpack.c.l.s4 1966171168
        %v1589 = vunpack.c.0.s8 %v1588
        %v1590 = vlaneseq
        %v1591 = vshrl.u32 %v1590, 7
        %v1592 = vsub.s32 %v1589, %v1591
        %v1593 = vrot.slane %v1577, %v1592
        %v1595 = vunpack.c.l.s4 1966171168
        %v1596 = vunpack.c.0.s8 %v1595
        %v1597 = vlaneseq
        %v1598 = vshrl.u32 %v1597, 7
        %v1599 = vsub.s32 %v1596, %v1598
        %v1600 = vrot.slane %v1578, %v1599
        %v1602 = vunpack.c.l.s4 1966171168
        %v1603 = vunpack.c.0.s8 %v1602
        %v1604 = vlaneseq
        %v1605 = vshrl.u32 %v1604, 7
        %v1606 = vsub.s32 %v1603, %v1605
        %v1607 = vrot.slane %v1579, %v1606
        %v1608 = vcombine.high %v1586, %v1586
        %v1609 = vcombine.high %v1593, %v1593
        %v1610 = vcombine.high %v1600, %v1600
        %v1611 = vcombine.high %v1607, %v1607
        %v1612 = vcombine.low %v1544, %v1546
        %v1613 = vcombine.high %v1544, %v1546
        %v1615 = vunpack.c.l.s4 1966171168
        %v1616 = vunpack.c.0.s8 %v1615
        %v1617 = vlaneseq
        %v1618 = vshrl.u32 %v1617, 7
        %v1619 = vsub.s32 %v1616, %v1618
        %v1620 = vrot.slane %v1612, %v1619
        %v1622 = vunpack.c.l.s4 1966171168
        %v1623 = vunpack.c.0.s8 %v1622
        %v1624 = vlaneseq
        %v1625 = vshrl.u32 %v1624, 7
        %v1626 = vsub.s32 %v1623, %v1625
        %v1627 = vrot.slane %v1613, %v1626
        %v1628 = vcombine.high %v1620, %v1620
        %v1629 = vcombine.high %v1627, %v1627
        %v1631 = vunpack.c.l.s4 1966171168
        %v1632 = vunpack.c.0.s8 %v1631
        %v1633 = vlaneseq
        %v1634 = vshrl.u32 %v1633, 7
        %v1635 = vsub.s32 %v1632, %v1634
        %v1636 = vrot.slane %v1620, %v1635
        %v1638 = vunpack.c.l.s4 1966171168
        %v1639 = vunpack.c.0.s8 %v1638
        %v1640 = vlaneseq
        %v1641 = vshrl.u32 %v1640, 7
        %v1642 = vsub.s32 %v1639, %v1641
        %v1643 = vrot.slane %v1627, %v1642
        %v1645 = vunpack.c.l.s4 1966171168
        %v1646 = vunpack.c.0.s8 %v1645
        %v1647 = vlaneseq
        %v1648 = vshrl.u32 %v1647, 7
        %v1649 = vsub.s32 %v1646, %v1648
        %v1650 = vrot.slane %v1628, %v1649
        %v1652 = vunpack.c.l.s4 1966171168
        %v1653 = vunpack.c.0.s8 %v1652
        %v1654 = vlaneseq
        %v1655 = vshrl.u32 %v1654, 7
        %v1656 = vsub.s32 %v1653, %v1655
        %v1657 = vrot.slane %v1629, %v1656
        %v1658 = vcombine.high %v1636, %v1636
        %v1659 = vcombine.high %v1643, %v1643
        %v1660 = vcombine.high %v1650, %v1650
        %v1661 = vcombine.high %v1657, %v1657
        %v1662 = vcombine.low %v1550, %v1552
        %v1664 = vunpack.c.l.s4 1966171168
        %v1665 = vunpack.c.0.s8 %v1664
        %v1666 = vlaneseq
        %v1667 = vshrl.u32 %v1666, 7
        %v1668 = vsub.s32 %v1665, %v1667
        %v1669 = vrot.slane %v1662, %v1668
        %v1670 = vcombine.high %v1669, %v1669
        %v1672 = vunpack.c.l.s4 1966171168
        %v1673 = vunpack.c.0.s8 %v1672
        %v1674 = vlaneseq
        %v1675 = vshrl.u32 %v1674, 7
        %v1676 = vsub.s32 %v1673, %v1675
        %v1677 = vrot.slane %v1669, %v1676
        %v1679 = vunpack.c.l.s4 1966171168
        %v1680 = vunpack.c.0.s8 %v1679
        %v1681 = vlaneseq
        %v1682 = vshrl.u32 %v1681, 7
        %v1683 = vsub.s32 %v1680, %v1682
        %v1684 = vrot.slane %v1670, %v1683
        %v1685 = vcombine.high %v1677, %v1677
        %v1686 = vcombine.high %v1684, %v1684
        %v1687 = vcombine.low %v1586, %v1600
        %v1688 = vcombine.low %v1608, %v1610
        %v1690 = vunpack.c.l.s4 1966171168
        %v1691 = vunpack.c.0.s8 %v1690
        %v1692 = vlaneseq
        %v1693 = vshrl.u32 %v1692, 7
        %v1694 = vsub.s32 %v1691, %v1693
        %v1695 = vrot.slane %v1687, %v1694
        %v1697 = vunpack.c.l.s4 1966171168
        %v1698 = vunpack.c.0.s8 %v1697
        %v1699 = vlaneseq
        %v1700 = vshrl.u32 %v1699, 7
        %v1701 = vsub.s32 %v1698, %v1700
        %v1702 = vrot.slane %v1688, %v1701
        %v1704 = vunpack.c.l.s4 1966171168
        %v1705 = vunpack.c.0.s8 %v1704
        %v1706 = vlaneseq
        %v1707 = vshrl.u32 %v1706, 7
        %v1708 = vsub.s32 %v1705, %v1707
        %v1709 = vrot.slane %v1593, %v1708
        %v1710 = vcombine.low %v1695, %v1702
        %v1712 = vunpack.c.l.s4 1966171168
        %v1713 = vunpack.c.0.s8 %v1712
        %v1714 = vlaneseq
        %v1715 = vshrl.u32 %v1714, 7
        %v1716 = vsub.s32 %v1713, %v1715
        %v1717 = vrot.slane %v1710, %v1716
        %v1719 = vunpack.c.l.s4 1966171168
        %v1720 = vunpack.c.0.s8 %v1719
        %v1721 = vlaneseq
        %v1722 = vshrl.u32 %v1721, 7
        %v1723 = vsub.s32 %v1720, %v1722
        %v1724 = vrot.slane %v1709, %v1723
        %v1725 = vcombine.low %v1717, %v1724
        %v1726 = vcombine.low %v1607, %v1609
        %v1727 = vcombine.low %v1611, %v1636
        %v1729 = vunpack.c.l.s4 1966171168
        %v1730 = vunpack.c.0.s8 %v1729
        %v1731 = vlaneseq
        %v1732 = vshrl.u32 %v1731, 7
        %v1733 = vsub.s32 %v1730, %v1732
        %v1734 = vrot.slane %v1726, %v1733
        %v1736 = vunpack.c.l.s4 1966171168
        %v1737 = vunpack.c.0.s8 %v1736
        %v1738 = vlaneseq
        %v1739 = vshrl.u32 %v1738, 7
        %v1740 = vsub.s32 %v1737, %v1739
        %v1741 = vrot.slane %v1727, %v1740
        %v1743 = vunpack.c.l.s4 1966171168
        %v1744 = vunpack.c.0.s8 %v1743
        %v1745 = vlaneseq
        %v1746 = vshrl.u32 %v1745, 7
        %v1747 = vsub.s32 %v1744, %v1746
        %v1748 = vrot.slane %v1650, %v1747
        %v1749 = vcombine.low %v1734, %v1741
        %v1751 = vunpack.c.l.s4 1966171168
        %v1752 = vunpack.c.0.s8 %v1751
        %v1753 = vlaneseq
        %v1754 = vshrl.u32 %v1753, 7
        %v1755 = vsub.s32 %v1752, %v1754
        %v1756 = vrot.slane %v1749, %v1755
        %v1758 = vunpack.c.l.s4 1966171168
        %v1759 = vunpack.c.0.s8 %v1758
        %v1760 = vlaneseq
        %v1761 = vshrl.u32 %v1760, 7
        %v1762 = vsub.s32 %v1759, %v1761
        %v1763 = vrot.slane %v1748, %v1762
        %v1764 = vcombine.low %v1756, %v1763
        %v1765 = vcombine.low %v1658, %v1660
        %v1766 = vcombine.low %v1643, %v1657
        %v1768 = vunpack.c.l.s4 1966171168
        %v1769 = vunpack.c.0.s8 %v1768
        %v1770 = vlaneseq
        %v1771 = vshrl.u32 %v1770, 7
        %v1772 = vsub.s32 %v1769, %v1771
        %v1773 = vrot.slane %v1765, %v1772
        %v1775 = vunpack.c.l.s4 1966171168
        %v1776 = vunpack.c.0.s8 %v1775
        %v1777 = vlaneseq
        %v1778 = vshrl.u32 %v1777, 7
        %v1779 = vsub.s32 %v1776, %v1778
        %v1780 = vrot.slane %v1766, %v1779
        %v1782 = vunpack.c.l.s4 1966171168
        %v1783 = vunpack.c.0.s8 %v1782
        %v1784 = vlaneseq
        %v1785 = vshrl.u32 %v1784, 7
        %v1786 = vsub.s32 %v1783, %v1785
        %v1787 = vrot.slane %v1659, %v1786
        %v1788 = vcombine.low %v1773, %v1780
        %v1790 = vunpack.c.l.s4 1966171168
        %v1791 = vunpack.c.0.s8 %v1790
        %v1792 = vlaneseq
        %v1793 = vshrl.u32 %v1792, 7
        %v1794 = vsub.s32 %v1791, %v1793
        %v1795 = vrot.slane %v1788, %v1794
        %v1797 = vunpack.c.l.s4 1966171168
        %v1798 = vunpack.c.0.s8 %v1797
        %v1799 = vlaneseq
        %v1800 = vshrl.u32 %v1799, 7
        %v1801 = vsub.s32 %v1798, %v1800
        %v1802 = vrot.slane %v1787, %v1801
        %v1803 = vcombine.low %v1795, %v1802
        %v1804 = vcombine.low %v1661, %v1677
        %v1805 = vcombine.low %v1684, %v1685
        %v1807 = vunpack.c.l.s4 1966171168
        %v1808 = vunpack.c.0.s8 %v1807
        %v1809 = vlaneseq
        %v1810 = vshrl.u32 %v1809, 7
        %v1811 = vsub.s32 %v1808, %v1810
        %v1812 = vrot.slane %v1804, %v1811
        %v1814 = vunpack.c.l.s4 1966171168
        %v1815 = vunpack.c.0.s8 %v1814
        %v1816 = vlaneseq
        %v1817 = vshrl.u32 %v1816, 7
        %v1818 = vsub.s32 %v1815, %v1817
        %v1819 = vrot.slane %v1805, %v1818
        %v1821 = vunpack.c.l.s4 1966171168
        %v1822 = vunpack.c.0.s8 %v1821
        %v1823 = vlaneseq
        %v1824 = vshrl.u32 %v1823, 7
        %v1825 = vsub.s32 %v1822, %v1824
        %v1826 = vrot.slane %v1686, %v1825
        %v1827 = vcombine.low %v1812, %v1819
        %v1829 = vunpack.c.l.s4 1966171168
        %v1830 = vunpack.c.0.s8 %v1829
        %v1831 = vlaneseq
        %v1832 = vshrl.u32 %v1831, 7
        %v1833 = vsub.s32 %v1830, %v1832
        %v1834 = vrot.slane %v1827, %v1833
        %v1836 = vunpack.c.l.s4 1966171168
        %v1837 = vunpack.c.0.s8 %v1836
        %v1838 = vlaneseq
        %v1839 = vshrl.u32 %v1838, 7
        %v1840 = vsub.s32 %v1837, %v1839
        %v1841 = vrot.slane %v1826, %v1840
        %v1842 = vcombine.low %v1834, %v1841
        %v1847 = vpack.c.bf16 %v1725, %v1725
        %v1848 = vpack.c.bf16 %v1764, %v1764
        %v1849 = vpack.c.bf16 %v1803, %v1803
        %v1850 = vpack.c.bf16 %v1842, %v1842
        %v1855 = vlaneseq
        %v1856 = vshrl.u32 %v1855, 7
        %v1857 = vsub.s32 0, %v1856
        %v1858 = vrot.slane %v1083, %v1857
        %v1859 = vlaneseq
        %v1860 = vshrl.u32 %v1859, 7
        %v1861 = vsub.s32 0, %v1860
        %v1862 = vrot.slane %v1084, %v1861
        %v1863 = vlaneseq
        %v1864 = vshrl.u32 %v1863, 7
        %v1865 = vsub.s32 0, %v1864
        %v1866 = vrot.slane %v1085, %v1865
        %v1867 = vlaneseq
        %v1868 = vshrl.u32 %v1867, 7
        %v1869 = vsub.s32 0, %v1868
        %v1870 = vrot.slane %v1086, %v1869
        %1876 = vrot.lane.b32.xlu0 %v1847, 80
        %v1877 = vpop.permute.xlu0 %1876
        %vm1878 = vcmask 130048
        %v1880 = vsel %vm1878, %v1847, 0
        %v1883 = vsel %vm1878, %v1877, 0
        %1885 = vmatprep.subr.bf16.mxu0 0
        %1886 = vmatpush1.bf16.xpose.msra.mxu0 0
        %1887 = vmatprep.subr.bf16.mxu0 0
        %1888 = vmatpush1.bf16.xpose.msra.mxu0 0
        %1889 = vmatprep.subr.bf16.mxu0 0
        %1890 = vmatpush1.bf16.xpose.msra.mxu0 0
        %1891 = vmatprep.subr.bf16.mxu0 0
        %1892 = vmatpush1.bf16.xpose.msra.mxu0 0
        %1893 = vmatprep.subr.bf16.mxu0 0
        %1894 = vmatpush1.bf16.xpose.msra.mxu0 0
        %1895 = vmatprep.subr.bf16.mxu0 0
        %1896 = vmatpush1.bf16.xpose.msra.mxu0 0
        %1897 = vmatprep.subr.bf16.mxu0 0
        %1898 = vmatpush1.bf16.xpose.msra.mxu0 0
        %1899 = vmatprep.subr.bf16.mxu0 0
        %1900 = vmatpush1.bf16.xpose.msra.mxu0 %v1883
        %1901 = vmatprep.subr.bf16.mxu0 0
        %1902 = vmatpush2.bf16.xpose.msra.mxu0 0
        %1903 = vmatprep.subr.bf16.mxu0 0
        %1904 = vmatpush2.bf16.xpose.msra.mxu0 0
        %1905 = vmatprep.subr.bf16.mxu0 0
        %1906 = vmatpush2.bf16.xpose.msra.mxu0 0
        %1907 = vmatprep.subr.bf16.mxu0 0
        %1908 = vmatpush2.bf16.xpose.msra.mxu0 0
        %1909 = vmatprep.subr.bf16.mxu0 0
        %1910 = vmatpush2.bf16.xpose.msra.mxu0 0
        %1911 = vmatprep.subr.bf16.mxu0 0
        %1912 = vmatpush2.bf16.xpose.msra.mxu0 0
        %1913 = vmatprep.subr.bf16.mxu0 0
        %1914 = vmatpush2.bf16.xpose.msra.mxu0 0
        %1915 = vmatprep.subr.bf16.mxu0 0
        %1916 = vmatpush2.bf16.xpose.msra.mxu0 0
        %1917 = vmatprep.mubr.bf16.mxu0 0
        %1918 = vmatmul.mubr.bf16.gmra.mxu0 %v1880
        %v1919 = vpop.f32.mrf.mxu0
        %v1920 = vadd.f32 %v1858, %v1919
        %v1921 = vpop.f32.mrf.mxu0
        %v1922 = vpop.f32.mrf.mxu0
        %v1923 = vpop.f32.mrf.mxu0
        %1924 = vdwg.mxu0
        %1926 = vrot.lane.b32.xlu0 %v1848, 80
        %v1927 = vpop.permute.xlu0 %1926
        %v1929 = vsel %vm1878, %v1848, 0
        %v1932 = vsel %vm1878, %v1927, 0
        %1934 = vmatprep.subr.bf16.mxu0 0
        %1935 = vmatpush1.bf16.xpose.msra.mxu0 0
        %1936 = vmatprep.subr.bf16.mxu0 0
        %1937 = vmatpush1.bf16.xpose.msra.mxu0 0
        %1938 = vmatprep.subr.bf16.mxu0 0
        %1939 = vmatpush1.bf16.xpose.msra.mxu0 0
        %1940 = vmatprep.subr.bf16.mxu0 0
        %1941 = vmatpush1.bf16.xpose.msra.mxu0 0
        %1942 = vmatprep.subr.bf16.mxu0 0
        %1943 = vmatpush1.bf16.xpose.msra.mxu0 0
        %1944 = vmatprep.subr.bf16.mxu0 0
        %1945 = vmatpush1.bf16.xpose.msra.mxu0 0
        %1946 = vmatprep.subr.bf16.mxu0 0
        %1947 = vmatpush1.bf16.xpose.msra.mxu0 0
        %1948 = vmatprep.subr.bf16.mxu0 0
        %1949 = vmatpush1.bf16.xpose.msra.mxu0 %v1932
        %1950 = vmatprep.subr.bf16.mxu0 0
        %1951 = vmatpush2.bf16.xpose.msra.mxu0 0
        %1952 = vmatprep.subr.bf16.mxu0 0
        %1953 = vmatpush2.bf16.xpose.msra.mxu0 0
        %1954 = vmatprep.subr.bf16.mxu0 0
        %1955 = vmatpush2.bf16.xpose.msra.mxu0 0
        %1956 = vmatprep.subr.bf16.mxu0 0
        %1957 = vmatpush2.bf16.xpose.msra.mxu0 0
        %1958 = vmatprep.subr.bf16.mxu0 0
        %1959 = vmatpush2.bf16.xpose.msra.mxu0 0
        %1960 = vmatprep.subr.bf16.mxu0 0
        %1961 = vmatpush2.bf16.xpose.msra.mxu0 0
        %1962 = vmatprep.subr.bf16.mxu0 0
        %1963 = vmatpush2.bf16.xpose.msra.mxu0 0
        %1964 = vmatprep.subr.bf16.mxu0 0
        %1965 = vmatpush2.bf16.xpose.msra.mxu0 0
        %1966 = vmatprep.mubr.bf16.mxu0 0
        %1967 = vmatmul.mubr.bf16.gmra.mxu0 %v1929
        %v1968 = vpop.f32.mrf.mxu0
        %v1969 = vadd.f32 %v1862, %v1968
        %v1970 = vpop.f32.mrf.mxu0
        %v1971 = vpop.f32.mrf.mxu0
        %v1972 = vpop.f32.mrf.mxu0
        %1973 = vdwg.mxu0
        %1975 = vrot.lane.b32.xlu0 %v1849, 80
        %v1976 = vpop.permute.xlu0 %1975
        %v1978 = vsel %vm1878, %v1849, 0
        %v1981 = vsel %vm1878, %v1976, 0
        %1983 = vmatprep.subr.bf16.mxu0 0
        %1984 = vmatpush1.bf16.xpose.msra.mxu0 0
        %1985 = vmatprep.subr.bf16.mxu0 0
        %1986 = vmatpush1.bf16.xpose.msra.mxu0 0
        %1987 = vmatprep.subr.bf16.mxu0 0
        %1988 = vmatpush1.bf16.xpose.msra.mxu0 0
        %1989 = vmatprep.subr.bf16.mxu0 0
        %1990 = vmatpush1.bf16.xpose.msra.mxu0 0
        %1991 = vmatprep.subr.bf16.mxu0 0
        %1992 = vmatpush1.bf16.xpose.msra.mxu0 0
        %1993 = vmatprep.subr.bf16.mxu0 0
        %1994 = vmatpush1.bf16.xpose.msra.mxu0 0
        %1995 = vmatprep.subr.bf16.mxu0 0
        %1996 = vmatpush1.bf16.xpose.msra.mxu0 0
        %1997 = vmatprep.subr.bf16.mxu0 0
        %1998 = vmatpush1.bf16.xpose.msra.mxu0 %v1981
        %1999 = vmatprep.subr.bf16.mxu0 0
        %2000 = vmatpush2.bf16.xpose.msra.mxu0 0
        %2001 = vmatprep.subr.bf16.mxu0 0
        %2002 = vmatpush2.bf16.xpose.msra.mxu0 0
        %2003 = vmatprep.subr.bf16.mxu0 0
        %2004 = vmatpush2.bf16.xpose.msra.mxu0 0
        %2005 = vmatprep.subr.bf16.mxu0 0
        %2006 = vmatpush2.bf16.xpose.msra.mxu0 0
        %2007 = vmatprep.subr.bf16.mxu0 0
        %2008 = vmatpush2.bf16.xpose.msra.mxu0 0
        %2009 = vmatprep.subr.bf16.mxu0 0
        %2010 = vmatpush2.bf16.xpose.msra.mxu0 0
        %2011 = vmatprep.subr.bf16.mxu0 0
        %2012 = vmatpush2.bf16.xpose.msra.mxu0 0
        %2013 = vmatprep.subr.bf16.mxu0 0
        %2014 = vmatpush2.bf16.xpose.msra.mxu0 0
        %2015 = vmatprep.mubr.bf16.mxu0 0
        %2016 = vmatmul.mubr.bf16.gmra.mxu0 %v1978
        %v2017 = vpop.f32.mrf.mxu0
        %v2018 = vadd.f32 %v1866, %v2017
        %v2019 = vpop.f32.mrf.mxu0
        %v2020 = vpop.f32.mrf.mxu0
        %v2021 = vpop.f32.mrf.mxu0
        %2022 = vdwg.mxu0
        %2024 = vrot.lane.b32.xlu0 %v1850, 80
        %v2025 = vpop.permute.xlu0 %2024
        %v2027 = vsel %vm1878, %v1850, 0
        %v2030 = vsel %vm1878, %v2025, 0
        %2032 = vmatprep.subr.bf16.mxu0 0
        %2033 = vmatpush1.bf16.xpose.msra.mxu0 0
        %2034 = vmatprep.subr.bf16.mxu0 0
        %2035 = vmatpush1.bf16.xpose.msra.mxu0 0
        %2036 = vmatprep.subr.bf16.mxu0 0
        %2037 = vmatpush1.bf16.xpose.msra.mxu0 0
        %2038 = vmatprep.subr.bf16.mxu0 0
        %2039 = vmatpush1.bf16.xpose.msra.mxu0 0
        %2040 = vmatprep.subr.bf16.mxu0 0
        %2041 = vmatpush1.bf16.xpose.msra.mxu0 0
        %2042 = vmatprep.subr.bf16.mxu0 0
        %2043 = vmatpush1.bf16.xpose.msra.mxu0 0
        %2044 = vmatprep.subr.bf16.mxu0 0
        %2045 = vmatpush1.bf16.xpose.msra.mxu0 0
        %2046 = vmatprep.subr.bf16.mxu0 0
        %2047 = vmatpush1.bf16.xpose.msra.mxu0 %v2030
        %2048 = vmatprep.subr.bf16.mxu0 0
        %2049 = vmatpush2.bf16.xpose.msra.mxu0 0
        %2050 = vmatprep.subr.bf16.mxu0 0
        %2051 = vmatpush2.bf16.xpose.msra.mxu0 0
        %2052 = vmatprep.subr.bf16.mxu0 0
        %2053 = vmatpush2.bf16.xpose.msra.mxu0 0
        %2054 = vmatprep.subr.bf16.mxu0 0
        %2055 = vmatpush2.bf16.xpose.msra.mxu0 0
        %2056 = vmatprep.subr.bf16.mxu0 0
        %2057 = vmatpush2.bf16.xpose.msra.mxu0 0
        %2058 = vmatprep.subr.bf16.mxu0 0
        %2059 = vmatpush2.bf16.xpose.msra.mxu0 0
        %2060 = vmatprep.subr.bf16.mxu0 0
        %2061 = vmatpush2.bf16.xpose.msra.mxu0 0
        %2062 = vmatprep.subr.bf16.mxu0 0
        %2063 = vmatpush2.bf16.xpose.msra.mxu0 0
        %2064 = vmatprep.mubr.bf16.mxu0 0
        %2065 = vmatmul.mubr.bf16.gmra.mxu0 %v2027
        %v2066 = vpop.f32.mrf.mxu0
        %v2067 = vadd.f32 %v1870, %v2066
        %v2068 = vpop.f32.mrf.mxu0
        %v2069 = vpop.f32.mrf.mxu0
        %v2070 = vpop.f32.mrf.mxu0
        %2071 = vdwg.mxu0
        %vm2072 = vcmask 36864
        %v2073 = vsel %vm2072, %v1920, -inf
        %2074 = vmax.xlane.f32.xlu0 %v2073
        %v2075 = vpop.xlane.xlu0 %2074
        %v2076 = vsel %vm2072, %v1969, -inf
        %2077 = vmax.xlane.f32.xlu0 %v2076
        %v2078 = vpop.xlane.xlu0 %2077
        %v2079 = vsel %vm2072, %v2018, -inf
        %2080 = vmax.xlane.f32.xlu0 %v2079
        %v2081 = vpop.xlane.xlu0 %2080
        %v2082 = vsel %vm2072, %v2067, -inf
        %2083 = vmax.xlane.f32.xlu0 %v2082
        %v2084 = vpop.xlane.xlu0 %2083
        %v2085 = vsub.f32 %v1920, %v2075
        %v2086 = vsub.f32 %v1969, %v2078
        %v2087 = vsub.f32 %v2018, %v2081
        %v2088 = vsub.f32 %v2067, %v2084
        %v2089 = vmul.f32 %v2085, 1.442695
        %v2090 = vpow.pop %v2089
        %v2091 = vmul.f32 %v2086, 1.442695
        %v2092 = vpow.pop %v2091
        %v2093 = vmul.f32 %v2087, 1.442695
        %v2094 = vpow.pop %v2093
        %v2095 = vmul.f32 %v2088, 1.442695
        %v2096 = vpow.pop %v2095
        %v2097 = vsel %vm2072, %v2090, 0.0
        %2098 = vadd.xlane.f32.xlu0 %v2097
        %v2099 = vpop.xlane.xlu0 %2098
        %v2100 = vsel %vm2072, %v2092, 0.0
        %2101 = vadd.xlane.f32.xlu0 %v2100
        %v2102 = vpop.xlane.xlu0 %2101
        %v2103 = vsel %vm2072, %v2094, 0.0
        %2104 = vadd.xlane.f32.xlu0 %v2103
        %v2105 = vpop.xlane.xlu0 %2104
        %v2106 = vsel %vm2072, %v2096, 0.0
        %2107 = vadd.xlane.f32.xlu0 %v2106
        %v2108 = vpop.xlane.xlu0 %2107
        %v2109 = vrcp.pop %v2099
        %v2110 = vrcp.pop %v2102
        %v2111 = vrcp.pop %v2105
        %v2112 = vrcp.pop %v2108
        %v2113 = vmul.f32 %v2090, %v2109
        %v2114 = vmul.f32 %v2092, %v2110
        %v2115 = vmul.f32 %v2094, %v2111
        %v2116 = vmul.f32 %v2096, %v2112
        %v2117 = vpack.c.bf16 %v2113, %v2113
        %v2118 = vpack.c.bf16 %v2114, %v2114
        %v2119 = vpack.c.bf16 %v2115, %v2115
        %v2120 = vpack.c.bf16 %v2116, %v2116
        %2121 = vrot.lane.b32.xlu0 %v1847, 32
        %v2122 = vpop.permute.xlu0 %2121
        %vm2123 = vcmask 39936
        %v2125 = vsel %vm2123, %v2117, 0
        %vm2127 = vcmask 1041408
        %vm2128 = vcmask 1042432
        %v2129 = vsel %vm2127, 4294967295, 65535
        %v2130 = vsel %vm2128, %v2129, 0
        %v2132 = vand.u32 %v2122, %v2130
        %2134 = vmatprep.subr.bf16.mxu0 0
        %2135 = vmatpush1.bf16.msra.mxu0 0
        %2136 = vmatprep.subr.bf16.mxu0 0
        %2137 = vmatpush1.bf16.msra.mxu0 0
        %2138 = vmatprep.subr.bf16.mxu0 0
        %2139 = vmatpush1.bf16.msra.mxu0 0
        %2140 = vmatprep.subr.bf16.mxu0 0
        %2141 = vmatpush1.bf16.msra.mxu0 0
        %2142 = vmatprep.subr.bf16.mxu0 0
        %2143 = vmatpush1.bf16.msra.mxu0 0
        %2144 = vmatprep.subr.bf16.mxu0 0
        %2145 = vmatpush1.bf16.msra.mxu0 0
        %2146 = vmatprep.subr.bf16.mxu0 0
        %2147 = vmatpush1.bf16.msra.mxu0 0
        %2148 = vmatprep.subr.bf16.mxu0 0
        %2149 = vmatpush1.bf16.msra.mxu0 %v2132
        %2150 = vmatprep.subr.bf16.mxu0 0
        %2151 = vmatpush2.bf16.msra.mxu0 0
        %2152 = vmatprep.subr.bf16.mxu0 0
        %2153 = vmatpush2.bf16.msra.mxu0 0
        %2154 = vmatprep.subr.bf16.mxu0 0
        %2155 = vmatpush2.bf16.msra.mxu0 0
        %2156 = vmatprep.subr.bf16.mxu0 0
        %2157 = vmatpush2.bf16.msra.mxu0 0
        %2158 = vmatprep.subr.bf16.mxu0 0
        %2159 = vmatpush2.bf16.msra.mxu0 0
        %2160 = vmatprep.subr.bf16.mxu0 0
        %2161 = vmatpush2.bf16.msra.mxu0 0
        %2162 = vmatprep.subr.bf16.mxu0 0
        %2163 = vmatpush2.bf16.msra.mxu0 0
        %2164 = vmatprep.subr.bf16.mxu0 0
        %2165 = vmatpush2.bf16.msra.mxu0 0
        %2166 = vmatprep.mubr.bf16.mxu0 0
        %2167 = vmatmul.mubr.bf16.gmra.mxu0 %v2125
        %v2168 = vpop.f32.mrf.mxu0
        %v2169 = vadd.f32 0.0, %v2168
        %v2170 = vpop.f32.mrf.mxu0
        %v2171 = vpop.f32.mrf.mxu0
        %v2172 = vpop.f32.mrf.mxu0
        %2173 = vdwg.mxu0
        %2174 = vrot.lane.b32.xlu0 %v1848, 32
        %v2175 = vpop.permute.xlu0 %2174
        %v2177 = vsel %vm2123, %v2118, 0
        %v2180 = vand.u32 %v2175, %v2130
        %2182 = vmatprep.subr.bf16.mxu0 0
        %2183 = vmatpush1.bf16.msra.mxu0 0
        %2184 = vmatprep.subr.bf16.mxu0 0
        %2185 = vmatpush1.bf16.msra.mxu0 0
        %2186 = vmatprep.subr.bf16.mxu0 0
        %2187 = vmatpush1.bf16.msra.mxu0 0
        %2188 = vmatprep.subr.bf16.mxu0 0
        %2189 = vmatpush1.bf16.msra.mxu0 0
        %2190 = vmatprep.subr.bf16.mxu0 0
        %2191 = vmatpush1.bf16.msra.mxu0 0
        %2192 = vmatprep.subr.bf16.mxu0 0
        %2193 = vmatpush1.bf16.msra.mxu0 0
        %2194 = vmatprep.subr.bf16.mxu0 0
        %2195 = vmatpush1.bf16.msra.mxu0 0
        %2196 = vmatprep.subr.bf16.mxu0 0
        %2197 = vmatpush1.bf16.msra.mxu0 %v2180
        %2198 = vmatprep.subr.bf16.mxu0 0
        %2199 = vmatpush2.bf16.msra.mxu0 0
        %2200 = vmatprep.subr.bf16.mxu0 0
        %2201 = vmatpush2.bf16.msra.mxu0 0
        %2202 = vmatprep.subr.bf16.mxu0 0
        %2203 = vmatpush2.bf16.msra.mxu0 0
        %2204 = vmatprep.subr.bf16.mxu0 0
        %2205 = vmatpush2.bf16.msra.mxu0 0
        %2206 = vmatprep.subr.bf16.mxu0 0
        %2207 = vmatpush2.bf16.msra.mxu0 0
        %2208 = vmatprep.subr.bf16.mxu0 0
        %2209 = vmatpush2.bf16.msra.mxu0 0
        %2210 = vmatprep.subr.bf16.mxu0 0
        %2211 = vmatpush2.bf16.msra.mxu0 0
        %2212 = vmatprep.subr.bf16.mxu0 0
        %2213 = vmatpush2.bf16.msra.mxu0 0
        %2214 = vmatprep.mubr.bf16.mxu0 0
        %2215 = vmatmul.mubr.bf16.gmra.mxu0 %v2177
        %v2216 = vpop.f32.mrf.mxu0
        %v2217 = vadd.f32 0.0, %v2216
        %v2218 = vpop.f32.mrf.mxu0
        %v2219 = vpop.f32.mrf.mxu0
        %v2220 = vpop.f32.mrf.mxu0
        %2221 = vdwg.mxu0
        %2222 = vrot.lane.b32.xlu0 %v1849, 32
        %v2223 = vpop.permute.xlu0 %2222
        %v2225 = vsel %vm2123, %v2119, 0
        %v2228 = vand.u32 %v2223, %v2130
        %2230 = vmatprep.subr.bf16.mxu0 0
        %2231 = vmatpush1.bf16.msra.mxu0 0
        %2232 = vmatprep.subr.bf16.mxu0 0
        %2233 = vmatpush1.bf16.msra.mxu0 0
        %2234 = vmatprep.subr.bf16.mxu0 0
        %2235 = vmatpush1.bf16.msra.mxu0 0
        %2236 = vmatprep.subr.bf16.mxu0 0
        %2237 = vmatpush1.bf16.msra.mxu0 0
        %2238 = vmatprep.subr.bf16.mxu0 0
        %2239 = vmatpush1.bf16.msra.mxu0 0
        %2240 = vmatprep.subr.bf16.mxu0 0
        %2241 = vmatpush1.bf16.msra.mxu0 0
        %2242 = vmatprep.subr.bf16.mxu0 0
        %2243 = vmatpush1.bf16.msra.mxu0 0
        %2244 = vmatprep.subr.bf16.mxu0 0
        %2245 = vmatpush1.bf16.msra.mxu0 %v2228
        %2246 = vmatprep.subr.bf16.mxu0 0
        %2247 = vmatpush2.bf16.msra.mxu0 0
        %2248 = vmatprep.subr.bf16.mxu0 0
        %2249 = vmatpush2.bf16.msra.mxu0 0
        %2250 = vmatprep.subr.bf16.mxu0 0
        %2251 = vmatpush2.bf16.msra.mxu0 0
        %2252 = vmatprep.subr.bf16.mxu0 0
        %2253 = vmatpush2.bf16.msra.mxu0 0
        %2254 = vmatprep.subr.bf16.mxu0 0
        %2255 = vmatpush2.bf16.msra.mxu0 0
        %2256 = vmatprep.subr.bf16.mxu0 0
        %2257 = vmatpush2.bf16.msra.mxu0 0
        %2258 = vmatprep.subr.bf16.mxu0 0
        %2259 = vmatpush2.bf16.msra.mxu0 0
        %2260 = vmatprep.subr.bf16.mxu0 0
        %2261 = vmatpush2.bf16.msra.mxu0 0
        %2262 = vmatprep.mubr.bf16.mxu0 0
        %2263 = vmatmul.mubr.bf16.gmra.mxu0 %v2225
        %v2264 = vpop.f32.mrf.mxu0
        %v2265 = vadd.f32 0.0, %v2264
        %v2266 = vpop.f32.mrf.mxu0
        %v2267 = vpop.f32.mrf.mxu0
        %v2268 = vpop.f32.mrf.mxu0
        %2269 = vdwg.mxu0
        %2270 = vrot.lane.b32.xlu0 %v1850, 32
        %v2271 = vpop.permute.xlu0 %2270
        %v2273 = vsel %vm2123, %v2120, 0
        %v2276 = vand.u32 %v2271, %v2130
        %2278 = vmatprep.subr.bf16.mxu0 0
        %2279 = vmatpush1.bf16.msra.mxu0 0
        %2280 = vmatprep.subr.bf16.mxu0 0
        %2281 = vmatpush1.bf16.msra.mxu0 0
        %2282 = vmatprep.subr.bf16.mxu0 0
        %2283 = vmatpush1.bf16.msra.mxu0 0
        %2284 = vmatprep.subr.bf16.mxu0 0
        %2285 = vmatpush1.bf16.msra.mxu0 0
        %2286 = vmatprep.subr.bf16.mxu0 0
        %2287 = vmatpush1.bf16.msra.mxu0 0
        %2288 = vmatprep.subr.bf16.mxu0 0
        %2289 = vmatpush1.bf16.msra.mxu0 0
        %2290 = vmatprep.subr.bf16.mxu0 0
        %2291 = vmatpush1.bf16.msra.mxu0 0
        %2292 = vmatprep.subr.bf16.mxu0 0
        %2293 = vmatpush1.bf16.msra.mxu0 %v2276
        %2294 = vmatprep.subr.bf16.mxu0 0
        %2295 = vmatpush2.bf16.msra.mxu0 0
        %2296 = vmatprep.subr.bf16.mxu0 0
        %2297 = vmatpush2.bf16.msra.mxu0 0
        %2298 = vmatprep.subr.bf16.mxu0 0
        %2299 = vmatpush2.bf16.msra.mxu0 0
        %2300 = vmatprep.subr.bf16.mxu0 0
        %2301 = vmatpush2.bf16.msra.mxu0 0
        %2302 = vmatprep.subr.bf16.mxu0 0
        %2303 = vmatpush2.bf16.msra.mxu0 0
        %2304 = vmatprep.subr.bf16.mxu0 0
        %2305 = vmatpush2.bf16.msra.mxu0 0
        %2306 = vmatprep.subr.bf16.mxu0 0
        %2307 = vmatpush2.bf16.msra.mxu0 0
        %2308 = vmatprep.subr.bf16.mxu0 0
        %2309 = vmatpush2.bf16.msra.mxu0 0
        %2310 = vmatprep.mubr.bf16.mxu0 0
        %2311 = vmatmul.mubr.bf16.gmra.mxu0 %v2273
        %v2312 = vpop.f32.mrf.mxu0
        %v2313 = vadd.f32 0.0, %v2312
        %v2314 = vpop.f32.mrf.mxu0
        %v2315 = vpop.f32.mrf.mxu0
        %v2316 = vpop.f32.mrf.mxu0
        %2317 = vdwg.mxu0
        %2318 = vrot.lane.b32.xlu0 %v1847, 112
        %v2319 = vpop.permute.xlu0 %2318
        %2320 = vrot.lane.b32.xlu0 %v1847, 64
        %v2321 = vpop.permute.xlu0 %2320
        %v2323 = vsel %vm1878, %v2319, 0
        %v2326 = vsel %vm1878, %v2321, 0
        %2328 = vmatprep.subr.bf16.mxu0 0
        %2329 = vmatpush1.bf16.xpose.msra.mxu0 0
        %2330 = vmatprep.subr.bf16.mxu0 0
        %2331 = vmatpush1.bf16.xpose.msra.mxu0 0
        %2332 = vmatprep.subr.bf16.mxu0 0
        %2333 = vmatpush1.bf16.xpose.msra.mxu0 0
        %2334 = vmatprep.subr.bf16.mxu0 0
        %2335 = vmatpush1.bf16.xpose.msra.mxu0 0
        %2336 = vmatprep.subr.bf16.mxu0 0
        %2337 = vmatpush1.bf16.xpose.msra.mxu0 0
        %2338 = vmatprep.subr.bf16.mxu0 0
        %2339 = vmatpush1.bf16.xpose.msra.mxu0 0
        %2340 = vmatprep.subr.bf16.mxu0 0
        %2341 = vmatpush1.bf16.xpose.msra.mxu0 0
        %2342 = vmatprep.subr.bf16.mxu0 0
        %2343 = vmatpush1.bf16.xpose.msra.mxu0 %v2326
        %2344 = vmatprep.subr.bf16.mxu0 0
        %2345 = vmatpush2.bf16.xpose.msra.mxu0 0
        %2346 = vmatprep.subr.bf16.mxu0 0
        %2347 = vmatpush2.bf16.xpose.msra.mxu0 0
        %2348 = vmatprep.subr.bf16.mxu0 0
        %2349 = vmatpush2.bf16.xpose.msra.mxu0 0
        %2350 = vmatprep.subr.bf16.mxu0 0
        %2351 = vmatpush2.bf16.xpose.msra.mxu0 0
        %2352 = vmatprep.subr.bf16.mxu0 0
        %2353 = vmatpush2.bf16.xpose.msra.mxu0 0
        %2354 = vmatprep.subr.bf16.mxu0 0
        %2355 = vmatpush2.bf16.xpose.msra.mxu0 0
        %2356 = vmatprep.subr.bf16.mxu0 0
        %2357 = vmatpush2.bf16.xpose.msra.mxu0 0
        %2358 = vmatprep.subr.bf16.mxu0 0
        %2359 = vmatpush2.bf16.xpose.msra.mxu0 0
        %2360 = vmatprep.mubr.bf16.mxu0 0
        %2361 = vmatmul.mubr.bf16.gmra.mxu0 %v2323
        %v2362 = vpop.f32.mrf.mxu0
        %v2363 = vadd.f32 %v1858, %v2362
        %v2364 = vpop.f32.mrf.mxu0
        %v2365 = vpop.f32.mrf.mxu0
        %v2366 = vpop.f32.mrf.mxu0
        %2367 = vdwg.mxu0
        %2368 = vrot.lane.b32.xlu0 %v1848, 112
        %v2369 = vpop.permute.xlu0 %2368
        %2370 = vrot.lane.b32.xlu0 %v1848, 64
        %v2371 = vpop.permute.xlu0 %2370
        %v2373 = vsel %vm1878, %v2369, 0
        %v2376 = vsel %vm1878, %v2371, 0
        %2378 = vmatprep.subr.bf16.mxu0 0
        %2379 = vmatpush1.bf16.xpose.msra.mxu0 0
        %2380 = vmatprep.subr.bf16.mxu0 0
        %2381 = vmatpush1.bf16.xpose.msra.mxu0 0
        %2382 = vmatprep.subr.bf16.mxu0 0
        %2383 = vmatpush1.bf16.xpose.msra.mxu0 0
        %2384 = vmatprep.subr.bf16.mxu0 0
        %2385 = vmatpush1.bf16.xpose.msra.mxu0 0
        %2386 = vmatprep.subr.bf16.mxu0 0
        %2387 = vmatpush1.bf16.xpose.msra.mxu0 0
        %2388 = vmatprep.subr.bf16.mxu0 0
        %2389 = vmatpush1.bf16.xpose.msra.mxu0 0
        %2390 = vmatprep.subr.bf16.mxu0 0
        %2391 = vmatpush1.bf16.xpose.msra.mxu0 0
        %2392 = vmatprep.subr.bf16.mxu0 0
        %2393 = vmatpush1.bf16.xpose.msra.mxu0 %v2376
        %2394 = vmatprep.subr.bf16.mxu0 0
        %2395 = vmatpush2.bf16.xpose.msra.mxu0 0
        %2396 = vmatprep.subr.bf16.mxu0 0
        %2397 = vmatpush2.bf16.xpose.msra.mxu0 0
        %2398 = vmatprep.subr.bf16.mxu0 0
        %2399 = vmatpush2.bf16.xpose.msra.mxu0 0
        %2400 = vmatprep.subr.bf16.mxu0 0
        %2401 = vmatpush2.bf16.xpose.msra.mxu0 0
        %2402 = vmatprep.subr.bf16.mxu0 0
        %2403 = vmatpush2.bf16.xpose.msra.mxu0 0
        %2404 = vmatprep.subr.bf16.mxu0 0
        %2405 = vmatpush2.bf16.xpose.msra.mxu0 0
        %2406 = vmatprep.subr.bf16.mxu0 0
        %2407 = vmatpush2.bf16.xpose.msra.mxu0 0
        %2408 = vmatprep.subr.bf16.mxu0 0
        %2409 = vmatpush2.bf16.xpose.msra.mxu0 0
        %2410 = vmatprep.mubr.bf16.mxu0 0
        %2411 = vmatmul.mubr.bf16.gmra.mxu0 %v2373
        %v2412 = vpop.f32.mrf.mxu0
        %v2413 = vadd.f32 %v1862, %v2412
        %v2414 = vpop.f32.mrf.mxu0
        %v2415 = vpop.f32.mrf.mxu0
        %v2416 = vpop.f32.mrf.mxu0
        %2417 = vdwg.mxu0
        %2418 = vrot.lane.b32.xlu0 %v1849, 112
        %v2419 = vpop.permute.xlu0 %2418
        %2420 = vrot.lane.b32.xlu0 %v1849, 64
        %v2421 = vpop.permute.xlu0 %2420
        %v2423 = vsel %vm1878, %v2419, 0
        %v2426 = vsel %vm1878, %v2421, 0
        %2428 = vmatprep.subr.bf16.mxu0 0
        %2429 = vmatpush1.bf16.xpose.msra.mxu0 0
        %2430 = vmatprep.subr.bf16.mxu0 0
        %2431 = vmatpush1.bf16.xpose.msra.mxu0 0
        %2432 = vmatprep.subr.bf16.mxu0 0
        %2433 = vmatpush1.bf16.xpose.msra.mxu0 0
        %2434 = vmatprep.subr.bf16.mxu0 0
        %2435 = vmatpush1.bf16.xpose.msra.mxu0 0
        %2436 = vmatprep.subr.bf16.mxu0 0
        %2437 = vmatpush1.bf16.xpose.msra.mxu0 0
        %2438 = vmatprep.subr.bf16.mxu0 0
        %2439 = vmatpush1.bf16.xpose.msra.mxu0 0
        %2440 = vmatprep.subr.bf16.mxu0 0
        %2441 = vmatpush1.bf16.xpose.msra.mxu0 0
        %2442 = vmatprep.subr.bf16.mxu0 0
        %2443 = vmatpush1.bf16.xpose.msra.mxu0 %v2426
        %2444 = vmatprep.subr.bf16.mxu0 0
        %2445 = vmatpush2.bf16.xpose.msra.mxu0 0
        %2446 = vmatprep.subr.bf16.mxu0 0
        %2447 = vmatpush2.bf16.xpose.msra.mxu0 0
        %2448 = vmatprep.subr.bf16.mxu0 0
        %2449 = vmatpush2.bf16.xpose.msra.mxu0 0
        %2450 = vmatprep.subr.bf16.mxu0 0
        %2451 = vmatpush2.bf16.xpose.msra.mxu0 0
        %2452 = vmatprep.subr.bf16.mxu0 0
        %2453 = vmatpush2.bf16.xpose.msra.mxu0 0
        %2454 = vmatprep.subr.bf16.mxu0 0
        %2455 = vmatpush2.bf16.xpose.msra.mxu0 0
        %2456 = vmatprep.subr.bf16.mxu0 0
        %2457 = vmatpush2.bf16.xpose.msra.mxu0 0
        %2458 = vmatprep.subr.bf16.mxu0 0
        %2459 = vmatpush2.bf16.xpose.msra.mxu0 0
        %2460 = vmatprep.mubr.bf16.mxu0 0
        %2461 = vmatmul.mubr.bf16.gmra.mxu0 %v2423
        %v2462 = vpop.f32.mrf.mxu0
        %v2463 = vadd.f32 %v1866, %v2462
        %v2464 = vpop.f32.mrf.mxu0
        %v2465 = vpop.f32.mrf.mxu0
        %v2466 = vpop.f32.mrf.mxu0
        %2467 = vdwg.mxu0
        %2468 = vrot.lane.b32.xlu0 %v1850, 112
        %v2469 = vpop.permute.xlu0 %2468
        %2470 = vrot.lane.b32.xlu0 %v1850, 64
        %v2471 = vpop.permute.xlu0 %2470
        %v2473 = vsel %vm1878, %v2469, 0
        %v2476 = vsel %vm1878, %v2471, 0
        %2478 = vmatprep.subr.bf16.mxu0 0
        %2479 = vmatpush1.bf16.xpose.msra.mxu0 0
        %2480 = vmatprep.subr.bf16.mxu0 0
        %2481 = vmatpush1.bf16.xpose.msra.mxu0 0
        %2482 = vmatprep.subr.bf16.mxu0 0
        %2483 = vmatpush1.bf16.xpose.msra.mxu0 0
        %2484 = vmatprep.subr.bf16.mxu0 0
        %2485 = vmatpush1.bf16.xpose.msra.mxu0 0
        %2486 = vmatprep.subr.bf16.mxu0 0
        %2487 = vmatpush1.bf16.xpose.msra.mxu0 0
        %2488 = vmatprep.subr.bf16.mxu0 0
        %2489 = vmatpush1.bf16.xpose.msra.mxu0 0
        %2490 = vmatprep.subr.bf16.mxu0 0
        %2491 = vmatpush1.bf16.xpose.msra.mxu0 0
        %2492 = vmatprep.subr.bf16.mxu0 0
        %2493 = vmatpush1.bf16.xpose.msra.mxu0 %v2476
        %2494 = vmatprep.subr.bf16.mxu0 0
        %2495 = vmatpush2.bf16.xpose.msra.mxu0 0
        %2496 = vmatprep.subr.bf16.mxu0 0
        %2497 = vmatpush2.bf16.xpose.msra.mxu0 0
        %2498 = vmatprep.subr.bf16.mxu0 0
        %2499 = vmatpush2.bf16.xpose.msra.mxu0 0
        %2500 = vmatprep.subr.bf16.mxu0 0
        %2501 = vmatpush2.bf16.xpose.msra.mxu0 0
        %2502 = vmatprep.subr.bf16.mxu0 0
        %2503 = vmatpush2.bf16.xpose.msra.mxu0 0
        %2504 = vmatprep.subr.bf16.mxu0 0
        %2505 = vmatpush2.bf16.xpose.msra.mxu0 0
        %2506 = vmatprep.subr.bf16.mxu0 0
        %2507 = vmatpush2.bf16.xpose.msra.mxu0 0
        %2508 = vmatprep.subr.bf16.mxu0 0
        %2509 = vmatpush2.bf16.xpose.msra.mxu0 0
        %2510 = vmatprep.mubr.bf16.mxu0 0
        %2511 = vmatmul.mubr.bf16.gmra.mxu0 %v2473
        %v2512 = vpop.f32.mrf.mxu0
        %v2513 = vadd.f32 %v1870, %v2512
        %v2514 = vpop.f32.mrf.mxu0
        %v2515 = vpop.f32.mrf.mxu0
        %v2516 = vpop.f32.mrf.mxu0
        %2517 = vdwg.mxu0
        %v2518 = vsel %vm2072, %v2363, -inf
        %2519 = vmax.xlane.f32.xlu0 %v2518
        %v2520 = vpop.xlane.xlu0 %2519
        %v2521 = vsel %vm2072, %v2413, -inf
        %2522 = vmax.xlane.f32.xlu0 %v2521
        %v2523 = vpop.xlane.xlu0 %2522
        %v2524 = vsel %vm2072, %v2463, -inf
        %2525 = vmax.xlane.f32.xlu0 %v2524
        %v2526 = vpop.xlane.xlu0 %2525
        %v2527 = vsel %vm2072, %v2513, -inf
        %2528 = vmax.xlane.f32.xlu0 %v2527
        %v2529 = vpop.xlane.xlu0 %2528
        %v2530 = vsub.f32 %v2363, %v2520
        %v2531 = vsub.f32 %v2413, %v2523
        %v2532 = vsub.f32 %v2463, %v2526
        %v2533 = vsub.f32 %v2513, %v2529
        %v2534 = vmul.f32 %v2530, 1.442695
        %v2535 = vpow.pop %v2534
        %v2536 = vmul.f32 %v2531, 1.442695
        %v2537 = vpow.pop %v2536
        %v2538 = vmul.f32 %v2532, 1.442695
        %v2539 = vpow.pop %v2538
        %v2540 = vmul.f32 %v2533, 1.442695
        %v2541 = vpow.pop %v2540
        %v2542 = vsel %vm2072, %v2535, 0.0
        %2543 = vadd.xlane.f32.xlu0 %v2542
        %v2544 = vpop.xlane.xlu0 %2543
        %v2545 = vsel %vm2072, %v2537, 0.0
        %2546 = vadd.xlane.f32.xlu0 %v2545
        %v2547 = vpop.xlane.xlu0 %2546
        %v2548 = vsel %vm2072, %v2539, 0.0
        %2549 = vadd.xlane.f32.xlu0 %v2548
        %v2550 = vpop.xlane.xlu0 %2549
        %v2551 = vsel %vm2072, %v2541, 0.0
        %2552 = vadd.xlane.f32.xlu0 %v2551
        %v2553 = vpop.xlane.xlu0 %2552
        %v2554 = vrcp.pop %v2544
        %v2555 = vrcp.pop %v2547
        %v2556 = vrcp.pop %v2550
        %v2557 = vrcp.pop %v2553
        %v2558 = vmul.f32 %v2535, %v2554
        %v2559 = vmul.f32 %v2537, %v2555
        %v2560 = vmul.f32 %v2539, %v2556
        %v2561 = vmul.f32 %v2541, %v2557
        %v2562 = vpack.c.bf16 %v2558, %v2558
        %v2563 = vpack.c.bf16 %v2559, %v2559
        %v2564 = vpack.c.bf16 %v2560, %v2560
        %v2565 = vpack.c.bf16 %v2561, %v2561
        %2566 = vrot.lane.b32.xlu0 %v1847, 16
        %v2567 = vpop.permute.xlu0 %2566
        %v2569 = vsel %vm2123, %v2562, 0
        %v2572 = vand.u32 %v2567, %v2130
        %2574 = vmatprep.subr.bf16.mxu0 0
        %2575 = vmatpush1.bf16.msra.mxu0 0
        %2576 = vmatprep.subr.bf16.mxu0 0
        %2577 = vmatpush1.bf16.msra.mxu0 0
        %2578 = vmatprep.subr.bf16.mxu0 0
        %2579 = vmatpush1.bf16.msra.mxu0 0
        %2580 = vmatprep.subr.bf16.mxu0 0
        %2581 = vmatpush1.bf16.msra.mxu0 0
        %2582 = vmatprep.subr.bf16.mxu0 0
        %2583 = vmatpush1.bf16.msra.mxu0 0
        %2584 = vmatprep.subr.bf16.mxu0 0
        %2585 = vmatpush1.bf16.msra.mxu0 0
        %2586 = vmatprep.subr.bf16.mxu0 0
        %2587 = vmatpush1.bf16.msra.mxu0 0
        %2588 = vmatprep.subr.bf16.mxu0 0
        %2589 = vmatpush1.bf16.msra.mxu0 %v2572
        %2590 = vmatprep.subr.bf16.mxu0 0
        %2591 = vmatpush2.bf16.msra.mxu0 0
        %2592 = vmatprep.subr.bf16.mxu0 0
        %2593 = vmatpush2.bf16.msra.mxu0 0
        %2594 = vmatprep.subr.bf16.mxu0 0
        %2595 = vmatpush2.bf16.msra.mxu0 0
        %2596 = vmatprep.subr.bf16.mxu0 0
        %2597 = vmatpush2.bf16.msra.mxu0 0
        %2598 = vmatprep.subr.bf16.mxu0 0
        %2599 = vmatpush2.bf16.msra.mxu0 0
        %2600 = vmatprep.subr.bf16.mxu0 0
        %2601 = vmatpush2.bf16.msra.mxu0 0
        %2602 = vmatprep.subr.bf16.mxu0 0
        %2603 = vmatpush2.bf16.msra.mxu0 0
        %2604 = vmatprep.subr.bf16.mxu0 0
        %2605 = vmatpush2.bf16.msra.mxu0 0
        %2606 = vmatprep.mubr.bf16.mxu0 0
        %2607 = vmatmul.mubr.bf16.gmra.mxu0 %v2569
        %v2608 = vpop.f32.mrf.mxu0
        %v2609 = vadd.f32 0.0, %v2608
        %v2610 = vpop.f32.mrf.mxu0
        %v2611 = vpop.f32.mrf.mxu0
        %v2612 = vpop.f32.mrf.mxu0
        %2613 = vdwg.mxu0
        %2614 = vrot.lane.b32.xlu0 %v1848, 16
        %v2615 = vpop.permute.xlu0 %2614
        %v2617 = vsel %vm2123, %v2563, 0
        %v2620 = vand.u32 %v2615, %v2130
        %2622 = vmatprep.subr.bf16.mxu0 0
        %2623 = vmatpush1.bf16.msra.mxu0 0
        %2624 = vmatprep.subr.bf16.mxu0 0
        %2625 = vmatpush1.bf16.msra.mxu0 0
        %2626 = vmatprep.subr.bf16.mxu0 0
        %2627 = vmatpush1.bf16.msra.mxu0 0
        %2628 = vmatprep.subr.bf16.mxu0 0
        %2629 = vmatpush1.bf16.msra.mxu0 0
        %2630 = vmatprep.subr.bf16.mxu0 0
        %2631 = vmatpush1.bf16.msra.mxu0 0
        %2632 = vmatprep.subr.bf16.mxu0 0
        %2633 = vmatpush1.bf16.msra.mxu0 0
        %2634 = vmatprep.subr.bf16.mxu0 0
        %2635 = vmatpush1.bf16.msra.mxu0 0
        %2636 = vmatprep.subr.bf16.mxu0 0
        %2637 = vmatpush1.bf16.msra.mxu0 %v2620
        %2638 = vmatprep.subr.bf16.mxu0 0
        %2639 = vmatpush2.bf16.msra.mxu0 0
        %2640 = vmatprep.subr.bf16.mxu0 0
        %2641 = vmatpush2.bf16.msra.mxu0 0
        %2642 = vmatprep.subr.bf16.mxu0 0
        %2643 = vmatpush2.bf16.msra.mxu0 0
        %2644 = vmatprep.subr.bf16.mxu0 0
        %2645 = vmatpush2.bf16.msra.mxu0 0
        %2646 = vmatprep.subr.bf16.mxu0 0
        %2647 = vmatpush2.bf16.msra.mxu0 0
        %2648 = vmatprep.subr.bf16.mxu0 0
        %2649 = vmatpush2.bf16.msra.mxu0 0
        %2650 = vmatprep.subr.bf16.mxu0 0
        %2651 = vmatpush2.bf16.msra.mxu0 0
        %2652 = vmatprep.subr.bf16.mxu0 0
        %2653 = vmatpush2.bf16.msra.mxu0 0
        %2654 = vmatprep.mubr.bf16.mxu0 0
        %2655 = vmatmul.mubr.bf16.gmra.mxu0 %v2617
        %v2656 = vpop.f32.mrf.mxu0
        %v2657 = vadd.f32 0.0, %v2656
        %v2658 = vpop.f32.mrf.mxu0
        %v2659 = vpop.f32.mrf.mxu0
        %v2660 = vpop.f32.mrf.mxu0
        %2661 = vdwg.mxu0
        %2662 = vrot.lane.b32.xlu0 %v1849, 16
        %v2663 = vpop.permute.xlu0 %2662
        %v2665 = vsel %vm2123, %v2564, 0
        %v2668 = vand.u32 %v2663, %v2130
        %2670 = vmatprep.subr.bf16.mxu0 0
        %2671 = vmatpush1.bf16.msra.mxu0 0
        %2672 = vmatprep.subr.bf16.mxu0 0
        %2673 = vmatpush1.bf16.msra.mxu0 0
        %2674 = vmatprep.subr.bf16.mxu0 0
        %2675 = vmatpush1.bf16.msra.mxu0 0
        %2676 = vmatprep.subr.bf16.mxu0 0
        %2677 = vmatpush1.bf16.msra.mxu0 0
        %2678 = vmatprep.subr.bf16.mxu0 0
        %2679 = vmatpush1.bf16.msra.mxu0 0
        %2680 = vmatprep.subr.bf16.mxu0 0
        %2681 = vmatpush1.bf16.msra.mxu0 0
        %2682 = vmatprep.subr.bf16.mxu0 0
        %2683 = vmatpush1.bf16.msra.mxu0 0
        %2684 = vmatprep.subr.bf16.mxu0 0
        %2685 = vmatpush1.bf16.msra.mxu0 %v2668
        %2686 = vmatprep.subr.bf16.mxu0 0
        %2687 = vmatpush2.bf16.msra.mxu0 0
        %2688 = vmatprep.subr.bf16.mxu0 0
        %2689 = vmatpush2.bf16.msra.mxu0 0
        %2690 = vmatprep.subr.bf16.mxu0 0
        %2691 = vmatpush2.bf16.msra.mxu0 0
        %2692 = vmatprep.subr.bf16.mxu0 0
        %2693 = vmatpush2.bf16.msra.mxu0 0
        %2694 = vmatprep.subr.bf16.mxu0 0
        %2695 = vmatpush2.bf16.msra.mxu0 0
        %2696 = vmatprep.subr.bf16.mxu0 0
        %2697 = vmatpush2.bf16.msra.mxu0 0
        %2698 = vmatprep.subr.bf16.mxu0 0
        %2699 = vmatpush2.bf16.msra.mxu0 0
        %2700 = vmatprep.subr.bf16.mxu0 0
        %2701 = vmatpush2.bf16.msra.mxu0 0
        %2702 = vmatprep.mubr.bf16.mxu0 0
        %2703 = vmatmul.mubr.bf16.gmra.mxu0 %v2665
        %v2704 = vpop.f32.mrf.mxu0
        %v2705 = vadd.f32 0.0, %v2704
        %v2706 = vpop.f32.mrf.mxu0
        %v2707 = vpop.f32.mrf.mxu0
        %v2708 = vpop.f32.mrf.mxu0
        %2709 = vdwg.mxu0
        %2710 = vrot.lane.b32.xlu0 %v1850, 16
        %v2711 = vpop.permute.xlu0 %2710
        %v2713 = vsel %vm2123, %v2565, 0
        %v2716 = vand.u32 %v2711, %v2130
        %2718 = vmatprep.subr.bf16.mxu0 0
        %2719 = vmatpush1.bf16.msra.mxu0 0
        %2720 = vmatprep.subr.bf16.mxu0 0
        %2721 = vmatpush1.bf16.msra.mxu0 0
        %2722 = vmatprep.subr.bf16.mxu0 0
        %2723 = vmatpush1.bf16.msra.mxu0 0
        %2724 = vmatprep.subr.bf16.mxu0 0
        %2725 = vmatpush1.bf16.msra.mxu0 0
        %2726 = vmatprep.subr.bf16.mxu0 0
        %2727 = vmatpush1.bf16.msra.mxu0 0
        %2728 = vmatprep.subr.bf16.mxu0 0
        %2729 = vmatpush1.bf16.msra.mxu0 0
        %2730 = vmatprep.subr.bf16.mxu0 0
        %2731 = vmatpush1.bf16.msra.mxu0 0
        %2732 = vmatprep.subr.bf16.mxu0 0
        %2733 = vmatpush1.bf16.msra.mxu0 %v2716
        %2734 = vmatprep.subr.bf16.mxu0 0
        %2735 = vmatpush2.bf16.msra.mxu0 0
        %2736 = vmatprep.subr.bf16.mxu0 0
        %2737 = vmatpush2.bf16.msra.mxu0 0
        %2738 = vmatprep.subr.bf16.mxu0 0
        %2739 = vmatpush2.bf16.msra.mxu0 0
        %2740 = vmatprep.subr.bf16.mxu0 0
        %2741 = vmatpush2.bf16.msra.mxu0 0
        %2742 = vmatprep.subr.bf16.mxu0 0
        %2743 = vmatpush2.bf16.msra.mxu0 0
        %2744 = vmatprep.subr.bf16.mxu0 0
        %2745 = vmatpush2.bf16.msra.mxu0 0
        %2746 = vmatprep.subr.bf16.mxu0 0
        %2747 = vmatpush2.bf16.msra.mxu0 0
        %2748 = vmatprep.subr.bf16.mxu0 0
        %2749 = vmatpush2.bf16.msra.mxu0 0
        %2750 = vmatprep.mubr.bf16.mxu0 0
        %2751 = vmatmul.mubr.bf16.gmra.mxu0 %v2713
        %v2752 = vpop.f32.mrf.mxu0
        %v2753 = vadd.f32 0.0, %v2752
        %v2754 = vpop.f32.mrf.mxu0
        %v2755 = vpop.f32.mrf.mxu0
        %v2756 = vpop.f32.mrf.mxu0
        %2757 = vdwg.mxu0
        %v2758 = vcombine.high %v1695, %v1702
        %v2759 = vcombine.high %v1709, %v1709
        %v2761 = vunpack.c.l.s4 1966171168
        %v2762 = vunpack.c.0.s8 %v2761
        %v2763 = vlaneseq
        %v2764 = vshrl.u32 %v2763, 7
        %v2765 = vsub.s32 %v2762, %v2764
        %v2766 = vrot.slane %v2758, %v2765
        %v2768 = vunpack.c.l.s4 1966171168
        %v2769 = vunpack.c.0.s8 %v2768
        %v2770 = vlaneseq
        %v2771 = vshrl.u32 %v2770, 7
        %v2772 = vsub.s32 %v2769, %v2771
        %v2773 = vrot.slane %v2759, %v2772
        %v2774 = vcombine.low %v2766, %v2773
        %v2775 = vcombine.high %v1734, %v1741
        %v2776 = vcombine.high %v1748, %v1748
        %v2778 = vunpack.c.l.s4 1966171168
        %v2779 = vunpack.c.0.s8 %v2778
        %v2780 = vlaneseq
        %v2781 = vshrl.u32 %v2780, 7
        %v2782 = vsub.s32 %v2779, %v2781
        %v2783 = vrot.slane %v2775, %v2782
        %v2785 = vunpack.c.l.s4 1966171168
        %v2786 = vunpack.c.0.s8 %v2785
        %v2787 = vlaneseq
        %v2788 = vshrl.u32 %v2787, 7
        %v2789 = vsub.s32 %v2786, %v2788
        %v2790 = vrot.slane %v2776, %v2789
        %v2791 = vcombine.low %v2783, %v2790
        %v2792 = vcombine.high %v1773, %v1780
        %v2793 = vcombine.high %v1787, %v1787
        %v2795 = vunpack.c.l.s4 1966171168
        %v2796 = vunpack.c.0.s8 %v2795
        %v2797 = vlaneseq
        %v2798 = vshrl.u32 %v2797, 7
        %v2799 = vsub.s32 %v2796, %v2798
        %v2800 = vrot.slane %v2792, %v2799
        %v2802 = vunpack.c.l.s4 1966171168
        %v2803 = vunpack.c.0.s8 %v2802
        %v2804 = vlaneseq
        %v2805 = vshrl.u32 %v2804, 7
        %v2806 = vsub.s32 %v2803, %v2805
        %v2807 = vrot.slane %v2793, %v2806
        %v2808 = vcombine.low %v2800, %v2807
        %v2809 = vcombine.high %v1812, %v1819
        %v2810 = vcombine.high %v1826, %v1826
        %v2812 = vunpack.c.l.s4 1966171168
        %v2813 = vunpack.c.0.s8 %v2812
        %v2814 = vlaneseq
        %v2815 = vshrl.u32 %v2814, 7
        %v2816 = vsub.s32 %v2813, %v2815
        %v2817 = vrot.slane %v2809, %v2816
        %v2819 = vunpack.c.l.s4 1966171168
        %v2820 = vunpack.c.0.s8 %v2819
        %v2821 = vlaneseq
        %v2822 = vshrl.u32 %v2821, 7
        %v2823 = vsub.s32 %v2820, %v2822
        %v2824 = vrot.slane %v2810, %v2823
        %v2825 = vcombine.low %v2817, %v2824
        %v2830 = vpack.c.bf16 %v2774, %v2774
        %v2831 = vpack.c.bf16 %v2791, %v2791
        %v2832 = vpack.c.bf16 %v2808, %v2808
        %v2833 = vpack.c.bf16 %v2825, %v2825
        %2834 = vrot.lane.b32.xlu0 %v1847, 96
        %v2835 = vpop.permute.xlu0 %2834
        %2836 = vrot.lane.b32.xlu0 %v1847, 48
        %v2837 = vpop.permute.xlu0 %2836
        %v2839 = vsel %vm1878, %v2835, 0
        %v2842 = vsel %vm1878, %v2837, 0
        %2844 = vmatprep.subr.bf16.mxu0 0
        %2845 = vmatpush1.bf16.xpose.msra.mxu0 0
        %2846 = vmatprep.subr.bf16.mxu0 0
        %2847 = vmatpush1.bf16.xpose.msra.mxu0 0
        %2848 = vmatprep.subr.bf16.mxu0 0
        %2849 = vmatpush1.bf16.xpose.msra.mxu0 0
        %2850 = vmatprep.subr.bf16.mxu0 0
        %2851 = vmatpush1.bf16.xpose.msra.mxu0 0
        %2852 = vmatprep.subr.bf16.mxu0 0
        %2853 = vmatpush1.bf16.xpose.msra.mxu0 0
        %2854 = vmatprep.subr.bf16.mxu0 0
        %2855 = vmatpush1.bf16.xpose.msra.mxu0 0
        %2856 = vmatprep.subr.bf16.mxu0 0
        %2857 = vmatpush1.bf16.xpose.msra.mxu0 0
        %2858 = vmatprep.subr.bf16.mxu0 0
        %2859 = vmatpush1.bf16.xpose.msra.mxu0 %v2842
        %2860 = vmatprep.subr.bf16.mxu0 0
        %2861 = vmatpush2.bf16.xpose.msra.mxu0 0
        %2862 = vmatprep.subr.bf16.mxu0 0
        %2863 = vmatpush2.bf16.xpose.msra.mxu0 0
        %2864 = vmatprep.subr.bf16.mxu0 0
        %2865 = vmatpush2.bf16.xpose.msra.mxu0 0
        %2866 = vmatprep.subr.bf16.mxu0 0
        %2867 = vmatpush2.bf16.xpose.msra.mxu0 0
        %2868 = vmatprep.subr.bf16.mxu0 0
        %2869 = vmatpush2.bf16.xpose.msra.mxu0 0
        %2870 = vmatprep.subr.bf16.mxu0 0
        %2871 = vmatpush2.bf16.xpose.msra.mxu0 0
        %2872 = vmatprep.subr.bf16.mxu0 0
        %2873 = vmatpush2.bf16.xpose.msra.mxu0 0
        %2874 = vmatprep.subr.bf16.mxu0 0
        %2875 = vmatpush2.bf16.xpose.msra.mxu0 0
        %2876 = vmatprep.mubr.bf16.mxu0 0
        %2877 = vmatmul.mubr.bf16.gmra.mxu0 %v2839
        %v2878 = vpop.f32.mrf.mxu0
        %v2879 = vadd.f32 %v1858, %v2878
        %v2880 = vpop.f32.mrf.mxu0
        %v2881 = vpop.f32.mrf.mxu0
        %v2882 = vpop.f32.mrf.mxu0
        %2883 = vdwg.mxu0
        %2884 = vrot.lane.b32.xlu0 %v1848, 96
        %v2885 = vpop.permute.xlu0 %2884
        %2886 = vrot.lane.b32.xlu0 %v1848, 48
        %v2887 = vpop.permute.xlu0 %2886
        %v2889 = vsel %vm1878, %v2885, 0
        %v2892 = vsel %vm1878, %v2887, 0
        %2894 = vmatprep.subr.bf16.mxu0 0
        %2895 = vmatpush1.bf16.xpose.msra.mxu0 0
        %2896 = vmatprep.subr.bf16.mxu0 0
        %2897 = vmatpush1.bf16.xpose.msra.mxu0 0
        %2898 = vmatprep.subr.bf16.mxu0 0
        %2899 = vmatpush1.bf16.xpose.msra.mxu0 0
        %2900 = vmatprep.subr.bf16.mxu0 0
        %2901 = vmatpush1.bf16.xpose.msra.mxu0 0
        %2902 = vmatprep.subr.bf16.mxu0 0
        %2903 = vmatpush1.bf16.xpose.msra.mxu0 0
        %2904 = vmatprep.subr.bf16.mxu0 0
        %2905 = vmatpush1.bf16.xpose.msra.mxu0 0
        %2906 = vmatprep.subr.bf16.mxu0 0
        %2907 = vmatpush1.bf16.xpose.msra.mxu0 0
        %2908 = vmatprep.subr.bf16.mxu0 0
        %2909 = vmatpush1.bf16.xpose.msra.mxu0 %v2892
        %2910 = vmatprep.subr.bf16.mxu0 0
        %2911 = vmatpush2.bf16.xpose.msra.mxu0 0
        %2912 = vmatprep.subr.bf16.mxu0 0
        %2913 = vmatpush2.bf16.xpose.msra.mxu0 0
        %2914 = vmatprep.subr.bf16.mxu0 0
        %2915 = vmatpush2.bf16.xpose.msra.mxu0 0
        %2916 = vmatprep.subr.bf16.mxu0 0
        %2917 = vmatpush2.bf16.xpose.msra.mxu0 0
        %2918 = vmatprep.subr.bf16.mxu0 0
        %2919 = vmatpush2.bf16.xpose.msra.mxu0 0
        %2920 = vmatprep.subr.bf16.mxu0 0
        %2921 = vmatpush2.bf16.xpose.msra.mxu0 0
        %2922 = vmatprep.subr.bf16.mxu0 0
        %2923 = vmatpush2.bf16.xpose.msra.mxu0 0
        %2924 = vmatprep.subr.bf16.mxu0 0
        %2925 = vmatpush2.bf16.xpose.msra.mxu0 0
        %2926 = vmatprep.mubr.bf16.mxu0 0
        %2927 = vmatmul.mubr.bf16.gmra.mxu0 %v2889
        %v2928 = vpop.f32.mrf.mxu0
        %v2929 = vadd.f32 %v1862, %v2928
        %v2930 = vpop.f32.mrf.mxu0
        %v2931 = vpop.f32.mrf.mxu0
        %v2932 = vpop.f32.mrf.mxu0
        %2933 = vdwg.mxu0
        %2934 = vrot.lane.b32.xlu0 %v1849, 96
        %v2935 = vpop.permute.xlu0 %2934
        %2936 = vrot.lane.b32.xlu0 %v1849, 48
        %v2937 = vpop.permute.xlu0 %2936
        %v2939 = vsel %vm1878, %v2935, 0
        %v2942 = vsel %vm1878, %v2937, 0
        %2944 = vmatprep.subr.bf16.mxu0 0
        %2945 = vmatpush1.bf16.xpose.msra.mxu0 0
        %2946 = vmatprep.subr.bf16.mxu0 0
        %2947 = vmatpush1.bf16.xpose.msra.mxu0 0
        %2948 = vmatprep.subr.bf16.mxu0 0
        %2949 = vmatpush1.bf16.xpose.msra.mxu0 0
        %2950 = vmatprep.subr.bf16.mxu0 0
        %2951 = vmatpush1.bf16.xpose.msra.mxu0 0
        %2952 = vmatprep.subr.bf16.mxu0 0
        %2953 = vmatpush1.bf16.xpose.msra.mxu0 0
        %2954 = vmatprep.subr.bf16.mxu0 0
        %2955 = vmatpush1.bf16.xpose.msra.mxu0 0
        %2956 = vmatprep.subr.bf16.mxu0 0
        %2957 = vmatpush1.bf16.xpose.msra.mxu0 0
        %2958 = vmatprep.subr.bf16.mxu0 0
        %2959 = vmatpush1.bf16.xpose.msra.mxu0 %v2942
        %2960 = vmatprep.subr.bf16.mxu0 0
        %2961 = vmatpush2.bf16.xpose.msra.mxu0 0
        %2962 = vmatprep.subr.bf16.mxu0 0
        %2963 = vmatpush2.bf16.xpose.msra.mxu0 0
        %2964 = vmatprep.subr.bf16.mxu0 0
        %2965 = vmatpush2.bf16.xpose.msra.mxu0 0
        %2966 = vmatprep.subr.bf16.mxu0 0
        %2967 = vmatpush2.bf16.xpose.msra.mxu0 0
        %2968 = vmatprep.subr.bf16.mxu0 0
        %2969 = vmatpush2.bf16.xpose.msra.mxu0 0
        %2970 = vmatprep.subr.bf16.mxu0 0
        %2971 = vmatpush2.bf16.xpose.msra.mxu0 0
        %2972 = vmatprep.subr.bf16.mxu0 0
        %2973 = vmatpush2.bf16.xpose.msra.mxu0 0
        %2974 = vmatprep.subr.bf16.mxu0 0
        %2975 = vmatpush2.bf16.xpose.msra.mxu0 0
        %2976 = vmatprep.mubr.bf16.mxu0 0
        %2977 = vmatmul.mubr.bf16.gmra.mxu0 %v2939
        %v2978 = vpop.f32.mrf.mxu0
        %v2979 = vadd.f32 %v1866, %v2978
        %v2980 = vpop.f32.mrf.mxu0
        %v2981 = vpop.f32.mrf.mxu0
        %v2982 = vpop.f32.mrf.mxu0
        %2983 = vdwg.mxu0
        %2984 = vrot.lane.b32.xlu0 %v1850, 96
        %v2985 = vpop.permute.xlu0 %2984
        %2986 = vrot.lane.b32.xlu0 %v1850, 48
        %v2987 = vpop.permute.xlu0 %2986
        %v2989 = vsel %vm1878, %v2985, 0
        %v2992 = vsel %vm1878, %v2987, 0
        %2994 = vmatprep.subr.bf16.mxu0 0
        %2995 = vmatpush1.bf16.xpose.msra.mxu0 0
        %2996 = vmatprep.subr.bf16.mxu0 0
        %2997 = vmatpush1.bf16.xpose.msra.mxu0 0
        %2998 = vmatprep.subr.bf16.mxu0 0
        %2999 = vmatpush1.bf16.xpose.msra.mxu0 0
        %3000 = vmatprep.subr.bf16.mxu0 0
        %3001 = vmatpush1.bf16.xpose.msra.mxu0 0
        %3002 = vmatprep.subr.bf16.mxu0 0
        %3003 = vmatpush1.bf16.xpose.msra.mxu0 0
        %3004 = vmatprep.subr.bf16.mxu0 0
        %3005 = vmatpush1.bf16.xpose.msra.mxu0 0
        %3006 = vmatprep.subr.bf16.mxu0 0
        %3007 = vmatpush1.bf16.xpose.msra.mxu0 0
        %3008 = vmatprep.subr.bf16.mxu0 0
        %3009 = vmatpush1.bf16.xpose.msra.mxu0 %v2992
        %3010 = vmatprep.subr.bf16.mxu0 0
        %3011 = vmatpush2.bf16.xpose.msra.mxu0 0
        %3012 = vmatprep.subr.bf16.mxu0 0
        %3013 = vmatpush2.bf16.xpose.msra.mxu0 0
        %3014 = vmatprep.subr.bf16.mxu0 0
        %3015 = vmatpush2.bf16.xpose.msra.mxu0 0
        %3016 = vmatprep.subr.bf16.mxu0 0
        %3017 = vmatpush2.bf16.xpose.msra.mxu0 0
        %3018 = vmatprep.subr.bf16.mxu0 0
        %3019 = vmatpush2.bf16.xpose.msra.mxu0 0
        %3020 = vmatprep.subr.bf16.mxu0 0
        %3021 = vmatpush2.bf16.xpose.msra.mxu0 0
        %3022 = vmatprep.subr.bf16.mxu0 0
        %3023 = vmatpush2.bf16.xpose.msra.mxu0 0
        %3024 = vmatprep.subr.bf16.mxu0 0
        %3025 = vmatpush2.bf16.xpose.msra.mxu0 0
        %3026 = vmatprep.mubr.bf16.mxu0 0
        %3027 = vmatmul.mubr.bf16.gmra.mxu0 %v2989
        %v3028 = vpop.f32.mrf.mxu0
        %v3029 = vadd.f32 %v1870, %v3028
        %v3030 = vpop.f32.mrf.mxu0
        %v3031 = vpop.f32.mrf.mxu0
        %v3032 = vpop.f32.mrf.mxu0
        %3033 = vdwg.mxu0
        %v3034 = vsel %vm2072, %v2879, -inf
        %3035 = vmax.xlane.f32.xlu0 %v3034
        %v3036 = vpop.xlane.xlu0 %3035
        %v3037 = vsel %vm2072, %v2929, -inf
        %3038 = vmax.xlane.f32.xlu0 %v3037
        %v3039 = vpop.xlane.xlu0 %3038
        %v3040 = vsel %vm2072, %v2979, -inf
        %3041 = vmax.xlane.f32.xlu0 %v3040
        %v3042 = vpop.xlane.xlu0 %3041
        %v3043 = vsel %vm2072, %v3029, -inf
        %3044 = vmax.xlane.f32.xlu0 %v3043
        %v3045 = vpop.xlane.xlu0 %3044
        %v3046 = vsub.f32 %v2879, %v3036
        %v3047 = vsub.f32 %v2929, %v3039
        %v3048 = vsub.f32 %v2979, %v3042
        %v3049 = vsub.f32 %v3029, %v3045
        %v3050 = vmul.f32 %v3046, 1.442695
        %v3051 = vpow.pop %v3050
        %v3052 = vmul.f32 %v3047, 1.442695
        %v3053 = vpow.pop %v3052
        %v3054 = vmul.f32 %v3048, 1.442695
        %v3055 = vpow.pop %v3054
        %v3056 = vmul.f32 %v3049, 1.442695
        %v3057 = vpow.pop %v3056
        %v3058 = vsel %vm2072, %v3051, 0.0
        %3059 = vadd.xlane.f32.xlu0 %v3058
        %v3060 = vpop.xlane.xlu0 %3059
        %v3061 = vsel %vm2072, %v3053, 0.0
        %3062 = vadd.xlane.f32.xlu0 %v3061
        %v3063 = vpop.xlane.xlu0 %3062
        %v3064 = vsel %vm2072, %v3055, 0.0
        %3065 = vadd.xlane.f32.xlu0 %v3064
        %v3066 = vpop.xlane.xlu0 %3065
        %v3067 = vsel %vm2072, %v3057, 0.0
        %3068 = vadd.xlane.f32.xlu0 %v3067
        %v3069 = vpop.xlane.xlu0 %3068
        %v3070 = vrcp.pop %v3060
        %v3071 = vrcp.pop %v3063
        %v3072 = vrcp.pop %v3066
        %v3073 = vrcp.pop %v3069
        %v3074 = vmul.f32 %v3051, %v3070
        %v3075 = vmul.f32 %v3053, %v3071
        %v3076 = vmul.f32 %v3055, %v3072
        %v3077 = vmul.f32 %v3057, %v3073
        %v3078 = vpack.c.bf16 %v3074, %v3074
        %v3079 = vpack.c.bf16 %v3075, %v3075
        %v3080 = vpack.c.bf16 %v3076, %v3076
        %v3081 = vpack.c.bf16 %v3077, %v3077
        %v3083 = vsel %vm2123, %v3078, 0
        %v3086 = vand.u32 %v2830, %v2130
        %3088 = vmatprep.subr.bf16.mxu0 0
        %3089 = vmatpush1.bf16.msra.mxu0 0
        %3090 = vmatprep.subr.bf16.mxu0 0
        %3091 = vmatpush1.bf16.msra.mxu0 0
        %3092 = vmatprep.subr.bf16.mxu0 0
        %3093 = vmatpush1.bf16.msra.mxu0 0
        %3094 = vmatprep.subr.bf16.mxu0 0
        %3095 = vmatpush1.bf16.msra.mxu0 0
        %3096 = vmatprep.subr.bf16.mxu0 0
        %3097 = vmatpush1.bf16.msra.mxu0 0
        %3098 = vmatprep.subr.bf16.mxu0 0
        %3099 = vmatpush1.bf16.msra.mxu0 0
        %3100 = vmatprep.subr.bf16.mxu0 0
        %3101 = vmatpush1.bf16.msra.mxu0 0
        %3102 = vmatprep.subr.bf16.mxu0 0
        %3103 = vmatpush1.bf16.msra.mxu0 %v3086
        %3104 = vmatprep.subr.bf16.mxu0 0
        %3105 = vmatpush2.bf16.msra.mxu0 0
        %3106 = vmatprep.subr.bf16.mxu0 0
        %3107 = vmatpush2.bf16.msra.mxu0 0
        %3108 = vmatprep.subr.bf16.mxu0 0
        %3109 = vmatpush2.bf16.msra.mxu0 0
        %3110 = vmatprep.subr.bf16.mxu0 0
        %3111 = vmatpush2.bf16.msra.mxu0 0
        %3112 = vmatprep.subr.bf16.mxu0 0
        %3113 = vmatpush2.bf16.msra.mxu0 0
        %3114 = vmatprep.subr.bf16.mxu0 0
        %3115 = vmatpush2.bf16.msra.mxu0 0
        %3116 = vmatprep.subr.bf16.mxu0 0
        %3117 = vmatpush2.bf16.msra.mxu0 0
        %3118 = vmatprep.subr.bf16.mxu0 0
        %3119 = vmatpush2.bf16.msra.mxu0 0
        %3120 = vmatprep.mubr.bf16.mxu0 0
        %3121 = vmatmul.mubr.bf16.gmra.mxu0 %v3083
        %v3122 = vpop.f32.mrf.mxu0
        %v3123 = vadd.f32 0.0, %v3122
        %v3124 = vpop.f32.mrf.mxu0
        %v3125 = vpop.f32.mrf.mxu0
        %v3126 = vpop.f32.mrf.mxu0
        %3127 = vdwg.mxu0
        %v3129 = vsel %vm2123, %v3079, 0
        %v3132 = vand.u32 %v2831, %v2130
        %3134 = vmatprep.subr.bf16.mxu0 0
        %3135 = vmatpush1.bf16.msra.mxu0 0
        %3136 = vmatprep.subr.bf16.mxu0 0
        %3137 = vmatpush1.bf16.msra.mxu0 0
        %3138 = vmatprep.subr.bf16.mxu0 0
        %3139 = vmatpush1.bf16.msra.mxu0 0
        %3140 = vmatprep.subr.bf16.mxu0 0
        %3141 = vmatpush1.bf16.msra.mxu0 0
        %3142 = vmatprep.subr.bf16.mxu0 0
        %3143 = vmatpush1.bf16.msra.mxu0 0
        %3144 = vmatprep.subr.bf16.mxu0 0
        %3145 = vmatpush1.bf16.msra.mxu0 0
        %3146 = vmatprep.subr.bf16.mxu0 0
        %3147 = vmatpush1.bf16.msra.mxu0 0
        %3148 = vmatprep.subr.bf16.mxu0 0
        %3149 = vmatpush1.bf16.msra.mxu0 %v3132
        %3150 = vmatprep.subr.bf16.mxu0 0
        %3151 = vmatpush2.bf16.msra.mxu0 0
        %3152 = vmatprep.subr.bf16.mxu0 0
        %3153 = vmatpush2.bf16.msra.mxu0 0
        %3154 = vmatprep.subr.bf16.mxu0 0
        %3155 = vmatpush2.bf16.msra.mxu0 0
        %3156 = vmatprep.subr.bf16.mxu0 0
        %3157 = vmatpush2.bf16.msra.mxu0 0
        %3158 = vmatprep.subr.bf16.mxu0 0
        %3159 = vmatpush2.bf16.msra.mxu0 0
        %3160 = vmatprep.subr.bf16.mxu0 0
        %3161 = vmatpush2.bf16.msra.mxu0 0
        %3162 = vmatprep.subr.bf16.mxu0 0
        %3163 = vmatpush2.bf16.msra.mxu0 0
        %3164 = vmatprep.subr.bf16.mxu0 0
        %3165 = vmatpush2.bf16.msra.mxu0 0
        %3166 = vmatprep.mubr.bf16.mxu0 0
        %3167 = vmatmul.mubr.bf16.gmra.mxu0 %v3129
        %v3168 = vpop.f32.mrf.mxu0
        %v3169 = vadd.f32 0.0, %v3168
        %v3170 = vpop.f32.mrf.mxu0
        %v3171 = vpop.f32.mrf.mxu0
        %v3172 = vpop.f32.mrf.mxu0
        %3173 = vdwg.mxu0
        %v3175 = vsel %vm2123, %v3080, 0
        %v3178 = vand.u32 %v2832, %v2130
        %3180 = vmatprep.subr.bf16.mxu0 0
        %3181 = vmatpush1.bf16.msra.mxu0 0
        %3182 = vmatprep.subr.bf16.mxu0 0
        %3183 = vmatpush1.bf16.msra.mxu0 0
        %3184 = vmatprep.subr.bf16.mxu0 0
        %3185 = vmatpush1.bf16.msra.mxu0 0
        %3186 = vmatprep.subr.bf16.mxu0 0
        %3187 = vmatpush1.bf16.msra.mxu0 0
        %3188 = vmatprep.subr.bf16.mxu0 0
        %3189 = vmatpush1.bf16.msra.mxu0 0
        %3190 = vmatprep.subr.bf16.mxu0 0
        %3191 = vmatpush1.bf16.msra.mxu0 0
        %3192 = vmatprep.subr.bf16.mxu0 0
        %3193 = vmatpush1.bf16.msra.mxu0 0
        %3194 = vmatprep.subr.bf16.mxu0 0
        %3195 = vmatpush1.bf16.msra.mxu0 %v3178
        %3196 = vmatprep.subr.bf16.mxu0 0
        %3197 = vmatpush2.bf16.msra.mxu0 0
        %3198 = vmatprep.subr.bf16.mxu0 0
        %3199 = vmatpush2.bf16.msra.mxu0 0
        %3200 = vmatprep.subr.bf16.mxu0 0
        %3201 = vmatpush2.bf16.msra.mxu0 0
        %3202 = vmatprep.subr.bf16.mxu0 0
        %3203 = vmatpush2.bf16.msra.mxu0 0
        %3204 = vmatprep.subr.bf16.mxu0 0
        %3205 = vmatpush2.bf16.msra.mxu0 0
        %3206 = vmatprep.subr.bf16.mxu0 0
        %3207 = vmatpush2.bf16.msra.mxu0 0
        %3208 = vmatprep.subr.bf16.mxu0 0
        %3209 = vmatpush2.bf16.msra.mxu0 0
        %3210 = vmatprep.subr.bf16.mxu0 0
        %3211 = vmatpush2.bf16.msra.mxu0 0
        %3212 = vmatprep.mubr.bf16.mxu0 0
        %3213 = vmatmul.mubr.bf16.gmra.mxu0 %v3175
        %v3214 = vpop.f32.mrf.mxu0
        %v3215 = vadd.f32 0.0, %v3214
        %v3216 = vpop.f32.mrf.mxu0
        %v3217 = vpop.f32.mrf.mxu0
        %v3218 = vpop.f32.mrf.mxu0
        %3219 = vdwg.mxu0
        %v3221 = vsel %vm2123, %v3081, 0
        %v3224 = vand.u32 %v2833, %v2130
        %3226 = vmatprep.subr.bf16.mxu0 0
        %3227 = vmatpush1.bf16.msra.mxu0 0
        %3228 = vmatprep.subr.bf16.mxu0 0
        %3229 = vmatpush1.bf16.msra.mxu0 0
        %3230 = vmatprep.subr.bf16.mxu0 0
        %3231 = vmatpush1.bf16.msra.mxu0 0
        %3232 = vmatprep.subr.bf16.mxu0 0
        %3233 = vmatpush1.bf16.msra.mxu0 0
        %3234 = vmatprep.subr.bf16.mxu0 0
        %3235 = vmatpush1.bf16.msra.mxu0 0
        %3236 = vmatprep.subr.bf16.mxu0 0
        %3237 = vmatpush1.bf16.msra.mxu0 0
        %3238 = vmatprep.subr.bf16.mxu0 0
        %3239 = vmatpush1.bf16.msra.mxu0 0
        %3240 = vmatprep.subr.bf16.mxu0 0
        %3241 = vmatpush1.bf16.msra.mxu0 %v3224
        %3242 = vmatprep.subr.bf16.mxu0 0
        %3243 = vmatpush2.bf16.msra.mxu0 0
        %3244 = vmatprep.subr.bf16.mxu0 0
        %3245 = vmatpush2.bf16.msra.mxu0 0
        %3246 = vmatprep.subr.bf16.mxu0 0
        %3247 = vmatpush2.bf16.msra.mxu0 0
        %3248 = vmatprep.subr.bf16.mxu0 0
        %3249 = vmatpush2.bf16.msra.mxu0 0
        %3250 = vmatprep.subr.bf16.mxu0 0
        %3251 = vmatpush2.bf16.msra.mxu0 0
        %3252 = vmatprep.subr.bf16.mxu0 0
        %3253 = vmatpush2.bf16.msra.mxu0 0
        %3254 = vmatprep.subr.bf16.mxu0 0
        %3255 = vmatpush2.bf16.msra.mxu0 0
        %3256 = vmatprep.subr.bf16.mxu0 0
        %3257 = vmatpush2.bf16.msra.mxu0 0
        %3258 = vmatprep.mubr.bf16.mxu0 0
        %3259 = vmatmul.mubr.bf16.gmra.mxu0 %v3221
        %v3260 = vpop.f32.mrf.mxu0
        %v3261 = vadd.f32 0.0, %v3260
        %v3262 = vpop.f32.mrf.mxu0
        %v3263 = vpop.f32.mrf.mxu0
        %v3264 = vpop.f32.mrf.mxu0
        %3265 = vdwg.mxu0
        %3270 = vrot.lane.b32.xlu0 %v2609, 16
        %v3271 = vpop.permute.xlu0 %3270
        %3272 = vrot.lane.b32.xlu0 %v2657, 16
        %v3273 = vpop.permute.xlu0 %3272
        %3274 = vrot.lane.b32.xlu0 %v2705, 16
        %v3275 = vpop.permute.xlu0 %3274
        %3276 = vrot.lane.b32.xlu0 %v2753, 16
        %v3277 = vpop.permute.xlu0 %3276
        %3286 = vrot.lane.b32.xlu0 %v3123, 32
        %v3287 = vpop.permute.xlu0 %3286
        %3288 = vrot.lane.b32.xlu0 %v3169, 32
        %v3289 = vpop.permute.xlu0 %3288
        %3290 = vrot.lane.b32.xlu0 %v3215, 32
        %v3291 = vpop.permute.xlu0 %3290
        %3292 = vrot.lane.b32.xlu0 %v3261, 32
        %v3293 = vpop.permute.xlu0 %3292
        %v3298 = vsel %vm1878, %v2169, %v3271
        %v3299 = vsel %vm1878, %v2217, %v3273
        %v3300 = vsel %vm1878, %v2265, %v3275
        %v3301 = vsel %vm1878, %v2313, %v3277
        %vm3302 = vcmask 261120
        %v3303 = vsel %vm3302, %v3298, %v3287
        %v3304 = vsel %vm3302, %v3299, %v3289
        %v3305 = vsel %vm3302, %v3300, %v3291
        %v3306 = vsel %vm3302, %v3301, %v3293
        %v3311 = vcombine.high %v3303, %v3303
        %v3313 = vunpack.c.l.s4 1966171168
        %v3314 = vunpack.c.0.s8 %v3313
        %v3315 = vlaneseq
        %v3316 = vshrl.u32 %v3315, 7
        %v3317 = vsub.s32 %v3314, %v3316
        %v3318 = vrot.slane %v3303, %v3317
        %v3320 = vunpack.c.l.s4 1966171168
        %v3321 = vunpack.c.0.s8 %v3320
        %v3322 = vlaneseq
        %v3323 = vshrl.u32 %v3322, 7
        %v3324 = vsub.s32 %v3321, %v3323
        %v3325 = vrot.slane %v3311, %v3324
        %v3326 = vcombine.high %v3318, %v3318
        %v3328 = vunpack.c.l.s4 1966171168
        %v3329 = vunpack.c.0.s8 %v3328
        %v3330 = vlaneseq
        %v3331 = vshrl.u32 %v3330, 7
        %v3332 = vsub.s32 %v3329, %v3331
        %v3333 = vrot.slane %v3318, %v3332
        %v3335 = vunpack.c.l.s4 1966171168
        %v3336 = vunpack.c.0.s8 %v3335
        %v3337 = vlaneseq
        %v3338 = vshrl.u32 %v3337, 7
        %v3339 = vsub.s32 %v3336, %v3338
        %v3340 = vrot.slane %v3325, %v3339
        %v3342 = vunpack.c.l.s4 1966171168
        %v3343 = vunpack.c.0.s8 %v3342
        %v3344 = vlaneseq
        %v3345 = vshrl.u32 %v3344, 7
        %v3346 = vsub.s32 %v3343, %v3345
        %v3347 = vrot.slane %v3326, %v3346
        %v3348 = vcombine.high %v3333, %v3333
        %v3349 = vcombine.high %v3347, %v3347
        %v3350 = vcombine.high %v3304, %v3304
        %v3352 = vunpack.c.l.s4 1966171168
        %v3353 = vunpack.c.0.s8 %v3352
        %v3354 = vlaneseq
        %v3355 = vshrl.u32 %v3354, 7
        %v3356 = vsub.s32 %v3353, %v3355
        %v3357 = vrot.slane %v3304, %v3356
        %v3359 = vunpack.c.l.s4 1966171168
        %v3360 = vunpack.c.0.s8 %v3359
        %v3361 = vlaneseq
        %v3362 = vshrl.u32 %v3361, 7
        %v3363 = vsub.s32 %v3360, %v3362
        %v3364 = vrot.slane %v3350, %v3363
        %v3365 = vcombine.high %v3357, %v3357
        %v3367 = vunpack.c.l.s4 1966171168
        %v3368 = vunpack.c.0.s8 %v3367
        %v3369 = vlaneseq
        %v3370 = vshrl.u32 %v3369, 7
        %v3371 = vsub.s32 %v3368, %v3370
        %v3372 = vrot.slane %v3357, %v3371
        %v3374 = vunpack.c.l.s4 1966171168
        %v3375 = vunpack.c.0.s8 %v3374
        %v3376 = vlaneseq
        %v3377 = vshrl.u32 %v3376, 7
        %v3378 = vsub.s32 %v3375, %v3377
        %v3379 = vrot.slane %v3364, %v3378
        %v3381 = vunpack.c.l.s4 1966171168
        %v3382 = vunpack.c.0.s8 %v3381
        %v3383 = vlaneseq
        %v3384 = vshrl.u32 %v3383, 7
        %v3385 = vsub.s32 %v3382, %v3384
        %v3386 = vrot.slane %v3365, %v3385
        %v3387 = vcombine.high %v3372, %v3372
        %v3388 = vcombine.high %v3386, %v3386
        %v3389 = vcombine.high %v3305, %v3305
        %v3391 = vunpack.c.l.s4 1966171168
        %v3392 = vunpack.c.0.s8 %v3391
        %v3393 = vlaneseq
        %v3394 = vshrl.u32 %v3393, 7
        %v3395 = vsub.s32 %v3392, %v3394
        %v3396 = vrot.slane %v3305, %v3395
        %v3398 = vunpack.c.l.s4 1966171168
        %v3399 = vunpack.c.0.s8 %v3398
        %v3400 = vlaneseq
        %v3401 = vshrl.u32 %v3400, 7
        %v3402 = vsub.s32 %v3399, %v3401
        %v3403 = vrot.slane %v3389, %v3402
        %v3404 = vcombine.high %v3396, %v3396
        %v3406 = vunpack.c.l.s4 1966171168
        %v3407 = vunpack.c.0.s8 %v3406
        %v3408 = vlaneseq
        %v3409 = vshrl.u32 %v3408, 7
        %v3410 = vsub.s32 %v3407, %v3409
        %v3411 = vrot.slane %v3396, %v3410
        %v3413 = vunpack.c.l.s4 1966171168
        %v3414 = vunpack.c.0.s8 %v3413
        %v3415 = vlaneseq
        %v3416 = vshrl.u32 %v3415, 7
        %v3417 = vsub.s32 %v3414, %v3416
        %v3418 = vrot.slane %v3403, %v3417
        %v3420 = vunpack.c.l.s4 1966171168
        %v3421 = vunpack.c.0.s8 %v3420
        %v3422 = vlaneseq
        %v3423 = vshrl.u32 %v3422, 7
        %v3424 = vsub.s32 %v3421, %v3423
        %v3425 = vrot.slane %v3404, %v3424
        %v3426 = vcombine.high %v3411, %v3411
        %v3427 = vcombine.high %v3425, %v3425
        %v3428 = vcombine.high %v3306, %v3306
        %v3430 = vunpack.c.l.s4 1966171168
        %v3431 = vunpack.c.0.s8 %v3430
        %v3432 = vlaneseq
        %v3433 = vshrl.u32 %v3432, 7
        %v3434 = vsub.s32 %v3431, %v3433
        %v3435 = vrot.slane %v3306, %v3434
        %v3437 = vunpack.c.l.s4 1966171168
        %v3438 = vunpack.c.0.s8 %v3437
        %v3439 = vlaneseq
        %v3440 = vshrl.u32 %v3439, 7
        %v3441 = vsub.s32 %v3438, %v3440
        %v3442 = vrot.slane %v3428, %v3441
        %v3443 = vcombine.high %v3435, %v3435
        %v3445 = vunpack.c.l.s4 1966171168
        %v3446 = vunpack.c.0.s8 %v3445
        %v3447 = vlaneseq
        %v3448 = vshrl.u32 %v3447, 7
        %v3449 = vsub.s32 %v3446, %v3448
        %v3450 = vrot.slane %v3435, %v3449
        %v3452 = vunpack.c.l.s4 1966171168
        %v3453 = vunpack.c.0.s8 %v3452
        %v3454 = vlaneseq
        %v3455 = vshrl.u32 %v3454, 7
        %v3456 = vsub.s32 %v3453, %v3455
        %v3457 = vrot.slane %v3442, %v3456
        %v3459 = vunpack.c.l.s4 1966171168
        %v3460 = vunpack.c.0.s8 %v3459
        %v3461 = vlaneseq
        %v3462 = vshrl.u32 %v3461, 7
        %v3463 = vsub.s32 %v3460, %v3462
        %v3464 = vrot.slane %v3443, %v3463
        %v3465 = vcombine.high %v3450, %v3450
        %v3466 = vcombine.high %v3464, %v3464
        %v3467 = vcombine.low %v3333, %v3347
        %v3468 = vcombine.low %v3348, %v3349
        %v3469 = vcombine.low %v3340, %v3372
        %v3470 = vcombine.low %v3386, %v3387
        %v3472 = vunpack.c.l.s4 1966171168
        %v3473 = vunpack.c.0.s8 %v3472
        %v3474 = vlaneseq
        %v3475 = vshrl.u32 %v3474, 7
        %v3476 = vsub.s32 %v3473, %v3475
        %v3477 = vrot.slane %v3467, %v3476
        %v3479 = vunpack.c.l.s4 1966171168
        %v3480 = vunpack.c.0.s8 %v3479
        %v3481 = vlaneseq
        %v3482 = vshrl.u32 %v3481, 7
        %v3483 = vsub.s32 %v3480, %v3482
        %v3484 = vrot.slane %v3468, %v3483
        %v3486 = vunpack.c.l.s4 1966171168
        %v3487 = vunpack.c.0.s8 %v3486
        %v3488 = vlaneseq
        %v3489 = vshrl.u32 %v3488, 7
        %v3490 = vsub.s32 %v3487, %v3489
        %v3491 = vrot.slane %v3469, %v3490
        %v3493 = vunpack.c.l.s4 1966171168
        %v3494 = vunpack.c.0.s8 %v3493
        %v3495 = vlaneseq
        %v3496 = vshrl.u32 %v3495, 7
        %v3497 = vsub.s32 %v3494, %v3496
        %v3498 = vrot.slane %v3470, %v3497
        %v3499 = vcombine.low %v3477, %v3484
        %v3500 = vcombine.low %v3491, %v3498
        %v3502 = vunpack.c.l.s4 1966171168
        %v3503 = vunpack.c.0.s8 %v3502
        %v3504 = vlaneseq
        %v3505 = vshrl.u32 %v3504, 7
        %v3506 = vsub.s32 %v3503, %v3505
        %v3507 = vrot.slane %v3499, %v3506
        %v3509 = vunpack.c.l.s4 1966171168
        %v3510 = vunpack.c.0.s8 %v3509
        %v3511 = vlaneseq
        %v3512 = vshrl.u32 %v3511, 7
        %v3513 = vsub.s32 %v3510, %v3512
        %v3514 = vrot.slane %v3500, %v3513
        %v3515 = vcombine.low %v3507, %v3514
        %v3516 = vcombine.low %v3388, %v3379
        %v3517 = vcombine.low %v3411, %v3425
        %v3518 = vcombine.low %v3426, %v3427
        %v3519 = vcombine.low %v3418, %v3450
        %v3521 = vunpack.c.l.s4 1966171168
        %v3522 = vunpack.c.0.s8 %v3521
        %v3523 = vlaneseq
        %v3524 = vshrl.u32 %v3523, 7
        %v3525 = vsub.s32 %v3522, %v3524
        %v3526 = vrot.slane %v3516, %v3525
        %v3528 = vunpack.c.l.s4 1966171168
        %v3529 = vunpack.c.0.s8 %v3528
        %v3530 = vlaneseq
        %v3531 = vshrl.u32 %v3530, 7
        %v3532 = vsub.s32 %v3529, %v3531
        %v3533 = vrot.slane %v3517, %v3532
        %v3535 = vunpack.c.l.s4 1966171168
        %v3536 = vunpack.c.0.s8 %v3535
        %v3537 = vlaneseq
        %v3538 = vshrl.u32 %v3537, 7
        %v3539 = vsub.s32 %v3536, %v3538
        %v3540 = vrot.slane %v3518, %v3539
        %v3542 = vunpack.c.l.s4 1966171168
        %v3543 = vunpack.c.0.s8 %v3542
        %v3544 = vlaneseq
        %v3545 = vshrl.u32 %v3544, 7
        %v3546 = vsub.s32 %v3543, %v3545
        %v3547 = vrot.slane %v3519, %v3546
        %v3548 = vcombine.low %v3526, %v3533
        %v3549 = vcombine.low %v3540, %v3547
        %v3551 = vunpack.c.l.s4 1966171168
        %v3552 = vunpack.c.0.s8 %v3551
        %v3553 = vlaneseq
        %v3554 = vshrl.u32 %v3553, 7
        %v3555 = vsub.s32 %v3552, %v3554
        %v3556 = vrot.slane %v3548, %v3555
        %v3558 = vunpack.c.l.s4 1966171168
        %v3559 = vunpack.c.0.s8 %v3558
        %v3560 = vlaneseq
        %v3561 = vshrl.u32 %v3560, 7
        %v3562 = vsub.s32 %v3559, %v3561
        %v3563 = vrot.slane %v3549, %v3562
        %v3564 = vcombine.low %v3556, %v3563
        %v3565 = vcombine.low %v3464, %v3465
        %v3566 = vcombine.low %v3466, %v3457
        %v3568 = vunpack.c.l.s4 1966171168
        %v3569 = vunpack.c.0.s8 %v3568
        %v3570 = vlaneseq
        %v3571 = vshrl.u32 %v3570, 7
        %v3572 = vsub.s32 %v3569, %v3571
        %v3573 = vrot.slane %v3565, %v3572
        %v3575 = vunpack.c.l.s4 1966171168
        %v3576 = vunpack.c.0.s8 %v3575
        %v3577 = vlaneseq
        %v3578 = vshrl.u32 %v3577, 7
        %v3579 = vsub.s32 %v3576, %v3578
        %v3580 = vrot.slane %v3566, %v3579
        %v3581 = vcombine.low %v3573, %v3580
        %v3583 = vunpack.c.l.s4 1966171168
        %v3584 = vunpack.c.0.s8 %v3583
        %v3585 = vlaneseq
        %v3586 = vshrl.u32 %v3585, 7
        %v3587 = vsub.s32 %v3584, %v3586
        %v3588 = vrot.slane %v3581, %v3587
        %v3592 = vpack.c.bf16 %v3564, %v3515
        %v3593 = vpack.c.bf16 %v3588, %v3588
        %v3594 = vld [vmem:[%s10] sm:$0xf]
        %v3595 = vld [vmem:[%s10 + $0x4] sm:$0xf]
        %v3596 = vld [vmem:[%s10 + $0x8] sm:$0xf]
        %v3597 = vld [vmem:[%s10 + $0xc] sm:$0xf]
        %v3598 = vld [vmem:[%s10 + $0x10] sm:$0xf]
        %v3599 = vld [vmem:[%s10 + $0x14] sm:$0xf]
        %v3600 = vld [vmem:[%s11] sm:$0x1]
        %v3602 = vlaneseq
        %v3603 = vshrl.u32 %v3602, 7
        %v3604 = vsub.s32 0, %v3603
        %v3605 = vrot.slane %v3600, %v3604
        %v3613 = vunpack.c.l.b16 %v3594
        %v3614 = vunpack.c.l.b16 %v3595
        %v3615 = vunpack.c.l.b16 %v3596
        %v3616 = vunpack.c.l.b16 %v3597
        %v3617 = vunpack.c.l.b16 %v3598
        %v3618 = vunpack.c.l.b16 %v3599
        %v3619 = vpack.c.b16 %v3614, %v3613
        %v3620 = vpack.c.b16 %v3616, %v3615
        %v3621 = vpack.c.b16 %v3618, %v3617
        %v3626 = vsel %vm1498, %v3592, 0
        %v3629 = vsel %vm1498, %v3593, 0
        %3631 = vmatprep.subr.bf16.mxu0 0
        %3632 = vmatpush1.bf16.msra.mxu0 0
        %3633 = vmatprep.subr.bf16.mxu0 0
        %3634 = vmatpush1.bf16.msra.mxu0 0
        %3635 = vmatprep.subr.bf16.mxu0 0
        %3636 = vmatpush1.bf16.msra.mxu0 0
        %3637 = vmatprep.subr.bf16.mxu0 0
        %3638 = vmatpush1.bf16.msra.mxu0 0
        %3639 = vmatprep.subr.bf16.mxu0 0
        %3640 = vmatpush1.bf16.msra.mxu0 0
        %3641 = vmatprep.subr.bf16.mxu0 0
        %3642 = vmatpush1.bf16.msra.mxu0 %v3621
        %3643 = vmatprep.subr.bf16.mxu0 0
        %3644 = vmatpush1.bf16.msra.mxu0 %v3620
        %3645 = vmatprep.subr.bf16.mxu0 0
        %3646 = vmatpush1.bf16.msra.mxu0 %v3619
        %3647 = vmatprep.subr.bf16.mxu0 0
        %3648 = vmatpush2.bf16.msra.mxu0 0
        %3649 = vmatprep.subr.bf16.mxu0 0
        %3650 = vmatpush2.bf16.msra.mxu0 0
        %3651 = vmatprep.subr.bf16.mxu0 0
        %3652 = vmatpush2.bf16.msra.mxu0 0
        %3653 = vmatprep.subr.bf16.mxu0 0
        %3654 = vmatpush2.bf16.msra.mxu0 0
        %3655 = vmatprep.subr.bf16.mxu0 0
        %3656 = vmatpush2.bf16.msra.mxu0 0
        %3657 = vmatprep.subr.bf16.mxu0 0
        %3658 = vmatpush2.bf16.msra.mxu0 0
        %3659 = vmatprep.subr.bf16.mxu0 0
        %3660 = vmatpush2.bf16.msra.mxu0 0
        %3661 = vmatprep.subr.bf16.mxu0 0
        %3662 = vmatpush2.bf16.msra.mxu0 0
        %3663 = vmatprep.mubr.bf16.mxu0 0
        %3664 = vmatmul.mubr.bf16.gmra.mxu0 %v3626
        %v3665 = vpop.f32.mrf.mxu0
        %v3666 = vadd.f32 %v3605, %v3665
        %v3667 = vpop.f32.mrf.mxu0
        %v3668 = vpop.f32.mrf.mxu0
        %v3669 = vadd.f32 %v3605, %v3668
        %v3670 = vpop.f32.mrf.mxu0
        %3671 = vmatprep.mubr.bf16.mxu0 0
        %3672 = vmatmul.mubr.bf16.gmra.mxu0 %v3629
        %v3673 = vpop.f32.mrf.mxu0
        %v3674 = vadd.f32 %v3605, %v3673
        %v3675 = vpop.f32.mrf.mxu0
        %v3676 = vpop.f32.mrf.mxu0
        %v3677 = vpop.f32.mrf.mxu0
        %3678 = vdwg.mxu0
        %v3682 = vcombine.high %v3666, %v3666
        %v3684 = vunpack.c.l.s4 1966171168
        %v3685 = vunpack.c.0.s8 %v3684
        %v3686 = vlaneseq
        %v3687 = vshrl.u32 %v3686, 7
        %v3688 = vsub.s32 %v3685, %v3687
        %v3689 = vrot.slane %v3666, %v3688
        %v3691 = vunpack.c.l.s4 1966171168
        %v3692 = vunpack.c.0.s8 %v3691
        %v3693 = vlaneseq
        %v3694 = vshrl.u32 %v3693, 7
        %v3695 = vsub.s32 %v3692, %v3694
        %v3696 = vrot.slane %v3682, %v3695
        %v3697 = vcombine.high %v3689, %v3689
        %v3698 = vcombine.high %v3696, %v3696
        %v3700 = vunpack.c.l.s4 1966171168
        %v3701 = vunpack.c.0.s8 %v3700
        %v3702 = vlaneseq
        %v3703 = vshrl.u32 %v3702, 7
        %v3704 = vsub.s32 %v3701, %v3703
        %v3705 = vrot.slane %v3689, %v3704
        %v3707 = vunpack.c.l.s4 1966171168
        %v3708 = vunpack.c.0.s8 %v3707
        %v3709 = vlaneseq
        %v3710 = vshrl.u32 %v3709, 7
        %v3711 = vsub.s32 %v3708, %v3710
        %v3712 = vrot.slane %v3696, %v3711
        %v3714 = vunpack.c.l.s4 1966171168
        %v3715 = vunpack.c.0.s8 %v3714
        %v3716 = vlaneseq
        %v3717 = vshrl.u32 %v3716, 7
        %v3718 = vsub.s32 %v3715, %v3717
        %v3719 = vrot.slane %v3697, %v3718
        %v3721 = vunpack.c.l.s4 1966171168
        %v3722 = vunpack.c.0.s8 %v3721
        %v3723 = vlaneseq
        %v3724 = vshrl.u32 %v3723, 7
        %v3725 = vsub.s32 %v3722, %v3724
        %v3726 = vrot.slane %v3698, %v3725
        %v3727 = vcombine.high %v3705, %v3705
        %v3728 = vcombine.high %v3712, %v3712
        %v3729 = vcombine.high %v3719, %v3719
        %v3730 = vcombine.high %v3726, %v3726
        %v3731 = vcombine.high %v3669, %v3669
        %v3733 = vunpack.c.l.s4 1966171168
        %v3734 = vunpack.c.0.s8 %v3733
        %v3735 = vlaneseq
        %v3736 = vshrl.u32 %v3735, 7
        %v3737 = vsub.s32 %v3734, %v3736
        %v3738 = vrot.slane %v3669, %v3737
        %v3740 = vunpack.c.l.s4 1966171168
        %v3741 = vunpack.c.0.s8 %v3740
        %v3742 = vlaneseq
        %v3743 = vshrl.u32 %v3742, 7
        %v3744 = vsub.s32 %v3741, %v3743
        %v3745 = vrot.slane %v3731, %v3744
        %v3746 = vcombine.high %v3738, %v3738
        %v3747 = vcombine.high %v3745, %v3745
        %v3749 = vunpack.c.l.s4 1966171168
        %v3750 = vunpack.c.0.s8 %v3749
        %v3751 = vlaneseq
        %v3752 = vshrl.u32 %v3751, 7
        %v3753 = vsub.s32 %v3750, %v3752
        %v3754 = vrot.slane %v3738, %v3753
        %v3756 = vunpack.c.l.s4 1966171168
        %v3757 = vunpack.c.0.s8 %v3756
        %v3758 = vlaneseq
        %v3759 = vshrl.u32 %v3758, 7
        %v3760 = vsub.s32 %v3757, %v3759
        %v3761 = vrot.slane %v3745, %v3760
        %v3763 = vunpack.c.l.s4 1966171168
        %v3764 = vunpack.c.0.s8 %v3763
        %v3765 = vlaneseq
        %v3766 = vshrl.u32 %v3765, 7
        %v3767 = vsub.s32 %v3764, %v3766
        %v3768 = vrot.slane %v3746, %v3767
        %v3770 = vunpack.c.l.s4 1966171168
        %v3771 = vunpack.c.0.s8 %v3770
        %v3772 = vlaneseq
        %v3773 = vshrl.u32 %v3772, 7
        %v3774 = vsub.s32 %v3771, %v3773
        %v3775 = vrot.slane %v3747, %v3774
        %v3776 = vcombine.high %v3754, %v3754
        %v3777 = vcombine.high %v3761, %v3761
        %v3778 = vcombine.high %v3768, %v3768
        %v3779 = vcombine.high %v3775, %v3775
        %v3781 = vunpack.c.l.s4 1966171168
        %v3782 = vunpack.c.0.s8 %v3781
        %v3783 = vlaneseq
        %v3784 = vshrl.u32 %v3783, 7
        %v3785 = vsub.s32 %v3782, %v3784
        %v3786 = vrot.slane %v3674, %v3785
        %v3787 = vcombine.high %v3786, %v3786
        %v3789 = vunpack.c.l.s4 1966171168
        %v3790 = vunpack.c.0.s8 %v3789
        %v3791 = vlaneseq
        %v3792 = vshrl.u32 %v3791, 7
        %v3793 = vsub.s32 %v3790, %v3792
        %v3794 = vrot.slane %v3786, %v3793
        %v3796 = vunpack.c.l.s4 1966171168
        %v3797 = vunpack.c.0.s8 %v3796
        %v3798 = vlaneseq
        %v3799 = vshrl.u32 %v3798, 7
        %v3800 = vsub.s32 %v3797, %v3799
        %v3801 = vrot.slane %v3787, %v3800
        %v3802 = vcombine.high %v3794, %v3794
        %v3803 = vcombine.high %v3801, %v3801
        %v3804 = vcombine.low %v3705, %v3719
        %v3805 = vcombine.low %v3727, %v3729
        %v3807 = vunpack.c.l.s4 1966171168
        %v3808 = vunpack.c.0.s8 %v3807
        %v3809 = vlaneseq
        %v3810 = vshrl.u32 %v3809, 7
        %v3811 = vsub.s32 %v3808, %v3810
        %v3812 = vrot.slane %v3804, %v3811
        %v3814 = vunpack.c.l.s4 1966171168
        %v3815 = vunpack.c.0.s8 %v3814
        %v3816 = vlaneseq
        %v3817 = vshrl.u32 %v3816, 7
        %v3818 = vsub.s32 %v3815, %v3817
        %v3819 = vrot.slane %v3805, %v3818
        %v3821 = vunpack.c.l.s4 1966171168
        %v3822 = vunpack.c.0.s8 %v3821
        %v3823 = vlaneseq
        %v3824 = vshrl.u32 %v3823, 7
        %v3825 = vsub.s32 %v3822, %v3824
        %v3826 = vrot.slane %v3712, %v3825
        %v3827 = vcombine.low %v3812, %v3819
        %v3829 = vunpack.c.l.s4 1966171168
        %v3830 = vunpack.c.0.s8 %v3829
        %v3831 = vlaneseq
        %v3832 = vshrl.u32 %v3831, 7
        %v3833 = vsub.s32 %v3830, %v3832
        %v3834 = vrot.slane %v3827, %v3833
        %v3836 = vunpack.c.l.s4 1966171168
        %v3837 = vunpack.c.0.s8 %v3836
        %v3838 = vlaneseq
        %v3839 = vshrl.u32 %v3838, 7
        %v3840 = vsub.s32 %v3837, %v3839
        %v3841 = vrot.slane %v3826, %v3840
        %v3842 = vcombine.low %v3834, %v3841
        %v3843 = vcombine.low %v3726, %v3728
        %v3844 = vcombine.low %v3730, %v3754
        %v3846 = vunpack.c.l.s4 1966171168
        %v3847 = vunpack.c.0.s8 %v3846
        %v3848 = vlaneseq
        %v3849 = vshrl.u32 %v3848, 7
        %v3850 = vsub.s32 %v3847, %v3849
        %v3851 = vrot.slane %v3843, %v3850
        %v3853 = vunpack.c.l.s4 1966171168
        %v3854 = vunpack.c.0.s8 %v3853
        %v3855 = vlaneseq
        %v3856 = vshrl.u32 %v3855, 7
        %v3857 = vsub.s32 %v3854, %v3856
        %v3858 = vrot.slane %v3844, %v3857
        %v3860 = vunpack.c.l.s4 1966171168
        %v3861 = vunpack.c.0.s8 %v3860
        %v3862 = vlaneseq
        %v3863 = vshrl.u32 %v3862, 7
        %v3864 = vsub.s32 %v3861, %v3863
        %v3865 = vrot.slane %v3768, %v3864
        %v3866 = vcombine.low %v3851, %v3858
        %v3868 = vunpack.c.l.s4 1966171168
        %v3869 = vunpack.c.0.s8 %v3868
        %v3870 = vlaneseq
        %v3871 = vshrl.u32 %v3870, 7
        %v3872 = vsub.s32 %v3869, %v3871
        %v3873 = vrot.slane %v3866, %v3872
        %v3875 = vunpack.c.l.s4 1966171168
        %v3876 = vunpack.c.0.s8 %v3875
        %v3877 = vlaneseq
        %v3878 = vshrl.u32 %v3877, 7
        %v3879 = vsub.s32 %v3876, %v3878
        %v3880 = vrot.slane %v3865, %v3879
        %v3881 = vcombine.low %v3873, %v3880
        %v3882 = vcombine.low %v3776, %v3778
        %v3883 = vcombine.low %v3761, %v3775
        %v3885 = vunpack.c.l.s4 1966171168
        %v3886 = vunpack.c.0.s8 %v3885
        %v3887 = vlaneseq
        %v3888 = vshrl.u32 %v3887, 7
        %v3889 = vsub.s32 %v3886, %v3888
        %v3890 = vrot.slane %v3882, %v3889
        %v3892 = vunpack.c.l.s4 1966171168
        %v3893 = vunpack.c.0.s8 %v3892
        %v3894 = vlaneseq
        %v3895 = vshrl.u32 %v3894, 7
        %v3896 = vsub.s32 %v3893, %v3895
        %v3897 = vrot.slane %v3883, %v3896
        %v3899 = vunpack.c.l.s4 1966171168
        %v3900 = vunpack.c.0.s8 %v3899
        %v3901 = vlaneseq
        %v3902 = vshrl.u32 %v3901, 7
        %v3903 = vsub.s32 %v3900, %v3902
        %v3904 = vrot.slane %v3777, %v3903
        %v3905 = vcombine.low %v3890, %v3897
        %v3907 = vunpack.c.l.s4 1966171168
        %v3908 = vunpack.c.0.s8 %v3907
        %v3909 = vlaneseq
        %v3910 = vshrl.u32 %v3909, 7
        %v3911 = vsub.s32 %v3908, %v3910
        %v3912 = vrot.slane %v3905, %v3911
        %v3914 = vunpack.c.l.s4 1966171168
        %v3915 = vunpack.c.0.s8 %v3914
        %v3916 = vlaneseq
        %v3917 = vshrl.u32 %v3916, 7
        %v3918 = vsub.s32 %v3915, %v3917
        %v3919 = vrot.slane %v3904, %v3918
        %v3920 = vcombine.low %v3912, %v3919
        %v3921 = vcombine.low %v3779, %v3794
        %v3922 = vcombine.low %v3801, %v3802
        %v3924 = vunpack.c.l.s4 1966171168
        %v3925 = vunpack.c.0.s8 %v3924
        %v3926 = vlaneseq
        %v3927 = vshrl.u32 %v3926, 7
        %v3928 = vsub.s32 %v3925, %v3927
        %v3929 = vrot.slane %v3921, %v3928
        %v3931 = vunpack.c.l.s4 1966171168
        %v3932 = vunpack.c.0.s8 %v3931
        %v3933 = vlaneseq
        %v3934 = vshrl.u32 %v3933, 7
        %v3935 = vsub.s32 %v3932, %v3934
        %v3936 = vrot.slane %v3922, %v3935
        %v3938 = vunpack.c.l.s4 1966171168
        %v3939 = vunpack.c.0.s8 %v3938
        %v3940 = vlaneseq
        %v3941 = vshrl.u32 %v3940, 7
        %v3942 = vsub.s32 %v3939, %v3941
        %v3943 = vrot.slane %v3803, %v3942
        %v3944 = vcombine.low %v3929, %v3936
        %v3946 = vunpack.c.l.s4 1966171168
        %v3947 = vunpack.c.0.s8 %v3946
        %v3948 = vlaneseq
        %v3949 = vshrl.u32 %v3948, 7
        %v3950 = vsub.s32 %v3947, %v3949
        %v3951 = vrot.slane %v3944, %v3950
        %v3953 = vunpack.c.l.s4 1966171168
        %v3954 = vunpack.c.0.s8 %v3953
        %v3955 = vlaneseq
        %v3956 = vshrl.u32 %v3955, 7
        %v3957 = vsub.s32 %v3954, %v3956
        %v3958 = vrot.slane %v3943, %v3957
        %v3959 = vcombine.low %v3951, %v3958
        %v3964 = vadd.f32 %v1079, %v3842
        %v3965 = vadd.f32 %v1080, %v3881
        %v3966 = vadd.f32 %v1081, %v3920
        %v3967 = vadd.f32 %v1082, %v3959
        %v3968 = vld [vmem:[%s12] sm:$0x1]
        %v3969 = vld [vmem:[%s13] sm:$0x1]
        %v3970 = vsel %vm1089, %v3964, 0.0
        %3971 = vadd.xlane.f32.xlu0 %v3970
        %v3972 = vpop.xlane.xlu0 %3971
        %v3973 = vsel %vm1089, %v3965, 0.0
        %3974 = vadd.xlane.f32.xlu0 %v3973
        %v3975 = vpop.xlane.xlu0 %3974
        %v3976 = vsel %vm1089, %v3966, 0.0
        %3977 = vadd.xlane.f32.xlu0 %v3976
        %v3978 = vpop.xlane.xlu0 %3977
        %v3979 = vsel %vm1089, %v3967, 0.0
        %3980 = vadd.xlane.f32.xlu0 %v3979
        %v3981 = vpop.xlane.xlu0 %3980
        %v3982 = vmul.f32 %v3972, %v1102
        %v3983 = vmul.f32 %v3975, %v1102
        %v3984 = vmul.f32 %v3978, %v1102
        %v3985 = vmul.f32 %v3981, %v1102
        %v3986 = vsub.f32 %v3964, %v3982
        %v3987 = vsub.f32 %v3965, %v3983
        %v3988 = vsub.f32 %v3966, %v3984
        %v3989 = vsub.f32 %v3967, %v3985
        %v3990 = vmul.f32 %v3986, %v3986
        %v3991 = vmul.f32 %v3987, %v3987
        %v3992 = vmul.f32 %v3988, %v3988
        %v3993 = vmul.f32 %v3989, %v3989
        %v3994 = vsel %vm1089, %v3990, 0.0
        %3995 = vadd.xlane.f32.xlu0 %v3994
        %v3996 = vpop.xlane.xlu0 %3995
        %v3997 = vsel %vm1089, %v3991, 0.0
        %3998 = vadd.xlane.f32.xlu0 %v3997
        %v3999 = vpop.xlane.xlu0 %3998
        %v4000 = vsel %vm1089, %v3992, 0.0
        %4001 = vadd.xlane.f32.xlu0 %v4000
        %v4002 = vpop.xlane.xlu0 %4001
        %v4003 = vsel %vm1089, %v3993, 0.0
        %4004 = vadd.xlane.f32.xlu0 %v4003
        %v4005 = vpop.xlane.xlu0 %4004
        %v4006 = vmul.f32 %v3996, %v1102
        %v4007 = vmul.f32 %v3999, %v1102
        %v4008 = vmul.f32 %v4002, %v1102
        %v4009 = vmul.f32 %v4005, %v1102
        %v4010 = vadd.f32 %v4006, 1e-06
        %v4011 = vadd.f32 %v4007, 1e-06
        %v4012 = vadd.f32 %v4008, 1e-06
        %v4013 = vadd.f32 %v4009, 1e-06
        %v4014 = vrsqrt.pop %v4010
        %v4015 = vrsqrt.pop %v4011
        %v4016 = vrsqrt.pop %v4012
        %v4017 = vrsqrt.pop %v4013
        %v4018 = vmul.f32 %v3986, %v4014
        %v4019 = vmul.f32 %v3987, %v4015
        %v4020 = vmul.f32 %v3988, %v4016
        %v4021 = vmul.f32 %v3989, %v4017
        %v4023 = vlaneseq
        %v4024 = vshrl.u32 %v4023, 7
        %v4025 = vsub.s32 0, %v4024
        %v4026 = vrot.slane %v3968, %v4025
        %v4028 = vmul.f32 %v4018, %v4026
        %v4029 = vmul.f32 %v4019, %v4026
        %v4030 = vmul.f32 %v4020, %v4026
        %v4031 = vmul.f32 %v4021, %v4026
        %v4033 = vlaneseq
        %v4034 = vshrl.u32 %v4033, 7
        %v4035 = vsub.s32 0, %v4034
        %v4036 = vrot.slane %v3969, %v4035
        %v4038 = vadd.f32 %v4028, %v4036
        %v4039 = vadd.f32 %v4029, %v4036
        %v4040 = vadd.f32 %v4030, %v4036
        %v4041 = vadd.f32 %v4031, %v4036
        %v4046 = vcombine.high %v4038, %v4038
        %v4048 = vunpack.c.l.s4 1966171168
        %v4049 = vunpack.c.0.s8 %v4048
        %v4050 = vlaneseq
        %v4051 = vshrl.u32 %v4050, 7
        %v4052 = vsub.s32 %v4049, %v4051
        %v4053 = vrot.slane %v4038, %v4052
        %v4055 = vunpack.c.l.s4 1966171168
        %v4056 = vunpack.c.0.s8 %v4055
        %v4057 = vlaneseq
        %v4058 = vshrl.u32 %v4057, 7
        %v4059 = vsub.s32 %v4056, %v4058
        %v4060 = vrot.slane %v4046, %v4059
        %v4061 = vcombine.high %v4053, %v4053
        %v4063 = vunpack.c.l.s4 1966171168
        %v4064 = vunpack.c.0.s8 %v4063
        %v4065 = vlaneseq
        %v4066 = vshrl.u32 %v4065, 7
        %v4067 = vsub.s32 %v4064, %v4066
        %v4068 = vrot.slane %v4053, %v4067
        %v4070 = vunpack.c.l.s4 1966171168
        %v4071 = vunpack.c.0.s8 %v4070
        %v4072 = vlaneseq
        %v4073 = vshrl.u32 %v4072, 7
        %v4074 = vsub.s32 %v4071, %v4073
        %v4075 = vrot.slane %v4060, %v4074
        %v4077 = vunpack.c.l.s4 1966171168
        %v4078 = vunpack.c.0.s8 %v4077
        %v4079 = vlaneseq
        %v4080 = vshrl.u32 %v4079, 7
        %v4081 = vsub.s32 %v4078, %v4080
        %v4082 = vrot.slane %v4061, %v4081
        %v4083 = vcombine.high %v4068, %v4068
        %v4084 = vcombine.high %v4082, %v4082
        %v4085 = vcombine.high %v4039, %v4039
        %v4087 = vunpack.c.l.s4 1966171168
        %v4088 = vunpack.c.0.s8 %v4087
        %v4089 = vlaneseq
        %v4090 = vshrl.u32 %v4089, 7
        %v4091 = vsub.s32 %v4088, %v4090
        %v4092 = vrot.slane %v4039, %v4091
        %v4094 = vunpack.c.l.s4 1966171168
        %v4095 = vunpack.c.0.s8 %v4094
        %v4096 = vlaneseq
        %v4097 = vshrl.u32 %v4096, 7
        %v4098 = vsub.s32 %v4095, %v4097
        %v4099 = vrot.slane %v4085, %v4098
        %v4100 = vcombine.high %v4092, %v4092
        %v4102 = vunpack.c.l.s4 1966171168
        %v4103 = vunpack.c.0.s8 %v4102
        %v4104 = vlaneseq
        %v4105 = vshrl.u32 %v4104, 7
        %v4106 = vsub.s32 %v4103, %v4105
        %v4107 = vrot.slane %v4092, %v4106
        %v4109 = vunpack.c.l.s4 1966171168
        %v4110 = vunpack.c.0.s8 %v4109
        %v4111 = vlaneseq
        %v4112 = vshrl.u32 %v4111, 7
        %v4113 = vsub.s32 %v4110, %v4112
        %v4114 = vrot.slane %v4099, %v4113
        %v4116 = vunpack.c.l.s4 1966171168
        %v4117 = vunpack.c.0.s8 %v4116
        %v4118 = vlaneseq
        %v4119 = vshrl.u32 %v4118, 7
        %v4120 = vsub.s32 %v4117, %v4119
        %v4121 = vrot.slane %v4100, %v4120
        %v4122 = vcombine.high %v4107, %v4107
        %v4123 = vcombine.high %v4121, %v4121
        %v4124 = vcombine.high %v4040, %v4040
        %v4126 = vunpack.c.l.s4 1966171168
        %v4127 = vunpack.c.0.s8 %v4126
        %v4128 = vlaneseq
        %v4129 = vshrl.u32 %v4128, 7
        %v4130 = vsub.s32 %v4127, %v4129
        %v4131 = vrot.slane %v4040, %v4130
        %v4133 = vunpack.c.l.s4 1966171168
        %v4134 = vunpack.c.0.s8 %v4133
        %v4135 = vlaneseq
        %v4136 = vshrl.u32 %v4135, 7
        %v4137 = vsub.s32 %v4134, %v4136
        %v4138 = vrot.slane %v4124, %v4137
        %v4139 = vcombine.high %v4131, %v4131
        %v4141 = vunpack.c.l.s4 1966171168
        %v4142 = vunpack.c.0.s8 %v4141
        %v4143 = vlaneseq
        %v4144 = vshrl.u32 %v4143, 7
        %v4145 = vsub.s32 %v4142, %v4144
        %v4146 = vrot.slane %v4131, %v4145
        %v4148 = vunpack.c.l.s4 1966171168
        %v4149 = vunpack.c.0.s8 %v4148
        %v4150 = vlaneseq
        %v4151 = vshrl.u32 %v4150, 7
        %v4152 = vsub.s32 %v4149, %v4151
        %v4153 = vrot.slane %v4138, %v4152
        %v4155 = vunpack.c.l.s4 1966171168
        %v4156 = vunpack.c.0.s8 %v4155
        %v4157 = vlaneseq
        %v4158 = vshrl.u32 %v4157, 7
        %v4159 = vsub.s32 %v4156, %v4158
        %v4160 = vrot.slane %v4139, %v4159
        %v4161 = vcombine.high %v4146, %v4146
        %v4162 = vcombine.high %v4160, %v4160
        %v4163 = vcombine.high %v4041, %v4041
        %v4165 = vunpack.c.l.s4 1966171168
        %v4166 = vunpack.c.0.s8 %v4165
        %v4167 = vlaneseq
        %v4168 = vshrl.u32 %v4167, 7
        %v4169 = vsub.s32 %v4166, %v4168
        %v4170 = vrot.slane %v4041, %v4169
        %v4172 = vunpack.c.l.s4 1966171168
        %v4173 = vunpack.c.0.s8 %v4172
        %v4174 = vlaneseq
        %v4175 = vshrl.u32 %v4174, 7
        %v4176 = vsub.s32 %v4173, %v4175
        %v4177 = vrot.slane %v4163, %v4176
        %v4178 = vcombine.high %v4170, %v4170
        %v4180 = vunpack.c.l.s4 1966171168
        %v4181 = vunpack.c.0.s8 %v4180
        %v4182 = vlaneseq
        %v4183 = vshrl.u32 %v4182, 7
        %v4184 = vsub.s32 %v4181, %v4183
        %v4185 = vrot.slane %v4170, %v4184
        %v4187 = vunpack.c.l.s4 1966171168
        %v4188 = vunpack.c.0.s8 %v4187
        %v4189 = vlaneseq
        %v4190 = vshrl.u32 %v4189, 7
        %v4191 = vsub.s32 %v4188, %v4190
        %v4192 = vrot.slane %v4177, %v4191
        %v4194 = vunpack.c.l.s4 1966171168
        %v4195 = vunpack.c.0.s8 %v4194
        %v4196 = vlaneseq
        %v4197 = vshrl.u32 %v4196, 7
        %v4198 = vsub.s32 %v4195, %v4197
        %v4199 = vrot.slane %v4178, %v4198
        %v4200 = vcombine.high %v4185, %v4185
        %v4201 = vcombine.high %v4199, %v4199
        %v4202 = vcombine.low %v4068, %v4082
        %v4203 = vcombine.low %v4083, %v4084
        %v4204 = vcombine.low %v4075, %v4107
        %v4205 = vcombine.low %v4121, %v4122
        %v4207 = vunpack.c.l.s4 1966171168
        %v4208 = vunpack.c.0.s8 %v4207
        %v4209 = vlaneseq
        %v4210 = vshrl.u32 %v4209, 7
        %v4211 = vsub.s32 %v4208, %v4210
        %v4212 = vrot.slane %v4202, %v4211
        %v4214 = vunpack.c.l.s4 1966171168
        %v4215 = vunpack.c.0.s8 %v4214
        %v4216 = vlaneseq
        %v4217 = vshrl.u32 %v4216, 7
        %v4218 = vsub.s32 %v4215, %v4217
        %v4219 = vrot.slane %v4203, %v4218
        %v4221 = vunpack.c.l.s4 1966171168
        %v4222 = vunpack.c.0.s8 %v4221
        %v4223 = vlaneseq
        %v4224 = vshrl.u32 %v4223, 7
        %v4225 = vsub.s32 %v4222, %v4224
        %v4226 = vrot.slane %v4204, %v4225
        %v4228 = vunpack.c.l.s4 1966171168
        %v4229 = vunpack.c.0.s8 %v4228
        %v4230 = vlaneseq
        %v4231 = vshrl.u32 %v4230, 7
        %v4232 = vsub.s32 %v4229, %v4231
        %v4233 = vrot.slane %v4205, %v4232
        %v4234 = vcombine.low %v4212, %v4219
        %v4235 = vcombine.low %v4226, %v4233
        %v4237 = vunpack.c.l.s4 1966171168
        %v4238 = vunpack.c.0.s8 %v4237
        %v4239 = vlaneseq
        %v4240 = vshrl.u32 %v4239, 7
        %v4241 = vsub.s32 %v4238, %v4240
        %v4242 = vrot.slane %v4234, %v4241
        %v4244 = vunpack.c.l.s4 1966171168
        %v4245 = vunpack.c.0.s8 %v4244
        %v4246 = vlaneseq
        %v4247 = vshrl.u32 %v4246, 7
        %v4248 = vsub.s32 %v4245, %v4247
        %v4249 = vrot.slane %v4235, %v4248
        %v4250 = vcombine.low %v4242, %v4249
        %v4251 = vcombine.low %v4123, %v4114
        %v4252 = vcombine.low %v4146, %v4160
        %v4253 = vcombine.low %v4161, %v4162
        %v4254 = vcombine.low %v4153, %v4185
        %v4256 = vunpack.c.l.s4 1966171168
        %v4257 = vunpack.c.0.s8 %v4256
        %v4258 = vlaneseq
        %v4259 = vshrl.u32 %v4258, 7
        %v4260 = vsub.s32 %v4257, %v4259
        %v4261 = vrot.slane %v4251, %v4260
        %v4263 = vunpack.c.l.s4 1966171168
        %v4264 = vunpack.c.0.s8 %v4263
        %v4265 = vlaneseq
        %v4266 = vshrl.u32 %v4265, 7
        %v4267 = vsub.s32 %v4264, %v4266
        %v4268 = vrot.slane %v4252, %v4267
        %v4270 = vunpack.c.l.s4 1966171168
        %v4271 = vunpack.c.0.s8 %v4270
        %v4272 = vlaneseq
        %v4273 = vshrl.u32 %v4272, 7
        %v4274 = vsub.s32 %v4271, %v4273
        %v4275 = vrot.slane %v4253, %v4274
        %v4277 = vunpack.c.l.s4 1966171168
        %v4278 = vunpack.c.0.s8 %v4277
        %v4279 = vlaneseq
        %v4280 = vshrl.u32 %v4279, 7
        %v4281 = vsub.s32 %v4278, %v4280
        %v4282 = vrot.slane %v4254, %v4281
        %v4283 = vcombine.low %v4261, %v4268
        %v4284 = vcombine.low %v4275, %v4282
        %v4286 = vunpack.c.l.s4 1966171168
        %v4287 = vunpack.c.0.s8 %v4286
        %v4288 = vlaneseq
        %v4289 = vshrl.u32 %v4288, 7
        %v4290 = vsub.s32 %v4287, %v4289
        %v4291 = vrot.slane %v4283, %v4290
        %v4293 = vunpack.c.l.s4 1966171168
        %v4294 = vunpack.c.0.s8 %v4293
        %v4295 = vlaneseq
        %v4296 = vshrl.u32 %v4295, 7
        %v4297 = vsub.s32 %v4294, %v4296
        %v4298 = vrot.slane %v4284, %v4297
        %v4299 = vcombine.low %v4291, %v4298
        %v4300 = vcombine.low %v4199, %v4200
        %v4301 = vcombine.low %v4201, %v4192
        %v4303 = vunpack.c.l.s4 1966171168
        %v4304 = vunpack.c.0.s8 %v4303
        %v4305 = vlaneseq
        %v4306 = vshrl.u32 %v4305, 7
        %v4307 = vsub.s32 %v4304, %v4306
        %v4308 = vrot.slane %v4300, %v4307
        %v4310 = vunpack.c.l.s4 1966171168
        %v4311 = vunpack.c.0.s8 %v4310
        %v4312 = vlaneseq
        %v4313 = vshrl.u32 %v4312, 7
        %v4314 = vsub.s32 %v4311, %v4313
        %v4315 = vrot.slane %v4301, %v4314
        %v4316 = vcombine.low %v4308, %v4315
        %v4318 = vunpack.c.l.s4 1966171168
        %v4319 = vunpack.c.0.s8 %v4318
        %v4320 = vlaneseq
        %v4321 = vshrl.u32 %v4320, 7
        %v4322 = vsub.s32 %v4319, %v4321
        %v4323 = vrot.slane %v4316, %v4322
        %v4327 = vpack.c.bf16 %v4299, %v4250
        %v4328 = vpack.c.bf16 %v4323, %v4323
        %v4329 = vld [vmem:[%s14] sm:$0xff]
        %v4330 = vld [vmem:[%s14 + $0x8] sm:$0xff]
        %v4331 = vld [vmem:[%s14 + $0x10] sm:$0xff]
        %v4332 = vld [vmem:[%s14 + $0x18] sm:$0xff]
        %v4333 = vld [vmem:[%s14 + $0x20] sm:$0xff]
        %v4334 = vld [vmem:[%s14 + $0x28] sm:$0xff]
        %v4335 = vld [vmem:[%s15] sm:$0x3]
        %v4337 = vlaneseq
        %v4338 = vshrl.u32 %v4337, 7
        %v4339 = vsub.s32 0, %v4338
        %v4340 = vrot.slane %v4335, %v4339
        %v4341 = vlaneseq
        %v4342 = vshrl.u32 %v4341, 7
        %v4343 = vsub.s32 1, %v4342
        %v4344 = vrot.slane %v4335, %v4343
        %v4353 = vunpack.c.l.b16 %v4329
        %v4354 = vunpack.c.h.b16 %v4329
        %v4355 = vunpack.c.l.b16 %v4330
        %v4356 = vunpack.c.h.b16 %v4330
        %v4357 = vunpack.c.l.b16 %v4331
        %v4358 = vunpack.c.h.b16 %v4331
        %v4359 = vunpack.c.l.b16 %v4332
        %v4360 = vunpack.c.h.b16 %v4332
        %v4361 = vunpack.c.l.b16 %v4333
        %v4362 = vunpack.c.h.b16 %v4333
        %v4363 = vunpack.c.l.b16 %v4334
        %v4364 = vunpack.c.h.b16 %v4334
        %v4365 = vpack.c.b16 %v4355, %v4353
        %v4366 = vpack.c.b16 %v4356, %v4354
        %v4367 = vpack.c.b16 %v4359, %v4357
        %v4368 = vpack.c.b16 %v4360, %v4358
        %v4369 = vpack.c.b16 %v4363, %v4361
        %v4370 = vpack.c.b16 %v4364, %v4362
        %v4378 = vsel %vm1498, %v4327, 0
        %v4381 = vsel %vm1498, %v4328, 0
        %4383 = vmatprep.subr.bf16.mxu0 0
        %4384 = vmatpush1.bf16.msra.mxu0 0
        %4385 = vmatprep.subr.bf16.mxu0 0
        %4386 = vmatpush1.bf16.msra.mxu0 0
        %4387 = vmatprep.subr.bf16.mxu0 0
        %4388 = vmatpush1.bf16.msra.mxu0 0
        %4389 = vmatprep.subr.bf16.mxu0 0
        %4390 = vmatpush1.bf16.msra.mxu0 0
        %4391 = vmatprep.subr.bf16.mxu0 0
        %4392 = vmatpush1.bf16.msra.mxu0 0
        %4393 = vmatprep.subr.bf16.mxu0 %v4370
        %4394 = vmatpush1.bf16.msra.mxu0 %v4369
        %4395 = vmatprep.subr.bf16.mxu0 %v4368
        %4396 = vmatpush1.bf16.msra.mxu0 %v4367
        %4397 = vmatprep.subr.bf16.mxu0 %v4366
        %4398 = vmatpush1.bf16.msra.mxu0 %v4365
        %4399 = vmatprep.subr.bf16.mxu0 0
        %4400 = vmatpush2.bf16.msra.mxu0 0
        %4401 = vmatprep.subr.bf16.mxu0 0
        %4402 = vmatpush2.bf16.msra.mxu0 0
        %4403 = vmatprep.subr.bf16.mxu0 0
        %4404 = vmatpush2.bf16.msra.mxu0 0
        %4405 = vmatprep.subr.bf16.mxu0 0
        %4406 = vmatpush2.bf16.msra.mxu0 0
        %4407 = vmatprep.subr.bf16.mxu0 0
        %4408 = vmatpush2.bf16.msra.mxu0 0
        %4409 = vmatprep.subr.bf16.mxu0 0
        %4410 = vmatpush2.bf16.msra.mxu0 0
        %4411 = vmatprep.subr.bf16.mxu0 0
        %4412 = vmatpush2.bf16.msra.mxu0 0
        %4413 = vmatprep.subr.bf16.mxu0 0
        %4414 = vmatpush2.bf16.msra.mxu0 0
        %4415 = vmatprep.mubr.bf16.mxu0 0
        %4416 = vmatmul.mubr.bf16.gmra.mxu0 %v4378
        %v4417 = vpop.f32.mrf.mxu0
        %v4418 = vadd.f32 %v4340, %v4417
        %v4419 = vpop.f32.mrf.mxu0
        %v4420 = vadd.f32 %v4344, %v4419
        %v4421 = vpop.f32.mrf.mxu0
        %v4422 = vadd.f32 %v4340, %v4421
        %v4423 = vpop.f32.mrf.mxu0
        %v4424 = vadd.f32 %v4344, %v4423
        %4425 = vmatprep.mubr.bf16.mxu0 0
        %4426 = vmatmul.mubr.bf16.gmra.mxu0 %v4381
        %v4427 = vpop.f32.mrf.mxu0
        %v4428 = vadd.f32 %v4340, %v4427
        %v4429 = vpop.f32.mrf.mxu0
        %v4430 = vadd.f32 %v4344, %v4429
        %v4431 = vpop.f32.mrf.mxu0
        %v4432 = vpop.f32.mrf.mxu0
        %4433 = vdwg.mxu0
        %v4434 = vmul.f32 %v4418, %v4418
        %v4435 = vmul.f32 %v4420, %v4420
        %v4436 = vmul.f32 %v4422, %v4422
        %v4437 = vmul.f32 %v4424, %v4424
        %v4438 = vmul.f32 %v4428, %v4428
        %v4439 = vmul.f32 %v4430, %v4430
        %v4440 = vmul.f32 %v4418, %v4434
        %v4441 = vmul.f32 %v4420, %v4435
        %v4442 = vmul.f32 %v4422, %v4436
        %v4443 = vmul.f32 %v4424, %v4437
        %v4444 = vmul.f32 %v4428, %v4438
        %v4445 = vmul.f32 %v4430, %v4439
        %v4446 = vmul.f32 %v4440, 0.044715
        %v4447 = vmul.f32 %v4441, 0.044715
        %v4448 = vmul.f32 %v4442, 0.044715
        %v4449 = vmul.f32 %v4443, 0.044715
        %v4450 = vmul.f32 %v4444, 0.044715
        %v4451 = vmul.f32 %v4445, 0.044715
        %v4452 = vadd.f32 %v4418, %v4446
        %v4453 = vadd.f32 %v4420, %v4447
        %v4454 = vadd.f32 %v4422, %v4448
        %v4455 = vadd.f32 %v4424, %v4449
        %v4456 = vadd.f32 %v4428, %v4450
        %v4457 = vadd.f32 %v4430, %v4451
        %v4458 = vmul.f32 %v4452, 0.7978846
        %v4459 = vmul.f32 %v4453, 0.7978846
        %v4460 = vmul.f32 %v4454, 0.7978846
        %v4461 = vmul.f32 %v4455, 0.7978846
        %v4462 = vmul.f32 %v4456, 0.7978846
        %v4463 = vmul.f32 %v4457, 0.7978846
        %v4464 = vtanh.pop %v4458
        %v4465 = vtanh.pop %v4459
        %v4466 = vtanh.pop %v4460
        %v4467 = vtanh.pop %v4461
        %v4468 = vtanh.pop %v4462
        %v4469 = vtanh.pop %v4463
        %v4470 = vadd.f32 %v4464, 1.0
        %v4471 = vadd.f32 %v4465, 1.0
        %v4472 = vadd.f32 %v4466, 1.0
        %v4473 = vadd.f32 %v4467, 1.0
        %v4474 = vadd.f32 %v4468, 1.0
        %v4475 = vadd.f32 %v4469, 1.0
        %v4476 = vmul.f32 %v4470, 0.5
        %v4477 = vmul.f32 %v4471, 0.5
        %v4478 = vmul.f32 %v4472, 0.5
        %v4479 = vmul.f32 %v4473, 0.5
        %v4480 = vmul.f32 %v4474, 0.5
        %v4481 = vmul.f32 %v4475, 0.5
        %v4482 = vmul.f32 %v4418, %v4476
        %v4483 = vmul.f32 %v4420, %v4477
        %v4484 = vmul.f32 %v4422, %v4478
        %v4485 = vmul.f32 %v4424, %v4479
        %v4486 = vmul.f32 %v4428, %v4480
        %v4487 = vmul.f32 %v4430, %v4481
        %v4488 = vpack.c.bf16 %v4484, %v4482
        %v4489 = vpack.c.bf16 %v4485, %v4483
        %v4490 = vpack.c.bf16 %v4486, %v4486
        %v4491 = vpack.c.bf16 %v4487, %v4487
        %v4492 = vld [vmem:[%s16] sm:$0xf]
        %v4493 = vld [vmem:[%s16 + $0x4] sm:$0xf]
        %v4494 = vld [vmem:[%s16 + $0x8] sm:$0xf]
        %v4495 = vld [vmem:[%s16 + $0xc] sm:$0xf]
        %v4496 = vld [vmem:[%s16 + $0x10] sm:$0xf]
        %v4497 = vld [vmem:[%s16 + $0x14] sm:$0xf]
        %v4498 = vld [vmem:[%s16 + $0x18] sm:$0xf]
        %v4499 = vld [vmem:[%s16 + $0x1c] sm:$0xf]
        %v4500 = vld [vmem:[%s16 + $0x20] sm:$0xf]
        %v4501 = vld [vmem:[%s16 + $0x24] sm:$0xf]
        %v4502 = vld [vmem:[%s16 + $0x28] sm:$0xf]
        %v4503 = vld [vmem:[%s16 + $0x2c] sm:$0xf]
        %v4504 = vld [vmem:[%s16 + $0x30] sm:$0xf]
        %v4505 = vld [vmem:[%s16 + $0x34] sm:$0xf]
        %v4506 = vld [vmem:[%s16 + $0x38] sm:$0xf]
        %v4507 = vld [vmem:[%s16 + $0x3c] sm:$0xf]
        %v4508 = vld [vmem:[%s16 + $0x40] sm:$0xf]
        %v4509 = vld [vmem:[%s16 + $0x44] sm:$0xf]
        %v4510 = vld [vmem:[%s16 + $0x48] sm:$0xf]
        %v4511 = vld [vmem:[%s16 + $0x4c] sm:$0xf]
        %v4512 = vld [vmem:[%s16 + $0x50] sm:$0xf]
        %v4513 = vld [vmem:[%s16 + $0x54] sm:$0xf]
        %v4514 = vld [vmem:[%s16 + $0x58] sm:$0xf]
        %v4515 = vld [vmem:[%s16 + $0x5c] sm:$0xf]
        %v4516 = vld [vmem:[%s17] sm:$0x1]
        %v4518 = vlaneseq
        %v4519 = vshrl.u32 %v4518, 7
        %v4520 = vsub.s32 0, %v4519
        %v4521 = vrot.slane %v4516, %v4520
        %v4547 = vunpack.c.l.b16 %v4492
        %v4548 = vunpack.c.l.b16 %v4493
        %v4549 = vunpack.c.l.b16 %v4494
        %v4550 = vunpack.c.l.b16 %v4495
        %v4551 = vunpack.c.l.b16 %v4496
        %v4552 = vunpack.c.l.b16 %v4497
        %v4553 = vunpack.c.l.b16 %v4498
        %v4554 = vunpack.c.l.b16 %v4499
        %v4555 = vunpack.c.l.b16 %v4500
        %v4556 = vunpack.c.l.b16 %v4501
        %v4557 = vunpack.c.l.b16 %v4502
        %v4558 = vunpack.c.l.b16 %v4503
        %v4559 = vunpack.c.l.b16 %v4504
        %v4560 = vunpack.c.l.b16 %v4505
        %v4561 = vunpack.c.l.b16 %v4506
        %v4562 = vunpack.c.l.b16 %v4507
        %v4563 = vunpack.c.l.b16 %v4508
        %v4564 = vunpack.c.l.b16 %v4509
        %v4565 = vunpack.c.l.b16 %v4510
        %v4566 = vunpack.c.l.b16 %v4511
        %v4567 = vunpack.c.l.b16 %v4512
        %v4568 = vunpack.c.l.b16 %v4513
        %v4569 = vunpack.c.l.b16 %v4514
        %v4570 = vunpack.c.l.b16 %v4515
        %v4571 = vpack.c.b16 %v4548, %v4547
        %v4572 = vpack.c.b16 %v4550, %v4549
        %v4573 = vpack.c.b16 %v4552, %v4551
        %v4574 = vpack.c.b16 %v4554, %v4553
        %v4575 = vpack.c.b16 %v4556, %v4555
        %v4576 = vpack.c.b16 %v4558, %v4557
        %v4577 = vpack.c.b16 %v4560, %v4559
        %v4578 = vpack.c.b16 %v4562, %v4561
        %v4579 = vpack.c.b16 %v4564, %v4563
        %v4580 = vpack.c.b16 %v4566, %v4565
        %v4581 = vpack.c.b16 %v4568, %v4567
        %v4582 = vpack.c.b16 %v4570, %v4569
        %v4596 = vsel %vm1012, %v4489, 0
        %v4599 = vsel %vm1012, %v4491, 0
        %4601 = vmatprep.subr.bf16.mxu0 0
        %4602 = vmatpush1.bf16.msra.mxu0 %v4578
        %4603 = vmatprep.subr.bf16.mxu0 0
        %4604 = vmatpush1.bf16.msra.mxu0 %v4577
        %4605 = vmatprep.subr.bf16.mxu0 0
        %4606 = vmatpush1.bf16.msra.mxu0 %v4576
        %4607 = vmatprep.subr.bf16.mxu0 0
        %4608 = vmatpush1.bf16.msra.mxu0 %v4575
        %4609 = vmatprep.subr.bf16.mxu0 0
        %4610 = vmatpush1.bf16.msra.mxu0 %v4574
        %4611 = vmatprep.subr.bf16.mxu0 0
        %4612 = vmatpush1.bf16.msra.mxu0 %v4573
        %4613 = vmatprep.subr.bf16.mxu0 0
        %4614 = vmatpush1.bf16.msra.mxu0 %v4572
        %4615 = vmatprep.subr.bf16.mxu0 0
        %4616 = vmatpush1.bf16.msra.mxu0 %v4571
        %4617 = vmatprep.subr.bf16.mxu0 0
        %4618 = vmatpush2.bf16.msra.mxu0 0
        %4619 = vmatprep.subr.bf16.mxu0 0
        %4620 = vmatpush2.bf16.msra.mxu0 0
        %4621 = vmatprep.subr.bf16.mxu0 0
        %4622 = vmatpush2.bf16.msra.mxu0 0
        %4623 = vmatprep.subr.bf16.mxu0 0
        %4624 = vmatpush2.bf16.msra.mxu0 0
        %4625 = vmatprep.subr.bf16.mxu0 0
        %4626 = vmatpush2.bf16.msra.mxu0 %v4582
        %4627 = vmatprep.subr.bf16.mxu0 0
        %4628 = vmatpush2.bf16.msra.mxu0 %v4581
        %4629 = vmatprep.subr.bf16.mxu0 0
        %4630 = vmatpush2.bf16.msra.mxu0 %v4580
        %4631 = vmatprep.subr.bf16.mxu0 0
        %4632 = vmatpush2.bf16.msra.mxu0 %v4579
        %4633 = vmatprep.mubr.bf16.mxu0 %v4596
        %4634 = vmatmul.mubr.bf16.gmra.mxu0 %v4488
        %v4635 = vpop.f32.mrf.mxu0
        %v4636 = vadd.f32 %v4521, %v4635
        %v4637 = vpop.f32.mrf.mxu0
        %v4638 = vpop.f32.mrf.mxu0
        %v4639 = vadd.f32 %v4521, %v4638
        %v4640 = vpop.f32.mrf.mxu0
        %4641 = vmatprep.mubr.bf16.mxu0 %v4599
        %4642 = vmatmul.mubr.bf16.gmra.mxu0 %v4490
        %v4643 = vpop.f32.mrf.mxu0
        %v4644 = vadd.f32 %v4521, %v4643
        %v4645 = vpop.f32.mrf.mxu0
        %v4646 = vpop.f32.mrf.mxu0
        %v4647 = vpop.f32.mrf.mxu0
        %4648 = vdwg.mxu0
        %v4652 = vcombine.high %v4636, %v4636
        %v4654 = vunpack.c.l.s4 1966171168
        %v4655 = vunpack.c.0.s8 %v4654
        %v4656 = vlaneseq
        %v4657 = vshrl.u32 %v4656, 7
        %v4658 = vsub.s32 %v4655, %v4657
        %v4659 = vrot.slane %v4636, %v4658
        %v4661 = vunpack.c.l.s4 1966171168
        %v4662 = vunpack.c.0.s8 %v4661
        %v4663 = vlaneseq
        %v4664 = vshrl.u32 %v4663, 7
        %v4665 = vsub.s32 %v4662, %v4664
        %v4666 = vrot.slane %v4652, %v4665
        %v4667 = vcombine.high %v4659, %v4659
        %v4668 = vcombine.high %v4666, %v4666
        %v4670 = vunpack.c.l.s4 1966171168
        %v4671 = vunpack.c.0.s8 %v4670
        %v4672 = vlaneseq
        %v4673 = vshrl.u32 %v4672, 7
        %v4674 = vsub.s32 %v4671, %v4673
        %v4675 = vrot.slane %v4659, %v4674
        %v4677 = vunpack.c.l.s4 1966171168
        %v4678 = vunpack.c.0.s8 %v4677
        %v4679 = vlaneseq
        %v4680 = vshrl.u32 %v4679, 7
        %v4681 = vsub.s32 %v4678, %v4680
        %v4682 = vrot.slane %v4666, %v4681
        %v4684 = vunpack.c.l.s4 1966171168
        %v4685 = vunpack.c.0.s8 %v4684
        %v4686 = vlaneseq
        %v4687 = vshrl.u32 %v4686, 7
        %v4688 = vsub.s32 %v4685, %v4687
        %v4689 = vrot.slane %v4667, %v4688
        %v4691 = vunpack.c.l.s4 1966171168
        %v4692 = vunpack.c.0.s8 %v4691
        %v4693 = vlaneseq
        %v4694 = vshrl.u32 %v4693, 7
        %v4695 = vsub.s32 %v4692, %v4694
        %v4696 = vrot.slane %v4668, %v4695
        %v4697 = vcombine.high %v4675, %v4675
        %v4698 = vcombine.high %v4682, %v4682
        %v4699 = vcombine.high %v4689, %v4689
        %v4700 = vcombine.high %v4696, %v4696
        %v4701 = vcombine.high %v4639, %v4639
        %v4703 = vunpack.c.l.s4 1966171168
        %v4704 = vunpack.c.0.s8 %v4703
        %v4705 = vlaneseq
        %v4706 = vshrl.u32 %v4705, 7
        %v4707 = vsub.s32 %v4704, %v4706
        %v4708 = vrot.slane %v4639, %v4707
        %v4710 = vunpack.c.l.s4 1966171168
        %v4711 = vunpack.c.0.s8 %v4710
        %v4712 = vlaneseq
        %v4713 = vshrl.u32 %v4712, 7
        %v4714 = vsub.s32 %v4711, %v4713
        %v4715 = vrot.slane %v4701, %v4714
        %v4716 = vcombine.high %v4708, %v4708
        %v4717 = vcombine.high %v4715, %v4715
        %v4719 = vunpack.c.l.s4 1966171168
        %v4720 = vunpack.c.0.s8 %v4719
        %v4721 = vlaneseq
        %v4722 = vshrl.u32 %v4721, 7
        %v4723 = vsub.s32 %v4720, %v4722
        %v4724 = vrot.slane %v4708, %v4723
        %v4726 = vunpack.c.l.s4 1966171168
        %v4727 = vunpack.c.0.s8 %v4726
        %v4728 = vlaneseq
        %v4729 = vshrl.u32 %v4728, 7
        %v4730 = vsub.s32 %v4727, %v4729
        %v4731 = vrot.slane %v4715, %v4730
        %v4733 = vunpack.c.l.s4 1966171168
        %v4734 = vunpack.c.0.s8 %v4733
        %v4735 = vlaneseq
        %v4736 = vshrl.u32 %v4735, 7
        %v4737 = vsub.s32 %v4734, %v4736
        %v4738 = vrot.slane %v4716, %v4737
        %v4740 = vunpack.c.l.s4 1966171168
        %v4741 = vunpack.c.0.s8 %v4740
        %v4742 = vlaneseq
        %v4743 = vshrl.u32 %v4742, 7
        %v4744 = vsub.s32 %v4741, %v4743
        %v4745 = vrot.slane %v4717, %v4744
        %v4746 = vcombine.high %v4724, %v4724
        %v4747 = vcombine.high %v4731, %v4731
        %v4748 = vcombine.high %v4738, %v4738
        %v4749 = vcombine.high %v4745, %v4745
        %v4751 = vunpack.c.l.s4 1966171168
        %v4752 = vunpack.c.0.s8 %v4751
        %v4753 = vlaneseq
        %v4754 = vshrl.u32 %v4753, 7
        %v4755 = vsub.s32 %v4752, %v4754
        %v4756 = vrot.slane %v4644, %v4755
        %v4757 = vcombine.high %v4756, %v4756
        %v4759 = vunpack.c.l.s4 1966171168
        %v4760 = vunpack.c.0.s8 %v4759
        %v4761 = vlaneseq
        %v4762 = vshrl.u32 %v4761, 7
        %v4763 = vsub.s32 %v4760, %v4762
        %v4764 = vrot.slane %v4756, %v4763
        %v4766 = vunpack.c.l.s4 1966171168
        %v4767 = vunpack.c.0.s8 %v4766
        %v4768 = vlaneseq
        %v4769 = vshrl.u32 %v4768, 7
        %v4770 = vsub.s32 %v4767, %v4769
        %v4771 = vrot.slane %v4757, %v4770
        %v4772 = vcombine.high %v4764, %v4764
        %v4773 = vcombine.high %v4771, %v4771
        %v4774 = vcombine.low %v4675, %v4689
        %v4775 = vcombine.low %v4697, %v4699
        %v4777 = vunpack.c.l.s4 1966171168
        %v4778 = vunpack.c.0.s8 %v4777
        %v4779 = vlaneseq
        %v4780 = vshrl.u32 %v4779, 7
        %v4781 = vsub.s32 %v4778, %v4780
        %v4782 = vrot.slane %v4774, %v4781
        %v4784 = vunpack.c.l.s4 1966171168
        %v4785 = vunpack.c.0.s8 %v4784
        %v4786 = vlaneseq
        %v4787 = vshrl.u32 %v4786, 7
        %v4788 = vsub.s32 %v4785, %v4787
        %v4789 = vrot.slane %v4775, %v4788
        %v4791 = vunpack.c.l.s4 1966171168
        %v4792 = vunpack.c.0.s8 %v4791
        %v4793 = vlaneseq
        %v4794 = vshrl.u32 %v4793, 7
        %v4795 = vsub.s32 %v4792, %v4794
        %v4796 = vrot.slane %v4682, %v4795
        %v4797 = vcombine.low %v4782, %v4789
        %v4799 = vunpack.c.l.s4 1966171168
        %v4800 = vunpack.c.0.s8 %v4799
        %v4801 = vlaneseq
        %v4802 = vshrl.u32 %v4801, 7
        %v4803 = vsub.s32 %v4800, %v4802
        %v4804 = vrot.slane %v4797, %v4803
        %v4806 = vunpack.c.l.s4 1966171168
        %v4807 = vunpack.c.0.s8 %v4806
        %v4808 = vlaneseq
        %v4809 = vshrl.u32 %v4808, 7
        %v4810 = vsub.s32 %v4807, %v4809
        %v4811 = vrot.slane %v4796, %v4810
        %v4812 = vcombine.low %v4804, %v4811
        %v4813 = vcombine.low %v4696, %v4698
        %v4814 = vcombine.low %v4700, %v4724
        %v4816 = vunpack.c.l.s4 1966171168
        %v4817 = vunpack.c.0.s8 %v4816
        %v4818 = vlaneseq
        %v4819 = vshrl.u32 %v4818, 7
        %v4820 = vsub.s32 %v4817, %v4819
        %v4821 = vrot.slane %v4813, %v4820
        %v4823 = vunpack.c.l.s4 1966171168
        %v4824 = vunpack.c.0.s8 %v4823
        %v4825 = vlaneseq
        %v4826 = vshrl.u32 %v4825, 7
        %v4827 = vsub.s32 %v4824, %v4826
        %v4828 = vrot.slane %v4814, %v4827
        %v4830 = vunpack.c.l.s4 1966171168
        %v4831 = vunpack.c.0.s8 %v4830
        %v4832 = vlaneseq
        %v4833 = vshrl.u32 %v4832, 7
        %v4834 = vsub.s32 %v4831, %v4833
        %v4835 = vrot.slane %v4738, %v4834
        %v4836 = vcombine.low %v4821, %v4828
        %v4838 = vunpack.c.l.s4 1966171168
        %v4839 = vunpack.c.0.s8 %v4838
        %v4840 = vlaneseq
        %v4841 = vshrl.u32 %v4840, 7
        %v4842 = vsub.s32 %v4839, %v4841
        %v4843 = vrot.slane %v4836, %v4842
        %v4845 = vunpack.c.l.s4 1966171168
        %v4846 = vunpack.c.0.s8 %v4845
        %v4847 = vlaneseq
        %v4848 = vshrl.u32 %v4847, 7
        %v4849 = vsub.s32 %v4846, %v4848
        %v4850 = vrot.slane %v4835, %v4849
        %v4851 = vcombine.low %v4843, %v4850
        %v4852 = vcombine.low %v4746, %v4748
        %v4853 = vcombine.low %v4731, %v4745
        %v4855 = vunpack.c.l.s4 1966171168
        %v4856 = vunpack.c.0.s8 %v4855
        %v4857 = vlaneseq
        %v4858 = vshrl.u32 %v4857, 7
        %v4859 = vsub.s32 %v4856, %v4858
        %v4860 = vrot.slane %v4852, %v4859
        %v4862 = vunpack.c.l.s4 1966171168
        %v4863 = vunpack.c.0.s8 %v4862
        %v4864 = vlaneseq
        %v4865 = vshrl.u32 %v4864, 7
        %v4866 = vsub.s32 %v4863, %v4865
        %v4867 = vrot.slane %v4853, %v4866
        %v4869 = vunpack.c.l.s4 1966171168
        %v4870 = vunpack.c.0.s8 %v4869
        %v4871 = vlaneseq
        %v4872 = vshrl.u32 %v4871, 7
        %v4873 = vsub.s32 %v4870, %v4872
        %v4874 = vrot.slane %v4747, %v4873
        %v4875 = vcombine.low %v4860, %v4867
        %v4877 = vunpack.c.l.s4 1966171168
        %v4878 = vunpack.c.0.s8 %v4877
        %v4879 = vlaneseq
        %v4880 = vshrl.u32 %v4879, 7
        %v4881 = vsub.s32 %v4878, %v4880
        %v4882 = vrot.slane %v4875, %v4881
        %v4884 = vunpack.c.l.s4 1966171168
        %v4885 = vunpack.c.0.s8 %v4884
        %v4886 = vlaneseq
        %v4887 = vshrl.u32 %v4886, 7
        %v4888 = vsub.s32 %v4885, %v4887
        %v4889 = vrot.slane %v4874, %v4888
        %v4890 = vcombine.low %v4882, %v4889
        %v4891 = vcombine.low %v4749, %v4764
        %v4892 = vcombine.low %v4771, %v4772
        %v4894 = vunpack.c.l.s4 1966171168
        %v4895 = vunpack.c.0.s8 %v4894
        %v4896 = vlaneseq
        %v4897 = vshrl.u32 %v4896, 7
        %v4898 = vsub.s32 %v4895, %v4897
        %v4899 = vrot.slane %v4891, %v4898
        %v4901 = vunpack.c.l.s4 1966171168
        %v4902 = vunpack.c.0.s8 %v4901
        %v4903 = vlaneseq
        %v4904 = vshrl.u32 %v4903, 7
        %v4905 = vsub.s32 %v4902, %v4904
        %v4906 = vrot.slane %v4892, %v4905
        %v4908 = vunpack.c.l.s4 1966171168
        %v4909 = vunpack.c.0.s8 %v4908
        %v4910 = vlaneseq
        %v4911 = vshrl.u32 %v4910, 7
        %v4912 = vsub.s32 %v4909, %v4911
        %v4913 = vrot.slane %v4773, %v4912
        %v4914 = vcombine.low %v4899, %v4906
        %v4916 = vunpack.c.l.s4 1966171168
        %v4917 = vunpack.c.0.s8 %v4916
        %v4918 = vlaneseq
        %v4919 = vshrl.u32 %v4918, 7
        %v4920 = vsub.s32 %v4917, %v4919
        %v4921 = vrot.slane %v4914, %v4920
        %v4923 = vunpack.c.l.s4 1966171168
        %v4924 = vunpack.c.0.s8 %v4923
        %v4925 = vlaneseq
        %v4926 = vshrl.u32 %v4925, 7
        %v4927 = vsub.s32 %v4924, %v4926
        %v4928 = vrot.slane %v4913, %v4927
        %v4929 = vcombine.low %v4921, %v4928
        %v4934 = vadd.f32 %v3964, %v4812
        %v4935 = vadd.f32 %v3965, %v4851
        %v4936 = vadd.f32 %v3966, %v4890
        %v4937 = vadd.f32 %v3967, %v4929
        %s4938 = scalar_lea.vmem %s6, 1
        %v4939 = vld [vmem:[%s4938] sm:$0x1]
        %s4940 = scalar_lea.vmem %s7, 1
        %v4941 = vld [vmem:[%s4940] sm:$0x1]
        %v4942 = vsel %vm1089, %v4934, 0.0
        %4943 = vadd.xlane.f32.xlu0 %v4942
        %v4944 = vpop.xlane.xlu0 %4943
        %v4945 = vsel %vm1089, %v4935, 0.0
        %4946 = vadd.xlane.f32.xlu0 %v4945
        %v4947 = vpop.xlane.xlu0 %4946
        %v4948 = vsel %vm1089, %v4936, 0.0
        %4949 = vadd.xlane.f32.xlu0 %v4948
        %v4950 = vpop.xlane.xlu0 %4949
        %v4951 = vsel %vm1089, %v4937, 0.0
        %4952 = vadd.xlane.f32.xlu0 %v4951
        %v4953 = vpop.xlane.xlu0 %4952
        %v4954 = vmul.f32 %v4944, %v1102
        %v4955 = vmul.f32 %v4947, %v1102
        %v4956 = vmul.f32 %v4950, %v1102
        %v4957 = vmul.f32 %v4953, %v1102
        %v4958 = vsub.f32 %v4934, %v4954
        %v4959 = vsub.f32 %v4935, %v4955
        %v4960 = vsub.f32 %v4936, %v4956
        %v4961 = vsub.f32 %v4937, %v4957
        %v4962 = vmul.f32 %v4958, %v4958
        %v4963 = vmul.f32 %v4959, %v4959
        %v4964 = vmul.f32 %v4960, %v4960
        %v4965 = vmul.f32 %v4961, %v4961
        %v4966 = vsel %vm1089, %v4962, 0.0
        %4967 = vadd.xlane.f32.xlu0 %v4966
        %v4968 = vpop.xlane.xlu0 %4967
        %v4969 = vsel %vm1089, %v4963, 0.0
        %4970 = vadd.xlane.f32.xlu0 %v4969
        %v4971 = vpop.xlane.xlu0 %4970
        %v4972 = vsel %vm1089, %v4964, 0.0
        %4973 = vadd.xlane.f32.xlu0 %v4972
        %v4974 = vpop.xlane.xlu0 %4973
        %v4975 = vsel %vm1089, %v4965, 0.0
        %4976 = vadd.xlane.f32.xlu0 %v4975
        %v4977 = vpop.xlane.xlu0 %4976
        %v4978 = vmul.f32 %v4968, %v1102
        %v4979 = vmul.f32 %v4971, %v1102
        %v4980 = vmul.f32 %v4974, %v1102
        %v4981 = vmul.f32 %v4977, %v1102
        %v4982 = vadd.f32 %v4978, 1e-06
        %v4983 = vadd.f32 %v4979, 1e-06
        %v4984 = vadd.f32 %v4980, 1e-06
        %v4985 = vadd.f32 %v4981, 1e-06
        %v4986 = vrsqrt.pop %v4982
        %v4987 = vrsqrt.pop %v4983
        %v4988 = vrsqrt.pop %v4984
        %v4989 = vrsqrt.pop %v4985
        %v4990 = vmul.f32 %v4958, %v4986
        %v4991 = vmul.f32 %v4959, %v4987
        %v4992 = vmul.f32 %v4960, %v4988
        %v4993 = vmul.f32 %v4961, %v4989
        %v4995 = vlaneseq
        %v4996 = vshrl.u32 %v4995, 7
        %v4997 = vsub.s32 0, %v4996
        %v4998 = vrot.slane %v4939, %v4997
        %v5000 = vmul.f32 %v4990, %v4998
        %v5001 = vmul.f32 %v4991, %v4998
        %v5002 = vmul.f32 %v4992, %v4998
        %v5003 = vmul.f32 %v4993, %v4998
        %v5005 = vlaneseq
        %v5006 = vshrl.u32 %v5005, 7
        %v5007 = vsub.s32 0, %v5006
        %v5008 = vrot.slane %v4941, %v5007
        %v5010 = vadd.f32 %v5000, %v5008
        %v5011 = vadd.f32 %v5001, %v5008
        %v5012 = vadd.f32 %v5002, %v5008
        %v5013 = vadd.f32 %v5003, %v5008
        %v5018 = vcombine.high %v5010, %v5010
        %v5020 = vunpack.c.l.s4 1966171168
        %v5021 = vunpack.c.0.s8 %v5020
        %v5022 = vlaneseq
        %v5023 = vshrl.u32 %v5022, 7
        %v5024 = vsub.s32 %v5021, %v5023
        %v5025 = vrot.slane %v5010, %v5024
        %v5027 = vunpack.c.l.s4 1966171168
        %v5028 = vunpack.c.0.s8 %v5027
        %v5029 = vlaneseq
        %v5030 = vshrl.u32 %v5029, 7
        %v5031 = vsub.s32 %v5028, %v5030
        %v5032 = vrot.slane %v5018, %v5031
        %v5033 = vcombine.high %v5025, %v5025
        %v5035 = vunpack.c.l.s4 1966171168
        %v5036 = vunpack.c.0.s8 %v5035
        %v5037 = vlaneseq
        %v5038 = vshrl.u32 %v5037, 7
        %v5039 = vsub.s32 %v5036, %v5038
        %v5040 = vrot.slane %v5025, %v5039
        %v5042 = vunpack.c.l.s4 1966171168
        %v5043 = vunpack.c.0.s8 %v5042
        %v5044 = vlaneseq
        %v5045 = vshrl.u32 %v5044, 7
        %v5046 = vsub.s32 %v5043, %v5045
        %v5047 = vrot.slane %v5032, %v5046
        %v5049 = vunpack.c.l.s4 1966171168
        %v5050 = vunpack.c.0.s8 %v5049
        %v5051 = vlaneseq
        %v5052 = vshrl.u32 %v5051, 7
        %v5053 = vsub.s32 %v5050, %v5052
        %v5054 = vrot.slane %v5033, %v5053
        %v5055 = vcombine.high %v5040, %v5040
        %v5056 = vcombine.high %v5054, %v5054
        %v5057 = vcombine.high %v5011, %v5011
        %v5059 = vunpack.c.l.s4 1966171168
        %v5060 = vunpack.c.0.s8 %v5059
        %v5061 = vlaneseq
        %v5062 = vshrl.u32 %v5061, 7
        %v5063 = vsub.s32 %v5060, %v5062
        %v5064 = vrot.slane %v5011, %v5063
        %v5066 = vunpack.c.l.s4 1966171168
        %v5067 = vunpack.c.0.s8 %v5066
        %v5068 = vlaneseq
        %v5069 = vshrl.u32 %v5068, 7
        %v5070 = vsub.s32 %v5067, %v5069
        %v5071 = vrot.slane %v5057, %v5070
        %v5072 = vcombine.high %v5064, %v5064
        %v5074 = vunpack.c.l.s4 1966171168
        %v5075 = vunpack.c.0.s8 %v5074
        %v5076 = vlaneseq
        %v5077 = vshrl.u32 %v5076, 7
        %v5078 = vsub.s32 %v5075, %v5077
        %v5079 = vrot.slane %v5064, %v5078
        %v5081 = vunpack.c.l.s4 1966171168
        %v5082 = vunpack.c.0.s8 %v5081
        %v5083 = vlaneseq
        %v5084 = vshrl.u32 %v5083, 7
        %v5085 = vsub.s32 %v5082, %v5084
        %v5086 = vrot.slane %v5071, %v5085
        %v5088 = vunpack.c.l.s4 1966171168
        %v5089 = vunpack.c.0.s8 %v5088
        %v5090 = vlaneseq
        %v5091 = vshrl.u32 %v5090, 7
        %v5092 = vsub.s32 %v5089, %v5091
        %v5093 = vrot.slane %v5072, %v5092
        %v5094 = vcombine.high %v5079, %v5079
        %v5095 = vcombine.high %v5093, %v5093
        %v5096 = vcombine.high %v5012, %v5012
        %v5098 = vunpack.c.l.s4 1966171168
        %v5099 = vunpack.c.0.s8 %v5098
        %v5100 = vlaneseq
        %v5101 = vshrl.u32 %v5100, 7
        %v5102 = vsub.s32 %v5099, %v5101
        %v5103 = vrot.slane %v5012, %v5102
        %v5105 = vunpack.c.l.s4 1966171168
        %v5106 = vunpack.c.0.s8 %v5105
        %v5107 = vlaneseq
        %v5108 = vshrl.u32 %v5107, 7
        %v5109 = vsub.s32 %v5106, %v5108
        %v5110 = vrot.slane %v5096, %v5109
        %v5111 = vcombine.high %v5103, %v5103
        %v5113 = vunpack.c.l.s4 1966171168
        %v5114 = vunpack.c.0.s8 %v5113
        %v5115 = vlaneseq
        %v5116 = vshrl.u32 %v5115, 7
        %v5117 = vsub.s32 %v5114, %v5116
        %v5118 = vrot.slane %v5103, %v5117
        %v5120 = vunpack.c.l.s4 1966171168
        %v5121 = vunpack.c.0.s8 %v5120
        %v5122 = vlaneseq
        %v5123 = vshrl.u32 %v5122, 7
        %v5124 = vsub.s32 %v5121, %v5123
        %v5125 = vrot.slane %v5110, %v5124
        %v5127 = vunpack.c.l.s4 1966171168
        %v5128 = vunpack.c.0.s8 %v5127
        %v5129 = vlaneseq
        %v5130 = vshrl.u32 %v5129, 7
        %v5131 = vsub.s32 %v5128, %v5130
        %v5132 = vrot.slane %v5111, %v5131
        %v5133 = vcombine.high %v5118, %v5118
        %v5134 = vcombine.high %v5132, %v5132
        %v5135 = vcombine.high %v5013, %v5013
        %v5137 = vunpack.c.l.s4 1966171168
        %v5138 = vunpack.c.0.s8 %v5137
        %v5139 = vlaneseq
        %v5140 = vshrl.u32 %v5139, 7
        %v5141 = vsub.s32 %v5138, %v5140
        %v5142 = vrot.slane %v5013, %v5141
        %v5144 = vunpack.c.l.s4 1966171168
        %v5145 = vunpack.c.0.s8 %v5144
        %v5146 = vlaneseq
        %v5147 = vshrl.u32 %v5146, 7
        %v5148 = vsub.s32 %v5145, %v5147
        %v5149 = vrot.slane %v5135, %v5148
        %v5150 = vcombine.high %v5142, %v5142
        %v5152 = vunpack.c.l.s4 1966171168
        %v5153 = vunpack.c.0.s8 %v5152
        %v5154 = vlaneseq
        %v5155 = vshrl.u32 %v5154, 7
        %v5156 = vsub.s32 %v5153, %v5155
        %v5157 = vrot.slane %v5142, %v5156
        %v5159 = vunpack.c.l.s4 1966171168
        %v5160 = vunpack.c.0.s8 %v5159
        %v5161 = vlaneseq
        %v5162 = vshrl.u32 %v5161, 7
        %v5163 = vsub.s32 %v5160, %v5162
        %v5164 = vrot.slane %v5149, %v5163
        %v5166 = vunpack.c.l.s4 1966171168
        %v5167 = vunpack.c.0.s8 %v5166
        %v5168 = vlaneseq
        %v5169 = vshrl.u32 %v5168, 7
        %v5170 = vsub.s32 %v5167, %v5169
        %v5171 = vrot.slane %v5150, %v5170
        %v5172 = vcombine.high %v5157, %v5157
        %v5173 = vcombine.high %v5171, %v5171
        %v5174 = vcombine.low %v5040, %v5054
        %v5175 = vcombine.low %v5055, %v5056
        %v5176 = vcombine.low %v5047, %v5079
        %v5177 = vcombine.low %v5093, %v5094
        %v5179 = vunpack.c.l.s4 1966171168
        %v5180 = vunpack.c.0.s8 %v5179
        %v5181 = vlaneseq
        %v5182 = vshrl.u32 %v5181, 7
        %v5183 = vsub.s32 %v5180, %v5182
        %v5184 = vrot.slane %v5174, %v5183
        %v5186 = vunpack.c.l.s4 1966171168
        %v5187 = vunpack.c.0.s8 %v5186
        %v5188 = vlaneseq
        %v5189 = vshrl.u32 %v5188, 7
        %v5190 = vsub.s32 %v5187, %v5189
        %v5191 = vrot.slane %v5175, %v5190
        %v5193 = vunpack.c.l.s4 1966171168
        %v5194 = vunpack.c.0.s8 %v5193
        %v5195 = vlaneseq
        %v5196 = vshrl.u32 %v5195, 7
        %v5197 = vsub.s32 %v5194, %v5196
        %v5198 = vrot.slane %v5176, %v5197
        %v5200 = vunpack.c.l.s4 1966171168
        %v5201 = vunpack.c.0.s8 %v5200
        %v5202 = vlaneseq
        %v5203 = vshrl.u32 %v5202, 7
        %v5204 = vsub.s32 %v5201, %v5203
        %v5205 = vrot.slane %v5177, %v5204
        %v5206 = vcombine.low %v5184, %v5191
        %v5207 = vcombine.low %v5198, %v5205
        %v5209 = vunpack.c.l.s4 1966171168
        %v5210 = vunpack.c.0.s8 %v5209
        %v5211 = vlaneseq
        %v5212 = vshrl.u32 %v5211, 7
        %v5213 = vsub.s32 %v5210, %v5212
        %v5214 = vrot.slane %v5206, %v5213
        %v5216 = vunpack.c.l.s4 1966171168
        %v5217 = vunpack.c.0.s8 %v5216
        %v5218 = vlaneseq
        %v5219 = vshrl.u32 %v5218, 7
        %v5220 = vsub.s32 %v5217, %v5219
        %v5221 = vrot.slane %v5207, %v5220
        %v5222 = vcombine.low %v5214, %v5221
        %v5223 = vcombine.low %v5095, %v5086
        %v5224 = vcombine.low %v5118, %v5132
        %v5225 = vcombine.low %v5133, %v5134
        %v5226 = vcombine.low %v5125, %v5157
        %v5228 = vunpack.c.l.s4 1966171168
        %v5229 = vunpack.c.0.s8 %v5228
        %v5230 = vlaneseq
        %v5231 = vshrl.u32 %v5230, 7
        %v5232 = vsub.s32 %v5229, %v5231
        %v5233 = vrot.slane %v5223, %v5232
        %v5235 = vunpack.c.l.s4 1966171168
        %v5236 = vunpack.c.0.s8 %v5235
        %v5237 = vlaneseq
        %v5238 = vshrl.u32 %v5237, 7
        %v5239 = vsub.s32 %v5236, %v5238
        %v5240 = vrot.slane %v5224, %v5239
        %v5242 = vunpack.c.l.s4 1966171168
        %v5243 = vunpack.c.0.s8 %v5242
        %v5244 = vlaneseq
        %v5245 = vshrl.u32 %v5244, 7
        %v5246 = vsub.s32 %v5243, %v5245
        %v5247 = vrot.slane %v5225, %v5246
        %v5249 = vunpack.c.l.s4 1966171168
        %v5250 = vunpack.c.0.s8 %v5249
        %v5251 = vlaneseq
        %v5252 = vshrl.u32 %v5251, 7
        %v5253 = vsub.s32 %v5250, %v5252
        %v5254 = vrot.slane %v5226, %v5253
        %v5255 = vcombine.low %v5233, %v5240
        %v5256 = vcombine.low %v5247, %v5254
        %v5258 = vunpack.c.l.s4 1966171168
        %v5259 = vunpack.c.0.s8 %v5258
        %v5260 = vlaneseq
        %v5261 = vshrl.u32 %v5260, 7
        %v5262 = vsub.s32 %v5259, %v5261
        %v5263 = vrot.slane %v5255, %v5262
        %v5265 = vunpack.c.l.s4 1966171168
        %v5266 = vunpack.c.0.s8 %v5265
        %v5267 = vlaneseq
        %v5268 = vshrl.u32 %v5267, 7
        %v5269 = vsub.s32 %v5266, %v5268
        %v5270 = vrot.slane %v5256, %v5269
        %v5271 = vcombine.low %v5263, %v5270
        %v5272 = vcombine.low %v5171, %v5172
        %v5273 = vcombine.low %v5173, %v5164
        %v5275 = vunpack.c.l.s4 1966171168
        %v5276 = vunpack.c.0.s8 %v5275
        %v5277 = vlaneseq
        %v5278 = vshrl.u32 %v5277, 7
        %v5279 = vsub.s32 %v5276, %v5278
        %v5280 = vrot.slane %v5272, %v5279
        %v5282 = vunpack.c.l.s4 1966171168
        %v5283 = vunpack.c.0.s8 %v5282
        %v5284 = vlaneseq
        %v5285 = vshrl.u32 %v5284, 7
        %v5286 = vsub.s32 %v5283, %v5285
        %v5287 = vrot.slane %v5273, %v5286
        %v5288 = vcombine.low %v5280, %v5287
        %v5290 = vunpack.c.l.s4 1966171168
        %v5291 = vunpack.c.0.s8 %v5290
        %v5292 = vlaneseq
        %v5293 = vshrl.u32 %v5292, 7
        %v5294 = vsub.s32 %v5291, %v5293
        %v5295 = vrot.slane %v5288, %v5294
        %v5299 = vpack.c.bf16 %v5271, %v5222
        %v5300 = vpack.c.bf16 %v5295, %v5295
        %s5301 = scalar_lea.vmem %s8, 48
        %v5302 = vld [vmem:[%s5301] sm:$0xff]
        %v5303 = vld [vmem:[%s5301 + $0x8] sm:$0xff]
        %v5304 = vld [vmem:[%s5301 + $0x10] sm:$0xff]
        %v5305 = vld [vmem:[%s5301 + $0x18] sm:$0xff]
        %v5306 = vld [vmem:[%s5301 + $0x20] sm:$0xff]
        %v5307 = vld [vmem:[%s5301 + $0x28] sm:$0xff]
        %s5308 = scalar_lea.vmem %s9, 2
        %v5309 = vld [vmem:[%s5308] sm:$0x3]
        %v5311 = vlaneseq
        %v5312 = vshrl.u32 %v5311, 7
        %v5313 = vsub.s32 0, %v5312
        %v5314 = vrot.slane %v5309, %v5313
        %v5315 = vlaneseq
        %v5316 = vshrl.u32 %v5315, 7
        %v5317 = vsub.s32 1, %v5316
        %v5318 = vrot.slane %v5309, %v5317
        %v5327 = vunpack.c.l.b16 %v5302
        %v5328 = vunpack.c.h.b16 %v5302
        %v5329 = vunpack.c.l.b16 %v5303
        %v5330 = vunpack.c.h.b16 %v5303
        %v5331 = vunpack.c.l.b16 %v5304
        %v5332 = vunpack.c.h.b16 %v5304
        %v5333 = vunpack.c.l.b16 %v5305
        %v5334 = vunpack.c.h.b16 %v5305
        %v5335 = vunpack.c.l.b16 %v5306
        %v5336 = vunpack.c.h.b16 %v5306
        %v5337 = vunpack.c.l.b16 %v5307
        %v5338 = vunpack.c.h.b16 %v5307
        %v5339 = vpack.c.b16 %v5329, %v5327
        %v5340 = vpack.c.b16 %v5330, %v5328
        %v5341 = vpack.c.b16 %v5333, %v5331
        %v5342 = vpack.c.b16 %v5334, %v5332
        %v5343 = vpack.c.b16 %v5337, %v5335
        %v5344 = vpack.c.b16 %v5338, %v5336
        %v5352 = vsel %vm1498, %v5299, 0
        %v5355 = vsel %vm1498, %v5300, 0
        %5357 = vmatprep.subr.bf16.mxu0 0
        %5358 = vmatpush1.bf16.msra.mxu0 0
        %5359 = vmatprep.subr.bf16.mxu0 0
        %5360 = vmatpush1.bf16.msra.mxu0 0
        %5361 = vmatprep.subr.bf16.mxu0 0
        %5362 = vmatpush1.bf16.msra.mxu0 0
        %5363 = vmatprep.subr.bf16.mxu0 0
        %5364 = vmatpush1.bf16.msra.mxu0 0
        %5365 = vmatprep.subr.bf16.mxu0 0
        %5366 = vmatpush1.bf16.msra.mxu0 0
        %5367 = vmatprep.subr.bf16.mxu0 %v5344
        %5368 = vmatpush1.bf16.msra.mxu0 %v5343
        %5369 = vmatprep.subr.bf16.mxu0 %v5342
        %5370 = vmatpush1.bf16.msra.mxu0 %v5341
        %5371 = vmatprep.subr.bf16.mxu0 %v5340
        %5372 = vmatpush1.bf16.msra.mxu0 %v5339
        %5373 = vmatprep.subr.bf16.mxu0 0
        %5374 = vmatpush2.bf16.msra.mxu0 0
        %5375 = vmatprep.subr.bf16.mxu0 0
        %5376 = vmatpush2.bf16.msra.mxu0 0
        %5377 = vmatprep.subr.bf16.mxu0 0
        %5378 = vmatpush2.bf16.msra.mxu0 0
        %5379 = vmatprep.subr.bf16.mxu0 0
        %5380 = vmatpush2.bf16.msra.mxu0 0
        %5381 = vmatprep.subr.bf16.mxu0 0
        %5382 = vmatpush2.bf16.msra.mxu0 0
        %5383 = vmatprep.subr.bf16.mxu0 0
        %5384 = vmatpush2.bf16.msra.mxu0 0
        %5385 = vmatprep.subr.bf16.mxu0 0
        %5386 = vmatpush2.bf16.msra.mxu0 0
        %5387 = vmatprep.subr.bf16.mxu0 0
        %5388 = vmatpush2.bf16.msra.mxu0 0
        %5389 = vmatprep.mubr.bf16.mxu0 0
        %5390 = vmatmul.mubr.bf16.gmra.mxu0 %v5352
        %v5391 = vpop.f32.mrf.mxu0
        %v5392 = vadd.f32 %v5314, %v5391
        %v5393 = vpop.f32.mrf.mxu0
        %v5394 = vadd.f32 %v5318, %v5393
        %v5395 = vpop.f32.mrf.mxu0
        %v5396 = vadd.f32 %v5314, %v5395
        %v5397 = vpop.f32.mrf.mxu0
        %v5398 = vadd.f32 %v5318, %v5397
        %5399 = vmatprep.mubr.bf16.mxu0 0
        %5400 = vmatmul.mubr.bf16.gmra.mxu0 %v5355
        %v5401 = vpop.f32.mrf.mxu0
        %v5402 = vadd.f32 %v5314, %v5401
        %v5403 = vpop.f32.mrf.mxu0
        %v5404 = vadd.f32 %v5318, %v5403
        %v5405 = vpop.f32.mrf.mxu0
        %v5406 = vpop.f32.mrf.mxu0
        %5407 = vdwg.mxu0
        %v5414 = vcombine.low %v5392, %v5394
        %v5415 = vcombine.high %v5392, %v5394
        %v5417 = vunpack.c.l.s4 1966171168
        %v5418 = vunpack.c.0.s8 %v5417
        %v5419 = vlaneseq
        %v5420 = vshrl.u32 %v5419, 7
        %v5421 = vsub.s32 %v5418, %v5420
        %v5422 = vrot.slane %v5414, %v5421
        %v5424 = vunpack.c.l.s4 1966171168
        %v5425 = vunpack.c.0.s8 %v5424
        %v5426 = vlaneseq
        %v5427 = vshrl.u32 %v5426, 7
        %v5428 = vsub.s32 %v5425, %v5427
        %v5429 = vrot.slane %v5415, %v5428
        %v5430 = vcombine.high %v5422, %v5422
        %v5431 = vcombine.high %v5429, %v5429
        %v5433 = vunpack.c.l.s4 1966171168
        %v5434 = vunpack.c.0.s8 %v5433
        %v5435 = vlaneseq
        %v5436 = vshrl.u32 %v5435, 7
        %v5437 = vsub.s32 %v5434, %v5436
        %v5438 = vrot.slane %v5422, %v5437
        %v5440 = vunpack.c.l.s4 1966171168
        %v5441 = vunpack.c.0.s8 %v5440
        %v5442 = vlaneseq
        %v5443 = vshrl.u32 %v5442, 7
        %v5444 = vsub.s32 %v5441, %v5443
        %v5445 = vrot.slane %v5429, %v5444
        %v5447 = vunpack.c.l.s4 1966171168
        %v5448 = vunpack.c.0.s8 %v5447
        %v5449 = vlaneseq
        %v5450 = vshrl.u32 %v5449, 7
        %v5451 = vsub.s32 %v5448, %v5450
        %v5452 = vrot.slane %v5430, %v5451
        %v5454 = vunpack.c.l.s4 1966171168
        %v5455 = vunpack.c.0.s8 %v5454
        %v5456 = vlaneseq
        %v5457 = vshrl.u32 %v5456, 7
        %v5458 = vsub.s32 %v5455, %v5457
        %v5459 = vrot.slane %v5431, %v5458
        %v5460 = vcombine.high %v5438, %v5438
        %v5461 = vcombine.high %v5445, %v5445
        %v5462 = vcombine.high %v5452, %v5452
        %v5463 = vcombine.high %v5459, %v5459
        %v5464 = vcombine.low %v5396, %v5398
        %v5465 = vcombine.high %v5396, %v5398
        %v5467 = vunpack.c.l.s4 1966171168
        %v5468 = vunpack.c.0.s8 %v5467
        %v5469 = vlaneseq
        %v5470 = vshrl.u32 %v5469, 7
        %v5471 = vsub.s32 %v5468, %v5470
        %v5472 = vrot.slane %v5464, %v5471
        %v5474 = vunpack.c.l.s4 1966171168
        %v5475 = vunpack.c.0.s8 %v5474
        %v5476 = vlaneseq
        %v5477 = vshrl.u32 %v5476, 7
        %v5478 = vsub.s32 %v5475, %v5477
        %v5479 = vrot.slane %v5465, %v5478
        %v5480 = vcombine.high %v5472, %v5472
        %v5481 = vcombine.high %v5479, %v5479
        %v5483 = vunpack.c.l.s4 1966171168
        %v5484 = vunpack.c.0.s8 %v5483
        %v5485 = vlaneseq
        %v5486 = vshrl.u32 %v5485, 7
        %v5487 = vsub.s32 %v5484, %v5486
        %v5488 = vrot.slane %v5472, %v5487
        %v5490 = vunpack.c.l.s4 1966171168
        %v5491 = vunpack.c.0.s8 %v5490
        %v5492 = vlaneseq
        %v5493 = vshrl.u32 %v5492, 7
        %v5494 = vsub.s32 %v5491, %v5493
        %v5495 = vrot.slane %v5479, %v5494
        %v5497 = vunpack.c.l.s4 1966171168
        %v5498 = vunpack.c.0.s8 %v5497
        %v5499 = vlaneseq
        %v5500 = vshrl.u32 %v5499, 7
        %v5501 = vsub.s32 %v5498, %v5500
        %v5502 = vrot.slane %v5480, %v5501
        %v5504 = vunpack.c.l.s4 1966171168
        %v5505 = vunpack.c.0.s8 %v5504
        %v5506 = vlaneseq
        %v5507 = vshrl.u32 %v5506, 7
        %v5508 = vsub.s32 %v5505, %v5507
        %v5509 = vrot.slane %v5481, %v5508
        %v5510 = vcombine.high %v5488, %v5488
        %v5511 = vcombine.high %v5495, %v5495
        %v5512 = vcombine.high %v5502, %v5502
        %v5513 = vcombine.high %v5509, %v5509
        %v5514 = vcombine.low %v5402, %v5404
        %v5516 = vunpack.c.l.s4 1966171168
        %v5517 = vunpack.c.0.s8 %v5516
        %v5518 = vlaneseq
        %v5519 = vshrl.u32 %v5518, 7
        %v5520 = vsub.s32 %v5517, %v5519
        %v5521 = vrot.slane %v5514, %v5520
        %v5522 = vcombine.high %v5521, %v5521
        %v5524 = vunpack.c.l.s4 1966171168
        %v5525 = vunpack.c.0.s8 %v5524
        %v5526 = vlaneseq
        %v5527 = vshrl.u32 %v5526, 7
        %v5528 = vsub.s32 %v5525, %v5527
        %v5529 = vrot.slane %v5521, %v5528
        %v5531 = vunpack.c.l.s4 1966171168
        %v5532 = vunpack.c.0.s8 %v5531
        %v5533 = vlaneseq
        %v5534 = vshrl.u32 %v5533, 7
        %v5535 = vsub.s32 %v5532, %v5534
        %v5536 = vrot.slane %v5522, %v5535
        %v5537 = vcombine.high %v5529, %v5529
        %v5538 = vcombine.high %v5536, %v5536
        %v5539 = vcombine.low %v5438, %v5452
        %v5540 = vcombine.low %v5460, %v5462
        %v5542 = vunpack.c.l.s4 1966171168
        %v5543 = vunpack.c.0.s8 %v5542
        %v5544 = vlaneseq
        %v5545 = vshrl.u32 %v5544, 7
        %v5546 = vsub.s32 %v5543, %v5545
        %v5547 = vrot.slane %v5539, %v5546
        %v5549 = vunpack.c.l.s4 1966171168
        %v5550 = vunpack.c.0.s8 %v5549
        %v5551 = vlaneseq
        %v5552 = vshrl.u32 %v5551, 7
        %v5553 = vsub.s32 %v5550, %v5552
        %v5554 = vrot.slane %v5540, %v5553
        %v5556 = vunpack.c.l.s4 1966171168
        %v5557 = vunpack.c.0.s8 %v5556
        %v5558 = vlaneseq
        %v5559 = vshrl.u32 %v5558, 7
        %v5560 = vsub.s32 %v5557, %v5559
        %v5561 = vrot.slane %v5445, %v5560
        %v5562 = vcombine.low %v5547, %v5554
        %v5564 = vunpack.c.l.s4 1966171168
        %v5565 = vunpack.c.0.s8 %v5564
        %v5566 = vlaneseq
        %v5567 = vshrl.u32 %v5566, 7
        %v5568 = vsub.s32 %v5565, %v5567
        %v5569 = vrot.slane %v5562, %v5568
        %v5571 = vunpack.c.l.s4 1966171168
        %v5572 = vunpack.c.0.s8 %v5571
        %v5573 = vlaneseq
        %v5574 = vshrl.u32 %v5573, 7
        %v5575 = vsub.s32 %v5572, %v5574
        %v5576 = vrot.slane %v5561, %v5575
        %v5577 = vcombine.low %v5569, %v5576
        %v5578 = vcombine.low %v5459, %v5461
        %v5579 = vcombine.low %v5463, %v5488
        %v5581 = vunpack.c.l.s4 1966171168
        %v5582 = vunpack.c.0.s8 %v5581
        %v5583 = vlaneseq
        %v5584 = vshrl.u32 %v5583, 7
        %v5585 = vsub.s32 %v5582, %v5584
        %v5586 = vrot.slane %v5578, %v5585
        %v5588 = vunpack.c.l.s4 1966171168
        %v5589 = vunpack.c.0.s8 %v5588
        %v5590 = vlaneseq
        %v5591 = vshrl.u32 %v5590, 7
        %v5592 = vsub.s32 %v5589, %v5591
        %v5593 = vrot.slane %v5579, %v5592
        %v5595 = vunpack.c.l.s4 1966171168
        %v5596 = vunpack.c.0.s8 %v5595
        %v5597 = vlaneseq
        %v5598 = vshrl.u32 %v5597, 7
        %v5599 = vsub.s32 %v5596, %v5598
        %v5600 = vrot.slane %v5502, %v5599
        %v5601 = vcombine.low %v5586, %v5593
        %v5603 = vunpack.c.l.s4 1966171168
        %v5604 = vunpack.c.0.s8 %v5603
        %v5605 = vlaneseq
        %v5606 = vshrl.u32 %v5605, 7
        %v5607 = vsub.s32 %v5604, %v5606
        %v5608 = vrot.slane %v5601, %v5607
        %v5610 = vunpack.c.l.s4 1966171168
        %v5611 = vunpack.c.0.s8 %v5610
        %v5612 = vlaneseq
        %v5613 = vshrl.u32 %v5612, 7
        %v5614 = vsub.s32 %v5611, %v5613
        %v5615 = vrot.slane %v5600, %v5614
        %v5616 = vcombine.low %v5608, %v5615
        %v5617 = vcombine.low %v5510, %v5512
        %v5618 = vcombine.low %v5495, %v5509
        %v5620 = vunpack.c.l.s4 1966171168
        %v5621 = vunpack.c.0.s8 %v5620
        %v5622 = vlaneseq
        %v5623 = vshrl.u32 %v5622, 7
        %v5624 = vsub.s32 %v5621, %v5623
        %v5625 = vrot.slane %v5617, %v5624
        %v5627 = vunpack.c.l.s4 1966171168
        %v5628 = vunpack.c.0.s8 %v5627
        %v5629 = vlaneseq
        %v5630 = vshrl.u32 %v5629, 7
        %v5631 = vsub.s32 %v5628, %v5630
        %v5632 = vrot.slane %v5618, %v5631
        %v5634 = vunpack.c.l.s4 1966171168
        %v5635 = vunpack.c.0.s8 %v5634
        %v5636 = vlaneseq
        %v5637 = vshrl.u32 %v5636, 7
        %v5638 = vsub.s32 %v5635, %v5637
        %v5639 = vrot.slane %v5511, %v5638
        %v5640 = vcombine.low %v5625, %v5632
        %v5642 = vunpack.c.l.s4 1966171168
        %v5643 = vunpack.c.0.s8 %v5642
        %v5644 = vlaneseq
        %v5645 = vshrl.u32 %v5644, 7
        %v5646 = vsub.s32 %v5643, %v5645
        %v5647 = vrot.slane %v5640, %v5646
        %v5649 = vunpack.c.l.s4 1966171168
        %v5650 = vunpack.c.0.s8 %v5649
        %v5651 = vlaneseq
        %v5652 = vshrl.u32 %v5651, 7
        %v5653 = vsub.s32 %v5650, %v5652
        %v5654 = vrot.slane %v5639, %v5653
        %v5655 = vcombine.low %v5647, %v5654
        %v5656 = vcombine.low %v5513, %v5529
        %v5657 = vcombine.low %v5536, %v5537
        %v5659 = vunpack.c.l.s4 1966171168
        %v5660 = vunpack.c.0.s8 %v5659
        %v5661 = vlaneseq
        %v5662 = vshrl.u32 %v5661, 7
        %v5663 = vsub.s32 %v5660, %v5662
        %v5664 = vrot.slane %v5656, %v5663
        %v5666 = vunpack.c.l.s4 1966171168
        %v5667 = vunpack.c.0.s8 %v5666
        %v5668 = vlaneseq
        %v5669 = vshrl.u32 %v5668, 7
        %v5670 = vsub.s32 %v5667, %v5669
        %v5671 = vrot.slane %v5657, %v5670
        %v5673 = vunpack.c.l.s4 1966171168
        %v5674 = vunpack.c.0.s8 %v5673
        %v5675 = vlaneseq
        %v5676 = vshrl.u32 %v5675, 7
        %v5677 = vsub.s32 %v5674, %v5676
        %v5678 = vrot.slane %v5538, %v5677
        %v5679 = vcombine.low %v5664, %v5671
        %v5681 = vunpack.c.l.s4 1966171168
        %v5682 = vunpack.c.0.s8 %v5681
        %v5683 = vlaneseq
        %v5684 = vshrl.u32 %v5683, 7
        %v5685 = vsub.s32 %v5682, %v5684
        %v5686 = vrot.slane %v5679, %v5685
        %v5688 = vunpack.c.l.s4 1966171168
        %v5689 = vunpack.c.0.s8 %v5688
        %v5690 = vlaneseq
        %v5691 = vshrl.u32 %v5690, 7
        %v5692 = vsub.s32 %v5689, %v5691
        %v5693 = vrot.slane %v5678, %v5692
        %v5694 = vcombine.low %v5686, %v5693
        %v5699 = vpack.c.bf16 %v5577, %v5577
        %v5700 = vpack.c.bf16 %v5616, %v5616
        %v5701 = vpack.c.bf16 %v5655, %v5655
        %v5702 = vpack.c.bf16 %v5694, %v5694
        %5704 = vrot.lane.b32.xlu0 %v5699, 80
        %v5705 = vpop.permute.xlu0 %5704
        %v5707 = vsel %vm1878, %v5699, 0
        %v5710 = vsel %vm1878, %v5705, 0
        %5712 = vmatprep.subr.bf16.mxu0 0
        %5713 = vmatpush1.bf16.xpose.msra.mxu0 0
        %5714 = vmatprep.subr.bf16.mxu0 0
        %5715 = vmatpush1.bf16.xpose.msra.mxu0 0
        %5716 = vmatprep.subr.bf16.mxu0 0
        %5717 = vmatpush1.bf16.xpose.msra.mxu0 0
        %5718 = vmatprep.subr.bf16.mxu0 0
        %5719 = vmatpush1.bf16.xpose.msra.mxu0 0
        %5720 = vmatprep.subr.bf16.mxu0 0
        %5721 = vmatpush1.bf16.xpose.msra.mxu0 0
        %5722 = vmatprep.subr.bf16.mxu0 0
        %5723 = vmatpush1.bf16.xpose.msra.mxu0 0
        %5724 = vmatprep.subr.bf16.mxu0 0
        %5725 = vmatpush1.bf16.xpose.msra.mxu0 0
        %5726 = vmatprep.subr.bf16.mxu0 0
        %5727 = vmatpush1.bf16.xpose.msra.mxu0 %v5710
        %5728 = vmatprep.subr.bf16.mxu0 0
        %5729 = vmatpush2.bf16.xpose.msra.mxu0 0
        %5730 = vmatprep.subr.bf16.mxu0 0
        %5731 = vmatpush2.bf16.xpose.msra.mxu0 0
        %5732 = vmatprep.subr.bf16.mxu0 0
        %5733 = vmatpush2.bf16.xpose.msra.mxu0 0
        %5734 = vmatprep.subr.bf16.mxu0 0
        %5735 = vmatpush2.bf16.xpose.msra.mxu0 0
        %5736 = vmatprep.subr.bf16.mxu0 0
        %5737 = vmatpush2.bf16.xpose.msra.mxu0 0
        %5738 = vmatprep.subr.bf16.mxu0 0
        %5739 = vmatpush2.bf16.xpose.msra.mxu0 0
        %5740 = vmatprep.subr.bf16.mxu0 0
        %5741 = vmatpush2.bf16.xpose.msra.mxu0 0
        %5742 = vmatprep.subr.bf16.mxu0 0
        %5743 = vmatpush2.bf16.xpose.msra.mxu0 0
        %5744 = vmatprep.mubr.bf16.mxu0 0
        %5745 = vmatmul.mubr.bf16.gmra.mxu0 %v5707
        %v5746 = vpop.f32.mrf.mxu0
        %v5747 = vadd.f32 %v1858, %v5746
        %v5748 = vpop.f32.mrf.mxu0
        %v5749 = vpop.f32.mrf.mxu0
        %v5750 = vpop.f32.mrf.mxu0
        %5751 = vdwg.mxu0
        %5753 = vrot.lane.b32.xlu0 %v5700, 80
        %v5754 = vpop.permute.xlu0 %5753
        %v5756 = vsel %vm1878, %v5700, 0
        %v5759 = vsel %vm1878, %v5754, 0
        %5761 = vmatprep.subr.bf16.mxu0 0
        %5762 = vmatpush1.bf16.xpose.msra.mxu0 0
        %5763 = vmatprep.subr.bf16.mxu0 0
        %5764 = vmatpush1.bf16.xpose.msra.mxu0 0
        %5765 = vmatprep.subr.bf16.mxu0 0
        %5766 = vmatpush1.bf16.xpose.msra.mxu0 0
        %5767 = vmatprep.subr.bf16.mxu0 0
        %5768 = vmatpush1.bf16.xpose.msra.mxu0 0
        %5769 = vmatprep.subr.bf16.mxu0 0
        %5770 = vmatpush1.bf16.xpose.msra.mxu0 0
        %5771 = vmatprep.subr.bf16.mxu0 0
        %5772 = vmatpush1.bf16.xpose.msra.mxu0 0
        %5773 = vmatprep.subr.bf16.mxu0 0
        %5774 = vmatpush1.bf16.xpose.msra.mxu0 0
        %5775 = vmatprep.subr.bf16.mxu0 0
        %5776 = vmatpush1.bf16.xpose.msra.mxu0 %v5759
        %5777 = vmatprep.subr.bf16.mxu0 0
        %5778 = vmatpush2.bf16.xpose.msra.mxu0 0
        %5779 = vmatprep.subr.bf16.mxu0 0
        %5780 = vmatpush2.bf16.xpose.msra.mxu0 0
        %5781 = vmatprep.subr.bf16.mxu0 0
        %5782 = vmatpush2.bf16.xpose.msra.mxu0 0
        %5783 = vmatprep.subr.bf16.mxu0 0
        %5784 = vmatpush2.bf16.xpose.msra.mxu0 0
        %5785 = vmatprep.subr.bf16.mxu0 0
        %5786 = vmatpush2.bf16.xpose.msra.mxu0 0
        %5787 = vmatprep.subr.bf16.mxu0 0
        %5788 = vmatpush2.bf16.xpose.msra.mxu0 0
        %5789 = vmatprep.subr.bf16.mxu0 0
        %5790 = vmatpush2.bf16.xpose.msra.mxu0 0
        %5791 = vmatprep.subr.bf16.mxu0 0
        %5792 = vmatpush2.bf16.xpose.msra.mxu0 0
        %5793 = vmatprep.mubr.bf16.mxu0 0
        %5794 = vmatmul.mubr.bf16.gmra.mxu0 %v5756
        %v5795 = vpop.f32.mrf.mxu0
        %v5796 = vadd.f32 %v1862, %v5795
        %v5797 = vpop.f32.mrf.mxu0
        %v5798 = vpop.f32.mrf.mxu0
        %v5799 = vpop.f32.mrf.mxu0
        %5800 = vdwg.mxu0
        %5802 = vrot.lane.b32.xlu0 %v5701, 80
        %v5803 = vpop.permute.xlu0 %5802
        %v5805 = vsel %vm1878, %v5701, 0
        %v5808 = vsel %vm1878, %v5803, 0
        %5810 = vmatprep.subr.bf16.mxu0 0
        %5811 = vmatpush1.bf16.xpose.msra.mxu0 0
        %5812 = vmatprep.subr.bf16.mxu0 0
        %5813 = vmatpush1.bf16.xpose.msra.mxu0 0
        %5814 = vmatprep.subr.bf16.mxu0 0
        %5815 = vmatpush1.bf16.xpose.msra.mxu0 0
        %5816 = vmatprep.subr.bf16.mxu0 0
        %5817 = vmatpush1.bf16.xpose.msra.mxu0 0
        %5818 = vmatprep.subr.bf16.mxu0 0
        %5819 = vmatpush1.bf16.xpose.msra.mxu0 0
        %5820 = vmatprep.subr.bf16.mxu0 0
        %5821 = vmatpush1.bf16.xpose.msra.mxu0 0
        %5822 = vmatprep.subr.bf16.mxu0 0
        %5823 = vmatpush1.bf16.xpose.msra.mxu0 0
        %5824 = vmatprep.subr.bf16.mxu0 0
        %5825 = vmatpush1.bf16.xpose.msra.mxu0 %v5808
        %5826 = vmatprep.subr.bf16.mxu0 0
        %5827 = vmatpush2.bf16.xpose.msra.mxu0 0
        %5828 = vmatprep.subr.bf16.mxu0 0
        %5829 = vmatpush2.bf16.xpose.msra.mxu0 0
        %5830 = vmatprep.subr.bf16.mxu0 0
        %5831 = vmatpush2.bf16.xpose.msra.mxu0 0
        %5832 = vmatprep.subr.bf16.mxu0 0
        %5833 = vmatpush2.bf16.xpose.msra.mxu0 0
        %5834 = vmatprep.subr.bf16.mxu0 0
        %5835 = vmatpush2.bf16.xpose.msra.mxu0 0
        %5836 = vmatprep.subr.bf16.mxu0 0
        %5837 = vmatpush2.bf16.xpose.msra.mxu0 0
        %5838 = vmatprep.subr.bf16.mxu0 0
        %5839 = vmatpush2.bf16.xpose.msra.mxu0 0
        %5840 = vmatprep.subr.bf16.mxu0 0
        %5841 = vmatpush2.bf16.xpose.msra.mxu0 0
        %5842 = vmatprep.mubr.bf16.mxu0 0
        %5843 = vmatmul.mubr.bf16.gmra.mxu0 %v5805
        %v5844 = vpop.f32.mrf.mxu0
        %v5845 = vadd.f32 %v1866, %v5844
        %v5846 = vpop.f32.mrf.mxu0
        %v5847 = vpop.f32.mrf.mxu0
        %v5848 = vpop.f32.mrf.mxu0
        %5849 = vdwg.mxu0
        %5851 = vrot.lane.b32.xlu0 %v5702, 80
        %v5852 = vpop.permute.xlu0 %5851
        %v5854 = vsel %vm1878, %v5702, 0
        %v5857 = vsel %vm1878, %v5852, 0
        %5859 = vmatprep.subr.bf16.mxu0 0
        %5860 = vmatpush1.bf16.xpose.msra.mxu0 0
        %5861 = vmatprep.subr.bf16.mxu0 0
        %5862 = vmatpush1.bf16.xpose.msra.mxu0 0
        %5863 = vmatprep.subr.bf16.mxu0 0
        %5864 = vmatpush1.bf16.xpose.msra.mxu0 0
        %5865 = vmatprep.subr.bf16.mxu0 0
        %5866 = vmatpush1.bf16.xpose.msra.mxu0 0
        %5867 = vmatprep.subr.bf16.mxu0 0
        %5868 = vmatpush1.bf16.xpose.msra.mxu0 0
        %5869 = vmatprep.subr.bf16.mxu0 0
        %5870 = vmatpush1.bf16.xpose.msra.mxu0 0
        %5871 = vmatprep.subr.bf16.mxu0 0
        %5872 = vmatpush1.bf16.xpose.msra.mxu0 0
        %5873 = vmatprep.subr.bf16.mxu0 0
        %5874 = vmatpush1.bf16.xpose.msra.mxu0 %v5857
        %5875 = vmatprep.subr.bf16.mxu0 0
        %5876 = vmatpush2.bf16.xpose.msra.mxu0 0
        %5877 = vmatprep.subr.bf16.mxu0 0
        %5878 = vmatpush2.bf16.xpose.msra.mxu0 0
        %5879 = vmatprep.subr.bf16.mxu0 0
        %5880 = vmatpush2.bf16.xpose.msra.mxu0 0
        %5881 = vmatprep.subr.bf16.mxu0 0
        %5882 = vmatpush2.bf16.xpose.msra.mxu0 0
        %5883 = vmatprep.subr.bf16.mxu0 0
        %5884 = vmatpush2.bf16.xpose.msra.mxu0 0
        %5885 = vmatprep.subr.bf16.mxu0 0
        %5886 = vmatpush2.bf16.xpose.msra.mxu0 0
        %5887 = vmatprep.subr.bf16.mxu0 0
        %5888 = vmatpush2.bf16.xpose.msra.mxu0 0
        %5889 = vmatprep.subr.bf16.mxu0 0
        %5890 = vmatpush2.bf16.xpose.msra.mxu0 0
        %5891 = vmatprep.mubr.bf16.mxu0 0
        %5892 = vmatmul.mubr.bf16.gmra.mxu0 %v5854
        %v5893 = vpop.f32.mrf.mxu0
        %v5894 = vadd.f32 %v1870, %v5893
        %v5895 = vpop.f32.mrf.mxu0
        %v5896 = vpop.f32.mrf.mxu0
        %v5897 = vpop.f32.mrf.mxu0
        %5898 = vdwg.mxu0
        %v5899 = vsel %vm2072, %v5747, -inf
        %5900 = vmax.xlane.f32.xlu0 %v5899
        %v5901 = vpop.xlane.xlu0 %5900
        %v5902 = vsel %vm2072, %v5796, -inf
        %5903 = vmax.xlane.f32.xlu0 %v5902
        %v5904 = vpop.xlane.xlu0 %5903
        %v5905 = vsel %vm2072, %v5845, -inf
        %5906 = vmax.xlane.f32.xlu0 %v5905
        %v5907 = vpop.xlane.xlu0 %5906
        %v5908 = vsel %vm2072, %v5894, -inf
        %5909 = vmax.xlane.f32.xlu0 %v5908
        %v5910 = vpop.xlane.xlu0 %5909
        %v5911 = vsub.f32 %v5747, %v5901
        %v5912 = vsub.f32 %v5796, %v5904
        %v5913 = vsub.f32 %v5845, %v5907
        %v5914 = vsub.f32 %v5894, %v5910
        %v5915 = vmul.f32 %v5911, 1.442695
        %v5916 = vpow.pop %v5915
        %v5917 = vmul.f32 %v5912, 1.442695
        %v5918 = vpow.pop %v5917
        %v5919 = vmul.f32 %v5913, 1.442695
        %v5920 = vpow.pop %v5919
        %v5921 = vmul.f32 %v5914, 1.442695
        %v5922 = vpow.pop %v5921
        %v5923 = vsel %vm2072, %v5916, 0.0
        %5924 = vadd.xlane.f32.xlu0 %v5923
        %v5925 = vpop.xlane.xlu0 %5924
        %v5926 = vsel %vm2072, %v5918, 0.0
        %5927 = vadd.xlane.f32.xlu0 %v5926
        %v5928 = vpop.xlane.xlu0 %5927
        %v5929 = vsel %vm2072, %v5920, 0.0
        %5930 = vadd.xlane.f32.xlu0 %v5929
        %v5931 = vpop.xlane.xlu0 %5930
        %v5932 = vsel %vm2072, %v5922, 0.0
        %5933 = vadd.xlane.f32.xlu0 %v5932
        %v5934 = vpop.xlane.xlu0 %5933
        %v5935 = vrcp.pop %v5925
        %v5936 = vrcp.pop %v5928
        %v5937 = vrcp.pop %v5931
        %v5938 = vrcp.pop %v5934
        %v5939 = vmul.f32 %v5916, %v5935
        %v5940 = vmul.f32 %v5918, %v5936
        %v5941 = vmul.f32 %v5920, %v5937
        %v5942 = vmul.f32 %v5922, %v5938
        %v5943 = vpack.c.bf16 %v5939, %v5939
        %v5944 = vpack.c.bf16 %v5940, %v5940
        %v5945 = vpack.c.bf16 %v5941, %v5941
        %v5946 = vpack.c.bf16 %v5942, %v5942
        %5947 = vrot.lane.b32.xlu0 %v5699, 32
        %v5948 = vpop.permute.xlu0 %5947
        %v5950 = vsel %vm2123, %v5943, 0
        %v5953 = vand.u32 %v5948, %v2130
        %5955 = vmatprep.subr.bf16.mxu0 0
        %5956 = vmatpush1.bf16.msra.mxu0 0
        %5957 = vmatprep.subr.bf16.mxu0 0
        %5958 = vmatpush1.bf16.msra.mxu0 0
        %5959 = vmatprep.subr.bf16.mxu0 0
        %5960 = vmatpush1.bf16.msra.mxu0 0
        %5961 = vmatprep.subr.bf16.mxu0 0
        %5962 = vmatpush1.bf16.msra.mxu0 0
        %5963 = vmatprep.subr.bf16.mxu0 0
        %5964 = vmatpush1.bf16.msra.mxu0 0
        %5965 = vmatprep.subr.bf16.mxu0 0
        %5966 = vmatpush1.bf16.msra.mxu0 0
        %5967 = vmatprep.subr.bf16.mxu0 0
        %5968 = vmatpush1.bf16.msra.mxu0 0
        %5969 = vmatprep.subr.bf16.mxu0 0
        %5970 = vmatpush1.bf16.msra.mxu0 %v5953
        %5971 = vmatprep.subr.bf16.mxu0 0
        %5972 = vmatpush2.bf16.msra.mxu0 0
        %5973 = vmatprep.subr.bf16.mxu0 0
        %5974 = vmatpush2.bf16.msra.mxu0 0
        %5975 = vmatprep.subr.bf16.mxu0 0
        %5976 = vmatpush2.bf16.msra.mxu0 0
        %5977 = vmatprep.subr.bf16.mxu0 0
        %5978 = vmatpush2.bf16.msra.mxu0 0
        %5979 = vmatprep.subr.bf16.mxu0 0
        %5980 = vmatpush2.bf16.msra.mxu0 0
        %5981 = vmatprep.subr.bf16.mxu0 0
        %5982 = vmatpush2.bf16.msra.mxu0 0
        %5983 = vmatprep.subr.bf16.mxu0 0
        %5984 = vmatpush2.bf16.msra.mxu0 0
        %5985 = vmatprep.subr.bf16.mxu0 0
        %5986 = vmatpush2.bf16.msra.mxu0 0
        %5987 = vmatprep.mubr.bf16.mxu0 0
        %5988 = vmatmul.mubr.bf16.gmra.mxu0 %v5950
        %v5989 = vpop.f32.mrf.mxu0
        %v5990 = vadd.f32 0.0, %v5989
        %v5991 = vpop.f32.mrf.mxu0
        %v5992 = vpop.f32.mrf.mxu0
        %v5993 = vpop.f32.mrf.mxu0
        %5994 = vdwg.mxu0
        %5995 = vrot.lane.b32.xlu0 %v5700, 32
        %v5996 = vpop.permute.xlu0 %5995
        %v5998 = vsel %vm2123, %v5944, 0
        %v6001 = vand.u32 %v5996, %v2130
        %6003 = vmatprep.subr.bf16.mxu0 0
        %6004 = vmatpush1.bf16.msra.mxu0 0
        %6005 = vmatprep.subr.bf16.mxu0 0
        %6006 = vmatpush1.bf16.msra.mxu0 0
        %6007 = vmatprep.subr.bf16.mxu0 0
        %6008 = vmatpush1.bf16.msra.mxu0 0
        %6009 = vmatprep.subr.bf16.mxu0 0
        %6010 = vmatpush1.bf16.msra.mxu0 0
        %6011 = vmatprep.subr.bf16.mxu0 0
        %6012 = vmatpush1.bf16.msra.mxu0 0
        %6013 = vmatprep.subr.bf16.mxu0 0
        %6014 = vmatpush1.bf16.msra.mxu0 0
        %6015 = vmatprep.subr.bf16.mxu0 0
        %6016 = vmatpush1.bf16.msra.mxu0 0
        %6017 = vmatprep.subr.bf16.mxu0 0
        %6018 = vmatpush1.bf16.msra.mxu0 %v6001
        %6019 = vmatprep.subr.bf16.mxu0 0
        %6020 = vmatpush2.bf16.msra.mxu0 0
        %6021 = vmatprep.subr.bf16.mxu0 0
        %6022 = vmatpush2.bf16.msra.mxu0 0
        %6023 = vmatprep.subr.bf16.mxu0 0
        %6024 = vmatpush2.bf16.msra.mxu0 0
        %6025 = vmatprep.subr.bf16.mxu0 0
        %6026 = vmatpush2.bf16.msra.mxu0 0
        %6027 = vmatprep.subr.bf16.mxu0 0
        %6028 = vmatpush2.bf16.msra.mxu0 0
        %6029 = vmatprep.subr.bf16.mxu0 0
        %6030 = vmatpush2.bf16.msra.mxu0 0
        %6031 = vmatprep.subr.bf16.mxu0 0
        %6032 = vmatpush2.bf16.msra.mxu0 0
        %6033 = vmatprep.subr.bf16.mxu0 0
        %6034 = vmatpush2.bf16.msra.mxu0 0
        %6035 = vmatprep.mubr.bf16.mxu0 0
        %6036 = vmatmul.mubr.bf16.gmra.mxu0 %v5998
        %v6037 = vpop.f32.mrf.mxu0
        %v6038 = vadd.f32 0.0, %v6037
        %v6039 = vpop.f32.mrf.mxu0
        %v6040 = vpop.f32.mrf.mxu0
        %v6041 = vpop.f32.mrf.mxu0
        %6042 = vdwg.mxu0
        %6043 = vrot.lane.b32.xlu0 %v5701, 32
        %v6044 = vpop.permute.xlu0 %6043
        %v6046 = vsel %vm2123, %v5945, 0
        %v6049 = vand.u32 %v6044, %v2130
        %6051 = vmatprep.subr.bf16.mxu0 0
        %6052 = vmatpush1.bf16.msra.mxu0 0
        %6053 = vmatprep.subr.bf16.mxu0 0
        %6054 = vmatpush1.bf16.msra.mxu0 0
        %6055 = vmatprep.subr.bf16.mxu0 0
        %6056 = vmatpush1.bf16.msra.mxu0 0
        %6057 = vmatprep.subr.bf16.mxu0 0
        %6058 = vmatpush1.bf16.msra.mxu0 0
        %6059 = vmatprep.subr.bf16.mxu0 0
        %6060 = vmatpush1.bf16.msra.mxu0 0
        %6061 = vmatprep.subr.bf16.mxu0 0
        %6062 = vmatpush1.bf16.msra.mxu0 0
        %6063 = vmatprep.subr.bf16.mxu0 0
        %6064 = vmatpush1.bf16.msra.mxu0 0
        %6065 = vmatprep.subr.bf16.mxu0 0
        %6066 = vmatpush1.bf16.msra.mxu0 %v6049
        %6067 = vmatprep.subr.bf16.mxu0 0
        %6068 = vmatpush2.bf16.msra.mxu0 0
        %6069 = vmatprep.subr.bf16.mxu0 0
        %6070 = vmatpush2.bf16.msra.mxu0 0
        %6071 = vmatprep.subr.bf16.mxu0 0
        %6072 = vmatpush2.bf16.msra.mxu0 0
        %6073 = vmatprep.subr.bf16.mxu0 0
        %6074 = vmatpush2.bf16.msra.mxu0 0
        %6075 = vmatprep.subr.bf16.mxu0 0
        %6076 = vmatpush2.bf16.msra.mxu0 0
        %6077 = vmatprep.subr.bf16.mxu0 0
        %6078 = vmatpush2.bf16.msra.mxu0 0
        %6079 = vmatprep.subr.bf16.mxu0 0
        %6080 = vmatpush2.bf16.msra.mxu0 0
        %6081 = vmatprep.subr.bf16.mxu0 0
        %6082 = vmatpush2.bf16.msra.mxu0 0
        %6083 = vmatprep.mubr.bf16.mxu0 0
        %6084 = vmatmul.mubr.bf16.gmra.mxu0 %v6046
        %v6085 = vpop.f32.mrf.mxu0
        %v6086 = vadd.f32 0.0, %v6085
        %v6087 = vpop.f32.mrf.mxu0
        %v6088 = vpop.f32.mrf.mxu0
        %v6089 = vpop.f32.mrf.mxu0
        %6090 = vdwg.mxu0
        %6091 = vrot.lane.b32.xlu0 %v5702, 32
        %v6092 = vpop.permute.xlu0 %6091
        %v6094 = vsel %vm2123, %v5946, 0
        %v6097 = vand.u32 %v6092, %v2130
        %6099 = vmatprep.subr.bf16.mxu0 0
        %6100 = vmatpush1.bf16.msra.mxu0 0
        %6101 = vmatprep.subr.bf16.mxu0 0
        %6102 = vmatpush1.bf16.msra.mxu0 0
        %6103 = vmatprep.subr.bf16.mxu0 0
        %6104 = vmatpush1.bf16.msra.mxu0 0
        %6105 = vmatprep.subr.bf16.mxu0 0
        %6106 = vmatpush1.bf16.msra.mxu0 0
        %6107 = vmatprep.subr.bf16.mxu0 0
        %6108 = vmatpush1.bf16.msra.mxu0 0
        %6109 = vmatprep.subr.bf16.mxu0 0
        %6110 = vmatpush1.bf16.msra.mxu0 0
        %6111 = vmatprep.subr.bf16.mxu0 0
        %6112 = vmatpush1.bf16.msra.mxu0 0
        %6113 = vmatprep.subr.bf16.mxu0 0
        %6114 = vmatpush1.bf16.msra.mxu0 %v6097
        %6115 = vmatprep.subr.bf16.mxu0 0
        %6116 = vmatpush2.bf16.msra.mxu0 0
        %6117 = vmatprep.subr.bf16.mxu0 0
        %6118 = vmatpush2.bf16.msra.mxu0 0
        %6119 = vmatprep.subr.bf16.mxu0 0
        %6120 = vmatpush2.bf16.msra.mxu0 0
        %6121 = vmatprep.subr.bf16.mxu0 0
        %6122 = vmatpush2.bf16.msra.mxu0 0
        %6123 = vmatprep.subr.bf16.mxu0 0
        %6124 = vmatpush2.bf16.msra.mxu0 0
        %6125 = vmatprep.subr.bf16.mxu0 0
        %6126 = vmatpush2.bf16.msra.mxu0 0
        %6127 = vmatprep.subr.bf16.mxu0 0
        %6128 = vmatpush2.bf16.msra.mxu0 0
        %6129 = vmatprep.subr.bf16.mxu0 0
        %6130 = vmatpush2.bf16.msra.mxu0 0
        %6131 = vmatprep.mubr.bf16.mxu0 0
        %6132 = vmatmul.mubr.bf16.gmra.mxu0 %v6094
        %v6133 = vpop.f32.mrf.mxu0
        %v6134 = vadd.f32 0.0, %v6133
        %v6135 = vpop.f32.mrf.mxu0
        %v6136 = vpop.f32.mrf.mxu0
        %v6137 = vpop.f32.mrf.mxu0
        %6138 = vdwg.mxu0
        %6139 = vrot.lane.b32.xlu0 %v5699, 112
        %v6140 = vpop.permute.xlu0 %6139
        %6141 = vrot.lane.b32.xlu0 %v5699, 64
        %v6142 = vpop.permute.xlu0 %6141
        %v6144 = vsel %vm1878, %v6140, 0
        %v6147 = vsel %vm1878, %v6142, 0
        %6149 = vmatprep.subr.bf16.mxu0 0
        %6150 = vmatpush1.bf16.xpose.msra.mxu0 0
        %6151 = vmatprep.subr.bf16.mxu0 0
        %6152 = vmatpush1.bf16.xpose.msra.mxu0 0
        %6153 = vmatprep.subr.bf16.mxu0 0
        %6154 = vmatpush1.bf16.xpose.msra.mxu0 0
        %6155 = vmatprep.subr.bf16.mxu0 0
        %6156 = vmatpush1.bf16.xpose.msra.mxu0 0
        %6157 = vmatprep.subr.bf16.mxu0 0
        %6158 = vmatpush1.bf16.xpose.msra.mxu0 0
        %6159 = vmatprep.subr.bf16.mxu0 0
        %6160 = vmatpush1.bf16.xpose.msra.mxu0 0
        %6161 = vmatprep.subr.bf16.mxu0 0
        %6162 = vmatpush1.bf16.xpose.msra.mxu0 0
        %6163 = vmatprep.subr.bf16.mxu0 0
        %6164 = vmatpush1.bf16.xpose.msra.mxu0 %v6147
        %6165 = vmatprep.subr.bf16.mxu0 0
        %6166 = vmatpush2.bf16.xpose.msra.mxu0 0
        %6167 = vmatprep.subr.bf16.mxu0 0
        %6168 = vmatpush2.bf16.xpose.msra.mxu0 0
        %6169 = vmatprep.subr.bf16.mxu0 0
        %6170 = vmatpush2.bf16.xpose.msra.mxu0 0
        %6171 = vmatprep.subr.bf16.mxu0 0
        %6172 = vmatpush2.bf16.xpose.msra.mxu0 0
        %6173 = vmatprep.subr.bf16.mxu0 0
        %6174 = vmatpush2.bf16.xpose.msra.mxu0 0
        %6175 = vmatprep.subr.bf16.mxu0 0
        %6176 = vmatpush2.bf16.xpose.msra.mxu0 0
        %6177 = vmatprep.subr.bf16.mxu0 0
        %6178 = vmatpush2.bf16.xpose.msra.mxu0 0
        %6179 = vmatprep.subr.bf16.mxu0 0
        %6180 = vmatpush2.bf16.xpose.msra.mxu0 0
        %6181 = vmatprep.mubr.bf16.mxu0 0
        %6182 = vmatmul.mubr.bf16.gmra.mxu0 %v6144
        %v6183 = vpop.f32.mrf.mxu0
        %v6184 = vadd.f32 %v1858, %v6183
        %v6185 = vpop.f32.mrf.mxu0
        %v6186 = vpop.f32.mrf.mxu0
        %v6187 = vpop.f32.mrf.mxu0
        %6188 = vdwg.mxu0
        %6189 = vrot.lane.b32.xlu0 %v5700, 112
        %v6190 = vpop.permute.xlu0 %6189
        %6191 = vrot.lane.b32.xlu0 %v5700, 64
        %v6192 = vpop.permute.xlu0 %6191
        %v6194 = vsel %vm1878, %v6190, 0
        %v6197 = vsel %vm1878, %v6192, 0
        %6199 = vmatprep.subr.bf16.mxu0 0
        %6200 = vmatpush1.bf16.xpose.msra.mxu0 0
        %6201 = vmatprep.subr.bf16.mxu0 0
        %6202 = vmatpush1.bf16.xpose.msra.mxu0 0
        %6203 = vmatprep.subr.bf16.mxu0 0
        %6204 = vmatpush1.bf16.xpose.msra.mxu0 0
        %6205 = vmatprep.subr.bf16.mxu0 0
        %6206 = vmatpush1.bf16.xpose.msra.mxu0 0
        %6207 = vmatprep.subr.bf16.mxu0 0
        %6208 = vmatpush1.bf16.xpose.msra.mxu0 0
        %6209 = vmatprep.subr.bf16.mxu0 0
        %6210 = vmatpush1.bf16.xpose.msra.mxu0 0
        %6211 = vmatprep.subr.bf16.mxu0 0
        %6212 = vmatpush1.bf16.xpose.msra.mxu0 0
        %6213 = vmatprep.subr.bf16.mxu0 0
        %6214 = vmatpush1.bf16.xpose.msra.mxu0 %v6197
        %6215 = vmatprep.subr.bf16.mxu0 0
        %6216 = vmatpush2.bf16.xpose.msra.mxu0 0
        %6217 = vmatprep.subr.bf16.mxu0 0
        %6218 = vmatpush2.bf16.xpose.msra.mxu0 0
        %6219 = vmatprep.subr.bf16.mxu0 0
        %6220 = vmatpush2.bf16.xpose.msra.mxu0 0
        %6221 = vmatprep.subr.bf16.mxu0 0
        %6222 = vmatpush2.bf16.xpose.msra.mxu0 0
        %6223 = vmatprep.subr.bf16.mxu0 0
        %6224 = vmatpush2.bf16.xpose.msra.mxu0 0
        %6225 = vmatprep.subr.bf16.mxu0 0
        %6226 = vmatpush2.bf16.xpose.msra.mxu0 0
        %6227 = vmatprep.subr.bf16.mxu0 0
        %6228 = vmatpush2.bf16.xpose.msra.mxu0 0
        %6229 = vmatprep.subr.bf16.mxu0 0
        %6230 = vmatpush2.bf16.xpose.msra.mxu0 0
        %6231 = vmatprep.mubr.bf16.mxu0 0
        %6232 = vmatmul.mubr.bf16.gmra.mxu0 %v6194
        %v6233 = vpop.f32.mrf.mxu0
        %v6234 = vadd.f32 %v1862, %v6233
        %v6235 = vpop.f32.mrf.mxu0
        %v6236 = vpop.f32.mrf.mxu0
        %v6237 = vpop.f32.mrf.mxu0
        %6238 = vdwg.mxu0
        %6239 = vrot.lane.b32.xlu0 %v5701, 112
        %v6240 = vpop.permute.xlu0 %6239
        %6241 = vrot.lane.b32.xlu0 %v5701, 64
        %v6242 = vpop.permute.xlu0 %6241
        %v6244 = vsel %vm1878, %v6240, 0
        %v6247 = vsel %vm1878, %v6242, 0
        %6249 = vmatprep.subr.bf16.mxu0 0
        %6250 = vmatpush1.bf16.xpose.msra.mxu0 0
        %6251 = vmatprep.subr.bf16.mxu0 0
        %6252 = vmatpush1.bf16.xpose.msra.mxu0 0
        %6253 = vmatprep.subr.bf16.mxu0 0
        %6254 = vmatpush1.bf16.xpose.msra.mxu0 0
        %6255 = vmatprep.subr.bf16.mxu0 0
        %6256 = vmatpush1.bf16.xpose.msra.mxu0 0
        %6257 = vmatprep.subr.bf16.mxu0 0
        %6258 = vmatpush1.bf16.xpose.msra.mxu0 0
        %6259 = vmatprep.subr.bf16.mxu0 0
        %6260 = vmatpush1.bf16.xpose.msra.mxu0 0
        %6261 = vmatprep.subr.bf16.mxu0 0
        %6262 = vmatpush1.bf16.xpose.msra.mxu0 0
        %6263 = vmatprep.subr.bf16.mxu0 0
        %6264 = vmatpush1.bf16.xpose.msra.mxu0 %v6247
        %6265 = vmatprep.subr.bf16.mxu0 0
        %6266 = vmatpush2.bf16.xpose.msra.mxu0 0
        %6267 = vmatprep.subr.bf16.mxu0 0
        %6268 = vmatpush2.bf16.xpose.msra.mxu0 0
        %6269 = vmatprep.subr.bf16.mxu0 0
        %6270 = vmatpush2.bf16.xpose.msra.mxu0 0
        %6271 = vmatprep.subr.bf16.mxu0 0
        %6272 = vmatpush2.bf16.xpose.msra.mxu0 0
        %6273 = vmatprep.subr.bf16.mxu0 0
        %6274 = vmatpush2.bf16.xpose.msra.mxu0 0
        %6275 = vmatprep.subr.bf16.mxu0 0
        %6276 = vmatpush2.bf16.xpose.msra.mxu0 0
        %6277 = vmatprep.subr.bf16.mxu0 0
        %6278 = vmatpush2.bf16.xpose.msra.mxu0 0
        %6279 = vmatprep.subr.bf16.mxu0 0
        %6280 = vmatpush2.bf16.xpose.msra.mxu0 0
        %6281 = vmatprep.mubr.bf16.mxu0 0
        %6282 = vmatmul.mubr.bf16.gmra.mxu0 %v6244
        %v6283 = vpop.f32.mrf.mxu0
        %v6284 = vadd.f32 %v1866, %v6283
        %v6285 = vpop.f32.mrf.mxu0
        %v6286 = vpop.f32.mrf.mxu0
        %v6287 = vpop.f32.mrf.mxu0
        %6288 = vdwg.mxu0
        %6289 = vrot.lane.b32.xlu0 %v5702, 112
        %v6290 = vpop.permute.xlu0 %6289
        %6291 = vrot.lane.b32.xlu0 %v5702, 64
        %v6292 = vpop.permute.xlu0 %6291
        %v6294 = vsel %vm1878, %v6290, 0
        %v6297 = vsel %vm1878, %v6292, 0
        %6299 = vmatprep.subr.bf16.mxu0 0
        %6300 = vmatpush1.bf16.xpose.msra.mxu0 0
        %6301 = vmatprep.subr.bf16.mxu0 0
        %6302 = vmatpush1.bf16.xpose.msra.mxu0 0
        %6303 = vmatprep.subr.bf16.mxu0 0
        %6304 = vmatpush1.bf16.xpose.msra.mxu0 0
        %6305 = vmatprep.subr.bf16.mxu0 0
        %6306 = vmatpush1.bf16.xpose.msra.mxu0 0
        %6307 = vmatprep.subr.bf16.mxu0 0
        %6308 = vmatpush1.bf16.xpose.msra.mxu0 0
        %6309 = vmatprep.subr.bf16.mxu0 0
        %6310 = vmatpush1.bf16.xpose.msra.mxu0 0
        %6311 = vmatprep.subr.bf16.mxu0 0
        %6312 = vmatpush1.bf16.xpose.msra.mxu0 0
        %6313 = vmatprep.subr.bf16.mxu0 0
        %6314 = vmatpush1.bf16.xpose.msra.mxu0 %v6297
        %6315 = vmatprep.subr.bf16.mxu0 0
        %6316 = vmatpush2.bf16.xpose.msra.mxu0 0
        %6317 = vmatprep.subr.bf16.mxu0 0
        %6318 = vmatpush2.bf16.xpose.msra.mxu0 0
        %6319 = vmatprep.subr.bf16.mxu0 0
        %6320 = vmatpush2.bf16.xpose.msra.mxu0 0
        %6321 = vmatprep.subr.bf16.mxu0 0
        %6322 = vmatpush2.bf16.xpose.msra.mxu0 0
        %6323 = vmatprep.subr.bf16.mxu0 0
        %6324 = vmatpush2.bf16.xpose.msra.mxu0 0
        %6325 = vmatprep.subr.bf16.mxu0 0
        %6326 = vmatpush2.bf16.xpose.msra.mxu0 0
        %6327 = vmatprep.subr.bf16.mxu0 0
        %6328 = vmatpush2.bf16.xpose.msra.mxu0 0
        %6329 = vmatprep.subr.bf16.mxu0 0
        %6330 = vmatpush2.bf16.xpose.msra.mxu0 0
        %6331 = vmatprep.mubr.bf16.mxu0 0
        %6332 = vmatmul.mubr.bf16.gmra.mxu0 %v6294
        %v6333 = vpop.f32.mrf.mxu0
        %v6334 = vadd.f32 %v1870, %v6333
        %v6335 = vpop.f32.mrf.mxu0
        %v6336 = vpop.f32.mrf.mxu0
        %v6337 = vpop.f32.mrf.mxu0
        %6338 = vdwg.mxu0
        %v6339 = vsel %vm2072, %v6184, -inf
        %6340 = vmax.xlane.f32.xlu0 %v6339
        %v6341 = vpop.xlane.xlu0 %6340
        %v6342 = vsel %vm2072, %v6234, -inf
        %6343 = vmax.xlane.f32.xlu0 %v6342
        %v6344 = vpop.xlane.xlu0 %6343
        %v6345 = vsel %vm2072, %v6284, -inf
        %6346 = vmax.xlane.f32.xlu0 %v6345
        %v6347 = vpop.xlane.xlu0 %6346
        %v6348 = vsel %vm2072, %v6334, -inf
        %6349 = vmax.xlane.f32.xlu0 %v6348
        %v6350 = vpop.xlane.xlu0 %6349
        %v6351 = vsub.f32 %v6184, %v6341
        %v6352 = vsub.f32 %v6234, %v6344
        %v6353 = vsub.f32 %v6284, %v6347
        %v6354 = vsub.f32 %v6334, %v6350
        %v6355 = vmul.f32 %v6351, 1.442695
        %v6356 = vpow.pop %v6355
        %v6357 = vmul.f32 %v6352, 1.442695
        %v6358 = vpow.pop %v6357
        %v6359 = vmul.f32 %v6353, 1.442695
        %v6360 = vpow.pop %v6359
        %v6361 = vmul.f32 %v6354, 1.442695
        %v6362 = vpow.pop %v6361
        %v6363 = vsel %vm2072, %v6356, 0.0
        %6364 = vadd.xlane.f32.xlu0 %v6363
        %v6365 = vpop.xlane.xlu0 %6364
        %v6366 = vsel %vm2072, %v6358, 0.0
        %6367 = vadd.xlane.f32.xlu0 %v6366
        %v6368 = vpop.xlane.xlu0 %6367
        %v6369 = vsel %vm2072, %v6360, 0.0
        %6370 = vadd.xlane.f32.xlu0 %v6369
        %v6371 = vpop.xlane.xlu0 %6370
        %v6372 = vsel %vm2072, %v6362, 0.0
        %6373 = vadd.xlane.f32.xlu0 %v6372
        %v6374 = vpop.xlane.xlu0 %6373
        %v6375 = vrcp.pop %v6365
        %v6376 = vrcp.pop %v6368
        %v6377 = vrcp.pop %v6371
        %v6378 = vrcp.pop %v6374
        %v6379 = vmul.f32 %v6356, %v6375
        %v6380 = vmul.f32 %v6358, %v6376
        %v6381 = vmul.f32 %v6360, %v6377
        %v6382 = vmul.f32 %v6362, %v6378
        %v6383 = vpack.c.bf16 %v6379, %v6379
        %v6384 = vpack.c.bf16 %v6380, %v6380
        %v6385 = vpack.c.bf16 %v6381, %v6381
        %v6386 = vpack.c.bf16 %v6382, %v6382
        %6387 = vrot.lane.b32.xlu0 %v5699, 16
        %v6388 = vpop.permute.xlu0 %6387
        %v6390 = vsel %vm2123, %v6383, 0
        %v6393 = vand.u32 %v6388, %v2130
        %6395 = vmatprep.subr.bf16.mxu0 0
        %6396 = vmatpush1.bf16.msra.mxu0 0
        %6397 = vmatprep.subr.bf16.mxu0 0
        %6398 = vmatpush1.bf16.msra.mxu0 0
        %6399 = vmatprep.subr.bf16.mxu0 0
        %6400 = vmatpush1.bf16.msra.mxu0 0
        %6401 = vmatprep.subr.bf16.mxu0 0
        %6402 = vmatpush1.bf16.msra.mxu0 0
        %6403 = vmatprep.subr.bf16.mxu0 0
        %6404 = vmatpush1.bf16.msra.mxu0 0
        %6405 = vmatprep.subr.bf16.mxu0 0
        %6406 = vmatpush1.bf16.msra.mxu0 0
        %6407 = vmatprep.subr.bf16.mxu0 0
        %6408 = vmatpush1.bf16.msra.mxu0 0
        %6409 = vmatprep.subr.bf16.mxu0 0
        %6410 = vmatpush1.bf16.msra.mxu0 %v6393
        %6411 = vmatprep.subr.bf16.mxu0 0
        %6412 = vmatpush2.bf16.msra.mxu0 0
        %6413 = vmatprep.subr.bf16.mxu0 0
        %6414 = vmatpush2.bf16.msra.mxu0 0
        %6415 = vmatprep.subr.bf16.mxu0 0
        %6416 = vmatpush2.bf16.msra.mxu0 0
        %6417 = vmatprep.subr.bf16.mxu0 0
        %6418 = vmatpush2.bf16.msra.mxu0 0
        %6419 = vmatprep.subr.bf16.mxu0 0
        %6420 = vmatpush2.bf16.msra.mxu0 0
        %6421 = vmatprep.subr.bf16.mxu0 0
        %6422 = vmatpush2.bf16.msra.mxu0 0
        %6423 = vmatprep.subr.bf16.mxu0 0
        %6424 = vmatpush2.bf16.msra.mxu0 0
        %6425 = vmatprep.subr.bf16.mxu0 0
        %6426 = vmatpush2.bf16.msra.mxu0 0
        %6427 = vmatprep.mubr.bf16.mxu0 0
        %6428 = vmatmul.mubr.bf16.gmra.mxu0 %v6390
        %v6429 = vpop.f32.mrf.mxu0
        %v6430 = vadd.f32 0.0, %v6429
        %v6431 = vpop.f32.mrf.mxu0
        %v6432 = vpop.f32.mrf.mxu0
        %v6433 = vpop.f32.mrf.mxu0
        %6434 = vdwg.mxu0
        %6435 = vrot.lane.b32.xlu0 %v5700, 16
        %v6436 = vpop.permute.xlu0 %6435
        %v6438 = vsel %vm2123, %v6384, 0
        %v6441 = vand.u32 %v6436, %v2130
        %6443 = vmatprep.subr.bf16.mxu0 0
        %6444 = vmatpush1.bf16.msra.mxu0 0
        %6445 = vmatprep.subr.bf16.mxu0 0
        %6446 = vmatpush1.bf16.msra.mxu0 0
        %6447 = vmatprep.subr.bf16.mxu0 0
        %6448 = vmatpush1.bf16.msra.mxu0 0
        %6449 = vmatprep.subr.bf16.mxu0 0
        %6450 = vmatpush1.bf16.msra.mxu0 0
        %6451 = vmatprep.subr.bf16.mxu0 0
        %6452 = vmatpush1.bf16.msra.mxu0 0
        %6453 = vmatprep.subr.bf16.mxu0 0
        %6454 = vmatpush1.bf16.msra.mxu0 0
        %6455 = vmatprep.subr.bf16.mxu0 0
        %6456 = vmatpush1.bf16.msra.mxu0 0
        %6457 = vmatprep.subr.bf16.mxu0 0
        %6458 = vmatpush1.bf16.msra.mxu0 %v6441
        %6459 = vmatprep.subr.bf16.mxu0 0
        %6460 = vmatpush2.bf16.msra.mxu0 0
        %6461 = vmatprep.subr.bf16.mxu0 0
        %6462 = vmatpush2.bf16.msra.mxu0 0
        %6463 = vmatprep.subr.bf16.mxu0 0
        %6464 = vmatpush2.bf16.msra.mxu0 0
        %6465 = vmatprep.subr.bf16.mxu0 0
        %6466 = vmatpush2.bf16.msra.mxu0 0
        %6467 = vmatprep.subr.bf16.mxu0 0
        %6468 = vmatpush2.bf16.msra.mxu0 0
        %6469 = vmatprep.subr.bf16.mxu0 0
        %6470 = vmatpush2.bf16.msra.mxu0 0
        %6471 = vmatprep.subr.bf16.mxu0 0
        %6472 = vmatpush2.bf16.msra.mxu0 0
        %6473 = vmatprep.subr.bf16.mxu0 0
        %6474 = vmatpush2.bf16.msra.mxu0 0
        %6475 = vmatprep.mubr.bf16.mxu0 0
        %6476 = vmatmul.mubr.bf16.gmra.mxu0 %v6438
        %v6477 = vpop.f32.mrf.mxu0
        %v6478 = vadd.f32 0.0, %v6477
        %v6479 = vpop.f32.mrf.mxu0
        %v6480 = vpop.f32.mrf.mxu0
        %v6481 = vpop.f32.mrf.mxu0
        %6482 = vdwg.mxu0
        %6483 = vrot.lane.b32.xlu0 %v5701, 16
        %v6484 = vpop.permute.xlu0 %6483
        %v6486 = vsel %vm2123, %v6385, 0
        %v6489 = vand.u32 %v6484, %v2130
        %6491 = vmatprep.subr.bf16.mxu0 0
        %6492 = vmatpush1.bf16.msra.mxu0 0
        %6493 = vmatprep.subr.bf16.mxu0 0
        %6494 = vmatpush1.bf16.msra.mxu0 0
        %6495 = vmatprep.subr.bf16.mxu0 0
        %6496 = vmatpush1.bf16.msra.mxu0 0
        %6497 = vmatprep.subr.bf16.mxu0 0
        %6498 = vmatpush1.bf16.msra.mxu0 0
        %6499 = vmatprep.subr.bf16.mxu0 0
        %6500 = vmatpush1.bf16.msra.mxu0 0
        %6501 = vmatprep.subr.bf16.mxu0 0
        %6502 = vmatpush1.bf16.msra.mxu0 0
        %6503 = vmatprep.subr.bf16.mxu0 0
        %6504 = vmatpush1.bf16.msra.mxu0 0
        %6505 = vmatprep.subr.bf16.mxu0 0
        %6506 = vmatpush1.bf16.msra.mxu0 %v6489
        %6507 = vmatprep.subr.bf16.mxu0 0
        %6508 = vmatpush2.bf16.msra.mxu0 0
        %6509 = vmatprep.subr.bf16.mxu0 0
        %6510 = vmatpush2.bf16.msra.mxu0 0
        %6511 = vmatprep.subr.bf16.mxu0 0
        %6512 = vmatpush2.bf16.msra.mxu0 0
        %6513 = vmatprep.subr.bf16.mxu0 0
        %6514 = vmatpush2.bf16.msra.mxu0 0
        %6515 = vmatprep.subr.bf16.mxu0 0
        %6516 = vmatpush2.bf16.msra.mxu0 0
        %6517 = vmatprep.subr.bf16.mxu0 0
        %6518 = vmatpush2.bf16.msra.mxu0 0
        %6519 = vmatprep.subr.bf16.mxu0 0
        %6520 = vmatpush2.bf16.msra.mxu0 0
        %6521 = vmatprep.subr.bf16.mxu0 0
        %6522 = vmatpush2.bf16.msra.mxu0 0
        %6523 = vmatprep.mubr.bf16.mxu0 0
        %6524 = vmatmul.mubr.bf16.gmra.mxu0 %v6486
        %v6525 = vpop.f32.mrf.mxu0
        %v6526 = vadd.f32 0.0, %v6525
        %v6527 = vpop.f32.mrf.mxu0
        %v6528 = vpop.f32.mrf.mxu0
        %v6529 = vpop.f32.mrf.mxu0
        %6530 = vdwg.mxu0
        %6531 = vrot.lane.b32.xlu0 %v5702, 16
        %v6532 = vpop.permute.xlu0 %6531
        %v6534 = vsel %vm2123, %v6386, 0
        %v6537 = vand.u32 %v6532, %v2130
        %6539 = vmatprep.subr.bf16.mxu0 0
        %6540 = vmatpush1.bf16.msra.mxu0 0
        %6541 = vmatprep.subr.bf16.mxu0 0
        %6542 = vmatpush1.bf16.msra.mxu0 0
        %6543 = vmatprep.subr.bf16.mxu0 0
        %6544 = vmatpush1.bf16.msra.mxu0 0
        %6545 = vmatprep.subr.bf16.mxu0 0
        %6546 = vmatpush1.bf16.msra.mxu0 0
        %6547 = vmatprep.subr.bf16.mxu0 0
        %6548 = vmatpush1.bf16.msra.mxu0 0
        %6549 = vmatprep.subr.bf16.mxu0 0
        %6550 = vmatpush1.bf16.msra.mxu0 0
        %6551 = vmatprep.subr.bf16.mxu0 0
        %6552 = vmatpush1.bf16.msra.mxu0 0
        %6553 = vmatprep.subr.bf16.mxu0 0
        %6554 = vmatpush1.bf16.msra.mxu0 %v6537
        %6555 = vmatprep.subr.bf16.mxu0 0
        %6556 = vmatpush2.bf16.msra.mxu0 0
        %6557 = vmatprep.subr.bf16.mxu0 0
        %6558 = vmatpush2.bf16.msra.mxu0 0
        %6559 = vmatprep.subr.bf16.mxu0 0
        %6560 = vmatpush2.bf16.msra.mxu0 0
        %6561 = vmatprep.subr.bf16.mxu0 0
        %6562 = vmatpush2.bf16.msra.mxu0 0
        %6563 = vmatprep.subr.bf16.mxu0 0
        %6564 = vmatpush2.bf16.msra.mxu0 0
        %6565 = vmatprep.subr.bf16.mxu0 0
        %6566 = vmatpush2.bf16.msra.mxu0 0
        %6567 = vmatprep.subr.bf16.mxu0 0
        %6568 = vmatpush2.bf16.msra.mxu0 0
        %6569 = vmatprep.subr.bf16.mxu0 0
        %6570 = vmatpush2.bf16.msra.mxu0 0
        %6571 = vmatprep.mubr.bf16.mxu0 0
        %6572 = vmatmul.mubr.bf16.gmra.mxu0 %v6534
        %v6573 = vpop.f32.mrf.mxu0
        %v6574 = vadd.f32 0.0, %v6573
        %v6575 = vpop.f32.mrf.mxu0
        %v6576 = vpop.f32.mrf.mxu0
        %v6577 = vpop.f32.mrf.mxu0
        %6578 = vdwg.mxu0
        %v6579 = vcombine.high %v5547, %v5554
        %v6580 = vcombine.high %v5561, %v5561
        %v6582 = vunpack.c.l.s4 1966171168
        %v6583 = vunpack.c.0.s8 %v6582
        %v6584 = vlaneseq
        %v6585 = vshrl.u32 %v6584, 7
        %v6586 = vsub.s32 %v6583, %v6585
        %v6587 = vrot.slane %v6579, %v6586
        %v6589 = vunpack.c.l.s4 1966171168
        %v6590 = vunpack.c.0.s8 %v6589
        %v6591 = vlaneseq
        %v6592 = vshrl.u32 %v6591, 7
        %v6593 = vsub.s32 %v6590, %v6592
        %v6594 = vrot.slane %v6580, %v6593
        %v6595 = vcombine.low %v6587, %v6594
        %v6596 = vcombine.high %v5586, %v5593
        %v6597 = vcombine.high %v5600, %v5600
        %v6599 = vunpack.c.l.s4 1966171168
        %v6600 = vunpack.c.0.s8 %v6599
        %v6601 = vlaneseq
        %v6602 = vshrl.u32 %v6601, 7
        %v6603 = vsub.s32 %v6600, %v6602
        %v6604 = vrot.slane %v6596, %v6603
        %v6606 = vunpack.c.l.s4 1966171168
        %v6607 = vunpack.c.0.s8 %v6606
        %v6608 = vlaneseq
        %v6609 = vshrl.u32 %v6608, 7
        %v6610 = vsub.s32 %v6607, %v6609
        %v6611 = vrot.slane %v6597, %v6610
        %v6612 = vcombine.low %v6604, %v6611
        %v6613 = vcombine.high %v5625, %v5632
        %v6614 = vcombine.high %v5639, %v5639
        %v6616 = vunpack.c.l.s4 1966171168
        %v6617 = vunpack.c.0.s8 %v6616
        %v6618 = vlaneseq
        %v6619 = vshrl.u32 %v6618, 7
        %v6620 = vsub.s32 %v6617, %v6619
        %v6621 = vrot.slane %v6613, %v6620
        %v6623 = vunpack.c.l.s4 1966171168
        %v6624 = vunpack.c.0.s8 %v6623
        %v6625 = vlaneseq
        %v6626 = vshrl.u32 %v6625, 7
        %v6627 = vsub.s32 %v6624, %v6626
        %v6628 = vrot.slane %v6614, %v6627
        %v6629 = vcombine.low %v6621, %v6628
        %v6630 = vcombine.high %v5664, %v5671
        %v6631 = vcombine.high %v5678, %v5678
        %v6633 = vunpack.c.l.s4 1966171168
        %v6634 = vunpack.c.0.s8 %v6633
        %v6635 = vlaneseq
        %v6636 = vshrl.u32 %v6635, 7
        %v6637 = vsub.s32 %v6634, %v6636
        %v6638 = vrot.slane %v6630, %v6637
        %v6640 = vunpack.c.l.s4 1966171168
        %v6641 = vunpack.c.0.s8 %v6640
        %v6642 = vlaneseq
        %v6643 = vshrl.u32 %v6642, 7
        %v6644 = vsub.s32 %v6641, %v6643
        %v6645 = vrot.slane %v6631, %v6644
        %v6646 = vcombine.low %v6638, %v6645
        %v6651 = vpack.c.bf16 %v6595, %v6595
        %v6652 = vpack.c.bf16 %v6612, %v6612
        %v6653 = vpack.c.bf16 %v6629, %v6629
        %v6654 = vpack.c.bf16 %v6646, %v6646
        %6655 = vrot.lane.b32.xlu0 %v5699, 96
        %v6656 = vpop.permute.xlu0 %6655
        %6657 = vrot.lane.b32.xlu0 %v5699, 48
        %v6658 = vpop.permute.xlu0 %6657
        %v6660 = vsel %vm1878, %v6656, 0
        %v6663 = vsel %vm1878, %v6658, 0
        %6665 = vmatprep.subr.bf16.mxu0 0
        %6666 = vmatpush1.bf16.xpose.msra.mxu0 0
        %6667 = vmatprep.subr.bf16.mxu0 0
        %6668 = vmatpush1.bf16.xpose.msra.mxu0 0
        %6669 = vmatprep.subr.bf16.mxu0 0
        %6670 = vmatpush1.bf16.xpose.msra.mxu0 0
        %6671 = vmatprep.subr.bf16.mxu0 0
        %6672 = vmatpush1.bf16.xpose.msra.mxu0 0
        %6673 = vmatprep.subr.bf16.mxu0 0
        %6674 = vmatpush1.bf16.xpose.msra.mxu0 0
        %6675 = vmatprep.subr.bf16.mxu0 0
        %6676 = vmatpush1.bf16.xpose.msra.mxu0 0
        %6677 = vmatprep.subr.bf16.mxu0 0
        %6678 = vmatpush1.bf16.xpose.msra.mxu0 0
        %6679 = vmatprep.subr.bf16.mxu0 0
        %6680 = vmatpush1.bf16.xpose.msra.mxu0 %v6663
        %6681 = vmatprep.subr.bf16.mxu0 0
        %6682 = vmatpush2.bf16.xpose.msra.mxu0 0
        %6683 = vmatprep.subr.bf16.mxu0 0
        %6684 = vmatpush2.bf16.xpose.msra.mxu0 0
        %6685 = vmatprep.subr.bf16.mxu0 0
        %6686 = vmatpush2.bf16.xpose.msra.mxu0 0
        %6687 = vmatprep.subr.bf16.mxu0 0
        %6688 = vmatpush2.bf16.xpose.msra.mxu0 0
        %6689 = vmatprep.subr.bf16.mxu0 0
        %6690 = vmatpush2.bf16.xpose.msra.mxu0 0
        %6691 = vmatprep.subr.bf16.mxu0 0
        %6692 = vmatpush2.bf16.xpose.msra.mxu0 0
        %6693 = vmatprep.subr.bf16.mxu0 0
        %6694 = vmatpush2.bf16.xpose.msra.mxu0 0
        %6695 = vmatprep.subr.bf16.mxu0 0
        %6696 = vmatpush2.bf16.xpose.msra.mxu0 0
        %6697 = vmatprep.mubr.bf16.mxu0 0
        %6698 = vmatmul.mubr.bf16.gmra.mxu0 %v6660
        %v6699 = vpop.f32.mrf.mxu0
        %v6700 = vadd.f32 %v1858, %v6699
        %v6701 = vpop.f32.mrf.mxu0
        %v6702 = vpop.f32.mrf.mxu0
        %v6703 = vpop.f32.mrf.mxu0
        %6704 = vdwg.mxu0
        %6705 = vrot.lane.b32.xlu0 %v5700, 96
        %v6706 = vpop.permute.xlu0 %6705
        %6707 = vrot.lane.b32.xlu0 %v5700, 48
        %v6708 = vpop.permute.xlu0 %6707
        %v6710 = vsel %vm1878, %v6706, 0
        %v6713 = vsel %vm1878, %v6708, 0
        %6715 = vmatprep.subr.bf16.mxu0 0
        %6716 = vmatpush1.bf16.xpose.msra.mxu0 0
        %6717 = vmatprep.subr.bf16.mxu0 0
        %6718 = vmatpush1.bf16.xpose.msra.mxu0 0
        %6719 = vmatprep.subr.bf16.mxu0 0
        %6720 = vmatpush1.bf16.xpose.msra.mxu0 0
        %6721 = vmatprep.subr.bf16.mxu0 0
        %6722 = vmatpush1.bf16.xpose.msra.mxu0 0
        %6723 = vmatprep.subr.bf16.mxu0 0
        %6724 = vmatpush1.bf16.xpose.msra.mxu0 0
        %6725 = vmatprep.subr.bf16.mxu0 0
        %6726 = vmatpush1.bf16.xpose.msra.mxu0 0
        %6727 = vmatprep.subr.bf16.mxu0 0
        %6728 = vmatpush1.bf16.xpose.msra.mxu0 0
        %6729 = vmatprep.subr.bf16.mxu0 0
        %6730 = vmatpush1.bf16.xpose.msra.mxu0 %v6713
        %6731 = vmatprep.subr.bf16.mxu0 0
        %6732 = vmatpush2.bf16.xpose.msra.mxu0 0
        %6733 = vmatprep.subr.bf16.mxu0 0
        %6734 = vmatpush2.bf16.xpose.msra.mxu0 0
        %6735 = vmatprep.subr.bf16.mxu0 0
        %6736 = vmatpush2.bf16.xpose.msra.mxu0 0
        %6737 = vmatprep.subr.bf16.mxu0 0
        %6738 = vmatpush2.bf16.xpose.msra.mxu0 0
        %6739 = vmatprep.subr.bf16.mxu0 0
        %6740 = vmatpush2.bf16.xpose.msra.mxu0 0
        %6741 = vmatprep.subr.bf16.mxu0 0
        %6742 = vmatpush2.bf16.xpose.msra.mxu0 0
        %6743 = vmatprep.subr.bf16.mxu0 0
        %6744 = vmatpush2.bf16.xpose.msra.mxu0 0
        %6745 = vmatprep.subr.bf16.mxu0 0
        %6746 = vmatpush2.bf16.xpose.msra.mxu0 0
        %6747 = vmatprep.mubr.bf16.mxu0 0
        %6748 = vmatmul.mubr.bf16.gmra.mxu0 %v6710
        %v6749 = vpop.f32.mrf.mxu0
        %v6750 = vadd.f32 %v1862, %v6749
        %v6751 = vpop.f32.mrf.mxu0
        %v6752 = vpop.f32.mrf.mxu0
        %v6753 = vpop.f32.mrf.mxu0
        %6754 = vdwg.mxu0
        %6755 = vrot.lane.b32.xlu0 %v5701, 96
        %v6756 = vpop.permute.xlu0 %6755
        %6757 = vrot.lane.b32.xlu0 %v5701, 48
        %v6758 = vpop.permute.xlu0 %6757
        %v6760 = vsel %vm1878, %v6756, 0
        %v6763 = vsel %vm1878, %v6758, 0
        %6765 = vmatprep.subr.bf16.mxu0 0
        %6766 = vmatpush1.bf16.xpose.msra.mxu0 0
        %6767 = vmatprep.subr.bf16.mxu0 0
        %6768 = vmatpush1.bf16.xpose.msra.mxu0 0
        %6769 = vmatprep.subr.bf16.mxu0 0
        %6770 = vmatpush1.bf16.xpose.msra.mxu0 0
        %6771 = vmatprep.subr.bf16.mxu0 0
        %6772 = vmatpush1.bf16.xpose.msra.mxu0 0
        %6773 = vmatprep.subr.bf16.mxu0 0
        %6774 = vmatpush1.bf16.xpose.msra.mxu0 0
        %6775 = vmatprep.subr.bf16.mxu0 0
        %6776 = vmatpush1.bf16.xpose.msra.mxu0 0
        %6777 = vmatprep.subr.bf16.mxu0 0
        %6778 = vmatpush1.bf16.xpose.msra.mxu0 0
        %6779 = vmatprep.subr.bf16.mxu0 0
        %6780 = vmatpush1.bf16.xpose.msra.mxu0 %v6763
        %6781 = vmatprep.subr.bf16.mxu0 0
        %6782 = vmatpush2.bf16.xpose.msra.mxu0 0
        %6783 = vmatprep.subr.bf16.mxu0 0
        %6784 = vmatpush2.bf16.xpose.msra.mxu0 0
        %6785 = vmatprep.subr.bf16.mxu0 0
        %6786 = vmatpush2.bf16.xpose.msra.mxu0 0
        %6787 = vmatprep.subr.bf16.mxu0 0
        %6788 = vmatpush2.bf16.xpose.msra.mxu0 0
        %6789 = vmatprep.subr.bf16.mxu0 0
        %6790 = vmatpush2.bf16.xpose.msra.mxu0 0
        %6791 = vmatprep.subr.bf16.mxu0 0
        %6792 = vmatpush2.bf16.xpose.msra.mxu0 0
        %6793 = vmatprep.subr.bf16.mxu0 0
        %6794 = vmatpush2.bf16.xpose.msra.mxu0 0
        %6795 = vmatprep.subr.bf16.mxu0 0
        %6796 = vmatpush2.bf16.xpose.msra.mxu0 0
        %6797 = vmatprep.mubr.bf16.mxu0 0
        %6798 = vmatmul.mubr.bf16.gmra.mxu0 %v6760
        %v6799 = vpop.f32.mrf.mxu0
        %v6800 = vadd.f32 %v1866, %v6799
        %v6801 = vpop.f32.mrf.mxu0
        %v6802 = vpop.f32.mrf.mxu0
        %v6803 = vpop.f32.mrf.mxu0
        %6804 = vdwg.mxu0
        %6805 = vrot.lane.b32.xlu0 %v5702, 96
        %v6806 = vpop.permute.xlu0 %6805
        %6807 = vrot.lane.b32.xlu0 %v5702, 48
        %v6808 = vpop.permute.xlu0 %6807
        %v6810 = vsel %vm1878, %v6806, 0
        %v6813 = vsel %vm1878, %v6808, 0
        %6815 = vmatprep.subr.bf16.mxu0 0
        %6816 = vmatpush1.bf16.xpose.msra.mxu0 0
        %6817 = vmatprep.subr.bf16.mxu0 0
        %6818 = vmatpush1.bf16.xpose.msra.mxu0 0
        %6819 = vmatprep.subr.bf16.mxu0 0
        %6820 = vmatpush1.bf16.xpose.msra.mxu0 0
        %6821 = vmatprep.subr.bf16.mxu0 0
        %6822 = vmatpush1.bf16.xpose.msra.mxu0 0
        %6823 = vmatprep.subr.bf16.mxu0 0
        %6824 = vmatpush1.bf16.xpose.msra.mxu0 0
        %6825 = vmatprep.subr.bf16.mxu0 0
        %6826 = vmatpush1.bf16.xpose.msra.mxu0 0
        %6827 = vmatprep.subr.bf16.mxu0 0
        %6828 = vmatpush1.bf16.xpose.msra.mxu0 0
        %6829 = vmatprep.subr.bf16.mxu0 0
        %6830 = vmatpush1.bf16.xpose.msra.mxu0 %v6813
        %6831 = vmatprep.subr.bf16.mxu0 0
        %6832 = vmatpush2.bf16.xpose.msra.mxu0 0
        %6833 = vmatprep.subr.bf16.mxu0 0
        %6834 = vmatpush2.bf16.xpose.msra.mxu0 0
        %6835 = vmatprep.subr.bf16.mxu0 0
        %6836 = vmatpush2.bf16.xpose.msra.mxu0 0
        %6837 = vmatprep.subr.bf16.mxu0 0
        %6838 = vmatpush2.bf16.xpose.msra.mxu0 0
        %6839 = vmatprep.subr.bf16.mxu0 0
        %6840 = vmatpush2.bf16.xpose.msra.mxu0 0
        %6841 = vmatprep.subr.bf16.mxu0 0
        %6842 = vmatpush2.bf16.xpose.msra.mxu0 0
        %6843 = vmatprep.subr.bf16.mxu0 0
        %6844 = vmatpush2.bf16.xpose.msra.mxu0 0
        %6845 = vmatprep.subr.bf16.mxu0 0
        %6846 = vmatpush2.bf16.xpose.msra.mxu0 0
        %6847 = vmatprep.mubr.bf16.mxu0 0
        %6848 = vmatmul.mubr.bf16.gmra.mxu0 %v6810
        %v6849 = vpop.f32.mrf.mxu0
        %v6850 = vadd.f32 %v1870, %v6849
        %v6851 = vpop.f32.mrf.mxu0
        %v6852 = vpop.f32.mrf.mxu0
        %v6853 = vpop.f32.mrf.mxu0
        %6854 = vdwg.mxu0
        %v6855 = vsel %vm2072, %v6700, -inf
        %6856 = vmax.xlane.f32.xlu0 %v6855
        %v6857 = vpop.xlane.xlu0 %6856
        %v6858 = vsel %vm2072, %v6750, -inf
        %6859 = vmax.xlane.f32.xlu0 %v6858
        %v6860 = vpop.xlane.xlu0 %6859
        %v6861 = vsel %vm2072, %v6800, -inf
        %6862 = vmax.xlane.f32.xlu0 %v6861
        %v6863 = vpop.xlane.xlu0 %6862
        %v6864 = vsel %vm2072, %v6850, -inf
        %6865 = vmax.xlane.f32.xlu0 %v6864
        %v6866 = vpop.xlane.xlu0 %6865
        %v6867 = vsub.f32 %v6700, %v6857
        %v6868 = vsub.f32 %v6750, %v6860
        %v6869 = vsub.f32 %v6800, %v6863
        %v6870 = vsub.f32 %v6850, %v6866
        %v6871 = vmul.f32 %v6867, 1.442695
        %v6872 = vpow.pop %v6871
        %v6873 = vmul.f32 %v6868, 1.442695
        %v6874 = vpow.pop %v6873
        %v6875 = vmul.f32 %v6869, 1.442695
        %v6876 = vpow.pop %v6875
        %v6877 = vmul.f32 %v6870, 1.442695
        %v6878 = vpow.pop %v6877
        %v6879 = vsel %vm2072, %v6872, 0.0
        %6880 = vadd.xlane.f32.xlu0 %v6879
        %v6881 = vpop.xlane.xlu0 %6880
        %v6882 = vsel %vm2072, %v6874, 0.0
        %6883 = vadd.xlane.f32.xlu0 %v6882
        %v6884 = vpop.xlane.xlu0 %6883
        %v6885 = vsel %vm2072, %v6876, 0.0
        %6886 = vadd.xlane.f32.xlu0 %v6885
        %v6887 = vpop.xlane.xlu0 %6886
        %v6888 = vsel %vm2072, %v6878, 0.0
        %6889 = vadd.xlane.f32.xlu0 %v6888
        %v6890 = vpop.xlane.xlu0 %6889
        %v6891 = vrcp.pop %v6881
        %v6892 = vrcp.pop %v6884
        %v6893 = vrcp.pop %v6887
        %v6894 = vrcp.pop %v6890
        %v6895 = vmul.f32 %v6872, %v6891
        %v6896 = vmul.f32 %v6874, %v6892
        %v6897 = vmul.f32 %v6876, %v6893
        %v6898 = vmul.f32 %v6878, %v6894
        %v6899 = vpack.c.bf16 %v6895, %v6895
        %v6900 = vpack.c.bf16 %v6896, %v6896
        %v6901 = vpack.c.bf16 %v6897, %v6897
        %v6902 = vpack.c.bf16 %v6898, %v6898
        %v6904 = vsel %vm2123, %v6899, 0
        %v6907 = vand.u32 %v6651, %v2130
        %6909 = vmatprep.subr.bf16.mxu0 0
        %6910 = vmatpush1.bf16.msra.mxu0 0
        %6911 = vmatprep.subr.bf16.mxu0 0
        %6912 = vmatpush1.bf16.msra.mxu0 0
        %6913 = vmatprep.subr.bf16.mxu0 0
        %6914 = vmatpush1.bf16.msra.mxu0 0
        %6915 = vmatprep.subr.bf16.mxu0 0
        %6916 = vmatpush1.bf16.msra.mxu0 0
        %6917 = vmatprep.subr.bf16.mxu0 0
        %6918 = vmatpush1.bf16.msra.mxu0 0
        %6919 = vmatprep.subr.bf16.mxu0 0
        %6920 = vmatpush1.bf16.msra.mxu0 0
        %6921 = vmatprep.subr.bf16.mxu0 0
        %6922 = vmatpush1.bf16.msra.mxu0 0
        %6923 = vmatprep.subr.bf16.mxu0 0
        %6924 = vmatpush1.bf16.msra.mxu0 %v6907
        %6925 = vmatprep.subr.bf16.mxu0 0
        %6926 = vmatpush2.bf16.msra.mxu0 0
        %6927 = vmatprep.subr.bf16.mxu0 0
        %6928 = vmatpush2.bf16.msra.mxu0 0
        %6929 = vmatprep.subr.bf16.mxu0 0
        %6930 = vmatpush2.bf16.msra.mxu0 0
        %6931 = vmatprep.subr.bf16.mxu0 0
        %6932 = vmatpush2.bf16.msra.mxu0 0
        %6933 = vmatprep.subr.bf16.mxu0 0
        %6934 = vmatpush2.bf16.msra.mxu0 0
        %6935 = vmatprep.subr.bf16.mxu0 0
        %6936 = vmatpush2.bf16.msra.mxu0 0
        %6937 = vmatprep.subr.bf16.mxu0 0
        %6938 = vmatpush2.bf16.msra.mxu0 0
        %6939 = vmatprep.subr.bf16.mxu0 0
        %6940 = vmatpush2.bf16.msra.mxu0 0
        %6941 = vmatprep.mubr.bf16.mxu0 0
        %6942 = vmatmul.mubr.bf16.gmra.mxu0 %v6904
        %v6943 = vpop.f32.mrf.mxu0
        %v6944 = vadd.f32 0.0, %v6943
        %v6945 = vpop.f32.mrf.mxu0
        %v6946 = vpop.f32.mrf.mxu0
        %v6947 = vpop.f32.mrf.mxu0
        %6948 = vdwg.mxu0
        %v6950 = vsel %vm2123, %v6900, 0
        %v6953 = vand.u32 %v6652, %v2130
        %6955 = vmatprep.subr.bf16.mxu0 0
        %6956 = vmatpush1.bf16.msra.mxu0 0
        %6957 = vmatprep.subr.bf16.mxu0 0
        %6958 = vmatpush1.bf16.msra.mxu0 0
        %6959 = vmatprep.subr.bf16.mxu0 0
        %6960 = vmatpush1.bf16.msra.mxu0 0
        %6961 = vmatprep.subr.bf16.mxu0 0
        %6962 = vmatpush1.bf16.msra.mxu0 0
        %6963 = vmatprep.subr.bf16.mxu0 0
        %6964 = vmatpush1.bf16.msra.mxu0 0
        %6965 = vmatprep.subr.bf16.mxu0 0
        %6966 = vmatpush1.bf16.msra.mxu0 0
        %6967 = vmatprep.subr.bf16.mxu0 0
        %6968 = vmatpush1.bf16.msra.mxu0 0
        %6969 = vmatprep.subr.bf16.mxu0 0
        %6970 = vmatpush1.bf16.msra.mxu0 %v6953
        %6971 = vmatprep.subr.bf16.mxu0 0
        %6972 = vmatpush2.bf16.msra.mxu0 0
        %6973 = vmatprep.subr.bf16.mxu0 0
        %6974 = vmatpush2.bf16.msra.mxu0 0
        %6975 = vmatprep.subr.bf16.mxu0 0
        %6976 = vmatpush2.bf16.msra.mxu0 0
        %6977 = vmatprep.subr.bf16.mxu0 0
        %6978 = vmatpush2.bf16.msra.mxu0 0
        %6979 = vmatprep.subr.bf16.mxu0 0
        %6980 = vmatpush2.bf16.msra.mxu0 0
        %6981 = vmatprep.subr.bf16.mxu0 0
        %6982 = vmatpush2.bf16.msra.mxu0 0
        %6983 = vmatprep.subr.bf16.mxu0 0
        %6984 = vmatpush2.bf16.msra.mxu0 0
        %6985 = vmatprep.subr.bf16.mxu0 0
        %6986 = vmatpush2.bf16.msra.mxu0 0
        %6987 = vmatprep.mubr.bf16.mxu0 0
        %6988 = vmatmul.mubr.bf16.gmra.mxu0 %v6950
        %v6989 = vpop.f32.mrf.mxu0
        %v6990 = vadd.f32 0.0, %v6989
        %v6991 = vpop.f32.mrf.mxu0
        %v6992 = vpop.f32.mrf.mxu0
        %v6993 = vpop.f32.mrf.mxu0
        %6994 = vdwg.mxu0
        %v6996 = vsel %vm2123, %v6901, 0
        %v6999 = vand.u32 %v6653, %v2130
        %7001 = vmatprep.subr.bf16.mxu0 0
        %7002 = vmatpush1.bf16.msra.mxu0 0
        %7003 = vmatprep.subr.bf16.mxu0 0
        %7004 = vmatpush1.bf16.msra.mxu0 0
        %7005 = vmatprep.subr.bf16.mxu0 0
        %7006 = vmatpush1.bf16.msra.mxu0 0
        %7007 = vmatprep.subr.bf16.mxu0 0
        %7008 = vmatpush1.bf16.msra.mxu0 0
        %7009 = vmatprep.subr.bf16.mxu0 0
        %7010 = vmatpush1.bf16.msra.mxu0 0
        %7011 = vmatprep.subr.bf16.mxu0 0
        %7012 = vmatpush1.bf16.msra.mxu0 0
        %7013 = vmatprep.subr.bf16.mxu0 0
        %7014 = vmatpush1.bf16.msra.mxu0 0
        %7015 = vmatprep.subr.bf16.mxu0 0
        %7016 = vmatpush1.bf16.msra.mxu0 %v6999
        %7017 = vmatprep.subr.bf16.mxu0 0
        %7018 = vmatpush2.bf16.msra.mxu0 0
        %7019 = vmatprep.subr.bf16.mxu0 0
        %7020 = vmatpush2.bf16.msra.mxu0 0
        %7021 = vmatprep.subr.bf16.mxu0 0
        %7022 = vmatpush2.bf16.msra.mxu0 0
        %7023 = vmatprep.subr.bf16.mxu0 0
        %7024 = vmatpush2.bf16.msra.mxu0 0
        %7025 = vmatprep.subr.bf16.mxu0 0
        %7026 = vmatpush2.bf16.msra.mxu0 0
        %7027 = vmatprep.subr.bf16.mxu0 0
        %7028 = vmatpush2.bf16.msra.mxu0 0
        %7029 = vmatprep.subr.bf16.mxu0 0
        %7030 = vmatpush2.bf16.msra.mxu0 0
        %7031 = vmatprep.subr.bf16.mxu0 0
        %7032 = vmatpush2.bf16.msra.mxu0 0
        %7033 = vmatprep.mubr.bf16.mxu0 0
        %7034 = vmatmul.mubr.bf16.gmra.mxu0 %v6996
        %v7035 = vpop.f32.mrf.mxu0
        %v7036 = vadd.f32 0.0, %v7035
        %v7037 = vpop.f32.mrf.mxu0
        %v7038 = vpop.f32.mrf.mxu0
        %v7039 = vpop.f32.mrf.mxu0
        %7040 = vdwg.mxu0
        %v7042 = vsel %vm2123, %v6902, 0
        %v7045 = vand.u32 %v6654, %v2130
        %7047 = vmatprep.subr.bf16.mxu0 0
        %7048 = vmatpush1.bf16.msra.mxu0 0
        %7049 = vmatprep.subr.bf16.mxu0 0
        %7050 = vmatpush1.bf16.msra.mxu0 0
        %7051 = vmatprep.subr.bf16.mxu0 0
        %7052 = vmatpush1.bf16.msra.mxu0 0
        %7053 = vmatprep.subr.bf16.mxu0 0
        %7054 = vmatpush1.bf16.msra.mxu0 0
        %7055 = vmatprep.subr.bf16.mxu0 0
        %7056 = vmatpush1.bf16.msra.mxu0 0
        %7057 = vmatprep.subr.bf16.mxu0 0
        %7058 = vmatpush1.bf16.msra.mxu0 0
        %7059 = vmatprep.subr.bf16.mxu0 0
        %7060 = vmatpush1.bf16.msra.mxu0 0
        %7061 = vmatprep.subr.bf16.mxu0 0
        %7062 = vmatpush1.bf16.msra.mxu0 %v7045
        %7063 = vmatprep.subr.bf16.mxu0 0
        %7064 = vmatpush2.bf16.msra.mxu0 0
        %7065 = vmatprep.subr.bf16.mxu0 0
        %7066 = vmatpush2.bf16.msra.mxu0 0
        %7067 = vmatprep.subr.bf16.mxu0 0
        %7068 = vmatpush2.bf16.msra.mxu0 0
        %7069 = vmatprep.subr.bf16.mxu0 0
        %7070 = vmatpush2.bf16.msra.mxu0 0
        %7071 = vmatprep.subr.bf16.mxu0 0
        %7072 = vmatpush2.bf16.msra.mxu0 0
        %7073 = vmatprep.subr.bf16.mxu0 0
        %7074 = vmatpush2.bf16.msra.mxu0 0
        %7075 = vmatprep.subr.bf16.mxu0 0
        %7076 = vmatpush2.bf16.msra.mxu0 0
        %7077 = vmatprep.subr.bf16.mxu0 0
        %7078 = vmatpush2.bf16.msra.mxu0 0
        %7079 = vmatprep.mubr.bf16.mxu0 0
        %7080 = vmatmul.mubr.bf16.gmra.mxu0 %v7042
        %v7081 = vpop.f32.mrf.mxu0
        %v7082 = vadd.f32 0.0, %v7081
        %v7083 = vpop.f32.mrf.mxu0
        %v7084 = vpop.f32.mrf.mxu0
        %v7085 = vpop.f32.mrf.mxu0
        %7086 = vdwg.mxu0
        %7091 = vrot.lane.b32.xlu0 %v6430, 16
        %v7092 = vpop.permute.xlu0 %7091
        %7093 = vrot.lane.b32.xlu0 %v6478, 16
        %v7094 = vpop.permute.xlu0 %7093
        %7095 = vrot.lane.b32.xlu0 %v6526, 16
        %v7096 = vpop.permute.xlu0 %7095
        %7097 = vrot.lane.b32.xlu0 %v6574, 16
        %v7098 = vpop.permute.xlu0 %7097
        %7107 = vrot.lane.b32.xlu0 %v6944, 32
        %v7108 = vpop.permute.xlu0 %7107
        %7109 = vrot.lane.b32.xlu0 %v6990, 32
        %v7110 = vpop.permute.xlu0 %7109
        %7111 = vrot.lane.b32.xlu0 %v7036, 32
        %v7112 = vpop.permute.xlu0 %7111
        %7113 = vrot.lane.b32.xlu0 %v7082, 32
        %v7114 = vpop.permute.xlu0 %7113
        %v7119 = vsel %vm1878, %v5990, %v7092
        %v7120 = vsel %vm1878, %v6038, %v7094
        %v7121 = vsel %vm1878, %v6086, %v7096
        %v7122 = vsel %vm1878, %v6134, %v7098
        %v7123 = vsel %vm3302, %v7119, %v7108
        %v7124 = vsel %vm3302, %v7120, %v7110
        %v7125 = vsel %vm3302, %v7121, %v7112
        %v7126 = vsel %vm3302, %v7122, %v7114
        %v7131 = vcombine.high %v7123, %v7123
        %v7133 = vunpack.c.l.s4 1966171168
        %v7134 = vunpack.c.0.s8 %v7133
        %v7135 = vlaneseq
        %v7136 = vshrl.u32 %v7135, 7
        %v7137 = vsub.s32 %v7134, %v7136
        %v7138 = vrot.slane %v7123, %v7137
        %v7140 = vunpack.c.l.s4 1966171168
        %v7141 = vunpack.c.0.s8 %v7140
        %v7142 = vlaneseq
        %v7143 = vshrl.u32 %v7142, 7
        %v7144 = vsub.s32 %v7141, %v7143
        %v7145 = vrot.slane %v7131, %v7144
        %v7146 = vcombine.high %v7138, %v7138
        %v7148 = vunpack.c.l.s4 1966171168
        %v7149 = vunpack.c.0.s8 %v7148
        %v7150 = vlaneseq
        %v7151 = vshrl.u32 %v7150, 7
        %v7152 = vsub.s32 %v7149, %v7151
        %v7153 = vrot.slane %v7138, %v7152
        %v7155 = vunpack.c.l.s4 1966171168
        %v7156 = vunpack.c.0.s8 %v7155
        %v7157 = vlaneseq
        %v7158 = vshrl.u32 %v7157, 7
        %v7159 = vsub.s32 %v7156, %v7158
        %v7160 = vrot.slane %v7145, %v7159
        %v7162 = vunpack.c.l.s4 1966171168
        %v7163 = vunpack.c.0.s8 %v7162
        %v7164 = vlaneseq
        %v7165 = vshrl.u32 %v7164, 7
        %v7166 = vsub.s32 %v7163, %v7165
        %v7167 = vrot.slane %v7146, %v7166
        %v7168 = vcombine.high %v7153, %v7153
        %v7169 = vcombine.high %v7167, %v7167
        %v7170 = vcombine.high %v7124, %v7124
        %v7172 = vunpack.c.l.s4 1966171168
        %v7173 = vunpack.c.0.s8 %v7172
        %v7174 = vlaneseq
        %v7175 = vshrl.u32 %v7174, 7
        %v7176 = vsub.s32 %v7173, %v7175
        %v7177 = vrot.slane %v7124, %v7176
        %v7179 = vunpack.c.l.s4 1966171168
        %v7180 = vunpack.c.0.s8 %v7179
        %v7181 = vlaneseq
        %v7182 = vshrl.u32 %v7181, 7
        %v7183 = vsub.s32 %v7180, %v7182
        %v7184 = vrot.slane %v7170, %v7183
        %v7185 = vcombine.high %v7177, %v7177
        %v7187 = vunpack.c.l.s4 1966171168
        %v7188 = vunpack.c.0.s8 %v7187
        %v7189 = vlaneseq
        %v7190 = vshrl.u32 %v7189, 7
        %v7191 = vsub.s32 %v7188, %v7190
        %v7192 = vrot.slane %v7177, %v7191
        %v7194 = vunpack.c.l.s4 1966171168
        %v7195 = vunpack.c.0.s8 %v7194
        %v7196 = vlaneseq
        %v7197 = vshrl.u32 %v7196, 7
        %v7198 = vsub.s32 %v7195, %v7197
        %v7199 = vrot.slane %v7184, %v7198
        %v7201 = vunpack.c.l.s4 1966171168
        %v7202 = vunpack.c.0.s8 %v7201
        %v7203 = vlaneseq
        %v7204 = vshrl.u32 %v7203, 7
        %v7205 = vsub.s32 %v7202, %v7204
        %v7206 = vrot.slane %v7185, %v7205
        %v7207 = vcombine.high %v7192, %v7192
        %v7208 = vcombine.high %v7206, %v7206
        %v7209 = vcombine.high %v7125, %v7125
        %v7211 = vunpack.c.l.s4 1966171168
        %v7212 = vunpack.c.0.s8 %v7211
        %v7213 = vlaneseq
        %v7214 = vshrl.u32 %v7213, 7
        %v7215 = vsub.s32 %v7212, %v7214
        %v7216 = vrot.slane %v7125, %v7215
        %v7218 = vunpack.c.l.s4 1966171168
        %v7219 = vunpack.c.0.s8 %v7218
        %v7220 = vlaneseq
        %v7221 = vshrl.u32 %v7220, 7
        %v7222 = vsub.s32 %v7219, %v7221
        %v7223 = vrot.slane %v7209, %v7222
        %v7224 = vcombine.high %v7216, %v7216
        %v7226 = vunpack.c.l.s4 1966171168
        %v7227 = vunpack.c.0.s8 %v7226
        %v7228 = vlaneseq
        %v7229 = vshrl.u32 %v7228, 7
        %v7230 = vsub.s32 %v7227, %v7229
        %v7231 = vrot.slane %v7216, %v7230
        %v7233 = vunpack.c.l.s4 1966171168
        %v7234 = vunpack.c.0.s8 %v7233
        %v7235 = vlaneseq
        %v7236 = vshrl.u32 %v7235, 7
        %v7237 = vsub.s32 %v7234, %v7236
        %v7238 = vrot.slane %v7223, %v7237
        %v7240 = vunpack.c.l.s4 1966171168
        %v7241 = vunpack.c.0.s8 %v7240
        %v7242 = vlaneseq
        %v7243 = vshrl.u32 %v7242, 7
        %v7244 = vsub.s32 %v7241, %v7243
        %v7245 = vrot.slane %v7224, %v7244
        %v7246 = vcombine.high %v7231, %v7231
        %v7247 = vcombine.high %v7245, %v7245
        %v7248 = vcombine.high %v7126, %v7126
        %v7250 = vunpack.c.l.s4 1966171168
        %v7251 = vunpack.c.0.s8 %v7250
        %v7252 = vlaneseq
        %v7253 = vshrl.u32 %v7252, 7
        %v7254 = vsub.s32 %v7251, %v7253
        %v7255 = vrot.slane %v7126, %v7254
        %v7257 = vunpack.c.l.s4 1966171168
        %v7258 = vunpack.c.0.s8 %v7257
        %v7259 = vlaneseq
        %v7260 = vshrl.u32 %v7259, 7
        %v7261 = vsub.s32 %v7258, %v7260
        %v7262 = vrot.slane %v7248, %v7261
        %v7263 = vcombine.high %v7255, %v7255
        %v7265 = vunpack.c.l.s4 1966171168
        %v7266 = vunpack.c.0.s8 %v7265
        %v7267 = vlaneseq
        %v7268 = vshrl.u32 %v7267, 7
        %v7269 = vsub.s32 %v7266, %v7268
        %v7270 = vrot.slane %v7255, %v7269
        %v7272 = vunpack.c.l.s4 1966171168
        %v7273 = vunpack.c.0.s8 %v7272
        %v7274 = vlaneseq
        %v7275 = vshrl.u32 %v7274, 7
        %v7276 = vsub.s32 %v7273, %v7275
        %v7277 = vrot.slane %v7262, %v7276
        %v7279 = vunpack.c.l.s4 1966171168
        %v7280 = vunpack.c.0.s8 %v7279
        %v7281 = vlaneseq
        %v7282 = vshrl.u32 %v7281, 7
        %v7283 = vsub.s32 %v7280, %v7282
        %v7284 = vrot.slane %v7263, %v7283
        %v7285 = vcombine.high %v7270, %v7270
        %v7286 = vcombine.high %v7284, %v7284
        %v7287 = vcombine.low %v7153, %v7167
        %v7288 = vcombine.low %v7168, %v7169
        %v7289 = vcombine.low %v7160, %v7192
        %v7290 = vcombine.low %v7206, %v7207
        %v7292 = vunpack.c.l.s4 1966171168
        %v7293 = vunpack.c.0.s8 %v7292
        %v7294 = vlaneseq
        %v7295 = vshrl.u32 %v7294, 7
        %v7296 = vsub.s32 %v7293, %v7295
        %v7297 = vrot.slane %v7287, %v7296
        %v7299 = vunpack.c.l.s4 1966171168
        %v7300 = vunpack.c.0.s8 %v7299
        %v7301 = vlaneseq
        %v7302 = vshrl.u32 %v7301, 7
        %v7303 = vsub.s32 %v7300, %v7302
        %v7304 = vrot.slane %v7288, %v7303
        %v7306 = vunpack.c.l.s4 1966171168
        %v7307 = vunpack.c.0.s8 %v7306
        %v7308 = vlaneseq
        %v7309 = vshrl.u32 %v7308, 7
        %v7310 = vsub.s32 %v7307, %v7309
        %v7311 = vrot.slane %v7289, %v7310
        %v7313 = vunpack.c.l.s4 1966171168
        %v7314 = vunpack.c.0.s8 %v7313
        %v7315 = vlaneseq
        %v7316 = vshrl.u32 %v7315, 7
        %v7317 = vsub.s32 %v7314, %v7316
        %v7318 = vrot.slane %v7290, %v7317
        %v7319 = vcombine.low %v7297, %v7304
        %v7320 = vcombine.low %v7311, %v7318
        %v7322 = vunpack.c.l.s4 1966171168
        %v7323 = vunpack.c.0.s8 %v7322
        %v7324 = vlaneseq
        %v7325 = vshrl.u32 %v7324, 7
        %v7326 = vsub.s32 %v7323, %v7325
        %v7327 = vrot.slane %v7319, %v7326
        %v7329 = vunpack.c.l.s4 1966171168
        %v7330 = vunpack.c.0.s8 %v7329
        %v7331 = vlaneseq
        %v7332 = vshrl.u32 %v7331, 7
        %v7333 = vsub.s32 %v7330, %v7332
        %v7334 = vrot.slane %v7320, %v7333
        %v7335 = vcombine.low %v7327, %v7334
        %v7336 = vcombine.low %v7208, %v7199
        %v7337 = vcombine.low %v7231, %v7245
        %v7338 = vcombine.low %v7246, %v7247
        %v7339 = vcombine.low %v7238, %v7270
        %v7341 = vunpack.c.l.s4 1966171168
        %v7342 = vunpack.c.0.s8 %v7341
        %v7343 = vlaneseq
        %v7344 = vshrl.u32 %v7343, 7
        %v7345 = vsub.s32 %v7342, %v7344
        %v7346 = vrot.slane %v7336, %v7345
        %v7348 = vunpack.c.l.s4 1966171168
        %v7349 = vunpack.c.0.s8 %v7348
        %v7350 = vlaneseq
        %v7351 = vshrl.u32 %v7350, 7
        %v7352 = vsub.s32 %v7349, %v7351
        %v7353 = vrot.slane %v7337, %v7352
        %v7355 = vunpack.c.l.s4 1966171168
        %v7356 = vunpack.c.0.s8 %v7355
        %v7357 = vlaneseq
        %v7358 = vshrl.u32 %v7357, 7
        %v7359 = vsub.s32 %v7356, %v7358
        %v7360 = vrot.slane %v7338, %v7359
        %v7362 = vunpack.c.l.s4 1966171168
        %v7363 = vunpack.c.0.s8 %v7362
        %v7364 = vlaneseq
        %v7365 = vshrl.u32 %v7364, 7
        %v7366 = vsub.s32 %v7363, %v7365
        %v7367 = vrot.slane %v7339, %v7366
        %v7368 = vcombine.low %v7346, %v7353
        %v7369 = vcombine.low %v7360, %v7367
        %v7371 = vunpack.c.l.s4 1966171168
        %v7372 = vunpack.c.0.s8 %v7371
        %v7373 = vlaneseq
        %v7374 = vshrl.u32 %v7373, 7
        %v7375 = vsub.s32 %v7372, %v7374
        %v7376 = vrot.slane %v7368, %v7375
        %v7378 = vunpack.c.l.s4 1966171168
        %v7379 = vunpack.c.0.s8 %v7378
        %v7380 = vlaneseq
        %v7381 = vshrl.u32 %v7380, 7
        %v7382 = vsub.s32 %v7379, %v7381
        %v7383 = vrot.slane %v7369, %v7382
        %v7384 = vcombine.low %v7376, %v7383
        %v7385 = vcombine.low %v7284, %v7285
        %v7386 = vcombine.low %v7286, %v7277
        %v7388 = vunpack.c.l.s4 1966171168
        %v7389 = vunpack.c.0.s8 %v7388
        %v7390 = vlaneseq
        %v7391 = vshrl.u32 %v7390, 7
        %v7392 = vsub.s32 %v7389, %v7391
        %v7393 = vrot.slane %v7385, %v7392
        %v7395 = vunpack.c.l.s4 1966171168
        %v7396 = vunpack.c.0.s8 %v7395
        %v7397 = vlaneseq
        %v7398 = vshrl.u32 %v7397, 7
        %v7399 = vsub.s32 %v7396, %v7398
        %v7400 = vrot.slane %v7386, %v7399
        %v7401 = vcombine.low %v7393, %v7400
        %v7403 = vunpack.c.l.s4 1966171168
        %v7404 = vunpack.c.0.s8 %v7403
        %v7405 = vlaneseq
        %v7406 = vshrl.u32 %v7405, 7
        %v7407 = vsub.s32 %v7404, %v7406
        %v7408 = vrot.slane %v7401, %v7407
        %v7412 = vpack.c.bf16 %v7384, %v7335
        %v7413 = vpack.c.bf16 %v7408, %v7408
        %s7414 = scalar_lea.vmem %s10, 24
        %v7415 = vld [vmem:[%s7414] sm:$0xf]
        %v7416 = vld [vmem:[%s7414 + $0x4] sm:$0xf]
        %v7417 = vld [vmem:[%s7414 + $0x8] sm:$0xf]
        %v7418 = vld [vmem:[%s7414 + $0xc] sm:$0xf]
        %v7419 = vld [vmem:[%s7414 + $0x10] sm:$0xf]
        %v7420 = vld [vmem:[%s7414 + $0x14] sm:$0xf]
        %s7421 = scalar_lea.vmem %s11, 1
        %v7422 = vld [vmem:[%s7421] sm:$0x1]
        %v7424 = vlaneseq
        %v7425 = vshrl.u32 %v7424, 7
        %v7426 = vsub.s32 0, %v7425
        %v7427 = vrot.slane %v7422, %v7426
        %v7435 = vunpack.c.l.b16 %v7415
        %v7436 = vunpack.c.l.b16 %v7416
        %v7437 = vunpack.c.l.b16 %v7417
        %v7438 = vunpack.c.l.b16 %v7418
        %v7439 = vunpack.c.l.b16 %v7419
        %v7440 = vunpack.c.l.b16 %v7420
        %v7441 = vpack.c.b16 %v7436, %v7435
        %v7442 = vpack.c.b16 %v7438, %v7437
        %v7443 = vpack.c.b16 %v7440, %v7439
        %v7448 = vsel %vm1498, %v7412, 0
        %v7451 = vsel %vm1498, %v7413, 0
        %7453 = vmatprep.subr.bf16.mxu0 0
        %7454 = vmatpush1.bf16.msra.mxu0 0
        %7455 = vmatprep.subr.bf16.mxu0 0
        %7456 = vmatpush1.bf16.msra.mxu0 0
        %7457 = vmatprep.subr.bf16.mxu0 0
        %7458 = vmatpush1.bf16.msra.mxu0 0
        %7459 = vmatprep.subr.bf16.mxu0 0
        %7460 = vmatpush1.bf16.msra.mxu0 0
        %7461 = vmatprep.subr.bf16.mxu0 0
        %7462 = vmatpush1.bf16.msra.mxu0 0
        %7463 = vmatprep.subr.bf16.mxu0 0
        %7464 = vmatpush1.bf16.msra.mxu0 %v7443
        %7465 = vmatprep.subr.bf16.mxu0 0
        %7466 = vmatpush1.bf16.msra.mxu0 %v7442
        %7467 = vmatprep.subr.bf16.mxu0 0
        %7468 = vmatpush1.bf16.msra.mxu0 %v7441
        %7469 = vmatprep.subr.bf16.mxu0 0
        %7470 = vmatpush2.bf16.msra.mxu0 0
        %7471 = vmatprep.subr.bf16.mxu0 0
        %7472 = vmatpush2.bf16.msra.mxu0 0
        %7473 = vmatprep.subr.bf16.mxu0 0
        %7474 = vmatpush2.bf16.msra.mxu0 0
        %7475 = vmatprep.subr.bf16.mxu0 0
        %7476 = vmatpush2.bf16.msra.mxu0 0
        %7477 = vmatprep.subr.bf16.mxu0 0
        %7478 = vmatpush2.bf16.msra.mxu0 0
        %7479 = vmatprep.subr.bf16.mxu0 0
        %7480 = vmatpush2.bf16.msra.mxu0 0
        %7481 = vmatprep.subr.bf16.mxu0 0
        %7482 = vmatpush2.bf16.msra.mxu0 0
        %7483 = vmatprep.subr.bf16.mxu0 0
        %7484 = vmatpush2.bf16.msra.mxu0 0
        %7485 = vmatprep.mubr.bf16.mxu0 0
        %7486 = vmatmul.mubr.bf16.gmra.mxu0 %v7448
        %v7487 = vpop.f32.mrf.mxu0
        %v7488 = vadd.f32 %v7427, %v7487
        %v7489 = vpop.f32.mrf.mxu0
        %v7490 = vpop.f32.mrf.mxu0
        %v7491 = vadd.f32 %v7427, %v7490
        %v7492 = vpop.f32.mrf.mxu0
        %7493 = vmatprep.mubr.bf16.mxu0 0
        %7494 = vmatmul.mubr.bf16.gmra.mxu0 %v7451
        %v7495 = vpop.f32.mrf.mxu0
        %v7496 = vadd.f32 %v7427, %v7495
        %v7497 = vpop.f32.mrf.mxu0
        %v7498 = vpop.f32.mrf.mxu0
        %v7499 = vpop.f32.mrf.mxu0
        %7500 = vdwg.mxu0
        %v7504 = vcombine.high %v7488, %v7488
        %v7506 = vunpack.c.l.s4 1966171168
        %v7507 = vunpack.c.0.s8 %v7506
        %v7508 = vlaneseq
        %v7509 = vshrl.u32 %v7508, 7
        %v7510 = vsub.s32 %v7507, %v7509
        %v7511 = vrot.slane %v7488, %v7510
        %v7513 = vunpack.c.l.s4 1966171168
        %v7514 = vunpack.c.0.s8 %v7513
        %v7515 = vlaneseq
        %v7516 = vshrl.u32 %v7515, 7
        %v7517 = vsub.s32 %v7514, %v7516
        %v7518 = vrot.slane %v7504, %v7517
        %v7519 = vcombine.high %v7511, %v7511
        %v7520 = vcombine.high %v7518, %v7518
        %v7522 = vunpack.c.l.s4 1966171168
        %v7523 = vunpack.c.0.s8 %v7522
        %v7524 = vlaneseq
        %v7525 = vshrl.u32 %v7524, 7
        %v7526 = vsub.s32 %v7523, %v7525
        %v7527 = vrot.slane %v7511, %v7526
        %v7529 = vunpack.c.l.s4 1966171168
        %v7530 = vunpack.c.0.s8 %v7529
        %v7531 = vlaneseq
        %v7532 = vshrl.u32 %v7531, 7
        %v7533 = vsub.s32 %v7530, %v7532
        %v7534 = vrot.slane %v7518, %v7533
        %v7536 = vunpack.c.l.s4 1966171168
        %v7537 = vunpack.c.0.s8 %v7536
        %v7538 = vlaneseq
        %v7539 = vshrl.u32 %v7538, 7
        %v7540 = vsub.s32 %v7537, %v7539
        %v7541 = vrot.slane %v7519, %v7540
        %v7543 = vunpack.c.l.s4 1966171168
        %v7544 = vunpack.c.0.s8 %v7543
        %v7545 = vlaneseq
        %v7546 = vshrl.u32 %v7545, 7
        %v7547 = vsub.s32 %v7544, %v7546
        %v7548 = vrot.slane %v7520, %v7547
        %v7549 = vcombine.high %v7527, %v7527
        %v7550 = vcombine.high %v7534, %v7534
        %v7551 = vcombine.high %v7541, %v7541
        %v7552 = vcombine.high %v7548, %v7548
        %v7553 = vcombine.high %v7491, %v7491
        %v7555 = vunpack.c.l.s4 1966171168
        %v7556 = vunpack.c.0.s8 %v7555
        %v7557 = vlaneseq
        %v7558 = vshrl.u32 %v7557, 7
        %v7559 = vsub.s32 %v7556, %v7558
        %v7560 = vrot.slane %v7491, %v7559
        %v7562 = vunpack.c.l.s4 1966171168
        %v7563 = vunpack.c.0.s8 %v7562
        %v7564 = vlaneseq
        %v7565 = vshrl.u32 %v7564, 7
        %v7566 = vsub.s32 %v7563, %v7565
        %v7567 = vrot.slane %v7553, %v7566
        %v7568 = vcombine.high %v7560, %v7560
        %v7569 = vcombine.high %v7567, %v7567
        %v7571 = vunpack.c.l.s4 1966171168
        %v7572 = vunpack.c.0.s8 %v7571
        %v7573 = vlaneseq
        %v7574 = vshrl.u32 %v7573, 7
        %v7575 = vsub.s32 %v7572, %v7574
        %v7576 = vrot.slane %v7560, %v7575
        %v7578 = vunpack.c.l.s4 1966171168
        %v7579 = vunpack.c.0.s8 %v7578
        %v7580 = vlaneseq
        %v7581 = vshrl.u32 %v7580, 7
        %v7582 = vsub.s32 %v7579, %v7581
        %v7583 = vrot.slane %v7567, %v7582
        %v7585 = vunpack.c.l.s4 1966171168
        %v7586 = vunpack.c.0.s8 %v7585
        %v7587 = vlaneseq
        %v7588 = vshrl.u32 %v7587, 7
        %v7589 = vsub.s32 %v7586, %v7588
        %v7590 = vrot.slane %v7568, %v7589
        %v7592 = vunpack.c.l.s4 1966171168
        %v7593 = vunpack.c.0.s8 %v7592
        %v7594 = vlaneseq
        %v7595 = vshrl.u32 %v7594, 7
        %v7596 = vsub.s32 %v7593, %v7595
        %v7597 = vrot.slane %v7569, %v7596
        %v7598 = vcombine.high %v7576, %v7576
        %v7599 = vcombine.high %v7583, %v7583
        %v7600 = vcombine.high %v7590, %v7590
        %v7601 = vcombine.high %v7597, %v7597
        %v7603 = vunpack.c.l.s4 1966171168
        %v7604 = vunpack.c.0.s8 %v7603
        %v7605 = vlaneseq
        %v7606 = vshrl.u32 %v7605, 7
        %v7607 = vsub.s32 %v7604, %v7606
        %v7608 = vrot.slane %v7496, %v7607
        %v7609 = vcombine.high %v7608, %v7608
        %v7611 = vunpack.c.l.s4 1966171168
        %v7612 = vunpack.c.0.s8 %v7611
        %v7613 = vlaneseq
        %v7614 = vshrl.u32 %v7613, 7
        %v7615 = vsub.s32 %v7612, %v7614
        %v7616 = vrot.slane %v7608, %v7615
        %v7618 = vunpack.c.l.s4 1966171168
        %v7619 = vunpack.c.0.s8 %v7618
        %v7620 = vlaneseq
        %v7621 = vshrl.u32 %v7620, 7
        %v7622 = vsub.s32 %v7619, %v7621
        %v7623 = vrot.slane %v7609, %v7622
        %v7624 = vcombine.high %v7616, %v7616
        %v7625 = vcombine.high %v7623, %v7623
        %v7626 = vcombine.low %v7527, %v7541
        %v7627 = vcombine.low %v7549, %v7551
        %v7629 = vunpack.c.l.s4 1966171168
        %v7630 = vunpack.c.0.s8 %v7629
        %v7631 = vlaneseq
        %v7632 = vshrl.u32 %v7631, 7
        %v7633 = vsub.s32 %v7630, %v7632
        %v7634 = vrot.slane %v7626, %v7633
        %v7636 = vunpack.c.l.s4 1966171168
        %v7637 = vunpack.c.0.s8 %v7636
        %v7638 = vlaneseq
        %v7639 = vshrl.u32 %v7638, 7
        %v7640 = vsub.s32 %v7637, %v7639
        %v7641 = vrot.slane %v7627, %v7640
        %v7643 = vunpack.c.l.s4 1966171168
        %v7644 = vunpack.c.0.s8 %v7643
        %v7645 = vlaneseq
        %v7646 = vshrl.u32 %v7645, 7
        %v7647 = vsub.s32 %v7644, %v7646
        %v7648 = vrot.slane %v7534, %v7647
        %v7649 = vcombine.low %v7634, %v7641
        %v7651 = vunpack.c.l.s4 1966171168
        %v7652 = vunpack.c.0.s8 %v7651
        %v7653 = vlaneseq
        %v7654 = vshrl.u32 %v7653, 7
        %v7655 = vsub.s32 %v7652, %v7654
        %v7656 = vrot.slane %v7649, %v7655
        %v7658 = vunpack.c.l.s4 1966171168
        %v7659 = vunpack.c.0.s8 %v7658
        %v7660 = vlaneseq
        %v7661 = vshrl.u32 %v7660, 7
        %v7662 = vsub.s32 %v7659, %v7661
        %v7663 = vrot.slane %v7648, %v7662
        %v7664 = vcombine.low %v7656, %v7663
        %v7665 = vcombine.low %v7548, %v7550
        %v7666 = vcombine.low %v7552, %v7576
        %v7668 = vunpack.c.l.s4 1966171168
        %v7669 = vunpack.c.0.s8 %v7668
        %v7670 = vlaneseq
        %v7671 = vshrl.u32 %v7670, 7
        %v7672 = vsub.s32 %v7669, %v7671
        %v7673 = vrot.slane %v7665, %v7672
        %v7675 = vunpack.c.l.s4 1966171168
        %v7676 = vunpack.c.0.s8 %v7675
        %v7677 = vlaneseq
        %v7678 = vshrl.u32 %v7677, 7
        %v7679 = vsub.s32 %v7676, %v7678
        %v7680 = vrot.slane %v7666, %v7679
        %v7682 = vunpack.c.l.s4 1966171168
        %v7683 = vunpack.c.0.s8 %v7682
        %v7684 = vlaneseq
        %v7685 = vshrl.u32 %v7684, 7
        %v7686 = vsub.s32 %v7683, %v7685
        %v7687 = vrot.slane %v7590, %v7686
        %v7688 = vcombine.low %v7673, %v7680
        %v7690 = vunpack.c.l.s4 1966171168
        %v7691 = vunpack.c.0.s8 %v7690
        %v7692 = vlaneseq
        %v7693 = vshrl.u32 %v7692, 7
        %v7694 = vsub.s32 %v7691, %v7693
        %v7695 = vrot.slane %v7688, %v7694
        %v7697 = vunpack.c.l.s4 1966171168
        %v7698 = vunpack.c.0.s8 %v7697
        %v7699 = vlaneseq
        %v7700 = vshrl.u32 %v7699, 7
        %v7701 = vsub.s32 %v7698, %v7700
        %v7702 = vrot.slane %v7687, %v7701
        %v7703 = vcombine.low %v7695, %v7702
        %v7704 = vcombine.low %v7598, %v7600
        %v7705 = vcombine.low %v7583, %v7597
        %v7707 = vunpack.c.l.s4 1966171168
        %v7708 = vunpack.c.0.s8 %v7707
        %v7709 = vlaneseq
        %v7710 = vshrl.u32 %v7709, 7
        %v7711 = vsub.s32 %v7708, %v7710
        %v7712 = vrot.slane %v7704, %v7711
        %v7714 = vunpack.c.l.s4 1966171168
        %v7715 = vunpack.c.0.s8 %v7714
        %v7716 = vlaneseq
        %v7717 = vshrl.u32 %v7716, 7
        %v7718 = vsub.s32 %v7715, %v7717
        %v7719 = vrot.slane %v7705, %v7718
        %v7721 = vunpack.c.l.s4 1966171168
        %v7722 = vunpack.c.0.s8 %v7721
        %v7723 = vlaneseq
        %v7724 = vshrl.u32 %v7723, 7
        %v7725 = vsub.s32 %v7722, %v7724
        %v7726 = vrot.slane %v7599, %v7725
        %v7727 = vcombine.low %v7712, %v7719
        %v7729 = vunpack.c.l.s4 1966171168
        %v7730 = vunpack.c.0.s8 %v7729
        %v7731 = vlaneseq
        %v7732 = vshrl.u32 %v7731, 7
        %v7733 = vsub.s32 %v7730, %v7732
        %v7734 = vrot.slane %v7727, %v7733
        %v7736 = vunpack.c.l.s4 1966171168
        %v7737 = vunpack.c.0.s8 %v7736
        %v7738 = vlaneseq
        %v7739 = vshrl.u32 %v7738, 7
        %v7740 = vsub.s32 %v7737, %v7739
        %v7741 = vrot.slane %v7726, %v7740
        %v7742 = vcombine.low %v7734, %v7741
        %v7743 = vcombine.low %v7601, %v7616
        %v7744 = vcombine.low %v7623, %v7624
        %v7746 = vunpack.c.l.s4 1966171168
        %v7747 = vunpack.c.0.s8 %v7746
        %v7748 = vlaneseq
        %v7749 = vshrl.u32 %v7748, 7
        %v7750 = vsub.s32 %v7747, %v7749
        %v7751 = vrot.slane %v7743, %v7750
        %v7753 = vunpack.c.l.s4 1966171168
        %v7754 = vunpack.c.0.s8 %v7753
        %v7755 = vlaneseq
        %v7756 = vshrl.u32 %v7755, 7
        %v7757 = vsub.s32 %v7754, %v7756
        %v7758 = vrot.slane %v7744, %v7757
        %v7760 = vunpack.c.l.s4 1966171168
        %v7761 = vunpack.c.0.s8 %v7760
        %v7762 = vlaneseq
        %v7763 = vshrl.u32 %v7762, 7
        %v7764 = vsub.s32 %v7761, %v7763
        %v7765 = vrot.slane %v7625, %v7764
        %v7766 = vcombine.low %v7751, %v7758
        %v7768 = vunpack.c.l.s4 1966171168
        %v7769 = vunpack.c.0.s8 %v7768
        %v7770 = vlaneseq
        %v7771 = vshrl.u32 %v7770, 7
        %v7772 = vsub.s32 %v7769, %v7771
        %v7773 = vrot.slane %v7766, %v7772
        %v7775 = vunpack.c.l.s4 1966171168
        %v7776 = vunpack.c.0.s8 %v7775
        %v7777 = vlaneseq
        %v7778 = vshrl.u32 %v7777, 7
        %v7779 = vsub.s32 %v7776, %v7778
        %v7780 = vrot.slane %v7765, %v7779
        %v7781 = vcombine.low %v7773, %v7780
        %v7786 = vadd.f32 %v4934, %v7664
        %v7787 = vadd.f32 %v4935, %v7703
        %v7788 = vadd.f32 %v4936, %v7742
        %v7789 = vadd.f32 %v4937, %v7781
        %s7790 = scalar_lea.vmem %s12, 1
        %v7791 = vld [vmem:[%s7790] sm:$0x1]
        %s7792 = scalar_lea.vmem %s13, 1
        %v7793 = vld [vmem:[%s7792] sm:$0x1]
        %v7794 = vsel %vm1089, %v7786, 0.0
        %7795 = vadd.xlane.f32.xlu0 %v7794
        %v7796 = vpop.xlane.xlu0 %7795
        %v7797 = vsel %vm1089, %v7787, 0.0
        %7798 = vadd.xlane.f32.xlu0 %v7797
        %v7799 = vpop.xlane.xlu0 %7798
        %v7800 = vsel %vm1089, %v7788, 0.0
        %7801 = vadd.xlane.f32.xlu0 %v7800
        %v7802 = vpop.xlane.xlu0 %7801
        %v7803 = vsel %vm1089, %v7789, 0.0
        %7804 = vadd.xlane.f32.xlu0 %v7803
        %v7805 = vpop.xlane.xlu0 %7804
        %v7806 = vmul.f32 %v7796, %v1102
        %v7807 = vmul.f32 %v7799, %v1102
        %v7808 = vmul.f32 %v7802, %v1102
        %v7809 = vmul.f32 %v7805, %v1102
        %v7810 = vsub.f32 %v7786, %v7806
        %v7811 = vsub.f32 %v7787, %v7807
        %v7812 = vsub.f32 %v7788, %v7808
        %v7813 = vsub.f32 %v7789, %v7809
        %v7814 = vmul.f32 %v7810, %v7810
        %v7815 = vmul.f32 %v7811, %v7811
        %v7816 = vmul.f32 %v7812, %v7812
        %v7817 = vmul.f32 %v7813, %v7813
        %v7818 = vsel %vm1089, %v7814, 0.0
        %7819 = vadd.xlane.f32.xlu0 %v7818
        %v7820 = vpop.xlane.xlu0 %7819
        %v7821 = vsel %vm1089, %v7815, 0.0
        %7822 = vadd.xlane.f32.xlu0 %v7821
        %v7823 = vpop.xlane.xlu0 %7822
        %v7824 = vsel %vm1089, %v7816, 0.0
        %7825 = vadd.xlane.f32.xlu0 %v7824
        %v7826 = vpop.xlane.xlu0 %7825
        %v7827 = vsel %vm1089, %v7817, 0.0
        %7828 = vadd.xlane.f32.xlu0 %v7827
        %v7829 = vpop.xlane.xlu0 %7828
        %v7830 = vmul.f32 %v7820, %v1102
        %v7831 = vmul.f32 %v7823, %v1102
        %v7832 = vmul.f32 %v7826, %v1102
        %v7833 = vmul.f32 %v7829, %v1102
        %v7834 = vadd.f32 %v7830, 1e-06
        %v7835 = vadd.f32 %v7831, 1e-06
        %v7836 = vadd.f32 %v7832, 1e-06
        %v7837 = vadd.f32 %v7833, 1e-06
        %v7838 = vrsqrt.pop %v7834
        %v7839 = vrsqrt.pop %v7835
        %v7840 = vrsqrt.pop %v7836
        %v7841 = vrsqrt.pop %v7837
        %v7842 = vmul.f32 %v7810, %v7838
        %v7843 = vmul.f32 %v7811, %v7839
        %v7844 = vmul.f32 %v7812, %v7840
        %v7845 = vmul.f32 %v7813, %v7841
        %v7847 = vlaneseq
        %v7848 = vshrl.u32 %v7847, 7
        %v7849 = vsub.s32 0, %v7848
        %v7850 = vrot.slane %v7791, %v7849
        %v7852 = vmul.f32 %v7842, %v7850
        %v7853 = vmul.f32 %v7843, %v7850
        %v7854 = vmul.f32 %v7844, %v7850
        %v7855 = vmul.f32 %v7845, %v7850
        %v7857 = vlaneseq
        %v7858 = vshrl.u32 %v7857, 7
        %v7859 = vsub.s32 0, %v7858
        %v7860 = vrot.slane %v7793, %v7859
        %v7862 = vadd.f32 %v7852, %v7860
        %v7863 = vadd.f32 %v7853, %v7860
        %v7864 = vadd.f32 %v7854, %v7860
        %v7865 = vadd.f32 %v7855, %v7860
        %v7870 = vcombine.high %v7862, %v7862
        %v7872 = vunpack.c.l.s4 1966171168
        %v7873 = vunpack.c.0.s8 %v7872
        %v7874 = vlaneseq
        %v7875 = vshrl.u32 %v7874, 7
        %v7876 = vsub.s32 %v7873, %v7875
        %v7877 = vrot.slane %v7862, %v7876
        %v7879 = vunpack.c.l.s4 1966171168
        %v7880 = vunpack.c.0.s8 %v7879
        %v7881 = vlaneseq
        %v7882 = vshrl.u32 %v7881, 7
        %v7883 = vsub.s32 %v7880, %v7882
        %v7884 = vrot.slane %v7870, %v7883
        %v7885 = vcombine.high %v7877, %v7877
        %v7887 = vunpack.c.l.s4 1966171168
        %v7888 = vunpack.c.0.s8 %v7887
        %v7889 = vlaneseq
        %v7890 = vshrl.u32 %v7889, 7
        %v7891 = vsub.s32 %v7888, %v7890
        %v7892 = vrot.slane %v7877, %v7891
        %v7894 = vunpack.c.l.s4 1966171168
        %v7895 = vunpack.c.0.s8 %v7894
        %v7896 = vlaneseq
        %v7897 = vshrl.u32 %v7896, 7
        %v7898 = vsub.s32 %v7895, %v7897
        %v7899 = vrot.slane %v7884, %v7898
        %v7901 = vunpack.c.l.s4 1966171168
        %v7902 = vunpack.c.0.s8 %v7901
        %v7903 = vlaneseq
        %v7904 = vshrl.u32 %v7903, 7
        %v7905 = vsub.s32 %v7902, %v7904
        %v7906 = vrot.slane %v7885, %v7905
        %v7907 = vcombine.high %v7892, %v7892
        %v7908 = vcombine.high %v7906, %v7906
        %v7909 = vcombine.high %v7863, %v7863
        %v7911 = vunpack.c.l.s4 1966171168
        %v7912 = vunpack.c.0.s8 %v7911
        %v7913 = vlaneseq
        %v7914 = vshrl.u32 %v7913, 7
        %v7915 = vsub.s32 %v7912, %v7914
        %v7916 = vrot.slane %v7863, %v7915
        %v7918 = vunpack.c.l.s4 1966171168
        %v7919 = vunpack.c.0.s8 %v7918
        %v7920 = vlaneseq
        %v7921 = vshrl.u32 %v7920, 7
        %v7922 = vsub.s32 %v7919, %v7921
        %v7923 = vrot.slane %v7909, %v7922
        %v7924 = vcombine.high %v7916, %v7916
        %v7926 = vunpack.c.l.s4 1966171168
        %v7927 = vunpack.c.0.s8 %v7926
        %v7928 = vlaneseq
        %v7929 = vshrl.u32 %v7928, 7
        %v7930 = vsub.s32 %v7927, %v7929
        %v7931 = vrot.slane %v7916, %v7930
        %v7933 = vunpack.c.l.s4 1966171168
        %v7934 = vunpack.c.0.s8 %v7933
        %v7935 = vlaneseq
        %v7936 = vshrl.u32 %v7935, 7
        %v7937 = vsub.s32 %v7934, %v7936
        %v7938 = vrot.slane %v7923, %v7937
        %v7940 = vunpack.c.l.s4 1966171168
        %v7941 = vunpack.c.0.s8 %v7940
        %v7942 = vlaneseq
        %v7943 = vshrl.u32 %v7942, 7
        %v7944 = vsub.s32 %v7941, %v7943
        %v7945 = vrot.slane %v7924, %v7944
        %v7946 = vcombine.high %v7931, %v7931
        %v7947 = vcombine.high %v7945, %v7945
        %v7948 = vcombine.high %v7864, %v7864
        %v7950 = vunpack.c.l.s4 1966171168
        %v7951 = vunpack.c.0.s8 %v7950
        %v7952 = vlaneseq
        %v7953 = vshrl.u32 %v7952, 7
        %v7954 = vsub.s32 %v7951, %v7953
        %v7955 = vrot.slane %v7864, %v7954
        %v7957 = vunpack.c.l.s4 1966171168
        %v7958 = vunpack.c.0.s8 %v7957
        %v7959 = vlaneseq
        %v7960 = vshrl.u32 %v7959, 7
        %v7961 = vsub.s32 %v7958, %v7960
        %v7962 = vrot.slane %v7948, %v7961
        %v7963 = vcombine.high %v7955, %v7955
        %v7965 = vunpack.c.l.s4 1966171168
        %v7966 = vunpack.c.0.s8 %v7965
        %v7967 = vlaneseq
        %v7968 = vshrl.u32 %v7967, 7
        %v7969 = vsub.s32 %v7966, %v7968
        %v7970 = vrot.slane %v7955, %v7969
        %v7972 = vunpack.c.l.s4 1966171168
        %v7973 = vunpack.c.0.s8 %v7972
        %v7974 = vlaneseq
        %v7975 = vshrl.u32 %v7974, 7
        %v7976 = vsub.s32 %v7973, %v7975
        %v7977 = vrot.slane %v7962, %v7976
        %v7979 = vunpack.c.l.s4 1966171168
        %v7980 = vunpack.c.0.s8 %v7979
        %v7981 = vlaneseq
        %v7982 = vshrl.u32 %v7981, 7
        %v7983 = vsub.s32 %v7980, %v7982
        %v7984 = vrot.slane %v7963, %v7983
        %v7985 = vcombine.high %v7970, %v7970
        %v7986 = vcombine.high %v7984, %v7984
        %v7987 = vcombine.high %v7865, %v7865
        %v7989 = vunpack.c.l.s4 1966171168
        %v7990 = vunpack.c.0.s8 %v7989
        %v7991 = vlaneseq
        %v7992 = vshrl.u32 %v7991, 7
        %v7993 = vsub.s32 %v7990, %v7992
        %v7994 = vrot.slane %v7865, %v7993
        %v7996 = vunpack.c.l.s4 1966171168
        %v7997 = vunpack.c.0.s8 %v7996
        %v7998 = vlaneseq
        %v7999 = vshrl.u32 %v7998, 7
        %v8000 = vsub.s32 %v7997, %v7999
        %v8001 = vrot.slane %v7987, %v8000
        %v8002 = vcombine.high %v7994, %v7994
        %v8004 = vunpack.c.l.s4 1966171168
        %v8005 = vunpack.c.0.s8 %v8004
        %v8006 = vlaneseq
        %v8007 = vshrl.u32 %v8006, 7
        %v8008 = vsub.s32 %v8005, %v8007
        %v8009 = vrot.slane %v7994, %v8008
        %v8011 = vunpack.c.l.s4 1966171168
        %v8012 = vunpack.c.0.s8 %v8011
        %v8013 = vlaneseq
        %v8014 = vshrl.u32 %v8013, 7
        %v8015 = vsub.s32 %v8012, %v8014
        %v8016 = vrot.slane %v8001, %v8015
        %v8018 = vunpack.c.l.s4 1966171168
        %v8019 = vunpack.c.0.s8 %v8018
        %v8020 = vlaneseq
        %v8021 = vshrl.u32 %v8020, 7
        %v8022 = vsub.s32 %v8019, %v8021
        %v8023 = vrot.slane %v8002, %v8022
        %v8024 = vcombine.high %v8009, %v8009
        %v8025 = vcombine.high %v8023, %v8023
        %v8026 = vcombine.low %v7892, %v7906
        %v8027 = vcombine.low %v7907, %v7908
        %v8028 = vcombine.low %v7899, %v7931
        %v8029 = vcombine.low %v7945, %v7946
        %v8031 = vunpack.c.l.s4 1966171168
        %v8032 = vunpack.c.0.s8 %v8031
        %v8033 = vlaneseq
        %v8034 = vshrl.u32 %v8033, 7
        %v8035 = vsub.s32 %v8032, %v8034
        %v8036 = vrot.slane %v8026, %v8035
        %v8038 = vunpack.c.l.s4 1966171168
        %v8039 = vunpack.c.0.s8 %v8038
        %v8040 = vlaneseq
        %v8041 = vshrl.u32 %v8040, 7
        %v8042 = vsub.s32 %v8039, %v8041
        %v8043 = vrot.slane %v8027, %v8042
        %v8045 = vunpack.c.l.s4 1966171168
        %v8046 = vunpack.c.0.s8 %v8045
        %v8047 = vlaneseq
        %v8048 = vshrl.u32 %v8047, 7
        %v8049 = vsub.s32 %v8046, %v8048
        %v8050 = vrot.slane %v8028, %v8049
        %v8052 = vunpack.c.l.s4 1966171168
        %v8053 = vunpack.c.0.s8 %v8052
        %v8054 = vlaneseq
        %v8055 = vshrl.u32 %v8054, 7
        %v8056 = vsub.s32 %v8053, %v8055
        %v8057 = vrot.slane %v8029, %v8056
        %v8058 = vcombine.low %v8036, %v8043
        %v8059 = vcombine.low %v8050, %v8057
        %v8061 = vunpack.c.l.s4 1966171168
        %v8062 = vunpack.c.0.s8 %v8061
        %v8063 = vlaneseq
        %v8064 = vshrl.u32 %v8063, 7
        %v8065 = vsub.s32 %v8062, %v8064
        %v8066 = vrot.slane %v8058, %v8065
        %v8068 = vunpack.c.l.s4 1966171168
        %v8069 = vunpack.c.0.s8 %v8068
        %v8070 = vlaneseq
        %v8071 = vshrl.u32 %v8070, 7
        %v8072 = vsub.s32 %v8069, %v8071
        %v8073 = vrot.slane %v8059, %v8072
        %v8074 = vcombine.low %v8066, %v8073
        %v8075 = vcombine.low %v7947, %v7938
        %v8076 = vcombine.low %v7970, %v7984
        %v8077 = vcombine.low %v7985, %v7986
        %v8078 = vcombine.low %v7977, %v8009
        %v8080 = vunpack.c.l.s4 1966171168
        %v8081 = vunpack.c.0.s8 %v8080
        %v8082 = vlaneseq
        %v8083 = vshrl.u32 %v8082, 7
        %v8084 = vsub.s32 %v8081, %v8083
        %v8085 = vrot.slane %v8075, %v8084
        %v8087 = vunpack.c.l.s4 1966171168
        %v8088 = vunpack.c.0.s8 %v8087
        %v8089 = vlaneseq
        %v8090 = vshrl.u32 %v8089, 7
        %v8091 = vsub.s32 %v8088, %v8090
        %v8092 = vrot.slane %v8076, %v8091
        %v8094 = vunpack.c.l.s4 1966171168
        %v8095 = vunpack.c.0.s8 %v8094
        %v8096 = vlaneseq
        %v8097 = vshrl.u32 %v8096, 7
        %v8098 = vsub.s32 %v8095, %v8097
        %v8099 = vrot.slane %v8077, %v8098
        %v8101 = vunpack.c.l.s4 1966171168
        %v8102 = vunpack.c.0.s8 %v8101
        %v8103 = vlaneseq
        %v8104 = vshrl.u32 %v8103, 7
        %v8105 = vsub.s32 %v8102, %v8104
        %v8106 = vrot.slane %v8078, %v8105
        %v8107 = vcombine.low %v8085, %v8092
        %v8108 = vcombine.low %v8099, %v8106
        %v8110 = vunpack.c.l.s4 1966171168
        %v8111 = vunpack.c.0.s8 %v8110
        %v8112 = vlaneseq
        %v8113 = vshrl.u32 %v8112, 7
        %v8114 = vsub.s32 %v8111, %v8113
        %v8115 = vrot.slane %v8107, %v8114
        %v8117 = vunpack.c.l.s4 1966171168
        %v8118 = vunpack.c.0.s8 %v8117
        %v8119 = vlaneseq
        %v8120 = vshrl.u32 %v8119, 7
        %v8121 = vsub.s32 %v8118, %v8120
        %v8122 = vrot.slane %v8108, %v8121
        %v8123 = vcombine.low %v8115, %v8122
        %v8124 = vcombine.low %v8023, %v8024
        %v8125 = vcombine.low %v8025, %v8016
        %v8127 = vunpack.c.l.s4 1966171168
        %v8128 = vunpack.c.0.s8 %v8127
        %v8129 = vlaneseq
        %v8130 = vshrl.u32 %v8129, 7
        %v8131 = vsub.s32 %v8128, %v8130
        %v8132 = vrot.slane %v8124, %v8131
        %v8134 = vunpack.c.l.s4 1966171168
        %v8135 = vunpack.c.0.s8 %v8134
        %v8136 = vlaneseq
        %v8137 = vshrl.u32 %v8136, 7
        %v8138 = vsub.s32 %v8135, %v8137
        %v8139 = vrot.slane %v8125, %v8138
        %v8140 = vcombine.low %v8132, %v8139
        %v8142 = vunpack.c.l.s4 1966171168
        %v8143 = vunpack.c.0.s8 %v8142
        %v8144 = vlaneseq
        %v8145 = vshrl.u32 %v8144, 7
        %v8146 = vsub.s32 %v8143, %v8145
        %v8147 = vrot.slane %v8140, %v8146
        %v8151 = vpack.c.bf16 %v8123, %v8074
        %v8152 = vpack.c.bf16 %v8147, %v8147
        %s8153 = scalar_lea.vmem %s14, 48
        %v8154 = vld [vmem:[%s8153] sm:$0xff]
        %v8155 = vld [vmem:[%s8153 + $0x8] sm:$0xff]
        %v8156 = vld [vmem:[%s8153 + $0x10] sm:$0xff]
        %v8157 = vld [vmem:[%s8153 + $0x18] sm:$0xff]
        %v8158 = vld [vmem:[%s8153 + $0x20] sm:$0xff]
        %v8159 = vld [vmem:[%s8153 + $0x28] sm:$0xff]
        %s8160 = scalar_lea.vmem %s15, 2
        %v8161 = vld [vmem:[%s8160] sm:$0x3]
        %v8163 = vlaneseq
        %v8164 = vshrl.u32 %v8163, 7
        %v8165 = vsub.s32 0, %v8164
        %v8166 = vrot.slane %v8161, %v8165
        %v8167 = vlaneseq
        %v8168 = vshrl.u32 %v8167, 7
        %v8169 = vsub.s32 1, %v8168
        %v8170 = vrot.slane %v8161, %v8169
        %v8179 = vunpack.c.l.b16 %v8154
        %v8180 = vunpack.c.h.b16 %v8154
        %v8181 = vunpack.c.l.b16 %v8155
        %v8182 = vunpack.c.h.b16 %v8155
        %v8183 = vunpack.c.l.b16 %v8156
        %v8184 = vunpack.c.h.b16 %v8156
        %v8185 = vunpack.c.l.b16 %v8157
        %v8186 = vunpack.c.h.b16 %v8157
        %v8187 = vunpack.c.l.b16 %v8158
        %v8188 = vunpack.c.h.b16 %v8158
        %v8189 = vunpack.c.l.b16 %v8159
        %v8190 = vunpack.c.h.b16 %v8159
        %v8191 = vpack.c.b16 %v8181, %v8179
        %v8192 = vpack.c.b16 %v8182, %v8180
        %v8193 = vpack.c.b16 %v8185, %v8183
        %v8194 = vpack.c.b16 %v8186, %v8184
        %v8195 = vpack.c.b16 %v8189, %v8187
        %v8196 = vpack.c.b16 %v8190, %v8188
        %v8204 = vsel %vm1498, %v8151, 0
        %v8207 = vsel %vm1498, %v8152, 0
        %8209 = vmatprep.subr.bf16.mxu0 0
        %8210 = vmatpush1.bf16.msra.mxu0 0
        %8211 = vmatprep.subr.bf16.mxu0 0
        %8212 = vmatpush1.bf16.msra.mxu0 0
        %8213 = vmatprep.subr.bf16.mxu0 0
        %8214 = vmatpush1.bf16.msra.mxu0 0
        %8215 = vmatprep.subr.bf16.mxu0 0
        %8216 = vmatpush1.bf16.msra.mxu0 0
        %8217 = vmatprep.subr.bf16.mxu0 0
        %8218 = vmatpush1.bf16.msra.mxu0 0
        %8219 = vmatprep.subr.bf16.mxu0 %v8196
        %8220 = vmatpush1.bf16.msra.mxu0 %v8195
        %8221 = vmatprep.subr.bf16.mxu0 %v8194
        %8222 = vmatpush1.bf16.msra.mxu0 %v8193
        %8223 = vmatprep.subr.bf16.mxu0 %v8192
        %8224 = vmatpush1.bf16.msra.mxu0 %v8191
        %8225 = vmatprep.subr.bf16.mxu0 0
        %8226 = vmatpush2.bf16.msra.mxu0 0
        %8227 = vmatprep.subr.bf16.mxu0 0
        %8228 = vmatpush2.bf16.msra.mxu0 0
        %8229 = vmatprep.subr.bf16.mxu0 0
        %8230 = vmatpush2.bf16.msra.mxu0 0
        %8231 = vmatprep.subr.bf16.mxu0 0
        %8232 = vmatpush2.bf16.msra.mxu0 0
        %8233 = vmatprep.subr.bf16.mxu0 0
        %8234 = vmatpush2.bf16.msra.mxu0 0
        %8235 = vmatprep.subr.bf16.mxu0 0
        %8236 = vmatpush2.bf16.msra.mxu0 0
        %8237 = vmatprep.subr.bf16.mxu0 0
        %8238 = vmatpush2.bf16.msra.mxu0 0
        %8239 = vmatprep.subr.bf16.mxu0 0
        %8240 = vmatpush2.bf16.msra.mxu0 0
        %8241 = vmatprep.mubr.bf16.mxu0 0
        %8242 = vmatmul.mubr.bf16.gmra.mxu0 %v8204
        %v8243 = vpop.f32.mrf.mxu0
        %v8244 = vadd.f32 %v8166, %v8243
        %v8245 = vpop.f32.mrf.mxu0
        %v8246 = vadd.f32 %v8170, %v8245
        %v8247 = vpop.f32.mrf.mxu0
        %v8248 = vadd.f32 %v8166, %v8247
        %v8249 = vpop.f32.mrf.mxu0
        %v8250 = vadd.f32 %v8170, %v8249
        %8251 = vmatprep.mubr.bf16.mxu0 0
        %8252 = vmatmul.mubr.bf16.gmra.mxu0 %v8207
        %v8253 = vpop.f32.mrf.mxu0
        %v8254 = vadd.f32 %v8166, %v8253
        %v8255 = vpop.f32.mrf.mxu0
        %v8256 = vadd.f32 %v8170, %v8255
        %v8257 = vpop.f32.mrf.mxu0
        %v8258 = vpop.f32.mrf.mxu0
        %8259 = vdwg.mxu0
        %v8260 = vmul.f32 %v8244, %v8244
        %v8261 = vmul.f32 %v8246, %v8246
        %v8262 = vmul.f32 %v8248, %v8248
        %v8263 = vmul.f32 %v8250, %v8250
        %v8264 = vmul.f32 %v8254, %v8254
        %v8265 = vmul.f32 %v8256, %v8256
        %v8266 = vmul.f32 %v8244, %v8260
        %v8267 = vmul.f32 %v8246, %v8261
        %v8268 = vmul.f32 %v8248, %v8262
        %v8269 = vmul.f32 %v8250, %v8263
        %v8270 = vmul.f32 %v8254, %v8264
        %v8271 = vmul.f32 %v8256, %v8265
        %v8272 = vmul.f32 %v8266, 0.044715
        %v8273 = vmul.f32 %v8267, 0.044715
        %v8274 = vmul.f32 %v8268, 0.044715
        %v8275 = vmul.f32 %v8269, 0.044715
        %v8276 = vmul.f32 %v8270, 0.044715
        %v8277 = vmul.f32 %v8271, 0.044715
        %v8278 = vadd.f32 %v8244, %v8272
        %v8279 = vadd.f32 %v8246, %v8273
        %v8280 = vadd.f32 %v8248, %v8274
        %v8281 = vadd.f32 %v8250, %v8275
        %v8282 = vadd.f32 %v8254, %v8276
        %v8283 = vadd.f32 %v8256, %v8277
        %v8284 = vmul.f32 %v8278, 0.7978846
        %v8285 = vmul.f32 %v8279, 0.7978846
        %v8286 = vmul.f32 %v8280, 0.7978846
        %v8287 = vmul.f32 %v8281, 0.7978846
        %v8288 = vmul.f32 %v8282, 0.7978846
        %v8289 = vmul.f32 %v8283, 0.7978846
        %v8290 = vtanh.pop %v8284
        %v8291 = vtanh.pop %v8285
        %v8292 = vtanh.pop %v8286
        %v8293 = vtanh.pop %v8287
        %v8294 = vtanh.pop %v8288
        %v8295 = vtanh.pop %v8289
        %v8296 = vadd.f32 %v8290, 1.0
        %v8297 = vadd.f32 %v8291, 1.0
        %v8298 = vadd.f32 %v8292, 1.0
        %v8299 = vadd.f32 %v8293, 1.0
        %v8300 = vadd.f32 %v8294, 1.0
        %v8301 = vadd.f32 %v8295, 1.0
        %v8302 = vmul.f32 %v8296, 0.5
        %v8303 = vmul.f32 %v8297, 0.5
        %v8304 = vmul.f32 %v8298, 0.5
        %v8305 = vmul.f32 %v8299, 0.5
        %v8306 = vmul.f32 %v8300, 0.5
        %v8307 = vmul.f32 %v8301, 0.5
        %v8308 = vmul.f32 %v8244, %v8302
        %v8309 = vmul.f32 %v8246, %v8303
        %v8310 = vmul.f32 %v8248, %v8304
        %v8311 = vmul.f32 %v8250, %v8305
        %v8312 = vmul.f32 %v8254, %v8306
        %v8313 = vmul.f32 %v8256, %v8307
        %v8314 = vpack.c.bf16 %v8310, %v8308
        %v8315 = vpack.c.bf16 %v8311, %v8309
        %v8316 = vpack.c.bf16 %v8312, %v8312
        %v8317 = vpack.c.bf16 %v8313, %v8313
        %s8318 = scalar_lea.vmem %s16, 96
        %v8319 = vld [vmem:[%s8318] sm:$0xf]
        %v8320 = vld [vmem:[%s8318 + $0x4] sm:$0xf]
        %v8321 = vld [vmem:[%s8318 + $0x8] sm:$0xf]
        %v8322 = vld [vmem:[%s8318 + $0xc] sm:$0xf]
        %v8323 = vld [vmem:[%s8318 + $0x10] sm:$0xf]
        %v8324 = vld [vmem:[%s8318 + $0x14] sm:$0xf]
        %v8325 = vld [vmem:[%s8318 + $0x18] sm:$0xf]
        %v8326 = vld [vmem:[%s8318 + $0x1c] sm:$0xf]
        %v8327 = vld [vmem:[%s8318 + $0x20] sm:$0xf]
        %v8328 = vld [vmem:[%s8318 + $0x24] sm:$0xf]
        %v8329 = vld [vmem:[%s8318 + $0x28] sm:$0xf]
        %v8330 = vld [vmem:[%s8318 + $0x2c] sm:$0xf]
        %v8331 = vld [vmem:[%s8318 + $0x30] sm:$0xf]
        %v8332 = vld [vmem:[%s8318 + $0x34] sm:$0xf]
        %v8333 = vld [vmem:[%s8318 + $0x38] sm:$0xf]
        %v8334 = vld [vmem:[%s8318 + $0x3c] sm:$0xf]
        %v8335 = vld [vmem:[%s8318 + $0x40] sm:$0xf]
        %v8336 = vld [vmem:[%s8318 + $0x44] sm:$0xf]
        %v8337 = vld [vmem:[%s8318 + $0x48] sm:$0xf]
        %v8338 = vld [vmem:[%s8318 + $0x4c] sm:$0xf]
        %v8339 = vld [vmem:[%s8318 + $0x50] sm:$0xf]
        %v8340 = vld [vmem:[%s8318 + $0x54] sm:$0xf]
        %v8341 = vld [vmem:[%s8318 + $0x58] sm:$0xf]
        %v8342 = vld [vmem:[%s8318 + $0x5c] sm:$0xf]
        %s8343 = scalar_lea.vmem %s17, 1
        %v8344 = vld [vmem:[%s8343] sm:$0x1]
        %v8346 = vlaneseq
        %v8347 = vshrl.u32 %v8346, 7
        %v8348 = vsub.s32 0, %v8347
        %v8349 = vrot.slane %v8344, %v8348
        %v8375 = vunpack.c.l.b16 %v8319
        %v8376 = vunpack.c.l.b16 %v8320
        %v8377 = vunpack.c.l.b16 %v8321
        %v8378 = vunpack.c.l.b16 %v8322
        %v8379 = vunpack.c.l.b16 %v8323
        %v8380 = vunpack.c.l.b16 %v8324
        %v8381 = vunpack.c.l.b16 %v8325
        %v8382 = vunpack.c.l.b16 %v8326
        %v8383 = vunpack.c.l.b16 %v8327
        %v8384 = vunpack.c.l.b16 %v8328
        %v8385 = vunpack.c.l.b16 %v8329
        %v8386 = vunpack.c.l.b16 %v8330
        %v8387 = vunpack.c.l.b16 %v8331
        %v8388 = vunpack.c.l.b16 %v8332
        %v8389 = vunpack.c.l.b16 %v8333
        %v8390 = vunpack.c.l.b16 %v8334
        %v8391 = vunpack.c.l.b16 %v8335
        %v8392 = vunpack.c.l.b16 %v8336
        %v8393 = vunpack.c.l.b16 %v8337
        %v8394 = vunpack.c.l.b16 %v8338
        %v8395 = vunpack.c.l.b16 %v8339
        %v8396 = vunpack.c.l.b16 %v8340
        %v8397 = vunpack.c.l.b16 %v8341
        %v8398 = vunpack.c.l.b16 %v8342
        %v8399 = vpack.c.b16 %v8376, %v8375
        %v8400 = vpack.c.b16 %v8378, %v8377
        %v8401 = vpack.c.b16 %v8380, %v8379
        %v8402 = vpack.c.b16 %v8382, %v8381
        %v8403 = vpack.c.b16 %v8384, %v8383
        %v8404 = vpack.c.b16 %v8386, %v8385
        %v8405 = vpack.c.b16 %v8388, %v8387
        %v8406 = vpack.c.b16 %v8390, %v8389
        %v8407 = vpack.c.b16 %v8392, %v8391
        %v8408 = vpack.c.b16 %v8394, %v8393
        %v8409 = vpack.c.b16 %v8396, %v8395
        %v8410 = vpack.c.b16 %v8398, %v8397
        %v8424 = vsel %vm1012, %v8315, 0
        %v8427 = vsel %vm1012, %v8317, 0
        %8429 = vmatprep.subr.bf16.mxu0 0
        %8430 = vmatpush1.bf16.msra.mxu0 %v8406
        %8431 = vmatprep.subr.bf16.mxu0 0
        %8432 = vmatpush1.bf16.msra.mxu0 %v8405
        %8433 = vmatprep.subr.bf16.mxu0 0
        %8434 = vmatpush1.bf16.msra.mxu0 %v8404
        %8435 = vmatprep.subr.bf16.mxu0 0
        %8436 = vmatpush1.bf16.msra.mxu0 %v8403
        %8437 = vmatprep.subr.bf16.mxu0 0
        %8438 = vmatpush1.bf16.msra.mxu0 %v8402
        %8439 = vmatprep.subr.bf16.mxu0 0
        %8440 = vmatpush1.bf16.msra.mxu0 %v8401
        %8441 = vmatprep.subr.bf16.mxu0 0
        %8442 = vmatpush1.bf16.msra.mxu0 %v8400
        %8443 = vmatprep.subr.bf16.mxu0 0
        %8444 = vmatpush1.bf16.msra.mxu0 %v8399
        %8445 = vmatprep.subr.bf16.mxu0 0
        %8446 = vmatpush2.bf16.msra.mxu0 0
        %8447 = vmatprep.subr.bf16.mxu0 0
        %8448 = vmatpush2.bf16.msra.mxu0 0
        %8449 = vmatprep.subr.bf16.mxu0 0
        %8450 = vmatpush2.bf16.msra.mxu0 0
        %8451 = vmatprep.subr.bf16.mxu0 0
        %8452 = vmatpush2.bf16.msra.mxu0 0
        %8453 = vmatprep.subr.bf16.mxu0 0
        %8454 = vmatpush2.bf16.msra.mxu0 %v8410
        %8455 = vmatprep.subr.bf16.mxu0 0
        %8456 = vmatpush2.bf16.msra.mxu0 %v8409
        %8457 = vmatprep.subr.bf16.mxu0 0
        %8458 = vmatpush2.bf16.msra.mxu0 %v8408
        %8459 = vmatprep.subr.bf16.mxu0 0
        %8460 = vmatpush2.bf16.msra.mxu0 %v8407
        %8461 = vmatprep.mubr.bf16.mxu0 %v8424
        %8462 = vmatmul.mubr.bf16.gmra.mxu0 %v8314
        %v8463 = vpop.f32.mrf.mxu0
        %v8464 = vadd.f32 %v8349, %v8463
        %v8465 = vpop.f32.mrf.mxu0
        %v8466 = vpop.f32.mrf.mxu0
        %v8467 = vadd.f32 %v8349, %v8466
        %v8468 = vpop.f32.mrf.mxu0
        %8469 = vmatprep.mubr.bf16.mxu0 %v8427
        %8470 = vmatmul.mubr.bf16.gmra.mxu0 %v8316
        %v8471 = vpop.f32.mrf.mxu0
        %v8472 = vadd.f32 %v8349, %v8471
        %v8473 = vpop.f32.mrf.mxu0
        %v8474 = vpop.f32.mrf.mxu0
        %v8475 = vpop.f32.mrf.mxu0
        %8476 = vdwg.mxu0
        %v8480 = vcombine.high %v8464, %v8464
        %v8482 = vunpack.c.l.s4 1966171168
        %v8483 = vunpack.c.0.s8 %v8482
        %v8484 = vlaneseq
        %v8485 = vshrl.u32 %v8484, 7
        %v8486 = vsub.s32 %v8483, %v8485
        %v8487 = vrot.slane %v8464, %v8486
        %v8489 = vunpack.c.l.s4 1966171168
        %v8490 = vunpack.c.0.s8 %v8489
        %v8491 = vlaneseq
        %v8492 = vshrl.u32 %v8491, 7
        %v8493 = vsub.s32 %v8490, %v8492
        %v8494 = vrot.slane %v8480, %v8493
        %v8495 = vcombine.high %v8487, %v8487
        %v8496 = vcombine.high %v8494, %v8494
        %v8498 = vunpack.c.l.s4 1966171168
        %v8499 = vunpack.c.0.s8 %v8498
        %v8500 = vlaneseq
        %v8501 = vshrl.u32 %v8500, 7
        %v8502 = vsub.s32 %v8499, %v8501
        %v8503 = vrot.slane %v8487, %v8502
        %v8505 = vunpack.c.l.s4 1966171168
        %v8506 = vunpack.c.0.s8 %v8505
        %v8507 = vlaneseq
        %v8508 = vshrl.u32 %v8507, 7
        %v8509 = vsub.s32 %v8506, %v8508
        %v8510 = vrot.slane %v8494, %v8509
        %v8512 = vunpack.c.l.s4 1966171168
        %v8513 = vunpack.c.0.s8 %v8512
        %v8514 = vlaneseq
        %v8515 = vshrl.u32 %v8514, 7
        %v8516 = vsub.s32 %v8513, %v8515
        %v8517 = vrot.slane %v8495, %v8516
        %v8519 = vunpack.c.l.s4 1966171168
        %v8520 = vunpack.c.0.s8 %v8519
        %v8521 = vlaneseq
        %v8522 = vshrl.u32 %v8521, 7
        %v8523 = vsub.s32 %v8520, %v8522
        %v8524 = vrot.slane %v8496, %v8523
        %v8525 = vcombine.high %v8503, %v8503
        %v8526 = vcombine.high %v8510, %v8510
        %v8527 = vcombine.high %v8517, %v8517
        %v8528 = vcombine.high %v8524, %v8524
        %v8529 = vcombine.high %v8467, %v8467
        %v8531 = vunpack.c.l.s4 1966171168
        %v8532 = vunpack.c.0.s8 %v8531
        %v8533 = vlaneseq
        %v8534 = vshrl.u32 %v8533, 7
        %v8535 = vsub.s32 %v8532, %v8534
        %v8536 = vrot.slane %v8467, %v8535
        %v8538 = vunpack.c.l.s4 1966171168
        %v8539 = vunpack.c.0.s8 %v8538
        %v8540 = vlaneseq
        %v8541 = vshrl.u32 %v8540, 7
        %v8542 = vsub.s32 %v8539, %v8541
        %v8543 = vrot.slane %v8529, %v8542
        %v8544 = vcombine.high %v8536, %v8536
        %v8545 = vcombine.high %v8543, %v8543
        %v8547 = vunpack.c.l.s4 1966171168
        %v8548 = vunpack.c.0.s8 %v8547
        %v8549 = vlaneseq
        %v8550 = vshrl.u32 %v8549, 7
        %v8551 = vsub.s32 %v8548, %v8550
        %v8552 = vrot.slane %v8536, %v8551
        %v8554 = vunpack.c.l.s4 1966171168
        %v8555 = vunpack.c.0.s8 %v8554
        %v8556 = vlaneseq
        %v8557 = vshrl.u32 %v8556, 7
        %v8558 = vsub.s32 %v8555, %v8557
        %v8559 = vrot.slane %v8543, %v8558
        %v8561 = vunpack.c.l.s4 1966171168
        %v8562 = vunpack.c.0.s8 %v8561
        %v8563 = vlaneseq
        %v8564 = vshrl.u32 %v8563, 7
        %v8565 = vsub.s32 %v8562, %v8564
        %v8566 = vrot.slane %v8544, %v8565
        %v8568 = vunpack.c.l.s4 1966171168
        %v8569 = vunpack.c.0.s8 %v8568
        %v8570 = vlaneseq
        %v8571 = vshrl.u32 %v8570, 7
        %v8572 = vsub.s32 %v8569, %v8571
        %v8573 = vrot.slane %v8545, %v8572
        %v8574 = vcombine.high %v8552, %v8552
        %v8575 = vcombine.high %v8559, %v8559
        %v8576 = vcombine.high %v8566, %v8566
        %v8577 = vcombine.high %v8573, %v8573
        %v8579 = vunpack.c.l.s4 1966171168
        %v8580 = vunpack.c.0.s8 %v8579
        %v8581 = vlaneseq
        %v8582 = vshrl.u32 %v8581, 7
        %v8583 = vsub.s32 %v8580, %v8582
        %v8584 = vrot.slane %v8472, %v8583
        %v8585 = vcombine.high %v8584, %v8584
        %v8587 = vunpack.c.l.s4 1966171168
        %v8588 = vunpack.c.0.s8 %v8587
        %v8589 = vlaneseq
        %v8590 = vshrl.u32 %v8589, 7
        %v8591 = vsub.s32 %v8588, %v8590
        %v8592 = vrot.slane %v8584, %v8591
        %v8594 = vunpack.c.l.s4 1966171168
        %v8595 = vunpack.c.0.s8 %v8594
        %v8596 = vlaneseq
        %v8597 = vshrl.u32 %v8596, 7
        %v8598 = vsub.s32 %v8595, %v8597
        %v8599 = vrot.slane %v8585, %v8598
        %v8600 = vcombine.high %v8592, %v8592
        %v8601 = vcombine.high %v8599, %v8599
        %v8602 = vcombine.low %v8503, %v8517
        %v8603 = vcombine.low %v8525, %v8527
        %v8605 = vunpack.c.l.s4 1966171168
        %v8606 = vunpack.c.0.s8 %v8605
        %v8607 = vlaneseq
        %v8608 = vshrl.u32 %v8607, 7
        %v8609 = vsub.s32 %v8606, %v8608
        %v8610 = vrot.slane %v8602, %v8609
        %v8612 = vunpack.c.l.s4 1966171168
        %v8613 = vunpack.c.0.s8 %v8612
        %v8614 = vlaneseq
        %v8615 = vshrl.u32 %v8614, 7
        %v8616 = vsub.s32 %v8613, %v8615
        %v8617 = vrot.slane %v8603, %v8616
        %v8619 = vunpack.c.l.s4 1966171168
        %v8620 = vunpack.c.0.s8 %v8619
        %v8621 = vlaneseq
        %v8622 = vshrl.u32 %v8621, 7
        %v8623 = vsub.s32 %v8620, %v8622
        %v8624 = vrot.slane %v8510, %v8623
        %v8625 = vcombine.low %v8610, %v8617
        %v8627 = vunpack.c.l.s4 1966171168
        %v8628 = vunpack.c.0.s8 %v8627
        %v8629 = vlaneseq
        %v8630 = vshrl.u32 %v8629, 7
        %v8631 = vsub.s32 %v8628, %v8630
        %v8632 = vrot.slane %v8625, %v8631
        %v8634 = vunpack.c.l.s4 1966171168
        %v8635 = vunpack.c.0.s8 %v8634
        %v8636 = vlaneseq
        %v8637 = vshrl.u32 %v8636, 7
        %v8638 = vsub.s32 %v8635, %v8637
        %v8639 = vrot.slane %v8624, %v8638
        %v8640 = vcombine.low %v8632, %v8639
        %v8641 = vcombine.low %v8524, %v8526
        %v8642 = vcombine.low %v8528, %v8552
        %v8644 = vunpack.c.l.s4 1966171168
        %v8645 = vunpack.c.0.s8 %v8644
        %v8646 = vlaneseq
        %v8647 = vshrl.u32 %v8646, 7
        %v8648 = vsub.s32 %v8645, %v8647
        %v8649 = vrot.slane %v8641, %v8648
        %v8651 = vunpack.c.l.s4 1966171168
        %v8652 = vunpack.c.0.s8 %v8651
        %v8653 = vlaneseq
        %v8654 = vshrl.u32 %v8653, 7
        %v8655 = vsub.s32 %v8652, %v8654
        %v8656 = vrot.slane %v8642, %v8655
        %v8658 = vunpack.c.l.s4 1966171168
        %v8659 = vunpack.c.0.s8 %v8658
        %v8660 = vlaneseq
        %v8661 = vshrl.u32 %v8660, 7
        %v8662 = vsub.s32 %v8659, %v8661
        %v8663 = vrot.slane %v8566, %v8662
        %v8664 = vcombine.low %v8649, %v8656
        %v8666 = vunpack.c.l.s4 1966171168
        %v8667 = vunpack.c.0.s8 %v8666
        %v8668 = vlaneseq
        %v8669 = vshrl.u32 %v8668, 7
        %v8670 = vsub.s32 %v8667, %v8669
        %v8671 = vrot.slane %v8664, %v8670
        %v8673 = vunpack.c.l.s4 1966171168
        %v8674 = vunpack.c.0.s8 %v8673
        %v8675 = vlaneseq
        %v8676 = vshrl.u32 %v8675, 7
        %v8677 = vsub.s32 %v8674, %v8676
        %v8678 = vrot.slane %v8663, %v8677
        %v8679 = vcombine.low %v8671, %v8678
        %v8680 = vcombine.low %v8574, %v8576
        %v8681 = vcombine.low %v8559, %v8573
        %v8683 = vunpack.c.l.s4 1966171168
        %v8684 = vunpack.c.0.s8 %v8683
        %v8685 = vlaneseq
        %v8686 = vshrl.u32 %v8685, 7
        %v8687 = vsub.s32 %v8684, %v8686
        %v8688 = vrot.slane %v8680, %v8687
        %v8690 = vunpack.c.l.s4 1966171168
        %v8691 = vunpack.c.0.s8 %v8690
        %v8692 = vlaneseq
        %v8693 = vshrl.u32 %v8692, 7
        %v8694 = vsub.s32 %v8691, %v8693
        %v8695 = vrot.slane %v8681, %v8694
        %v8697 = vunpack.c.l.s4 1966171168
        %v8698 = vunpack.c.0.s8 %v8697
        %v8699 = vlaneseq
        %v8700 = vshrl.u32 %v8699, 7
        %v8701 = vsub.s32 %v8698, %v8700
        %v8702 = vrot.slane %v8575, %v8701
        %v8703 = vcombine.low %v8688, %v8695
        %v8705 = vunpack.c.l.s4 1966171168
        %v8706 = vunpack.c.0.s8 %v8705
        %v8707 = vlaneseq
        %v8708 = vshrl.u32 %v8707, 7
        %v8709 = vsub.s32 %v8706, %v8708
        %v8710 = vrot.slane %v8703, %v8709
        %v8712 = vunpack.c.l.s4 1966171168
        %v8713 = vunpack.c.0.s8 %v8712
        %v8714 = vlaneseq
        %v8715 = vshrl.u32 %v8714, 7
        %v8716 = vsub.s32 %v8713, %v8715
        %v8717 = vrot.slane %v8702, %v8716
        %v8718 = vcombine.low %v8710, %v8717
        %v8719 = vcombine.low %v8577, %v8592
        %v8720 = vcombine.low %v8599, %v8600
        %v8722 = vunpack.c.l.s4 1966171168
        %v8723 = vunpack.c.0.s8 %v8722
        %v8724 = vlaneseq
        %v8725 = vshrl.u32 %v8724, 7
        %v8726 = vsub.s32 %v8723, %v8725
        %v8727 = vrot.slane %v8719, %v8726
        %v8729 = vunpack.c.l.s4 1966171168
        %v8730 = vunpack.c.0.s8 %v8729
        %v8731 = vlaneseq
        %v8732 = vshrl.u32 %v8731, 7
        %v8733 = vsub.s32 %v8730, %v8732
        %v8734 = vrot.slane %v8720, %v8733
        %v8736 = vunpack.c.l.s4 1966171168
        %v8737 = vunpack.c.0.s8 %v8736
        %v8738 = vlaneseq
        %v8739 = vshrl.u32 %v8738, 7
        %v8740 = vsub.s32 %v8737, %v8739
        %v8741 = vrot.slane %v8601, %v8740
        %v8742 = vcombine.low %v8727, %v8734
        %v8744 = vunpack.c.l.s4 1966171168
        %v8745 = vunpack.c.0.s8 %v8744
        %v8746 = vlaneseq
        %v8747 = vshrl.u32 %v8746, 7
        %v8748 = vsub.s32 %v8745, %v8747
        %v8749 = vrot.slane %v8742, %v8748
        %v8751 = vunpack.c.l.s4 1966171168
        %v8752 = vunpack.c.0.s8 %v8751
        %v8753 = vlaneseq
        %v8754 = vshrl.u32 %v8753, 7
        %v8755 = vsub.s32 %v8752, %v8754
        %v8756 = vrot.slane %v8741, %v8755
        %v8757 = vcombine.low %v8749, %v8756
        %v8762 = vadd.f32 %v7786, %v8640
        %v8763 = vadd.f32 %v7787, %v8679
        %v8764 = vadd.f32 %v7788, %v8718
        %v8765 = vadd.f32 %v7789, %v8757
        %v8766 = vld [vmem:[%s18] sm:$0x1]
        %v8767 = vld [vmem:[%s19] sm:$0x1]
        %v8772 = vrot.slane %v8763, 7
        %vm8773 = vcmask 1041409
        %v8774 = vsel %vm8773, %v8772, %v8762
        %v8775 = vrot.slane %v8764, 6
        %vm8776 = vcmask 1042434
        %v8777 = vsel %vm8776, %v8775, %v8774
        %v8778 = vrot.slane %v8765, 5
        %vm8779 = vcmask 1043459
        %v8780 = vsel %vm8779, %v8778, %v8777
        %vm8782 = vcmask 388096
        %v8783 = vsel %vm8782, %v8780, 0.0
        %8784 = vadd.xlane.f32.xlu0 %v8783
        %v8785 = vpop.xlane.xlu0 %8784
        %v8786 = vmul.f32 %v8785, %v1102
        %v8788 = vrot.slane %v8786, 1
        %v8789 = vrot.slane %v8786, 2
        %v8790 = vrot.slane %v8786, 3
        %v8795 = vsub.f32 %v8762, %v8786
        %v8796 = vsub.f32 %v8763, %v8788
        %v8797 = vsub.f32 %v8764, %v8789
        %v8798 = vsub.f32 %v8765, %v8790
        %v8799 = vmul.f32 %v8795, %v8795
        %v8800 = vmul.f32 %v8796, %v8796
        %v8801 = vmul.f32 %v8797, %v8797
        %v8802 = vmul.f32 %v8798, %v8798
        %v8807 = vrot.slane %v8800, 7
        %v8808 = vsel %vm8773, %v8807, %v8799
        %v8809 = vrot.slane %v8801, 6
        %v8810 = vsel %vm8776, %v8809, %v8808
        %v8811 = vrot.slane %v8802, 5
        %v8812 = vsel %vm8779, %v8811, %v8810
        %v8814 = vsel %vm8782, %v8812, 0.0
        %8815 = vadd.xlane.f32.xlu0 %v8814
        %v8816 = vpop.xlane.xlu0 %8815
        %v8817 = vmul.f32 %v8816, %v1102
        %v8818 = vadd.f32 %v8817, 1e-06
        %v8819 = vrsqrt.pop %v8818
        %v8821 = vrot.slane %v8819, 1
        %v8822 = vrot.slane %v8819, 2
        %v8823 = vrot.slane %v8819, 3
        %v8828 = vmul.f32 %v8795, %v8819
        %v8829 = vmul.f32 %v8796, %v8821
        %v8830 = vmul.f32 %v8797, %v8822
        %v8831 = vmul.f32 %v8798, %v8823
        %v8833 = vlaneseq
        %v8834 = vshrl.u32 %v8833, 7
        %v8835 = vsub.s32 0, %v8834
        %v8836 = vrot.slane %v8766, %v8835
        %v8838 = vmul.f32 %v8828, %v8836
        %v8839 = vmul.f32 %v8829, %v8836
        %v8840 = vmul.f32 %v8830, %v8836
        %v8841 = vmul.f32 %v8831, %v8836
        %v8843 = vlaneseq
        %v8844 = vshrl.u32 %v8843, 7
        %v8845 = vsub.s32 0, %v8844
        %v8846 = vrot.slane %v8767, %v8845
        %v8848 = vadd.f32 %v8838, %v8846
        %v8849 = vadd.f32 %v8839, %v8846
        %v8850 = vadd.f32 %v8840, %v8846
        %v8851 = vadd.f32 %v8841, %v8846
        %v8852 = vpack.c.bf16 %v8848, %v8848
        %v8853 = vpack.c.bf16 %v8849, %v8849
        %v8854 = vpack.c.bf16 %v8850, %v8850
        %v8855 = vpack.c.bf16 %v8851, %v8851
        %v8856 = vld [vmem:[%s20] sm:$0xf]
        %v8857 = vld [vmem:[%s20 + $0x4] sm:$0xf]
        %v8858 = vld [vmem:[%s20 + $0x8] sm:$0xf]
        %v8859 = vld [vmem:[%s20 + $0xc] sm:$0xf]
        %v8860 = vld [vmem:[%s20 + $0x10] sm:$0xf]
        %v8861 = vld [vmem:[%s20 + $0x14] sm:$0xf]
        %v8862 = vld [vmem:[%s21] sm:$0x1]
        %v8864 = vlaneseq
        %v8865 = vshrl.u32 %v8864, 7
        %v8866 = vsub.s32 0, %v8865
        %v8867 = vrot.slane %v8862, %v8866
        %v8873 = vunpack.c.l.b16 %v8852
        %v8874 = vunpack.c.l.b16 %v8853
        %v8875 = vunpack.c.l.b16 %v8854
        %v8876 = vunpack.c.l.b16 %v8855
        %v8877 = vrot.slane %v8874, 7
        %v8878 = vsel %vm8773, %v8877, %v8873
        %v8879 = vrot.slane %v8875, 6
        %v8880 = vsel %vm8776, %v8879, %v8878
        %v8881 = vrot.slane %v8876, 5
        %v8882 = vsel %vm8779, %v8881, %v8880
        %v8883 = vpack.c.b16 %v8882, %v8882
        %v8890 = vunpack.c.l.b16 %v8856
        %v8891 = vunpack.c.l.b16 %v8857
        %v8892 = vunpack.c.l.b16 %v8858
        %v8893 = vunpack.c.l.b16 %v8859
        %v8894 = vunpack.c.l.b16 %v8860
        %v8895 = vunpack.c.l.b16 %v8861
        %v8896 = vpack.c.b16 %v8891, %v8890
        %v8897 = vpack.c.b16 %v8893, %v8892
        %v8898 = vpack.c.b16 %v8895, %v8894
        %v8903 = vsel %vm1498, %v8883, 0
        %8905 = vmatprep.subr.bf16.mxu0 0
        %8906 = vmatpush1.bf16.msra.mxu0 0
        %8907 = vmatprep.subr.bf16.mxu0 0
        %8908 = vmatpush1.bf16.msra.mxu0 0
        %8909 = vmatprep.subr.bf16.mxu0 0
        %8910 = vmatpush1.bf16.msra.mxu0 0
        %8911 = vmatprep.subr.bf16.mxu0 0
        %8912 = vmatpush1.bf16.msra.mxu0 0
        %8913 = vmatprep.subr.bf16.mxu0 0
        %8914 = vmatpush1.bf16.msra.mxu0 0
        %8915 = vmatprep.subr.bf16.mxu0 0
        %8916 = vmatpush1.bf16.msra.mxu0 %v8898
        %8917 = vmatprep.subr.bf16.mxu0 0
        %8918 = vmatpush1.bf16.msra.mxu0 %v8897
        %8919 = vmatprep.subr.bf16.mxu0 0
        %8920 = vmatpush1.bf16.msra.mxu0 %v8896
        %8921 = vmatprep.subr.bf16.mxu0 0
        %8922 = vmatpush2.bf16.msra.mxu0 0
        %8923 = vmatprep.subr.bf16.mxu0 0
        %8924 = vmatpush2.bf16.msra.mxu0 0
        %8925 = vmatprep.subr.bf16.mxu0 0
        %8926 = vmatpush2.bf16.msra.mxu0 0
        %8927 = vmatprep.subr.bf16.mxu0 0
        %8928 = vmatpush2.bf16.msra.mxu0 0
        %8929 = vmatprep.subr.bf16.mxu0 0
        %8930 = vmatpush2.bf16.msra.mxu0 0
        %8931 = vmatprep.subr.bf16.mxu0 0
        %8932 = vmatpush2.bf16.msra.mxu0 0
        %8933 = vmatprep.subr.bf16.mxu0 0
        %8934 = vmatpush2.bf16.msra.mxu0 0
        %8935 = vmatprep.subr.bf16.mxu0 0
        %8936 = vmatpush2.bf16.msra.mxu0 0
        %8937 = vmatprep.mubr.bf16.mxu0 0
        %8938 = vmatmul.mubr.bf16.gmra.mxu0 %v8903
        %v8939 = vpop.f32.mrf.mxu0
        %v8940 = vadd.f32 %v8867, %v8939
        %v8941 = vpop.f32.mrf.mxu0
        %v8942 = vpop.f32.mrf.mxu0
        %v8943 = vpop.f32.mrf.mxu0
        %8944 = vdwg.mxu0
        %v8945 = vmul.f32 %v8940, %v8940
        %v8946 = vmul.f32 %v8940, %v8945
        %v8947 = vmul.f32 %v8946, 0.044715
        %v8948 = vadd.f32 %v8940, %v8947
        %v8949 = vmul.f32 %v8948, 0.7978846
        %v8950 = vtanh.pop %v8949
        %v8951 = vadd.f32 %v8950, 1.0
        %v8952 = vmul.f32 %v8951, 0.5
        %v8953 = vmul.f32 %v8940, %v8952
        %v8954 = vpack.c.bf16 %v8953, %v8953
        %v8955 = vld [vmem:[%s22] sm:$0xf]
        %v8956 = vld [vmem:[%s22 + $0x4] sm:$0xf]
        %v8957 = vld [vmem:[%s22 + $0x8] sm:$0xf]
        %v8958 = vld [vmem:[%s22 + $0xc] sm:$0xf]
        %v8959 = vld [vmem:[%s22 + $0x10] sm:$0xf]
        %v8960 = vld [vmem:[%s22 + $0x14] sm:$0xf]
        %v8961 = vld [vmem:[%s22 + $0x18] sm:$0xf]
        %v8962 = vld [vmem:[%s22 + $0x1c] sm:$0xf]
        %v8963 = vld [vmem:[%s23] sm:$0x1]
        %v8965 = vlaneseq
        %v8966 = vshrl.u32 %v8965, 7
        %v8967 = vsub.s32 0, %v8966
        %v8968 = vrot.slane %v8963, %v8967
        %v8978 = vunpack.c.l.b16 %v8955
        %v8979 = vunpack.c.l.b16 %v8956
        %v8980 = vunpack.c.l.b16 %v8957
        %v8981 = vunpack.c.l.b16 %v8958
        %v8982 = vunpack.c.l.b16 %v8959
        %v8983 = vunpack.c.l.b16 %v8960
        %v8984 = vunpack.c.l.b16 %v8961
        %v8985 = vunpack.c.l.b16 %v8962
        %v8986 = vpack.c.b16 %v8979, %v8978
        %v8987 = vpack.c.b16 %v8981, %v8980
        %v8988 = vpack.c.b16 %v8983, %v8982
        %v8989 = vpack.c.b16 %v8985, %v8984
        %v8995 = vsel %vm1012, %v8954, 0
        %8997 = vmatprep.subr.bf16.mxu0 0
        %8998 = vmatpush1.bf16.msra.mxu0 0
        %8999 = vmatprep.subr.bf16.mxu0 0
        %9000 = vmatpush1.bf16.msra.mxu0 0
        %9001 = vmatprep.subr.bf16.mxu0 0
        %9002 = vmatpush1.bf16.msra.mxu0 0
        %9003 = vmatprep.subr.bf16.mxu0 0
        %9004 = vmatpush1.bf16.msra.mxu0 0
        %9005 = vmatprep.subr.bf16.mxu0 0
        %9006 = vmatpush1.bf16.msra.mxu0 %v8989
        %9007 = vmatprep.subr.bf16.mxu0 0
        %9008 = vmatpush1.bf16.msra.mxu0 %v8988
        %9009 = vmatprep.subr.bf16.mxu0 0
        %9010 = vmatpush1.bf16.msra.mxu0 %v8987
        %9011 = vmatprep.subr.bf16.mxu0 0
        %9012 = vmatpush1.bf16.msra.mxu0 %v8986
        %9013 = vmatprep.subr.bf16.mxu0 0
        %9014 = vmatpush2.bf16.msra.mxu0 0
        %9015 = vmatprep.subr.bf16.mxu0 0
        %9016 = vmatpush2.bf16.msra.mxu0 0
        %9017 = vmatprep.subr.bf16.mxu0 0
        %9018 = vmatpush2.bf16.msra.mxu0 0
        %9019 = vmatprep.subr.bf16.mxu0 0
        %9020 = vmatpush2.bf16.msra.mxu0 0
        %9021 = vmatprep.subr.bf16.mxu0 0
        %9022 = vmatpush2.bf16.msra.mxu0 0
        %9023 = vmatprep.subr.bf16.mxu0 0
        %9024 = vmatpush2.bf16.msra.mxu0 0
        %9025 = vmatprep.subr.bf16.mxu0 0
        %9026 = vmatpush2.bf16.msra.mxu0 0
        %9027 = vmatprep.subr.bf16.mxu0 0
        %9028 = vmatpush2.bf16.msra.mxu0 0
        %9029 = vmatprep.mubr.bf16.mxu0 0
        %9030 = vmatmul.mubr.bf16.gmra.mxu0 %v8995
        %v9031 = vpop.f32.mrf.mxu0
        %v9032 = vadd.f32 %v8968, %v9031
        %v9033 = vpop.f32.mrf.mxu0
        %v9034 = vpop.f32.mrf.mxu0
        %v9035 = vpop.f32.mrf.mxu0
        %9036 = vdwg.mxu0
        %v9037 = vmul.f32 %v9032, %v9032
        %v9038 = vmul.f32 %v9032, %v9037
        %v9039 = vmul.f32 %v9038, 0.044715
        %v9040 = vadd.f32 %v9032, %v9039
        %v9041 = vmul.f32 %v9040, 0.7978846
        %v9042 = vtanh.pop %v9041
        %v9043 = vadd.f32 %v9042, 1.0
        %v9044 = vmul.f32 %v9043, 0.5
        %v9045 = vmul.f32 %v9032, %v9044
        %v9046 = vpack.c.bf16 %v9045, %v9045
        %v9047 = vld [vmem:[%s24] sm:$0xf]
        %v9048 = vld [vmem:[%s24 + $0x4] sm:$0xf]
        %v9049 = vld [vmem:[%s24 + $0x8] sm:$0xf]
        %v9050 = vld [vmem:[%s24 + $0xc] sm:$0xf]
        %v9051 = vld [vmem:[%s24 + $0x10] sm:$0xf]
        %v9052 = vld [vmem:[%s24 + $0x14] sm:$0xf]
        %v9053 = vld [vmem:[%s24 + $0x18] sm:$0xf]
        %v9054 = vld [vmem:[%s24 + $0x1c] sm:$0xf]
        %v9055 = vld [vmem:[%s25] sm:$0x1]
        %v9057 = vlaneseq
        %v9058 = vshrl.u32 %v9057, 7
        %v9059 = vsub.s32 0, %v9058
        %v9060 = vrot.slane %v9055, %v9059
        %v9070 = vunpack.c.l.b16 %v9047
        %v9071 = vunpack.c.l.b16 %v9048
        %v9072 = vunpack.c.l.b16 %v9049
        %v9073 = vunpack.c.l.b16 %v9050
        %v9074 = vunpack.c.l.b16 %v9051
        %v9075 = vunpack.c.l.b16 %v9052
        %v9076 = vunpack.c.l.b16 %v9053
        %v9077 = vunpack.c.l.b16 %v9054
        %v9078 = vpack.c.b16 %v9071, %v9070
        %v9079 = vpack.c.b16 %v9073, %v9072
        %v9080 = vpack.c.b16 %v9075, %v9074
        %v9081 = vpack.c.b16 %v9077, %v9076
        %v9087 = vsel %vm1012, %v9046, 0
        %9089 = vmatprep.subr.bf16.mxu0 0
        %9090 = vmatpush1.bf16.msra.mxu0 0
        %9091 = vmatprep.subr.bf16.mxu0 0
        %9092 = vmatpush1.bf16.msra.mxu0 0
        %9093 = vmatprep.subr.bf16.mxu0 0
        %9094 = vmatpush1.bf16.msra.mxu0 0
        %9095 = vmatprep.subr.bf16.mxu0 0
        %9096 = vmatpush1.bf16.msra.mxu0 0
        %9097 = vmatprep.subr.bf16.mxu0 0
        %9098 = vmatpush1.bf16.msra.mxu0 %v9081
        %9099 = vmatprep.subr.bf16.mxu0 0
        %9100 = vmatpush1.bf16.msra.mxu0 %v9080
        %9101 = vmatprep.subr.bf16.mxu0 0
        %9102 = vmatpush1.bf16.msra.mxu0 %v9079
        %9103 = vmatprep.subr.bf16.mxu0 0
        %9104 = vmatpush1.bf16.msra.mxu0 %v9078
        %9105 = vmatprep.subr.bf16.mxu0 0
        %9106 = vmatpush2.bf16.msra.mxu0 0
        %9107 = vmatprep.subr.bf16.mxu0 0
        %9108 = vmatpush2.bf16.msra.mxu0 0
        %9109 = vmatprep.subr.bf16.mxu0 0
        %9110 = vmatpush2.bf16.msra.mxu0 0
        %9111 = vmatprep.subr.bf16.mxu0 0
        %9112 = vmatpush2.bf16.msra.mxu0 0
        %9113 = vmatprep.subr.bf16.mxu0 0
        %9114 = vmatpush2.bf16.msra.mxu0 0
        %9115 = vmatprep.subr.bf16.mxu0 0
        %9116 = vmatpush2.bf16.msra.mxu0 0
        %9117 = vmatprep.subr.bf16.mxu0 0
        %9118 = vmatpush2.bf16.msra.mxu0 0
        %9119 = vmatprep.subr.bf16.mxu0 0
        %9120 = vmatpush2.bf16.msra.mxu0 0
        %9121 = vmatprep.mubr.bf16.mxu0 0
        %9122 = vmatmul.mubr.bf16.gmra.mxu0 %v9087
        %v9123 = vpop.f32.mrf.mxu0
        %v9124 = vadd.f32 %v9060, %v9123
        %v9125 = vpop.f32.mrf.mxu0
        %v9126 = vpop.f32.mrf.mxu0
        %v9127 = vpop.f32.mrf.mxu0
        %9128 = vdwg.mxu0
        %v9129 = vmul.f32 %v9124, %v9124
        %vm9130 = vcmask 257024
        %v9131 = vsel %vm9130, %v9129, 0.0
        %9132 = vadd.xlane.f32.xlu0 %v9131
        %v9133 = vpop.xlane.xlu0 %9132
        %v9134 = vmax.f32 %v9133, 1e-24
        %v9135 = vrsqrt.pop %v9134
        %v9136 = vmul.f32 %v9124, %v9135
        %v9137 = vld [vmem:[%s26] sm:$0xff]
        %v9138 = vld [vmem:[%s26 + $0x8] sm:$0xff]
        %v9139 = vld [vmem:[%s26 + $0x10] sm:$0xff]
        %v9140 = vld [vmem:[%s26 + $0x18] sm:$0xff]
        %v9141 = vmul.f32 %v9137, %v9137
        %v9142 = vmul.f32 %v9138, %v9138
        %v9143 = vmul.f32 %v9139, %v9139
        %v9144 = vmul.f32 %v9140, %v9140
        %vm9145 = vcmask 785408
        %v9146 = vsel %vm9145, %v9141, 0.0
        %v9147 = vsel %vm9145, %v9142, 0.0
        %v9148 = vadd.f32 %v9146, %v9147
        %v9149 = vsel %vm9145, %v9143, 0.0
        %v9150 = vadd.f32 %v9148, %v9149
        %v9151 = vsel %vm9145, %v9144, 0.0
        %v9152 = vadd.f32 %v9150, %v9151
        %v9153 = vrot.slane %v9152, 4
        %v9154 = vadd.f32 %v9152, %v9153
        %v9155 = vrot.slane %v9154, 2
        %v9156 = vadd.f32 %v9154, %v9155
        %v9157 = vrot.slane %v9156, 1
        %v9158 = vadd.f32 %v9156, %v9157
        %v9159 = vrsqrt.pop %v9158
        %v9160 = vmul.f32 %v9137, %v9159
        %v9161 = vmul.f32 %v9138, %v9159
        %v9162 = vmul.f32 %v9139, %v9159
        %v9163 = vmul.f32 %v9140, %v9159
        %v9164 = vld [vmem:[%s27] sm:$0x1]
        %v9166 = vlaneseq
        %v9167 = vshrl.u32 %v9166, 7
        %v9168 = vsub.s32 0, %v9167
        %v9169 = vrot.slane %v9164, %v9168
        %v9171 = vmul.f32 %v9160, %v9169
        %v9172 = vmul.f32 %v9161, %v9169
        %v9173 = vmul.f32 %v9162, %v9169
        %v9174 = vmul.f32 %v9163, %v9169
        %v9175 = vpack.c.bf16 %v9172, %v9171
        %v9176 = vpack.c.bf16 %v9174, %v9173
        %v9177 = vpack.c.bf16 %v9136, %v9136
        %v9179 = vsel %vm3302, %v9177, 0
        %9181 = vmatprep.subr.bf16.mxu0 0
        %9182 = vmatpush1.bf16.msra.mxu0 0
        %9183 = vmatprep.subr.bf16.mxu0 0
        %9184 = vmatpush1.bf16.msra.mxu0 0
        %9185 = vmatprep.subr.bf16.mxu0 0
        %9186 = vmatpush1.bf16.msra.mxu0 0
        %9187 = vmatprep.subr.bf16.mxu0 0
        %9188 = vmatpush1.bf16.msra.mxu0 0
        %9189 = vmatprep.subr.bf16.mxu0 0
        %9190 = vmatpush1.bf16.msra.mxu0 0
        %9191 = vmatprep.subr.bf16.mxu0 0
        %9192 = vmatpush1.bf16.msra.mxu0 0
        %9193 = vmatprep.subr.bf16.mxu0 0
        %9194 = vmatpush1.bf16.msra.mxu0 %v9176
        %9195 = vmatprep.subr.bf16.mxu0 0
        %9196 = vmatpush1.bf16.msra.mxu0 %v9175
        %9197 = vmatprep.subr.bf16.mxu0 0
        %9198 = vmatpush2.bf16.msra.mxu0 0
        %9199 = vmatprep.subr.bf16.mxu0 0
        %9200 = vmatpush2.bf16.msra.mxu0 0
        %9201 = vmatprep.subr.bf16.mxu0 0
        %9202 = vmatpush2.bf16.msra.mxu0 0
        %9203 = vmatprep.subr.bf16.mxu0 0
        %9204 = vmatpush2.bf16.msra.mxu0 0
        %9205 = vmatprep.subr.bf16.mxu0 0
        %9206 = vmatpush2.bf16.msra.mxu0 0
        %9207 = vmatprep.subr.bf16.mxu0 0
        %9208 = vmatpush2.bf16.msra.mxu0 0
        %9209 = vmatprep.subr.bf16.mxu0 0
        %9210 = vmatpush2.bf16.msra.mxu0 0
        %9211 = vmatprep.subr.bf16.mxu0 0
        %9212 = vmatpush2.bf16.msra.mxu0 0
        %9213 = vmatprep.mubr.bf16.mxu0 0
        %9214 = vmatmul.mubr.bf16.gmra.mxu0 %v9179
        %v9215 = vpop.f32.mrf.mxu0
        %v9216 = vadd.f32 0.0, %v9215
        %v9217 = vpop.f32.mrf.mxu0
        %v9218 = vpop.f32.mrf.mxu0
        %v9219 = vpop.f32.mrf.mxu0
        %9220 = vdwg.mxu0
        %vm9221 = vcmask 781312
        %9222 = vst.msk [vmem:[%s871] sm:$0xf] %vm9221, %v9216
        %s9223 = sand.u32 %s653, 1
        %s9224 = scalar_lea.sflag [#allocation3], %s9223
        %s9225 = sand.u32 %s653, 1
        %s9226 = smul.addr %s9225, 4
        %s9227 = scalar_lea.vmem [#allocation2], %s9226
        // Predicated region
        $region133: #{tpu_custom_call.1} parent=131 // pred_check
          %p9228 = pneg %p663
        $region134: #{tpu_custom_call.1} parent=131 // pred_check_branch
          %9230 = sbr.rel (%p9228) target = $region136
        $region135: #{tpu_custom_call.1} parent=131 // pred_region
          %s9232 = ssub.s32 64, 64
          %9233 = vsyncadd %s9224, %s9232
          %s9234 = smul.addr %s42, 64
          %s9235 = scalar_lea.hbm %s28, %s9234
          %s9237 = sshll.u32 %s9227, 4
          %s9238 = int_to_ptr.vmem [resolvable:$true] %s9237
          %9240 = dma.vmem_to_hbm [thread:$0]  %s9238, 64, %s9235, %s9224
        $region136: #{tpu_custom_call.1} parent=131 // pred_fallthru
          _
      $region132: #{tpu_custom_call.1} parent=5 // pred_fallthru
        _
      %p9241 = scmp.le.s32.totalorder 2, %s37
      // Predicated region
      $region137: #{tpu_custom_call.1} parent=5 // pred_check
        %p9242 = pneg %p9241
      $region138: #{tpu_custom_call.1} parent=5 // pred_check_branch
        %9244 = sbr.rel (%p9242) target = $region140
      $region139: #{tpu_custom_call.1} parent=5 // pred_region
        %s9245 = ssub.s32 %s37, 2
        // Predicated region
        $region141: #{tpu_custom_call.1} parent=139 // pred_check
          %p9246 = pneg %p669
        $region142: #{tpu_custom_call.1} parent=139 // pred_check_branch
          %9248 = sbr.rel (%p9246) target = $region144
        $region143: #{tpu_custom_call.1} parent=139 // pred_region
          %s9249 = sand.u32 %s654, 1
          %s9250 = scalar_lea.sflag [#allocation3], %s9249
          %s9251 = sand.u32 %s654, 1
          %s9252 = smul.addr %s9251, 4
          %s9253 = scalar_lea.vmem [#allocation2], %s9252
          %9254 = dma.done %s9250, 64
        $region144: #{tpu_custom_call.1} parent=139 // pred_fallthru
          _
      $region140: #{tpu_custom_call.1} parent=5 // pred_fallthru
        _
    $region6: #{tpu_custom_call.1} parent=1 // loop_footer
      %s41 = sadd.s32 1, %s37
    $region7: #{tpu_custom_call.1} parent=1 // loop_footer_branch
      %36 = sbr.rel target = $region3
    $region8: #{tpu_custom_call.1} parent=1 // loop_exit
      _
    %9255 = vsyncpa [#allocation3], 1
    %s9256 = scalar_lea.sflag [#allocation3], 1
    %9257 = vsyncpa %s9256, 1

</llo_original>
